<compile_context>
chip_gen: v7x
topology: tpu7x:2x2x1
jax: 0.10.0
libtpu: 0.0.40
codegen_flags: <defaults>
</compile_context>

<pallas_src>
import functools

import jax
import jax.numpy as jnp
from jax.experimental import pallas as pl
from jax.experimental.pallas import tpu as pltpu

_COUT_PAD = 8  # 4 (bbox_reg) + 1 (ctrness) padded to 8 for layout friendliness


# ----------------------------------------------------------------------------
# Fused Pallas kernel: full FCOSRegressionHead for one sample of one level
# ----------------------------------------------------------------------------
def _fcos_level_kernel(xp_ref, wt_ref, bt_ref, g_ref, be_ref, wh_ref, bh_ref,
                       out_ref, act_ref, *, H, W, C, G, num_convs, eps):
    """xp_ref:  (1, H+2, W+2, C) zero-padded level input (one sample)
       wt_ref:  (num_convs, 9*C, C) trunk conv weights (im2col layout)
       bt_ref:  (num_convs, 1, C) trunk conv biases
       g_ref:   (num_convs, 1, C) GroupNorm gammas
       be_ref:  (num_convs, 1, C) GroupNorm betas
       wh_ref:  (9*C, COUT_PAD)   fused head weights [reg(4) | ctr(1) | pad(3)]
       bh_ref:  (1, COUT_PAD)     fused head bias
       out_ref: (1, COUT_PAD, H*W) lane-dense output
       act_ref: (H+2, W+2, C)     VMEM scratch, padded activation buffer
    """
    HW = H * W
    cpg = C // G
    inv_cnt = 1.0 / float(HW * cpg)

    # Zero halo comes from the padded input; interior is overwritten each layer.
    act_ref[...] = xp_ref[0]

    def im2col():
        # (H*W, 9*C) patch matrix gathered from the padded VMEM activation.
        cols = []
        for dy in range(3):
            for dx in range(3):
                cols.append(act_ref[dy:dy + H, dx:dx + W, :].reshape(HW, C))
        return jnp.concatenate(cols, axis=-1)

    # ---- trunk: num_convs x [conv3x3 -> GroupNorm -> ReLU] -----------------
    for l in range(num_convs):
        patches = im2col()
        y = jnp.dot(patches, wt_ref[l],
                    preferred_element_type=jnp.float32) + bt_ref[l]   # (HW, C)

        # GroupNorm statistics as a by-product of the conv output (one pass).
        s = jnp.sum(y, axis=0, keepdims=True)                         # (1, C)
        sq = jnp.sum(y * y, axis=0, keepdims=True)                    # (1, C)
        if cpg == 1:
            # Each channel is its own group (the demo / C==16 case).
            mean_c = s * inv_cnt
            var_c = sq * inv_cnt - mean_c * mean_c
        else:
            # Fold channels into groups with an iota-built membership matrix.
            cid = jax.lax.broadcasted_iota(jnp.int32, (C, G), 0) // cpg
            gid = jax.lax.broadcasted_iota(jnp.int32, (C, G), 1)
            m = (cid == gid).astype(jnp.float32)                      # (C, G)
            gs = jnp.dot(s, m, preferred_element_type=jnp.float32)    # (1, G)
            gsq = jnp.dot(sq, m, preferred_element_type=jnp.float32)  # (1, G)
            mean_g = gs * inv_cnt
            var_g = gsq * inv_cnt - mean_g * mean_g
            mean_c = jnp.dot(mean_g, m.T, preferred_element_type=jnp.float32)
            var_c = jnp.dot(var_g, m.T, preferred_element_type=jnp.float32)

        var_c = jnp.maximum(var_c, 0.0)            # guard E[x^2]-mean^2 cancellation
        scale = jax.lax.rsqrt(var_c + eps) * g_ref[l]                 # (1, C)
        shift = be_ref[l] - mean_c * scale                            # (1, C)
        act = jnp.maximum(y * scale + shift, 0.0)                     # (HW, C)

        # Write back into the interior of the padded scratch for the next conv.
        act_ref[1:H + 1, 1:W + 1, :] = act.reshape(H, W, C)

    # ---- fused heads: bbox_reg (4ch, ReLU) + bbox_ctrness (1ch) ------------
    patches = im2col()
    yh = jnp.dot(patches, wh_ref[...],
                 preferred_element_type=jnp.float32) + bh_ref[...]    # (HW, 8)
    col = jax.lax.broadcasted_iota(jnp.int32, yh.shape, 1)
    yh = jnp.where(col < 4, jnp.maximum(yh, 0.0), yh)  # ReLU on reg channels only

    # Lane-dense store: last dim is H*W (>= 128 for all but the tiniest level).
    out_ref[0] = yh.T


# ----------------------------------------------------------------------------
# Wrapper: one pallas_call per pyramid level
# ----------------------------------------------------------------------------
def _fcos_level_forward(x_nchw, packed, num_groups, eps=1e-5):
    N, C, H, W = x_nchw.shape
    wt, bt, gm, be = packed["wt"], packed["bt"], packed["gamma"], packed["beta"]
    wh, bh = packed["wh"], packed["bh"]
    num_convs = wt.shape[0]

    x = jnp.transpose(x_nchw, (0, 2, 3, 1)).astype(jnp.float32)       # NHWC
    xp = jnp.pad(x, ((0, 0), (1, 1), (1, 1), (0, 0)))                 # one pad / level

    kernel = functools.partial(_fcos_level_kernel, H=H, W=W, C=C, G=num_groups,
                               num_convs=num_convs, eps=eps)
    out = pl.pallas_call(
        kernel,
        out_shape=jax.ShapeDtypeStruct((N, _COUT_PAD, H * W), jnp.float32),
        grid=(N,),
        in_specs=[
            pl.BlockSpec((1, H + 2, W + 2, C), lambda n: (n, 0, 0, 0)),
            pl.BlockSpec((num_convs, 9 * C, C), lambda n: (0, 0, 0)),
            pl.BlockSpec((num_convs, 1, C), lambda n: (0, 0, 0)),
            pl.BlockSpec((num_convs, 1, C), lambda n: (0, 0, 0)),
            pl.BlockSpec((num_convs, 1, C), lambda n: (0, 0, 0)),
            pl.BlockSpec((9 * C, _COUT_PAD), lambda n: (0, 0)),
            pl.BlockSpec((1, _COUT_PAD), lambda n: (0, 0)),
        ],
        out_specs=pl.BlockSpec((1, _COUT_PAD, H * W), lambda n: (n, 0, 0)),
        scratch_shapes=[pltpu.VMEM((H + 2, W + 2, C), jnp.float32)],
        compiler_params=pltpu.CompilerParams(
            dimension_semantics=("parallel",)),
    )(xp, wt, bt, gm, be, wh, bh)

    out = out.reshape(N, _COUT_PAD, H, W)          # already NCHW-style layout
    return out[:, :4], out[:, 4:5]                 # (N,4,H,W), (N,1,H,W)


# ----------------------------------------------------------------------------
# FCOSRegressionHead parameters (PyTorch init_weights semantics) + packing
# ----------------------------------------------------------------------------
def init_params(key, in_channels, num_convs=3):
    C = in_channels
    params = {"trunk": []}
    for _ in range(num_convs):
        key, kw = jax.random.split(key)
        params["trunk"].append({
            "w": 0.01 * jax.random.normal(kw, (3, 3, C, C), jnp.float32),
            "b": jnp.zeros((C,), jnp.float32),
            "gamma": jnp.ones((C,), jnp.float32),
            "beta": jnp.zeros((C,), jnp.float32),
        })
    key, kreg = jax.random.split(key)
    key, kctr = jax.random.split(key)
    params["bbox_reg"] = {
        "w": 0.01 * jax.random.normal(kreg, (3, 3, C, 4), jnp.float32),
        "b": jnp.zeros((4,), jnp.float32),
    }
    params["bbox_ctrness"] = {
        "w": 0.01 * jax.random.normal(kctr, (3, 3, C, 1), jnp.float32),
        "b": jnp.zeros((1,), jnp.float32),
    }
    return params


def pack_params(params):
    """Reshape weights into the im2col / fused-head layouts the kernel expects."""
    C = params["trunk"][0]["w"].shape[2]
    wt = jnp.stack([l["w"].reshape(9 * C, C) for l in params["trunk"]])
    bt = jnp.stack([l["b"].reshape(1, C) for l in params["trunk"]])
    gm = jnp.stack([l["gamma"].reshape(1, C) for l in params["trunk"]])
    be = jnp.stack([l["beta"].reshape(1, C) for l in params["trunk"]])
    w_reg = params["bbox_reg"]["w"]            # (3,3,C,4)
    w_ctr = params["bbox_ctrness"]["w"]        # (3,3,C,1)
    pad_c = _COUT_PAD - 5
    wh = jnp.concatenate(
        [w_reg, w_ctr, jnp.zeros((3, 3, C, pad_c), jnp.float32)], axis=-1)
    wh = wh.reshape(9 * C, _COUT_PAD)
    bh = jnp.concatenate(
        [params["bbox_reg"]["b"], params["bbox_ctrness"]["b"],
         jnp.zeros((pad_c,), jnp.float32)]).reshape(1, _COUT_PAD)
    return {"wt": wt, "bt": bt, "gamma": gm, "beta": be, "wh": wh, "bh": bh}


def fcos_regression_head_forward(params, feats_nchw, num_groups=16):
    """feats_nchw: list of (N, C, H, W) pyramid features (PyTorch layout)."""
    packed = pack_params(params)
    x_reg_out, x_ctr_out = [], []
    for x in feats_nchw:
        reg, ctr = _fcos_level_forward(x, packed, num_groups)
        x_reg_out.append(reg)
        x_ctr_out.append(ctr)
    return x_reg_out, x_ctr_out


# ----------------------------------------------------------------------------
# Pure-JAX reference (for correctness check)
# ----------------------------------------------------------------------------
def _ref_conv(x, w, b, relu):
    y = jax.lax.conv_general_dilated(
        x, w, window_strides=(1, 1), padding="SAME",
        dimension_numbers=("NHWC", "HWIO", "NHWC")) + b.reshape(1, 1, 1, -1)
    return jnp.maximum(y, 0.0) if relu else y


def _ref_gn_relu(x, gamma, beta, G, eps=1e-5):
    N, H, W, C = x.shape
    xg = x.reshape(N, H, W, G, C // G)
    mean = xg.mean(axis=(1, 2, 4), keepdims=True)
    var = ((xg - mean) ** 2).mean(axis=(1, 2, 4), keepdims=True)
    y = (xg - mean) / jnp.sqrt(var + eps)
    y = y.reshape(N, H, W, C) * gamma.reshape(1, 1, 1, C) + beta.reshape(1, 1, 1, C)
    return jnp.maximum(y, 0.0)


def _ref_forward(params, feats_nchw, num_groups=16):
    regs, ctrs = [], []
    for x in feats_nchw:
        h = jnp.transpose(x, (0, 2, 3, 1)).astype(jnp.float32)
        for layer in params["trunk"]:
            h = _ref_conv(h, layer["w"], layer["b"], relu=False)
            h = _ref_gn_relu(h, layer["gamma"], layer["beta"], num_groups)
        reg = _ref_conv(h, params["bbox_reg"]["w"], params["bbox_reg"]["b"], relu=True)
        ctr = _ref_conv(h, params["bbox_ctrness"]["w"], params["bbox_ctrness"]["b"],
                        relu=False)
        regs.append(jnp.transpose(reg, (0, 3, 1, 2)))
        ctrs.append(jnp.transpose(ctr, (0, 3, 1, 2)))
    return regs, ctrs


# ----------------------------------------------------------------------------
if __name__ == "__main__":
    key = jax.random.PRNGKey(0)
    in_channels = 16            # GroupNorm(16, C) requires C % 16 == 0
    N = 2

    key, kp, k0, k1 = jax.random.split(key, 4)
    params = init_params(kp, in_channels, num_convs=3)

    # Two pyramid levels (PyTorch NCHW layout), increasing depth order.
    feats = [
        jax.random.normal(k0, (N, in_channels, 16, 16), jnp.float32),
        jax.random.normal(k1, (N, in_channels, 8, 8), jnp.float32),
    ]

    x_reg, x_ctr = fcos_regression_head_forward(params, feats)
    jax.block_until_ready(x_reg)
    jax.block_until_ready(x_ctr)

    # Shape checks vs. the PyTorch contract: (N,4,H,W) and (N,1,H,W) per level.
    for lvl, x in enumerate(feats):
        n, c, hh, ww = x.shape
        assert x_reg[lvl].shape == (n, 4, hh, ww)
        assert x_ctr[lvl].shape == (n, 1, hh, ww)

    # Numerical check against a pure-JAX reference.
    ref_reg, ref_ctr = _ref_forward(params, feats)
    for got, ref in zip(x_reg + x_ctr, ref_reg + ref_ctr):
        assert jnp.allclose(got, ref, atol=1e-3, rtol=1e-3), "mismatch vs reference"

    print("KERNEL_OK")
</pallas_src>

<mosaic_0001>
module attributes {stable_mosaic.version = 11 : i64} {
  func.func @_fcos_level_kernel(%arg0: i32, %arg1: memref<1x18x18x16xf32, #tpu.memory_space<vmem>>, %arg2: memref<3x144x16xf32, #tpu.memory_space<vmem>>, %arg3: memref<3x1x16xf32, #tpu.memory_space<vmem>>, %arg4: memref<3x1x16xf32, #tpu.memory_space<vmem>>, %arg5: memref<3x1x16xf32, #tpu.memory_space<vmem>>, %arg6: memref<144x8xf32, #tpu.memory_space<vmem>>, %arg7: memref<1x8xf32, #tpu.memory_space<vmem>>, %arg8: memref<1x8x256xf32, #tpu.memory_space<vmem>>, %arg9: memref<18x18x16xf32, #tpu.memory_space<vmem>>) attributes {dimension_semantics = [#tpu.dimension_semantics<parallel>], iteration_bounds = array<i64: 2>, scalar_prefetch = 0 : i64, scratch_operands = 1 : i64, tpu.core_type = #tpu.core_type<tc>, window_params = [{transform_indices = @transform_0, window_bounds = array<i64: 1, 18, 18, 16>}, {pipeline_mode = #tpu.pipeline_mode<synchronous>, transform_indices = @transform_1, window_bounds = array<i64: 3, 144, 16>}, {pipeline_mode = #tpu.pipeline_mode<synchronous>, transform_indices = @transform_2, window_bounds = array<i64: 3, 1, 16>}, {pipeline_mode = #tpu.pipeline_mode<synchronous>, transform_indices = @transform_3, window_bounds = array<i64: 3, 1, 16>}, {pipeline_mode = #tpu.pipeline_mode<synchronous>, transform_indices = @transform_4, window_bounds = array<i64: 3, 1, 16>}, {pipeline_mode = #tpu.pipeline_mode<synchronous>, transform_indices = @transform_5, window_bounds = array<i64: 144, 8>}, {pipeline_mode = #tpu.pipeline_mode<synchronous>, transform_indices = @transform_6, window_bounds = array<i64: 1, 8>}, {transform_indices = @transform_7, window_bounds = array<i64: 1, 8, 256>}]} {
    %c0 = arith.constant 0 : index
    %c0_0 = arith.constant 0 : index
    %c0_1 = arith.constant 0 : index
    %c0_2 = arith.constant 0 : index
    %0 = vector.load %arg1[%c0, %c0_0, %c0_1, %c0_2] : memref<1x18x18x16xf32, #tpu.memory_space<vmem>>, vector<1x18x18x16xf32>
    %1 = vector.shape_cast %0 : vector<1x18x18x16xf32> to vector<18x18x16xf32>
    %c0_3 = arith.constant 0 : index
    %c0_4 = arith.constant 0 : index
    %c0_5 = arith.constant 0 : index
    %2 = vector.load %arg9[%c0_3, %c0_4, %c0_5] : memref<18x18x16xf32, #tpu.memory_space<vmem>>, vector<18x18x16xf32>
    tpu.vector_store %arg9[%c0_3, %c0_4, %c0_5], %1 {strides = array<i32>} : memref<18x18x16xf32, #tpu.memory_space<vmem>>, vector<18x18x16xf32>,
    %c0_6 = arith.constant 0 : index
    %c0_7 = arith.constant 0 : index
    %c0_8 = arith.constant 0 : index
    %3 = vector.load %arg9[%c0_6, %c0_7, %c0_8] : memref<18x18x16xf32, #tpu.memory_space<vmem>>, vector<16x16x16xf32>
    %4 = vector.shape_cast %3 : vector<16x16x16xf32> to vector<256x16xf32>
    %c0_9 = arith.constant 0 : index
    %c1 = arith.constant 1 : index
    %c0_10 = arith.constant 0 : index
    %5 = vector.load %arg9[%c0_9, %c1, %c0_10] : memref<18x18x16xf32, #tpu.memory_space<vmem>>, vector<16x16x16xf32>
    %6 = vector.shape_cast %5 : vector<16x16x16xf32> to vector<256x16xf32>
    %c0_11 = arith.constant 0 : index
    %c2 = arith.constant 2 : index
    %c0_12 = arith.constant 0 : index
    %7 = vector.load %arg9[%c0_11, %c2, %c0_12] : memref<18x18x16xf32, #tpu.memory_space<vmem>>, vector<16x16x16xf32>
    %8 = vector.shape_cast %7 : vector<16x16x16xf32> to vector<256x16xf32>
    %c1_13 = arith.constant 1 : index
    %c0_14 = arith.constant 0 : index
    %c0_15 = arith.constant 0 : index
    %9 = vector.load %arg9[%c1_13, %c0_14, %c0_15] : memref<18x18x16xf32, #tpu.memory_space<vmem>>, vector<16x16x16xf32>
    %10 = vector.shape_cast %9 : vector<16x16x16xf32> to vector<256x16xf32>
    %c1_16 = arith.constant 1 : index
    %c1_17 = arith.constant 1 : index
    %c0_18 = arith.constant 0 : index
    %11 = vector.load %arg9[%c1_16, %c1_17, %c0_18] : memref<18x18x16xf32, #tpu.memory_space<vmem>>, vector<16x16x16xf32>
    %12 = vector.shape_cast %11 : vector<16x16x16xf32> to vector<256x16xf32>
    %c1_19 = arith.constant 1 : index
    %c2_20 = arith.constant 2 : index
    %c0_21 = arith.constant 0 : index
    %13 = vector.load %arg9[%c1_19, %c2_20, %c0_21] : memref<18x18x16xf32, #tpu.memory_space<vmem>>, vector<16x16x16xf32>
    %14 = vector.shape_cast %13 : vector<16x16x16xf32> to vector<256x16xf32>
    %c2_22 = arith.constant 2 : index
    %c0_23 = arith.constant 0 : index
    %c0_24 = arith.constant 0 : index
    %15 = vector.load %arg9[%c2_22, %c0_23, %c0_24] : memref<18x18x16xf32, #tpu.memory_space<vmem>>, vector<16x16x16xf32>
    %16 = vector.shape_cast %15 : vector<16x16x16xf32> to vector<256x16xf32>
    %c2_25 = arith.constant 2 : index
    %c1_26 = arith.constant 1 : index
    %c0_27 = arith.constant 0 : index
    %17 = vector.load %arg9[%c2_25, %c1_26, %c0_27] : memref<18x18x16xf32, #tpu.memory_space<vmem>>, vector<16x16x16xf32>
    %18 = vector.shape_cast %17 : vector<16x16x16xf32> to vector<256x16xf32>
    %c2_28 = arith.constant 2 : index
    %c2_29 = arith.constant 2 : index
    %c0_30 = arith.constant 0 : index
    %19 = vector.load %arg9[%c2_28, %c2_29, %c0_30] : memref<18x18x16xf32, #tpu.memory_space<vmem>>, vector<16x16x16xf32>
    %20 = vector.shape_cast %19 : vector<16x16x16xf32> to vector<256x16xf32>
    %21 = tpu.concatenate %4, %6, %8, %10, %12, %14, %16, %18, %20 in 1 : vector<256x16xf32>, vector<256x16xf32>, vector<256x16xf32>, vector<256x16xf32>, vector<256x16xf32>, vector<256x16xf32>, vector<256x16xf32>, vector<256x16xf32>, vector<256x16xf32> -> vector<256x144xf32>
    %c0_31 = arith.constant 0 : index
    %c0_32 = arith.constant 0 : index
    %c0_33 = arith.constant 0 : index
    %22 = vector.load %arg2[%c0_31, %c0_32, %c0_33] : memref<3x144x16xf32, #tpu.memory_space<vmem>>, vector<1x144x16xf32>
    %23 = vector.shape_cast %22 : vector<1x144x16xf32> to vector<144x16xf32>
    %cst = arith.constant dense<0.000000e+00> : vector<256x16xf32>
    %24 = tpu.matmul %21, %23, %cst {dimension_numbers = #tpu.dot_dimension_numbers<[1], [0], [0], [1], [0, 0, 1, 1], [], []>} : vector<256x144xf32>, vector<144x16xf32>, vector<256x16xf32> -> vector<256x16xf32>
    %c0_34 = arith.constant 0 : index
    %c0_35 = arith.constant 0 : index
    %c0_36 = arith.constant 0 : index
    %25 = vector.load %arg3[%c0_34, %c0_35, %c0_36] : memref<3x1x16xf32, #tpu.memory_space<vmem>>, vector<1x1x16xf32>
    %26 = vector.shape_cast %25 : vector<1x1x16xf32> to vector<1x16xf32>
    %27 = vector.broadcast %26 : vector<1x16xf32> to vector<256x16xf32>
    %28 = arith.addf %24, %27 : vector<256x16xf32>
    %cst_37 = arith.constant dense<0.000000e+00> : vector<16xf32>
    %29 = vector.multi_reduction <add>, %28, %cst_37 [0] : vector<256x16xf32> to vector<16xf32>
    %30 = vector.shape_cast %29 : vector<16xf32> to vector<1x16xf32>
    %31 = arith.mulf %28, %28 : vector<256x16xf32>
    %cst_38 = arith.constant dense<0.000000e+00> : vector<16xf32>
    %32 = vector.multi_reduction <add>, %31, %cst_38 [0] : vector<256x16xf32> to vector<16xf32>
    %33 = vector.shape_cast %32 : vector<16xf32> to vector<1x16xf32>
    %cst_39 = arith.constant 3.906250e-03 : f32
    %34 = vector.broadcast %cst_39 : f32 to vector<1x16xf32>
    %35 = arith.mulf %30, %34 : vector<1x16xf32>
    %cst_40 = arith.constant 3.906250e-03 : f32
    %36 = vector.broadcast %cst_40 : f32 to vector<1x16xf32>
    %37 = arith.mulf %33, %36 : vector<1x16xf32>
    %38 = arith.mulf %35, %35 : vector<1x16xf32>
    %39 = arith.subf %37, %38 : vector<1x16xf32>
    %cst_41 = arith.constant 0.000000e+00 : f32
    %40 = vector.broadcast %cst_41 : f32 to vector<1x16xf32>
    %41 = arith.maximumf %39, %40 : vector<1x16xf32>
    %cst_42 = arith.constant 9.99999974E-6 : f32
    %42 = vector.broadcast %cst_42 : f32 to vector<1x16xf32>
    %43 = arith.addf %41, %42 : vector<1x16xf32>
    %44 = math.rsqrt %43 : vector<1x16xf32>
    %c0_43 = arith.constant 0 : index
    %c0_44 = arith.constant 0 : index
    %c0_45 = arith.constant 0 : index
    %45 = vector.load %arg4[%c0_43, %c0_44, %c0_45] : memref<3x1x16xf32, #tpu.memory_space<vmem>>, vector<1x1x16xf32>
    %46 = vector.shape_cast %45 : vector<1x1x16xf32> to vector<1x16xf32>
    %47 = arith.mulf %44, %46 : vector<1x16xf32>
    %c0_46 = arith.constant 0 : index
    %c0_47 = arith.constant 0 : index
    %c0_48 = arith.constant 0 : index
    %48 = vector.load %arg5[%c0_46, %c0_47, %c0_48] : memref<3x1x16xf32, #tpu.memory_space<vmem>>, vector<1x1x16xf32>
    %49 = vector.shape_cast %48 : vector<1x1x16xf32> to vector<1x16xf32>
    %50 = arith.mulf %35, %47 : vector<1x16xf32>
    %51 = arith.subf %49, %50 : vector<1x16xf32>
    %52 = vector.broadcast %47 : vector<1x16xf32> to vector<256x16xf32>
    %53 = arith.mulf %28, %52 : vector<256x16xf32>
    %54 = vector.broadcast %51 : vector<1x16xf32> to vector<256x16xf32>
    %55 = arith.addf %53, %54 : vector<256x16xf32>
    %cst_49 = arith.constant 0.000000e+00 : f32
    %56 = vector.broadcast %cst_49 : f32 to vector<256x16xf32>
    %57 = arith.maximumf %55, %56 : vector<256x16xf32>
    %58 = vector.shape_cast %57 : vector<256x16xf32> to vector<16x16x16xf32>
    %c1_50 = arith.constant 1 : index
    %c1_51 = arith.constant 1 : index
    %c0_52 = arith.constant 0 : index
    %59 = vector.load %arg9[%c1_50, %c1_51, %c0_52] : memref<18x18x16xf32, #tpu.memory_space<vmem>>, vector<16x16x16xf32>
    tpu.vector_store %arg9[%c1_50, %c1_51, %c0_52], %58 {strides = array<i32>} : memref<18x18x16xf32, #tpu.memory_space<vmem>>, vector<16x16x16xf32>,
    %c0_53 = arith.constant 0 : index
    %c0_54 = arith.constant 0 : index
    %c0_55 = arith.constant 0 : index
    %60 = vector.load %arg9[%c0_53, %c0_54, %c0_55] : memref<18x18x16xf32, #tpu.memory_space<vmem>>, vector<16x16x16xf32>
    %61 = vector.shape_cast %60 : vector<16x16x16xf32> to vector<256x16xf32>
    %c0_56 = arith.constant 0 : index
    %c1_57 = arith.constant 1 : index
    %c0_58 = arith.constant 0 : index
    %62 = vector.load %arg9[%c0_56, %c1_57, %c0_58] : memref<18x18x16xf32, #tpu.memory_space<vmem>>, vector<16x16x16xf32>
    %63 = vector.shape_cast %62 : vector<16x16x16xf32> to vector<256x16xf32>
    %c0_59 = arith.constant 0 : index
    %c2_60 = arith.constant 2 : index
    %c0_61 = arith.constant 0 : index
    %64 = vector.load %arg9[%c0_59, %c2_60, %c0_61] : memref<18x18x16xf32, #tpu.memory_space<vmem>>, vector<16x16x16xf32>
    %65 = vector.shape_cast %64 : vector<16x16x16xf32> to vector<256x16xf32>
    %c1_62 = arith.constant 1 : index
    %c0_63 = arith.constant 0 : index
    %c0_64 = arith.constant 0 : index
    %66 = vector.load %arg9[%c1_62, %c0_63, %c0_64] : memref<18x18x16xf32, #tpu.memory_space<vmem>>, vector<16x16x16xf32>
    %67 = vector.shape_cast %66 : vector<16x16x16xf32> to vector<256x16xf32>
    %c1_65 = arith.constant 1 : index
    %c1_66 = arith.constant 1 : index
    %c0_67 = arith.constant 0 : index
    %68 = vector.load %arg9[%c1_65, %c1_66, %c0_67] : memref<18x18x16xf32, #tpu.memory_space<vmem>>, vector<16x16x16xf32>
    %69 = vector.shape_cast %68 : vector<16x16x16xf32> to vector<256x16xf32>
    %c1_68 = arith.constant 1 : index
    %c2_69 = arith.constant 2 : index
    %c0_70 = arith.constant 0 : index
    %70 = vector.load %arg9[%c1_68, %c2_69, %c0_70] : memref<18x18x16xf32, #tpu.memory_space<vmem>>, vector<16x16x16xf32>
    %71 = vector.shape_cast %70 : vector<16x16x16xf32> to vector<256x16xf32>
    %c2_71 = arith.constant 2 : index
    %c0_72 = arith.constant 0 : index
    %c0_73 = arith.constant 0 : index
    %72 = vector.load %arg9[%c2_71, %c0_72, %c0_73] : memref<18x18x16xf32, #tpu.memory_space<vmem>>, vector<16x16x16xf32>
    %73 = vector.shape_cast %72 : vector<16x16x16xf32> to vector<256x16xf32>
    %c2_74 = arith.constant 2 : index
    %c1_75 = arith.constant 1 : index
    %c0_76 = arith.constant 0 : index
    %74 = vector.load %arg9[%c2_74, %c1_75, %c0_76] : memref<18x18x16xf32, #tpu.memory_space<vmem>>, vector<16x16x16xf32>
    %75 = vector.shape_cast %74 : vector<16x16x16xf32> to vector<256x16xf32>
    %c2_77 = arith.constant 2 : index
    %c2_78 = arith.constant 2 : index
    %c0_79 = arith.constant 0 : index
    %76 = vector.load %arg9[%c2_77, %c2_78, %c0_79] : memref<18x18x16xf32, #tpu.memory_space<vmem>>, vector<16x16x16xf32>
    %77 = vector.shape_cast %76 : vector<16x16x16xf32> to vector<256x16xf32>
    %78 = tpu.concatenate %61, %63, %65, %67, %69, %71, %73, %75, %77 in 1 : vector<256x16xf32>, vector<256x16xf32>, vector<256x16xf32>, vector<256x16xf32>, vector<256x16xf32>, vector<256x16xf32>, vector<256x16xf32>, vector<256x16xf32>, vector<256x16xf32> -> vector<256x144xf32>
    %c1_80 = arith.constant 1 : index
    %c0_81 = arith.constant 0 : index
    %c0_82 = arith.constant 0 : index
    %79 = vector.load %arg2[%c1_80, %c0_81, %c0_82] : memref<3x144x16xf32, #tpu.memory_space<vmem>>, vector<1x144x16xf32>
    %80 = vector.shape_cast %79 : vector<1x144x16xf32> to vector<144x16xf32>
    %cst_83 = arith.constant dense<0.000000e+00> : vector<256x16xf32>
    %81 = tpu.matmul %78, %80, %cst_83 {dimension_numbers = #tpu.dot_dimension_numbers<[1], [0], [0], [1], [0, 0, 1, 1], [], []>} : vector<256x144xf32>, vector<144x16xf32>, vector<256x16xf32> -> vector<256x16xf32>
    %c1_84 = arith.constant 1 : index
    %c0_85 = arith.constant 0 : index
    %c0_86 = arith.constant 0 : index
    %82 = vector.load %arg3[%c1_84, %c0_85, %c0_86] : memref<3x1x16xf32, #tpu.memory_space<vmem>>, vector<1x1x16xf32>
    %83 = vector.shape_cast %82 : vector<1x1x16xf32> to vector<1x16xf32>
    %84 = vector.broadcast %83 : vector<1x16xf32> to vector<256x16xf32>
    %85 = arith.addf %81, %84 : vector<256x16xf32>
    %cst_87 = arith.constant dense<0.000000e+00> : vector<16xf32>
    %86 = vector.multi_reduction <add>, %85, %cst_87 [0] : vector<256x16xf32> to vector<16xf32>
    %87 = vector.shape_cast %86 : vector<16xf32> to vector<1x16xf32>
    %88 = arith.mulf %85, %85 : vector<256x16xf32>
    %cst_88 = arith.constant dense<0.000000e+00> : vector<16xf32>
    %89 = vector.multi_reduction <add>, %88, %cst_88 [0] : vector<256x16xf32> to vector<16xf32>
    %90 = vector.shape_cast %89 : vector<16xf32> to vector<1x16xf32>
    %cst_89 = arith.constant 3.906250e-03 : f32
    %91 = vector.broadcast %cst_89 : f32 to vector<1x16xf32>
    %92 = arith.mulf %87, %91 : vector<1x16xf32>
    %cst_90 = arith.constant 3.906250e-03 : f32
    %93 = vector.broadcast %cst_90 : f32 to vector<1x16xf32>
    %94 = arith.mulf %90, %93 : vector<1x16xf32>
    %95 = arith.mulf %92, %92 : vector<1x16xf32>
    %96 = arith.subf %94, %95 : vector<1x16xf32>
    %cst_91 = arith.constant 0.000000e+00 : f32
    %97 = vector.broadcast %cst_91 : f32 to vector<1x16xf32>
    %98 = arith.maximumf %96, %97 : vector<1x16xf32>
    %cst_92 = arith.constant 9.99999974E-6 : f32
    %99 = vector.broadcast %cst_92 : f32 to vector<1x16xf32>
    %100 = arith.addf %98, %99 : vector<1x16xf32>
    %101 = math.rsqrt %100 : vector<1x16xf32>
    %c1_93 = arith.constant 1 : index
    %c0_94 = arith.constant 0 : index
    %c0_95 = arith.constant 0 : index
    %102 = vector.load %arg4[%c1_93, %c0_94, %c0_95] : memref<3x1x16xf32, #tpu.memory_space<vmem>>, vector<1x1x16xf32>
    %103 = vector.shape_cast %102 : vector<1x1x16xf32> to vector<1x16xf32>
    %104 = arith.mulf %101, %103 : vector<1x16xf32>
    %c1_96 = arith.constant 1 : index
    %c0_97 = arith.constant 0 : index
    %c0_98 = arith.constant 0 : index
    %105 = vector.load %arg5[%c1_96, %c0_97, %c0_98] : memref<3x1x16xf32, #tpu.memory_space<vmem>>, vector<1x1x16xf32>
    %106 = vector.shape_cast %105 : vector<1x1x16xf32> to vector<1x16xf32>
    %107 = arith.mulf %92, %104 : vector<1x16xf32>
    %108 = arith.subf %106, %107 : vector<1x16xf32>
    %109 = vector.broadcast %104 : vector<1x16xf32> to vector<256x16xf32>
    %110 = arith.mulf %85, %109 : vector<256x16xf32>
    %111 = vector.broadcast %108 : vector<1x16xf32> to vector<256x16xf32>
    %112 = arith.addf %110, %111 : vector<256x16xf32>
    %cst_99 = arith.constant 0.000000e+00 : f32
    %113 = vector.broadcast %cst_99 : f32 to vector<256x16xf32>
    %114 = arith.maximumf %112, %113 : vector<256x16xf32>
    %115 = vector.shape_cast %114 : vector<256x16xf32> to vector<16x16x16xf32>
    %c1_100 = arith.constant 1 : index
    %c1_101 = arith.constant 1 : index
    %c0_102 = arith.constant 0 : index
    %116 = vector.load %arg9[%c1_100, %c1_101, %c0_102] : memref<18x18x16xf32, #tpu.memory_space<vmem>>, vector<16x16x16xf32>
    tpu.vector_store %arg9[%c1_100, %c1_101, %c0_102], %115 {strides = array<i32>} : memref<18x18x16xf32, #tpu.memory_space<vmem>>, vector<16x16x16xf32>,
    %c0_103 = arith.constant 0 : index
    %c0_104 = arith.constant 0 : index
    %c0_105 = arith.constant 0 : index
    %117 = vector.load %arg9[%c0_103, %c0_104, %c0_105] : memref<18x18x16xf32, #tpu.memory_space<vmem>>, vector<16x16x16xf32>
    %118 = vector.shape_cast %117 : vector<16x16x16xf32> to vector<256x16xf32>
    %c0_106 = arith.constant 0 : index
    %c1_107 = arith.constant 1 : index
    %c0_108 = arith.constant 0 : index
    %119 = vector.load %arg9[%c0_106, %c1_107, %c0_108] : memref<18x18x16xf32, #tpu.memory_space<vmem>>, vector<16x16x16xf32>
    %120 = vector.shape_cast %119 : vector<16x16x16xf32> to vector<256x16xf32>
    %c0_109 = arith.constant 0 : index
    %c2_110 = arith.constant 2 : index
    %c0_111 = arith.constant 0 : index
    %121 = vector.load %arg9[%c0_109, %c2_110, %c0_111] : memref<18x18x16xf32, #tpu.memory_space<vmem>>, vector<16x16x16xf32>
    %122 = vector.shape_cast %121 : vector<16x16x16xf32> to vector<256x16xf32>
    %c1_112 = arith.constant 1 : index
    %c0_113 = arith.constant 0 : index
    %c0_114 = arith.constant 0 : index
    %123 = vector.load %arg9[%c1_112, %c0_113, %c0_114] : memref<18x18x16xf32, #tpu.memory_space<vmem>>, vector<16x16x16xf32>
    %124 = vector.shape_cast %123 : vector<16x16x16xf32> to vector<256x16xf32>
    %c1_115 = arith.constant 1 : index
    %c1_116 = arith.constant 1 : index
    %c0_117 = arith.constant 0 : index
    %125 = vector.load %arg9[%c1_115, %c1_116, %c0_117] : memref<18x18x16xf32, #tpu.memory_space<vmem>>, vector<16x16x16xf32>
    %126 = vector.shape_cast %125 : vector<16x16x16xf32> to vector<256x16xf32>
    %c1_118 = arith.constant 1 : index
    %c2_119 = arith.constant 2 : index
    %c0_120 = arith.constant 0 : index
    %127 = vector.load %arg9[%c1_118, %c2_119, %c0_120] : memref<18x18x16xf32, #tpu.memory_space<vmem>>, vector<16x16x16xf32>
    %128 = vector.shape_cast %127 : vector<16x16x16xf32> to vector<256x16xf32>
    %c2_121 = arith.constant 2 : index
    %c0_122 = arith.constant 0 : index
    %c0_123 = arith.constant 0 : index
    %129 = vector.load %arg9[%c2_121, %c0_122, %c0_123] : memref<18x18x16xf32, #tpu.memory_space<vmem>>, vector<16x16x16xf32>
    %130 = vector.shape_cast %129 : vector<16x16x16xf32> to vector<256x16xf32>
    %c2_124 = arith.constant 2 : index
    %c1_125 = arith.constant 1 : index
    %c0_126 = arith.constant 0 : index
    %131 = vector.load %arg9[%c2_124, %c1_125, %c0_126] : memref<18x18x16xf32, #tpu.memory_space<vmem>>, vector<16x16x16xf32>
    %132 = vector.shape_cast %131 : vector<16x16x16xf32> to vector<256x16xf32>
    %c2_127 = arith.constant 2 : index
    %c2_128 = arith.constant 2 : index
    %c0_129 = arith.constant 0 : index
    %133 = vector.load %arg9[%c2_127, %c2_128, %c0_129] : memref<18x18x16xf32, #tpu.memory_space<vmem>>, vector<16x16x16xf32>
    %134 = vector.shape_cast %133 : vector<16x16x16xf32> to vector<256x16xf32>
    %135 = tpu.concatenate %118, %120, %122, %124, %126, %128, %130, %132, %134 in 1 : vector<256x16xf32>, vector<256x16xf32>, vector<256x16xf32>, vector<256x16xf32>, vector<256x16xf32>, vector<256x16xf32>, vector<256x16xf32>, vector<256x16xf32>, vector<256x16xf32> -> vector<256x144xf32>
    %c2_130 = arith.constant 2 : index
    %c0_131 = arith.constant 0 : index
    %c0_132 = arith.constant 0 : index
    %136 = vector.load %arg2[%c2_130, %c0_131, %c0_132] : memref<3x144x16xf32, #tpu.memory_space<vmem>>, vector<1x144x16xf32>
    %137 = vector.shape_cast %136 : vector<1x144x16xf32> to vector<144x16xf32>
    %cst_133 = arith.constant dense<0.000000e+00> : vector<256x16xf32>
    %138 = tpu.matmul %135, %137, %cst_133 {dimension_numbers = #tpu.dot_dimension_numbers<[1], [0], [0], [1], [0, 0, 1, 1], [], []>} : vector<256x144xf32>, vector<144x16xf32>, vector<256x16xf32> -> vector<256x16xf32>
    %c2_134 = arith.constant 2 : index
    %c0_135 = arith.constant 0 : index
    %c0_136 = arith.constant 0 : index
    %139 = vector.load %arg3[%c2_134, %c0_135, %c0_136] : memref<3x1x16xf32, #tpu.memory_space<vmem>>, vector<1x1x16xf32>
    %140 = vector.shape_cast %139 : vector<1x1x16xf32> to vector<1x16xf32>
    %141 = vector.broadcast %140 : vector<1x16xf32> to vector<256x16xf32>
    %142 = arith.addf %138, %141 : vector<256x16xf32>
    %cst_137 = arith.constant dense<0.000000e+00> : vector<16xf32>
    %143 = vector.multi_reduction <add>, %142, %cst_137 [0] : vector<256x16xf32> to vector<16xf32>
    %144 = vector.shape_cast %143 : vector<16xf32> to vector<1x16xf32>
    %145 = arith.mulf %142, %142 : vector<256x16xf32>
    %cst_138 = arith.constant dense<0.000000e+00> : vector<16xf32>
    %146 = vector.multi_reduction <add>, %145, %cst_138 [0] : vector<256x16xf32> to vector<16xf32>
    %147 = vector.shape_cast %146 : vector<16xf32> to vector<1x16xf32>
    %cst_139 = arith.constant 3.906250e-03 : f32
    %148 = vector.broadcast %cst_139 : f32 to vector<1x16xf32>
    %149 = arith.mulf %144, %148 : vector<1x16xf32>
    %cst_140 = arith.constant 3.906250e-03 : f32
    %150 = vector.broadcast %cst_140 : f32 to vector<1x16xf32>
    %151 = arith.mulf %147, %150 : vector<1x16xf32>
    %152 = arith.mulf %149, %149 : vector<1x16xf32>
    %153 = arith.subf %151, %152 : vector<1x16xf32>
    %cst_141 = arith.constant 0.000000e+00 : f32
    %154 = vector.broadcast %cst_141 : f32 to vector<1x16xf32>
    %155 = arith.maximumf %153, %154 : vector<1x16xf32>
    %cst_142 = arith.constant 9.99999974E-6 : f32
    %156 = vector.broadcast %cst_142 : f32 to vector<1x16xf32>
    %157 = arith.addf %155, %156 : vector<1x16xf32>
    %158 = math.rsqrt %157 : vector<1x16xf32>
    %c2_143 = arith.constant 2 : index
    %c0_144 = arith.constant 0 : index
    %c0_145 = arith.constant 0 : index
    %159 = vector.load %arg4[%c2_143, %c0_144, %c0_145] : memref<3x1x16xf32, #tpu.memory_space<vmem>>, vector<1x1x16xf32>
    %160 = vector.shape_cast %159 : vector<1x1x16xf32> to vector<1x16xf32>
    %161 = arith.mulf %158, %160 : vector<1x16xf32>
    %c2_146 = arith.constant 2 : index
    %c0_147 = arith.constant 0 : index
    %c0_148 = arith.constant 0 : index
    %162 = vector.load %arg5[%c2_146, %c0_147, %c0_148] : memref<3x1x16xf32, #tpu.memory_space<vmem>>, vector<1x1x16xf32>
    %163 = vector.shape_cast %162 : vector<1x1x16xf32> to vector<1x16xf32>
    %164 = arith.mulf %149, %161 : vector<1x16xf32>
    %165 = arith.subf %163, %164 : vector<1x16xf32>
    %166 = vector.broadcast %161 : vector<1x16xf32> to vector<256x16xf32>
    %167 = arith.mulf %142, %166 : vector<256x16xf32>
    %168 = vector.broadcast %165 : vector<1x16xf32> to vector<256x16xf32>
    %169 = arith.addf %167, %168 : vector<256x16xf32>
    %cst_149 = arith.constant 0.000000e+00 : f32
    %170 = vector.broadcast %cst_149 : f32 to vector<256x16xf32>
    %171 = arith.maximumf %169, %170 : vector<256x16xf32>
    %172 = vector.shape_cast %171 : vector<256x16xf32> to vector<16x16x16xf32>
    %c1_150 = arith.constant 1 : index
    %c1_151 = arith.constant 1 : index
    %c0_152 = arith.constant 0 : index
    %173 = vector.load %arg9[%c1_150, %c1_151, %c0_152] : memref<18x18x16xf32, #tpu.memory_space<vmem>>, vector<16x16x16xf32>
    tpu.vector_store %arg9[%c1_150, %c1_151, %c0_152], %172 {strides = array<i32>} : memref<18x18x16xf32, #tpu.memory_space<vmem>>, vector<16x16x16xf32>,
    %c0_153 = arith.constant 0 : index
    %c0_154 = arith.constant 0 : index
    %c0_155 = arith.constant 0 : index
    %174 = vector.load %arg9[%c0_153, %c0_154, %c0_155] : memref<18x18x16xf32, #tpu.memory_space<vmem>>, vector<16x16x16xf32>
    %175 = vector.shape_cast %174 : vector<16x16x16xf32> to vector<256x16xf32>
    %c0_156 = arith.constant 0 : index
    %c1_157 = arith.constant 1 : index
    %c0_158 = arith.constant 0 : index
    %176 = vector.load %arg9[%c0_156, %c1_157, %c0_158] : memref<18x18x16xf32, #tpu.memory_space<vmem>>, vector<16x16x16xf32>
    %177 = vector.shape_cast %176 : vector<16x16x16xf32> to vector<256x16xf32>
    %c0_159 = arith.constant 0 : index
    %c2_160 = arith.constant 2 : index
    %c0_161 = arith.constant 0 : index
    %178 = vector.load %arg9[%c0_159, %c2_160, %c0_161] : memref<18x18x16xf32, #tpu.memory_space<vmem>>, vector<16x16x16xf32>
    %179 = vector.shape_cast %178 : vector<16x16x16xf32> to vector<256x16xf32>
    %c1_162 = arith.constant 1 : index
    %c0_163 = arith.constant 0 : index
    %c0_164 = arith.constant 0 : index
    %180 = vector.load %arg9[%c1_162, %c0_163, %c0_164] : memref<18x18x16xf32, #tpu.memory_space<vmem>>, vector<16x16x16xf32>
    %181 = vector.shape_cast %180 : vector<16x16x16xf32> to vector<256x16xf32>
    %c1_165 = arith.constant 1 : index
    %c1_166 = arith.constant 1 : index
    %c0_167 = arith.constant 0 : index
    %182 = vector.load %arg9[%c1_165, %c1_166, %c0_167] : memref<18x18x16xf32, #tpu.memory_space<vmem>>, vector<16x16x16xf32>
    %183 = vector.shape_cast %182 : vector<16x16x16xf32> to vector<256x16xf32>
    %c1_168 = arith.constant 1 : index
    %c2_169 = arith.constant 2 : index
    %c0_170 = arith.constant 0 : index
    %184 = vector.load %arg9[%c1_168, %c2_169, %c0_170] : memref<18x18x16xf32, #tpu.memory_space<vmem>>, vector<16x16x16xf32>
    %185 = vector.shape_cast %184 : vector<16x16x16xf32> to vector<256x16xf32>
    %c2_171 = arith.constant 2 : index
    %c0_172 = arith.constant 0 : index
    %c0_173 = arith.constant 0 : index
    %186 = vector.load %arg9[%c2_171, %c0_172, %c0_173] : memref<18x18x16xf32, #tpu.memory_space<vmem>>, vector<16x16x16xf32>
    %187 = vector.shape_cast %186 : vector<16x16x16xf32> to vector<256x16xf32>
    %c2_174 = arith.constant 2 : index
    %c1_175 = arith.constant 1 : index
    %c0_176 = arith.constant 0 : index
    %188 = vector.load %arg9[%c2_174, %c1_175, %c0_176] : memref<18x18x16xf32, #tpu.memory_space<vmem>>, vector<16x16x16xf32>
    %189 = vector.shape_cast %188 : vector<16x16x16xf32> to vector<256x16xf32>
    %c2_177 = arith.constant 2 : index
    %c2_178 = arith.constant 2 : index
    %c0_179 = arith.constant 0 : index
    %190 = vector.load %arg9[%c2_177, %c2_178, %c0_179] : memref<18x18x16xf32, #tpu.memory_space<vmem>>, vector<16x16x16xf32>
    %191 = vector.shape_cast %190 : vector<16x16x16xf32> to vector<256x16xf32>
    %192 = tpu.concatenate %175, %177, %179, %181, %183, %185, %187, %189, %191 in 1 : vector<256x16xf32>, vector<256x16xf32>, vector<256x16xf32>, vector<256x16xf32>, vector<256x16xf32>, vector<256x16xf32>, vector<256x16xf32>, vector<256x16xf32>, vector<256x16xf32> -> vector<256x144xf32>
    %c0_180 = arith.constant 0 : index
    %c0_181 = arith.constant 0 : index
    %193 = vector.load %arg6[%c0_180, %c0_181] : memref<144x8xf32, #tpu.memory_space<vmem>>, vector<144x8xf32>
    %cst_182 = arith.constant dense<0.000000e+00> : vector<256x8xf32>
    %194 = tpu.matmul %192, %193, %cst_182 {dimension_numbers = #tpu.dot_dimension_numbers<[1], [0], [0], [1], [0, 0, 1, 1], [], []>} : vector<256x144xf32>, vector<144x8xf32>, vector<256x8xf32> -> vector<256x8xf32>
    %c0_183 = arith.constant 0 : index
    %c0_184 = arith.constant 0 : index
    %195 = vector.load %arg7[%c0_183, %c0_184] : memref<1x8xf32, #tpu.memory_space<vmem>>, vector<1x8xf32>
    %196 = vector.broadcast %195 : vector<1x8xf32> to vector<256x8xf32>
    %197 = arith.addf %194, %196 : vector<256x8xf32>
    %198 = tpu.iota {dimensions = array<i32: 1>} : vector<256x8xi32>
    %c4_i32 = arith.constant 4 : i32
    %199 = vector.broadcast %c4_i32 : i32 to vector<256x8xi32>
    %200 = arith.cmpi slt, %198, %199 : vector<256x8xi32>
    %cst_185 = arith.constant 0.000000e+00 : f32
    %201 = vector.broadcast %cst_185 : f32 to vector<256x8xf32>
    %202 = arith.maximumf %197, %201 : vector<256x8xf32>
    %203 = arith.select %200, %202, %197 : vector<256x8xi1>, vector<256x8xf32>
    %204 = tpu.transpose %203, [1, 0] : vector<256x8xf32> -> vector<8x256xf32>
    %c0_186 = arith.constant 0 : index
    %c0_187 = arith.constant 0 : index
    %c0_188 = arith.constant 0 : index
    %205 = vector.load %arg8[%c0_186, %c0_187, %c0_188] : memref<1x8x256xf32, #tpu.memory_space<vmem>>, vector<1x8x256xf32>
    %206 = vector.shape_cast %205 : vector<1x8x256xf32> to vector<8x256xf32>
    %207 = vector.shape_cast %204 : vector<8x256xf32> to vector<1x8x256xf32>
    tpu.vector_store %arg8[%c0_186, %c0_187, %c0_188], %207 {strides = array<i32>} : memref<1x8x256xf32, #tpu.memory_space<vmem>>, vector<1x8x256xf32>,
    return
  }
  func.func @transform_0(%arg0: i32) -> (i32, i32, i32, i32) {
    %c0_i32 = arith.constant 0 : i32
    %c0_i32_0 = arith.constant 0 : i32
    %c0_i32_1 = arith.constant 0 : i32
    %c0_i32_2 = arith.constant 0 : i32
    return %arg0, %c0_i32, %c0_i32_0, %c0_i32_1 : i32, i32, i32, i32
  }
  func.func @transform_1(%arg0: i32) -> (i32, i32, i32) {
    %c0_i32 = arith.constant 0 : i32
    %c0_i32_0 = arith.constant 0 : i32
    %c0_i32_1 = arith.constant 0 : i32
    %c0_i32_2 = arith.constant 0 : i32
    return %c0_i32, %c0_i32_0, %c0_i32_1 : i32, i32, i32
  }
  func.func @transform_2(%arg0: i32) -> (i32, i32, i32) {
    %c0_i32 = arith.constant 0 : i32
    %c0_i32_0 = arith.constant 0 : i32
    %c0_i32_1 = arith.constant 0 : i32
    %c0_i32_2 = arith.constant 0 : i32
    return %c0_i32, %c0_i32_0, %c0_i32_1 : i32, i32, i32
  }
  func.func @transform_3(%arg0: i32) -> (i32, i32, i32) {
    %c0_i32 = arith.constant 0 : i32
    %c0_i32_0 = arith.constant 0 : i32
    %c0_i32_1 = arith.constant 0 : i32
    %c0_i32_2 = arith.constant 0 : i32
    return %c0_i32, %c0_i32_0, %c0_i32_1 : i32, i32, i32
  }
  func.func @transform_4(%arg0: i32) -> (i32, i32, i32) {
    %c0_i32 = arith.constant 0 : i32
    %c0_i32_0 = arith.constant 0 : i32
    %c0_i32_1 = arith.constant 0 : i32
    %c0_i32_2 = arith.constant 0 : i32
    return %c0_i32, %c0_i32_0, %c0_i32_1 : i32, i32, i32
  }
  func.func @transform_5(%arg0: i32) -> (i32, i32) {
    %c0_i32 = arith.constant 0 : i32
    %c0_i32_0 = arith.constant 0 : i32
    %c0_i32_1 = arith.constant 0 : i32
    return %c0_i32, %c0_i32_0 : i32, i32
  }
  func.func @transform_6(%arg0: i32) -> (i32, i32) {
    %c0_i32 = arith.constant 0 : i32
    %c0_i32_0 = arith.constant 0 : i32
    %c0_i32_1 = arith.constant 0 : i32
    return %c0_i32, %c0_i32_0 : i32, i32
  }
  func.func @transform_7(%arg0: i32) -> (i32, i32, i32) {
    %c0_i32 = arith.constant 0 : i32
    %c0_i32_0 = arith.constant 0 : i32
    %c0_i32_1 = arith.constant 0 : i32
    return %arg0, %c0_i32, %c0_i32_0 : i32, i32, i32
  }
}

</mosaic_0001>

<llo_original>
// kernel: tpu_custom_call.1
$region0: #{tpu_custom_call.1}
  #allocation0 [shape = 'u32[]', space=smem, size = 0x4, offset = 0x4, fixed_abs, tag = 'smem constant byte address 0x4 - core index']
  #allocation1 [shape = 'u32[144,128]{1,0:T(1,128)}', space=vmem, size = 0x12000, scoped, tag = 'internal scratch']
  #allocation2 [shape = 'f32[18,18,16]{2,1,0:T(8,128)}', space=vmem, size = 0x36000, scoped, tag = 'scratch operand']
  %s0 = inlined_call_operand.vmem [shape: f32[2,18,18,16], index: 0, kind: input, shape index: {}]
  %s1 = inlined_call_operand.vmem [shape: f32[3,144,16], index: 1, kind: input, shape index: {}]
  %s2 = inlined_call_operand.vmem [shape: f32[3,1,16], index: 2, kind: input, shape index: {}]
  %s3 = inlined_call_operand.vmem [shape: f32[3,1,16], index: 3, kind: input, shape index: {}]
  %s4 = inlined_call_operand.vmem [shape: f32[3,1,16], index: 4, kind: input, shape index: {}]
  %s5 = inlined_call_operand.vmem [shape: f32[144,8], index: 5, kind: input, shape index: {}]
  %s6 = inlined_call_operand.vmem [shape: f32[1,8], index: 6, kind: input, shape index: {}]
  %s7 = inlined_call_operand.hbm [shape: f32[2,8,256], index: 7, kind: output, shape index: {}]
  %s8 = sld [smem:[#allocation0]]
  $region61: #{tpu_custom_call.1} parent=0
    _
  %s10 = ssub.s32 1, %s8
  %s11 = scalar_select 0, %s10, %s8
  $region1: #{tpu_custom_call.1} parent=0
    #allocation3 [shape = 'u8[16384]{0}', space=vmem, size = 0x4000, scoped, tag = 'output window, operand 0']
    #allocation4 [shape = 's32[2]{0}', space=sflag, size = 0x8, scoped, tag = 'scoped memory for tpu_custom_call.1']
    %12 = vsyncpa [#allocation4], 0
    %s13 = scalar_lea.sflag [#allocation4], 1
    %14 = vsyncpa %s13, 0
    loop: start=0, step=1, limit=4
    $region2: #{tpu_custom_call.1} parent=1 // loop_pre_header
      _
    $region3: #{tpu_custom_call.1} parent=1 // loop_header
      %s16 = sphi 0, %s20
      %p17 = scmp.ge.s32.totalorder %s16, 4
      %s26 = sphi 0, %s28
      %s29 = sphi 0, %s26
      %s30 = sphi 0, %s29
      %s46 = sphi 0, %s30
      %s50 = sphi 0, %s50
      %s52 = sphi 0, %s50
      %s53 = sphi 0, %s52
      %s67 = sphi 0, %s53
      %s71 = sphi 0, %s71
      %s73 = sphi 0, %s71
      %s74 = sphi 0, %s73
      %s88 = sphi 0, %s74
      %s92 = sphi 0, %s92
      %s94 = sphi 0, %s92
      %s95 = sphi 0, %s94
      %s109 = sphi 0, %s95
      %s113 = sphi 0, %s113
      %s115 = sphi 0, %s113
      %s116 = sphi 0, %s115
      %s130 = sphi 0, %s116
      %s134 = sphi 0, %s134
      %s136 = sphi 0, %s134
      %s137 = sphi 0, %s136
      %s151 = sphi 0, %s137
      %s155 = sphi 0, %s155
      %s157 = sphi 0, %s155
      %s158 = sphi 0, %s157
      %s172 = sphi 0, %s158
      %s178 = sphi 0, %s180
      %s181 = sphi 0, %s178
      %s182 = sphi 0, %s181
      %s198 = sphi 0, %s182
    $region4: #{tpu_custom_call.1} parent=1 // loop_header_branch
      %19 = sbr.rel (%p17) target = $region8
    $region5: #{tpu_custom_call.1} parent=1 // loop_body
      %s21 = ssub.s32 %s16, 1
      %s22 = ssub.s32 %s16, 2
      %s23 = sadd.s32 %s16, 1
      %s24 = ssub.s32 %s16, %s23
      %p25 = scmp.eq.s32.totalorder %s24, 0
      %s27 = sadd.s32 %s26, 1
      %s28 = scalar_select %p25, %s26, %s27
      %p31 = pneg %p25
      %p32 = scmp.eq.s32.totalorder %s16, 1
      %p33 = por %p31, %p32
      %p34 = scmp.ne.s32.totalorder %s26, %s29
      %p35 = scmp.eq.s32.totalorder %s16, 0
      %p36 = por %p34, %p35
      %p37 = scmp.ne.s32.totalorder %s26, %s29
      %p38 = scmp.eq.s32.totalorder %s21, 1
      %p39 = por %p37, %p38
      %p40 = scmp.ne.s32.totalorder %s29, %s30
      %p41 = scmp.eq.s32.totalorder %s21, 0
      %p42 = por %p40, %p41
      %p43 = scmp.ne.s32.totalorder %s29, %s30
      %p44 = scmp.eq.s32.totalorder %s22, 1
      %p45 = por %p43, %p44
      %p47 = scmp.ne.s32.totalorder %s30, %s46
      %p48 = scmp.eq.s32.totalorder %s22, 0
      %p49 = por %p47, %p48
      %s51 = sadd.s32 %s50, 1
      %p54 = scmp.eq.s32.totalorder %s16, 1
      %p55 = scmp.ne.s32.totalorder %s50, %s52
      %p56 = scmp.eq.s32.totalorder %s16, 0
      %p57 = por %p55, %p56
      %p58 = scmp.ne.s32.totalorder %s50, %s52
      %p59 = scmp.eq.s32.totalorder %s21, 1
      %p60 = por %p58, %p59
      %p61 = scmp.ne.s32.totalorder %s52, %s53
      %p62 = scmp.eq.s32.totalorder %s21, 0
      %p63 = por %p61, %p62
      %p64 = scmp.ne.s32.totalorder %s52, %s53
      %p65 = scmp.eq.s32.totalorder %s22, 1
      %p66 = por %p64, %p65
      %p68 = scmp.ne.s32.totalorder %s53, %s67
      %p69 = scmp.eq.s32.totalorder %s22, 0
      %p70 = por %p68, %p69
      %s72 = sadd.s32 %s71, 1
      %p75 = scmp.eq.s32.totalorder %s16, 1
      %p76 = scmp.ne.s32.totalorder %s71, %s73
      %p77 = scmp.eq.s32.totalorder %s16, 0
      %p78 = por %p76, %p77
      %p79 = scmp.ne.s32.totalorder %s71, %s73
      %p80 = scmp.eq.s32.totalorder %s21, 1
      %p81 = por %p79, %p80
      %p82 = scmp.ne.s32.totalorder %s73, %s74
      %p83 = scmp.eq.s32.totalorder %s21, 0
      %p84 = por %p82, %p83
      %p85 = scmp.ne.s32.totalorder %s73, %s74
      %p86 = scmp.eq.s32.totalorder %s22, 1
      %p87 = por %p85, %p86
      %p89 = scmp.ne.s32.totalorder %s74, %s88
      %p90 = scmp.eq.s32.totalorder %s22, 0
      %p91 = por %p89, %p90
      %s93 = sadd.s32 %s92, 1
      %p96 = scmp.eq.s32.totalorder %s16, 1
      %p97 = scmp.ne.s32.totalorder %s92, %s94
      %p98 = scmp.eq.s32.totalorder %s16, 0
      %p99 = por %p97, %p98
      %p100 = scmp.ne.s32.totalorder %s92, %s94
      %p101 = scmp.eq.s32.totalorder %s21, 1
      %p102 = por %p100, %p101
      %p103 = scmp.ne.s32.totalorder %s94, %s95
      %p104 = scmp.eq.s32.totalorder %s21, 0
      %p105 = por %p103, %p104
      %p106 = scmp.ne.s32.totalorder %s94, %s95
      %p107 = scmp.eq.s32.totalorder %s22, 1
      %p108 = por %p106, %p107
      %p110 = scmp.ne.s32.totalorder %s95, %s109
      %p111 = scmp.eq.s32.totalorder %s22, 0
      %p112 = por %p110, %p111
      %s114 = sadd.s32 %s113, 1
      %p117 = scmp.eq.s32.totalorder %s16, 1
      %p118 = scmp.ne.s32.totalorder %s113, %s115
      %p119 = scmp.eq.s32.totalorder %s16, 0
      %p120 = por %p118, %p119
      %p121 = scmp.ne.s32.totalorder %s113, %s115
      %p122 = scmp.eq.s32.totalorder %s21, 1
      %p123 = por %p121, %p122
      %p124 = scmp.ne.s32.totalorder %s115, %s116
      %p125 = scmp.eq.s32.totalorder %s21, 0
      %p126 = por %p124, %p125
      %p127 = scmp.ne.s32.totalorder %s115, %s116
      %p128 = scmp.eq.s32.totalorder %s22, 1
      %p129 = por %p127, %p128
      %p131 = scmp.ne.s32.totalorder %s116, %s130
      %p132 = scmp.eq.s32.totalorder %s22, 0
      %p133 = por %p131, %p132
      %s135 = sadd.s32 %s134, 1
      %p138 = scmp.eq.s32.totalorder %s16, 1
      %p139 = scmp.ne.s32.totalorder %s134, %s136
      %p140 = scmp.eq.s32.totalorder %s16, 0
      %p141 = por %p139, %p140
      %p142 = scmp.ne.s32.totalorder %s134, %s136
      %p143 = scmp.eq.s32.totalorder %s21, 1
      %p144 = por %p142, %p143
      %p145 = scmp.ne.s32.totalorder %s136, %s137
      %p146 = scmp.eq.s32.totalorder %s21, 0
      %p147 = por %p145, %p146
      %p148 = scmp.ne.s32.totalorder %s136, %s137
      %p149 = scmp.eq.s32.totalorder %s22, 1
      %p150 = por %p148, %p149
      %p152 = scmp.ne.s32.totalorder %s137, %s151
      %p153 = scmp.eq.s32.totalorder %s22, 0
      %p154 = por %p152, %p153
      %s156 = sadd.s32 %s155, 1
      %p159 = scmp.eq.s32.totalorder %s16, 1
      %p160 = scmp.ne.s32.totalorder %s155, %s157
      %p161 = scmp.eq.s32.totalorder %s16, 0
      %p162 = por %p160, %p161
      %p163 = scmp.ne.s32.totalorder %s155, %s157
      %p164 = scmp.eq.s32.totalorder %s21, 1
      %p165 = por %p163, %p164
      %p166 = scmp.ne.s32.totalorder %s157, %s158
      %p167 = scmp.eq.s32.totalorder %s21, 0
      %p168 = por %p166, %p167
      %p169 = scmp.ne.s32.totalorder %s157, %s158
      %p170 = scmp.eq.s32.totalorder %s22, 1
      %p171 = por %p169, %p170
      %p173 = scmp.ne.s32.totalorder %s158, %s172
      %p174 = scmp.eq.s32.totalorder %s22, 0
      %p175 = por %p173, %p174
      %s176 = ssub.s32 %s16, %s23
      %p177 = scmp.eq.s32.totalorder %s176, 0
      %s179 = sadd.s32 %s178, 1
      %s180 = scalar_select %p177, %s178, %s179
      %p183 = pneg %p177
      %p184 = scmp.eq.s32.totalorder %s16, 1
      %p185 = por %p183, %p184
      %p186 = scmp.ne.s32.totalorder %s178, %s181
      %p187 = scmp.eq.s32.totalorder %s16, 0
      %p188 = por %p186, %p187
      %p189 = scmp.ne.s32.totalorder %s178, %s181
      %p190 = scmp.eq.s32.totalorder %s21, 1
      %p191 = por %p189, %p190
      %p192 = scmp.ne.s32.totalorder %s181, %s182
      %p193 = scmp.eq.s32.totalorder %s21, 0
      %p194 = por %p192, %p193
      %p195 = scmp.ne.s32.totalorder %s181, %s182
      %p196 = scmp.eq.s32.totalorder %s22, 1
      %p197 = por %p195, %p196
      %p199 = scmp.ne.s32.totalorder %s182, %s198
      %p200 = scmp.eq.s32.totalorder %s22, 0
      %p201 = por %p199, %p200
      %p202 = scmp.le.s32.totalorder 1, %s16
      %p203 = scmp.lt.s32.totalorder %s16, 3
      %p204 = pnand %p202, %p203
      %p205 = pneg %p204
      // Predicated region
      $region9: #{tpu_custom_call.1} parent=5 // pred_check
        _
      $region10: #{tpu_custom_call.1} parent=5 // pred_check_branch
        %207 = sbr.rel (%p204) target = $region12
      $region11: #{tpu_custom_call.1} parent=5 // pred_region
        %s208 = ssub.s32 %s16, 1
        // Predicated region
        $region13: #{tpu_custom_call.1} parent=11 // pred_check
          %p209 = pneg %p63
        $region14: #{tpu_custom_call.1} parent=11 // pred_check_branch
          %211 = sbr.rel (%p209) target = $region16
        $region15: #{tpu_custom_call.1} parent=11 // pred_region
          _
        $region16: #{tpu_custom_call.1} parent=11 // pred_fallthru
          _
        // Predicated region
        $region17: #{tpu_custom_call.1} parent=11 // pred_check
          %p212 = pneg %p84
        $region18: #{tpu_custom_call.1} parent=11 // pred_check_branch
          %214 = sbr.rel (%p212) target = $region20
        $region19: #{tpu_custom_call.1} parent=11 // pred_region
          _
        $region20: #{tpu_custom_call.1} parent=11 // pred_fallthru
          _
        // Predicated region
        $region21: #{tpu_custom_call.1} parent=11 // pred_check
          %p215 = pneg %p105
        $region22: #{tpu_custom_call.1} parent=11 // pred_check_branch
          %217 = sbr.rel (%p215) target = $region24
        $region23: #{tpu_custom_call.1} parent=11 // pred_region
          _
        $region24: #{tpu_custom_call.1} parent=11 // pred_fallthru
          _
        // Predicated region
        $region25: #{tpu_custom_call.1} parent=11 // pred_check
          %p218 = pneg %p126
        $region26: #{tpu_custom_call.1} parent=11 // pred_check_branch
          %220 = sbr.rel (%p218) target = $region28
        $region27: #{tpu_custom_call.1} parent=11 // pred_region
          _
        $region28: #{tpu_custom_call.1} parent=11 // pred_fallthru
          _
        // Predicated region
        $region29: #{tpu_custom_call.1} parent=11 // pred_check
          %p221 = pneg %p147
        $region30: #{tpu_custom_call.1} parent=11 // pred_check_branch
          %223 = sbr.rel (%p221) target = $region32
        $region31: #{tpu_custom_call.1} parent=11 // pred_region
          _
        $region32: #{tpu_custom_call.1} parent=11 // pred_fallthru
          _
        // Predicated region
        $region33: #{tpu_custom_call.1} parent=11 // pred_check
          %p224 = pneg %p168
        $region34: #{tpu_custom_call.1} parent=11 // pred_check_branch
          %226 = sbr.rel (%p224) target = $region36
        $region35: #{tpu_custom_call.1} parent=11 // pred_region
          _
        $region36: #{tpu_custom_call.1} parent=11 // pred_fallthru
          _
      $region12: #{tpu_custom_call.1} parent=5 // pred_fallthru
        _
      %p227 = scmp.lt.s32.totalorder %s16, 2
      // Predicated region
      $region37: #{tpu_custom_call.1} parent=5 // pred_check
        %p228 = pneg %p227
      $region38: #{tpu_custom_call.1} parent=5 // pred_check_branch
        %230 = sbr.rel (%p228) target = $region40
      $region39: #{tpu_custom_call.1} parent=5 // pred_region
        // Predicated region
        $region41: #{tpu_custom_call.1} parent=39 // pred_check
          %p231 = pneg %p36
        $region42: #{tpu_custom_call.1} parent=39 // pred_check_branch
          %233 = sbr.rel (%p231) target = $region44
        $region43: #{tpu_custom_call.1} parent=39 // pred_region
          %p234 = scmp.lt.s32.totalorder %s16, 1
          %s235 = scalar_select %p234, %s16, 1
          %s236 = smul.addr %s235, 54
          %s237 = smul.addr %s236, 8
          %s238 = scalar_lea.vmem %s0, %s237
        $region44: #{tpu_custom_call.1} parent=39 // pred_fallthru
          _
      $region40: #{tpu_custom_call.1} parent=5 // pred_fallthru
        _
      %p239 = scmp.le.s32.totalorder 1, %s16
      %p240 = scmp.lt.s32.totalorder %s16, 3
      %p241 = pnand %p239, %p240
      %p242 = pneg %p241
      // Predicated region
      $region45: #{tpu_custom_call.1} parent=5 // pred_check
        _
      $region46: #{tpu_custom_call.1} parent=5 // pred_check_branch
        %244 = sbr.rel (%p241) target = $region48
      $region47: #{tpu_custom_call.1} parent=5 // pred_region
        %s245 = ssub.s32 %s16, 1
        %p246 = scmp.lt.s32.totalorder %s21, 1
        %s247 = scalar_select %p246, %s21, 1
        %s248 = smul.addr %s247, 54
        %s249 = smul.addr %s248, 8
        %s250 = scalar_lea.vmem %s0, %s249
        %p251 = pneg %p42
        %p252 = pneg %p39
        %p253 = pneg %p63
        %p254 = pneg %p60
        %p255 = pneg %p84
        %p256 = pneg %p81
        %p257 = pneg %p105
        %p258 = pneg %p102
        %p259 = pneg %p126
        %p260 = pneg %p123
        %p261 = pneg %p147
        %p262 = pneg %p144
        %p263 = pneg %p168
        %p264 = pneg %p165
        %p265 = pneg %p194
        %p266 = pneg %p191
        %s267 = sand.u32 %s181, 1
        %s268 = scalar_lea.sflag [#allocation4], %s267
        %s269 = sand.u32 %s181, 1
        %s270 = smul.addr %s269, 16
        %s271 = scalar_lea.vmem [#allocation3], %s270
        %p272 = scmp.lt.s32.totalorder %s21, 1
        %s273 = scalar_select %p272, %s21, 1
        %s274 = smul.addr %s273, 54
        %s275 = smul.addr %s274, 8
        %s276 = scalar_lea.vmem %s0, %s275
        %v277 = vld [vmem:[%s276] sm:$0xff]
        %v278 = vld [vmem:[%s276 + $0x8] sm:$0xff]
        %v279 = vld [vmem:[%s276 + $0x10] sm:$0x3]
        %v280 = vld [vmem:[%s276 + $0x18] sm:$0xff]
        %v281 = vld [vmem:[%s276 + $0x20] sm:$0xff]
        %v282 = vld [vmem:[%s276 + $0x28] sm:$0x3]
        %v283 = vld [vmem:[%s276 + $0x30] sm:$0xff]
        %v284 = vld [vmem:[%s276 + $0x38] sm:$0xff]
        %v285 = vld [vmem:[%s276 + $0x40] sm:$0x3]
        %v286 = vld [vmem:[%s276 + $0x48] sm:$0xff]
        %v287 = vld [vmem:[%s276 + $0x50] sm:$0xff]
        %v288 = vld [vmem:[%s276 + $0x58] sm:$0x3]
        %v289 = vld [vmem:[%s276 + $0x60] sm:$0xff]
        %v290 = vld [vmem:[%s276 + $0x68] sm:$0xff]
        %v291 = vld [vmem:[%s276 + $0x70] sm:$0x3]
        %v292 = vld [vmem:[%s276 + $0x78] sm:$0xff]
        %v293 = vld [vmem:[%s276 + $0x80] sm:$0xff]
        %v294 = vld [vmem:[%s276 + $0x88] sm:$0x3]
        %v295 = vld [vmem:[%s276 + $0x90] sm:$0xff]
        %v296 = vld [vmem:[%s276 + $0x98] sm:$0xff]
        %v297 = vld [vmem:[%s276 + $0xa0] sm:$0x3]
        %v298 = vld [vmem:[%s276 + $0xa8] sm:$0xff]
        %v299 = vld [vmem:[%s276 + $0xb0] sm:$0xff]
        %v300 = vld [vmem:[%s276 + $0xb8] sm:$0x3]
        %v301 = vld [vmem:[%s276 + $0xc0] sm:$0xff]
        %v302 = vld [vmem:[%s276 + $0xc8] sm:$0xff]
        %v303 = vld [vmem:[%s276 + $0xd0] sm:$0x3]
        %v304 = vld [vmem:[%s276 + $0xd8] sm:$0xff]
        %v305 = vld [vmem:[%s276 + $0xe0] sm:$0xff]
        %v306 = vld [vmem:[%s276 + $0xe8] sm:$0x3]
        %v307 = vld [vmem:[%s276 + $0xf0] sm:$0xff]
        %v308 = vld [vmem:[%s276 + $0xf8] sm:$0xff]
        %v309 = vld [vmem:[%s276 + $0x100] sm:$0x3]
        %v310 = vld [vmem:[%s276 + $0x108] sm:$0xff]
        %v311 = vld [vmem:[%s276 + $0x110] sm:$0xff]
        %v312 = vld [vmem:[%s276 + $0x118] sm:$0x3]
        %v313 = vld [vmem:[%s276 + $0x120] sm:$0xff]
        %v314 = vld [vmem:[%s276 + $0x128] sm:$0xff]
        %v315 = vld [vmem:[%s276 + $0x130] sm:$0x3]
        %v316 = vld [vmem:[%s276 + $0x138] sm:$0xff]
        %v317 = vld [vmem:[%s276 + $0x140] sm:$0xff]
        %v318 = vld [vmem:[%s276 + $0x148] sm:$0x3]
        %v319 = vld [vmem:[%s276 + $0x150] sm:$0xff]
        %v320 = vld [vmem:[%s276 + $0x158] sm:$0xff]
        %v321 = vld [vmem:[%s276 + $0x160] sm:$0x3]
        %v322 = vld [vmem:[%s276 + $0x168] sm:$0xff]
        %v323 = vld [vmem:[%s276 + $0x170] sm:$0xff]
        %v324 = vld [vmem:[%s276 + $0x178] sm:$0x3]
        %v325 = vld [vmem:[%s276 + $0x180] sm:$0xff]
        %v326 = vld [vmem:[%s276 + $0x188] sm:$0xff]
        %v327 = vld [vmem:[%s276 + $0x190] sm:$0x3]
        %v328 = vld [vmem:[%s276 + $0x198] sm:$0xff]
        %v329 = vld [vmem:[%s276 + $0x1a0] sm:$0xff]
        %v330 = vld [vmem:[%s276 + $0x1a8] sm:$0x3]
        %vm331 = vcmask 130048
        %332 = vst.msk [vmem:[#allocation2] sm:$0xff] %vm331, %v277
        %333 = vst.msk [vmem:[#allocation2 + $0x8] sm:$0xff] %vm331, %v278
        %vm334 = vcmask 123904
        %335 = vst.msk [vmem:[#allocation2 + $0x10] sm:$0x3] %vm334, %v279
        %336 = vst.msk [vmem:[#allocation2 + $0x18] sm:$0xff] %vm331, %v280
        %337 = vst.msk [vmem:[#allocation2 + $0x20] sm:$0xff] %vm331, %v281
        %338 = vst.msk [vmem:[#allocation2 + $0x28] sm:$0x3] %vm334, %v282
        %339 = vst.msk [vmem:[#allocation2 + $0x30] sm:$0xff] %vm331, %v283
        %340 = vst.msk [vmem:[#allocation2 + $0x38] sm:$0xff] %vm331, %v284
        %341 = vst.msk [vmem:[#allocation2 + $0x40] sm:$0x3] %vm334, %v285
        %342 = vst.msk [vmem:[#allocation2 + $0x48] sm:$0xff] %vm331, %v286
        %343 = vst.msk [vmem:[#allocation2 + $0x50] sm:$0xff] %vm331, %v287
        %344 = vst.msk [vmem:[#allocation2 + $0x58] sm:$0x3] %vm334, %v288
        %345 = vst.msk [vmem:[#allocation2 + $0x60] sm:$0xff] %vm331, %v289
        %346 = vst.msk [vmem:[#allocation2 + $0x68] sm:$0xff] %vm331, %v290
        %347 = vst.msk [vmem:[#allocation2 + $0x70] sm:$0x3] %vm334, %v291
        %348 = vst.msk [vmem:[#allocation2 + $0x78] sm:$0xff] %vm331, %v292
        %349 = vst.msk [vmem:[#allocation2 + $0x80] sm:$0xff] %vm331, %v293
        %350 = vst.msk [vmem:[#allocation2 + $0x88] sm:$0x3] %vm334, %v294
        %351 = vst.msk [vmem:[#allocation2 + $0x90] sm:$0xff] %vm331, %v295
        %352 = vst.msk [vmem:[#allocation2 + $0x98] sm:$0xff] %vm331, %v296
        %353 = vst.msk [vmem:[#allocation2 + $0xa0] sm:$0x3] %vm334, %v297
        %354 = vst.msk [vmem:[#allocation2 + $0xa8] sm:$0xff] %vm331, %v298
        %355 = vst.msk [vmem:[#allocation2 + $0xb0] sm:$0xff] %vm331, %v299
        %356 = vst.msk [vmem:[#allocation2 + $0xb8] sm:$0x3] %vm334, %v300
        %357 = vst.msk [vmem:[#allocation2 + $0xc0] sm:$0xff] %vm331, %v301
        %358 = vst.msk [vmem:[#allocation2 + $0xc8] sm:$0xff] %vm331, %v302
        %359 = vst.msk [vmem:[#allocation2 + $0xd0] sm:$0x3] %vm334, %v303
        %360 = vst.msk [vmem:[#allocation2 + $0xd8] sm:$0xff] %vm331, %v304
        %361 = vst.msk [vmem:[#allocation2 + $0xe0] sm:$0xff] %vm331, %v305
        %362 = vst.msk [vmem:[#allocation2 + $0xe8] sm:$0x3] %vm334, %v306
        %363 = vst.msk [vmem:[#allocation2 + $0xf0] sm:$0xff] %vm331, %v307
        %364 = vst.msk [vmem:[#allocation2 + $0xf8] sm:$0xff] %vm331, %v308
        %365 = vst.msk [vmem:[#allocation2 + $0x100] sm:$0x3] %vm334, %v309
        %366 = vst.msk [vmem:[#allocation2 + $0x108] sm:$0xff] %vm331, %v310
        %367 = vst.msk [vmem:[#allocation2 + $0x110] sm:$0xff] %vm331, %v311
        %368 = vst.msk [vmem:[#allocation2 + $0x118] sm:$0x3] %vm334, %v312
        %369 = vst.msk [vmem:[#allocation2 + $0x120] sm:$0xff] %vm331, %v313
        %370 = vst.msk [vmem:[#allocation2 + $0x128] sm:$0xff] %vm331, %v314
        %371 = vst.msk [vmem:[#allocation2 + $0x130] sm:$0x3] %vm334, %v315
        %372 = vst.msk [vmem:[#allocation2 + $0x138] sm:$0xff] %vm331, %v316
        %373 = vst.msk [vmem:[#allocation2 + $0x140] sm:$0xff] %vm331, %v317
        %374 = vst.msk [vmem:[#allocation2 + $0x148] sm:$0x3] %vm334, %v318
        %375 = vst.msk [vmem:[#allocation2 + $0x150] sm:$0xff] %vm331, %v319
        %376 = vst.msk [vmem:[#allocation2 + $0x158] sm:$0xff] %vm331, %v320
        %377 = vst.msk [vmem:[#allocation2 + $0x160] sm:$0x3] %vm334, %v321
        %378 = vst.msk [vmem:[#allocation2 + $0x168] sm:$0xff] %vm331, %v322
        %379 = vst.msk [vmem:[#allocation2 + $0x170] sm:$0xff] %vm331, %v323
        %380 = vst.msk [vmem:[#allocation2 + $0x178] sm:$0x3] %vm334, %v324
        %381 = vst.msk [vmem:[#allocation2 + $0x180] sm:$0xff] %vm331, %v325
        %382 = vst.msk [vmem:[#allocation2 + $0x188] sm:$0xff] %vm331, %v326
        %383 = vst.msk [vmem:[#allocation2 + $0x190] sm:$0x3] %vm334, %v327
        %384 = vst.msk [vmem:[#allocation2 + $0x198] sm:$0xff] %vm331, %v328
        %385 = vst.msk [vmem:[#allocation2 + $0x1a0] sm:$0xff] %vm331, %v329
        %386 = vst.msk [vmem:[#allocation2 + $0x1a8] sm:$0x3] %vm334, %v330
        %v387 = vld [vmem:[#allocation2] sm:$0xff]
        %v388 = vld [vmem:[#allocation2 + $0x8] sm:$0xff]
        %v389 = vld [vmem:[#allocation2 + $0x18] sm:$0xff]
        %v390 = vld [vmem:[#allocation2 + $0x20] sm:$0xff]
        %v391 = vld [vmem:[#allocation2 + $0x30] sm:$0xff]
        %v392 = vld [vmem:[#allocation2 + $0x38] sm:$0xff]
        %v393 = vld [vmem:[#allocation2 + $0x48] sm:$0xff]
        %v394 = vld [vmem:[#allocation2 + $0x50] sm:$0xff]
        %v395 = vld [vmem:[#allocation2 + $0x60] sm:$0xff]
        %v396 = vld [vmem:[#allocation2 + $0x68] sm:$0xff]
        %v397 = vld [vmem:[#allocation2 + $0x78] sm:$0xff]
        %v398 = vld [vmem:[#allocation2 + $0x80] sm:$0xff]
        %v399 = vld [vmem:[#allocation2 + $0x90] sm:$0xff]
        %v400 = vld [vmem:[#allocation2 + $0x98] sm:$0xff]
        %v401 = vld [vmem:[#allocation2 + $0xa8] sm:$0xff]
        %v402 = vld [vmem:[#allocation2 + $0xb0] sm:$0xff]
        %v403 = vld [vmem:[#allocation2 + $0xc0] sm:$0xff]
        %v404 = vld [vmem:[#allocation2 + $0xc8] sm:$0xff]
        %v405 = vld [vmem:[#allocation2 + $0xd8] sm:$0xff]
        %v406 = vld [vmem:[#allocation2 + $0xe0] sm:$0xff]
        %v407 = vld [vmem:[#allocation2 + $0xf0] sm:$0xff]
        %v408 = vld [vmem:[#allocation2 + $0xf8] sm:$0xff]
        %v409 = vld [vmem:[#allocation2 + $0x108] sm:$0xff]
        %v410 = vld [vmem:[#allocation2 + $0x110] sm:$0xff]
        %v411 = vld [vmem:[#allocation2 + $0x120] sm:$0xff]
        %v412 = vld [vmem:[#allocation2 + $0x128] sm:$0xff]
        %v413 = vld [vmem:[#allocation2 + $0x138] sm:$0xff]
        %v414 = vld [vmem:[#allocation2 + $0x140] sm:$0xff]
        %v415 = vld [vmem:[#allocation2 + $0x150] sm:$0xff]
        %v416 = vld [vmem:[#allocation2 + $0x158] sm:$0xff]
        %v417 = vld [vmem:[#allocation2 + $0x168] sm:$0xff]
        %v418 = vld [vmem:[#allocation2 + $0x170] sm:$0xff]
        %v419 = vld [vmem:[#allocation2 + $0x1] sm:$0xff]
        %v420 = vld [vmem:[#allocation2 + $0x9] sm:$0xff]
        %v421 = vld [vmem:[#allocation2 + $0x19] sm:$0xff]
        %v422 = vld [vmem:[#allocation2 + $0x21] sm:$0xff]
        %v423 = vld [vmem:[#allocation2 + $0x31] sm:$0xff]
        %v424 = vld [vmem:[#allocation2 + $0x39] sm:$0xff]
        %v425 = vld [vmem:[#allocation2 + $0x49] sm:$0xff]
        %v426 = vld [vmem:[#allocation2 + $0x51] sm:$0xff]
        %v427 = vld [vmem:[#allocation2 + $0x61] sm:$0xff]
        %v428 = vld [vmem:[#allocation2 + $0x69] sm:$0xff]
        %v429 = vld [vmem:[#allocation2 + $0x79] sm:$0xff]
        %v430 = vld [vmem:[#allocation2 + $0x81] sm:$0xff]
        %v431 = vld [vmem:[#allocation2 + $0x91] sm:$0xff]
        %v432 = vld [vmem:[#allocation2 + $0x99] sm:$0xff]
        %v433 = vld [vmem:[#allocation2 + $0xa9] sm:$0xff]
        %v434 = vld [vmem:[#allocation2 + $0xb1] sm:$0xff]
        %v435 = vld [vmem:[#allocation2 + $0xc1] sm:$0xff]
        %v436 = vld [vmem:[#allocation2 + $0xc9] sm:$0xff]
        %v437 = vld [vmem:[#allocation2 + $0xd9] sm:$0xff]
        %v438 = vld [vmem:[#allocation2 + $0xe1] sm:$0xff]
        %v439 = vld [vmem:[#allocation2 + $0xf1] sm:$0xff]
        %v440 = vld [vmem:[#allocation2 + $0xf9] sm:$0xff]
        %v441 = vld [vmem:[#allocation2 + $0x109] sm:$0xff]
        %v442 = vld [vmem:[#allocation2 + $0x111] sm:$0xff]
        %v443 = vld [vmem:[#allocation2 + $0x121] sm:$0xff]
        %v444 = vld [vmem:[#allocation2 + $0x129] sm:$0xff]
        %v445 = vld [vmem:[#allocation2 + $0x139] sm:$0xff]
        %v446 = vld [vmem:[#allocation2 + $0x141] sm:$0xff]
        %v447 = vld [vmem:[#allocation2 + $0x151] sm:$0xff]
        %v448 = vld [vmem:[#allocation2 + $0x159] sm:$0xff]
        %v449 = vld [vmem:[#allocation2 + $0x169] sm:$0xff]
        %v450 = vld [vmem:[#allocation2 + $0x171] sm:$0xff]
        %v451 = vld [vmem:[#allocation2 + $0x2] sm:$0xff]
        %v452 = vld [vmem:[#allocation2 + $0xa] sm:$0xff]
        %v453 = vld [vmem:[#allocation2 + $0x1a] sm:$0xff]
        %v454 = vld [vmem:[#allocation2 + $0x22] sm:$0xff]
        %v455 = vld [vmem:[#allocation2 + $0x32] sm:$0xff]
        %v456 = vld [vmem:[#allocation2 + $0x3a] sm:$0xff]
        %v457 = vld [vmem:[#allocation2 + $0x4a] sm:$0xff]
        %v458 = vld [vmem:[#allocation2 + $0x52] sm:$0xff]
        %v459 = vld [vmem:[#allocation2 + $0x62] sm:$0xff]
        %v460 = vld [vmem:[#allocation2 + $0x6a] sm:$0xff]
        %v461 = vld [vmem:[#allocation2 + $0x7a] sm:$0xff]
        %v462 = vld [vmem:[#allocation2 + $0x82] sm:$0xff]
        %v463 = vld [vmem:[#allocation2 + $0x92] sm:$0xff]
        %v464 = vld [vmem:[#allocation2 + $0x9a] sm:$0xff]
        %v465 = vld [vmem:[#allocation2 + $0xaa] sm:$0xff]
        %v466 = vld [vmem:[#allocation2 + $0xb2] sm:$0xff]
        %v467 = vld [vmem:[#allocation2 + $0xc2] sm:$0xff]
        %v468 = vld [vmem:[#allocation2 + $0xca] sm:$0xff]
        %v469 = vld [vmem:[#allocation2 + $0xda] sm:$0xff]
        %v470 = vld [vmem:[#allocation2 + $0xe2] sm:$0xff]
        %v471 = vld [vmem:[#allocation2 + $0xf2] sm:$0xff]
        %v472 = vld [vmem:[#allocation2 + $0xfa] sm:$0xff]
        %v473 = vld [vmem:[#allocation2 + $0x10a] sm:$0xff]
        %v474 = vld [vmem:[#allocation2 + $0x112] sm:$0xff]
        %v475 = vld [vmem:[#allocation2 + $0x122] sm:$0xff]
        %v476 = vld [vmem:[#allocation2 + $0x12a] sm:$0xff]
        %v477 = vld [vmem:[#allocation2 + $0x13a] sm:$0xff]
        %v478 = vld [vmem:[#allocation2 + $0x142] sm:$0xff]
        %v479 = vld [vmem:[#allocation2 + $0x152] sm:$0xff]
        %v480 = vld [vmem:[#allocation2 + $0x15a] sm:$0xff]
        %v481 = vld [vmem:[#allocation2 + $0x16a] sm:$0xff]
        %v482 = vld [vmem:[#allocation2 + $0x172] sm:$0xff]
        %s483 = scalar_lea.vmem [#allocation2], 24
        %v484 = vld [vmem:[%s483] sm:$0xff]
        %v485 = vld [vmem:[%s483 + $0x8] sm:$0xff]
        %v486 = vld [vmem:[%s483 + $0x18] sm:$0xff]
        %v487 = vld [vmem:[%s483 + $0x20] sm:$0xff]
        %v488 = vld [vmem:[%s483 + $0x30] sm:$0xff]
        %v489 = vld [vmem:[%s483 + $0x38] sm:$0xff]
        %v490 = vld [vmem:[%s483 + $0x48] sm:$0xff]
        %v491 = vld [vmem:[%s483 + $0x50] sm:$0xff]
        %v492 = vld [vmem:[%s483 + $0x60] sm:$0xff]
        %v493 = vld [vmem:[%s483 + $0x68] sm:$0xff]
        %v494 = vld [vmem:[%s483 + $0x78] sm:$0xff]
        %v495 = vld [vmem:[%s483 + $0x80] sm:$0xff]
        %v496 = vld [vmem:[%s483 + $0x90] sm:$0xff]
        %v497 = vld [vmem:[%s483 + $0x98] sm:$0xff]
        %v498 = vld [vmem:[%s483 + $0xa8] sm:$0xff]
        %v499 = vld [vmem:[%s483 + $0xb0] sm:$0xff]
        %v500 = vld [vmem:[%s483 + $0xc0] sm:$0xff]
        %v501 = vld [vmem:[%s483 + $0xc8] sm:$0xff]
        %v502 = vld [vmem:[%s483 + $0xd8] sm:$0xff]
        %v503 = vld [vmem:[%s483 + $0xe0] sm:$0xff]
        %v504 = vld [vmem:[%s483 + $0xf0] sm:$0xff]
        %v505 = vld [vmem:[%s483 + $0xf8] sm:$0xff]
        %v506 = vld [vmem:[%s483 + $0x108] sm:$0xff]
        %v507 = vld [vmem:[%s483 + $0x110] sm:$0xff]
        %v508 = vld [vmem:[%s483 + $0x120] sm:$0xff]
        %v509 = vld [vmem:[%s483 + $0x128] sm:$0xff]
        %v510 = vld [vmem:[%s483 + $0x138] sm:$0xff]
        %v511 = vld [vmem:[%s483 + $0x140] sm:$0xff]
        %v512 = vld [vmem:[%s483 + $0x150] sm:$0xff]
        %v513 = vld [vmem:[%s483 + $0x158] sm:$0xff]
        %v514 = vld [vmem:[%s483 + $0x168] sm:$0xff]
        %v515 = vld [vmem:[%s483 + $0x170] sm:$0xff]
        %v516 = vld [vmem:[%s483 + $0x1] sm:$0xff]
        %v517 = vld [vmem:[%s483 + $0x9] sm:$0xff]
        %v518 = vld [vmem:[%s483 + $0x19] sm:$0xff]
        %v519 = vld [vmem:[%s483 + $0x21] sm:$0xff]
        %v520 = vld [vmem:[%s483 + $0x31] sm:$0xff]
        %v521 = vld [vmem:[%s483 + $0x39] sm:$0xff]
        %v522 = vld [vmem:[%s483 + $0x49] sm:$0xff]
        %v523 = vld [vmem:[%s483 + $0x51] sm:$0xff]
        %v524 = vld [vmem:[%s483 + $0x61] sm:$0xff]
        %v525 = vld [vmem:[%s483 + $0x69] sm:$0xff]
        %v526 = vld [vmem:[%s483 + $0x79] sm:$0xff]
        %v527 = vld [vmem:[%s483 + $0x81] sm:$0xff]
        %v528 = vld [vmem:[%s483 + $0x91] sm:$0xff]
        %v529 = vld [vmem:[%s483 + $0x99] sm:$0xff]
        %v530 = vld [vmem:[%s483 + $0xa9] sm:$0xff]
        %v531 = vld [vmem:[%s483 + $0xb1] sm:$0xff]
        %v532 = vld [vmem:[%s483 + $0xc1] sm:$0xff]
        %v533 = vld [vmem:[%s483 + $0xc9] sm:$0xff]
        %v534 = vld [vmem:[%s483 + $0xd9] sm:$0xff]
        %v535 = vld [vmem:[%s483 + $0xe1] sm:$0xff]
        %v536 = vld [vmem:[%s483 + $0xf1] sm:$0xff]
        %v537 = vld [vmem:[%s483 + $0xf9] sm:$0xff]
        %v538 = vld [vmem:[%s483 + $0x109] sm:$0xff]
        %v539 = vld [vmem:[%s483 + $0x111] sm:$0xff]
        %v540 = vld [vmem:[%s483 + $0x121] sm:$0xff]
        %v541 = vld [vmem:[%s483 + $0x129] sm:$0xff]
        %v542 = vld [vmem:[%s483 + $0x139] sm:$0xff]
        %v543 = vld [vmem:[%s483 + $0x141] sm:$0xff]
        %v544 = vld [vmem:[%s483 + $0x151] sm:$0xff]
        %v545 = vld [vmem:[%s483 + $0x159] sm:$0xff]
        %v546 = vld [vmem:[%s483 + $0x169] sm:$0xff]
        %v547 = vld [vmem:[%s483 + $0x171] sm:$0xff]
        %v548 = vld [vmem:[%s483 + $0x2] sm:$0xff]
        %v549 = vld [vmem:[%s483 + $0xa] sm:$0xff]
        %v550 = vld [vmem:[%s483 + $0x1a] sm:$0xff]
        %v551 = vld [vmem:[%s483 + $0x22] sm:$0xff]
        %v552 = vld [vmem:[%s483 + $0x32] sm:$0xff]
        %v553 = vld [vmem:[%s483 + $0x3a] sm:$0xff]
        %v554 = vld [vmem:[%s483 + $0x4a] sm:$0xff]
        %v555 = vld [vmem:[%s483 + $0x52] sm:$0xff]
        %v556 = vld [vmem:[%s483 + $0x62] sm:$0xff]
        %v557 = vld [vmem:[%s483 + $0x6a] sm:$0xff]
        %v558 = vld [vmem:[%s483 + $0x7a] sm:$0xff]
        %v559 = vld [vmem:[%s483 + $0x82] sm:$0xff]
        %v560 = vld [vmem:[%s483 + $0x92] sm:$0xff]
        %v561 = vld [vmem:[%s483 + $0x9a] sm:$0xff]
        %v562 = vld [vmem:[%s483 + $0xaa] sm:$0xff]
        %v563 = vld [vmem:[%s483 + $0xb2] sm:$0xff]
        %v564 = vld [vmem:[%s483 + $0xc2] sm:$0xff]
        %v565 = vld [vmem:[%s483 + $0xca] sm:$0xff]
        %v566 = vld [vmem:[%s483 + $0xda] sm:$0xff]
        %v567 = vld [vmem:[%s483 + $0xe2] sm:$0xff]
        %v568 = vld [vmem:[%s483 + $0xf2] sm:$0xff]
        %v569 = vld [vmem:[%s483 + $0xfa] sm:$0xff]
        %v570 = vld [vmem:[%s483 + $0x10a] sm:$0xff]
        %v571 = vld [vmem:[%s483 + $0x112] sm:$0xff]
        %v572 = vld [vmem:[%s483 + $0x122] sm:$0xff]
        %v573 = vld [vmem:[%s483 + $0x12a] sm:$0xff]
        %v574 = vld [vmem:[%s483 + $0x13a] sm:$0xff]
        %v575 = vld [vmem:[%s483 + $0x142] sm:$0xff]
        %v576 = vld [vmem:[%s483 + $0x152] sm:$0xff]
        %v577 = vld [vmem:[%s483 + $0x15a] sm:$0xff]
        %v578 = vld [vmem:[%s483 + $0x16a] sm:$0xff]
        %v579 = vld [vmem:[%s483 + $0x172] sm:$0xff]
        %s580 = scalar_lea.vmem [#allocation2], 48
        %v581 = vld [vmem:[%s580] sm:$0xff]
        %v582 = vld [vmem:[%s580 + $0x8] sm:$0xff]
        %v583 = vld [vmem:[%s580 + $0x18] sm:$0xff]
        %v584 = vld [vmem:[%s580 + $0x20] sm:$0xff]
        %v585 = vld [vmem:[%s580 + $0x30] sm:$0xff]
        %v586 = vld [vmem:[%s580 + $0x38] sm:$0xff]
        %v587 = vld [vmem:[%s580 + $0x48] sm:$0xff]
        %v588 = vld [vmem:[%s580 + $0x50] sm:$0xff]
        %v589 = vld [vmem:[%s580 + $0x60] sm:$0xff]
        %v590 = vld [vmem:[%s580 + $0x68] sm:$0xff]
        %v591 = vld [vmem:[%s580 + $0x78] sm:$0xff]
        %v592 = vld [vmem:[%s580 + $0x80] sm:$0xff]
        %v593 = vld [vmem:[%s580 + $0x90] sm:$0xff]
        %v594 = vld [vmem:[%s580 + $0x98] sm:$0xff]
        %v595 = vld [vmem:[%s580 + $0xa8] sm:$0xff]
        %v596 = vld [vmem:[%s580 + $0xb0] sm:$0xff]
        %v597 = vld [vmem:[%s580 + $0xc0] sm:$0xff]
        %v598 = vld [vmem:[%s580 + $0xc8] sm:$0xff]
        %v599 = vld [vmem:[%s580 + $0xd8] sm:$0xff]
        %v600 = vld [vmem:[%s580 + $0xe0] sm:$0xff]
        %v601 = vld [vmem:[%s580 + $0xf0] sm:$0xff]
        %v602 = vld [vmem:[%s580 + $0xf8] sm:$0xff]
        %v603 = vld [vmem:[%s580 + $0x108] sm:$0xff]
        %v604 = vld [vmem:[%s580 + $0x110] sm:$0xff]
        %v605 = vld [vmem:[%s580 + $0x120] sm:$0xff]
        %v606 = vld [vmem:[%s580 + $0x128] sm:$0xff]
        %v607 = vld [vmem:[%s580 + $0x138] sm:$0xff]
        %v608 = vld [vmem:[%s580 + $0x140] sm:$0xff]
        %v609 = vld [vmem:[%s580 + $0x150] sm:$0xff]
        %v610 = vld [vmem:[%s580 + $0x158] sm:$0xff]
        %v611 = vld [vmem:[%s580 + $0x168] sm:$0xff]
        %v612 = vld [vmem:[%s580 + $0x170] sm:$0xff]
        %v613 = vld [vmem:[%s580 + $0x1] sm:$0xff]
        %v614 = vld [vmem:[%s580 + $0x9] sm:$0xff]
        %v615 = vld [vmem:[%s580 + $0x19] sm:$0xff]
        %v616 = vld [vmem:[%s580 + $0x21] sm:$0xff]
        %v617 = vld [vmem:[%s580 + $0x31] sm:$0xff]
        %v618 = vld [vmem:[%s580 + $0x39] sm:$0xff]
        %v619 = vld [vmem:[%s580 + $0x49] sm:$0xff]
        %v620 = vld [vmem:[%s580 + $0x51] sm:$0xff]
        %v621 = vld [vmem:[%s580 + $0x61] sm:$0xff]
        %v622 = vld [vmem:[%s580 + $0x69] sm:$0xff]
        %v623 = vld [vmem:[%s580 + $0x79] sm:$0xff]
        %v624 = vld [vmem:[%s580 + $0x81] sm:$0xff]
        %v625 = vld [vmem:[%s580 + $0x91] sm:$0xff]
        %v626 = vld [vmem:[%s580 + $0x99] sm:$0xff]
        %v627 = vld [vmem:[%s580 + $0xa9] sm:$0xff]
        %v628 = vld [vmem:[%s580 + $0xb1] sm:$0xff]
        %v629 = vld [vmem:[%s580 + $0xc1] sm:$0xff]
        %v630 = vld [vmem:[%s580 + $0xc9] sm:$0xff]
        %v631 = vld [vmem:[%s580 + $0xd9] sm:$0xff]
        %v632 = vld [vmem:[%s580 + $0xe1] sm:$0xff]
        %v633 = vld [vmem:[%s580 + $0xf1] sm:$0xff]
        %v634 = vld [vmem:[%s580 + $0xf9] sm:$0xff]
        %v635 = vld [vmem:[%s580 + $0x109] sm:$0xff]
        %v636 = vld [vmem:[%s580 + $0x111] sm:$0xff]
        %v637 = vld [vmem:[%s580 + $0x121] sm:$0xff]
        %v638 = vld [vmem:[%s580 + $0x129] sm:$0xff]
        %v639 = vld [vmem:[%s580 + $0x139] sm:$0xff]
        %v640 = vld [vmem:[%s580 + $0x141] sm:$0xff]
        %v641 = vld [vmem:[%s580 + $0x151] sm:$0xff]
        %v642 = vld [vmem:[%s580 + $0x159] sm:$0xff]
        %v643 = vld [vmem:[%s580 + $0x169] sm:$0xff]
        %v644 = vld [vmem:[%s580 + $0x171] sm:$0xff]
        %v645 = vld [vmem:[%s580 + $0x2] sm:$0xff]
        %v646 = vld [vmem:[%s580 + $0xa] sm:$0xff]
        %v647 = vld [vmem:[%s580 + $0x1a] sm:$0xff]
        %v648 = vld [vmem:[%s580 + $0x22] sm:$0xff]
        %v649 = vld [vmem:[%s580 + $0x32] sm:$0xff]
        %v650 = vld [vmem:[%s580 + $0x3a] sm:$0xff]
        %v651 = vld [vmem:[%s580 + $0x4a] sm:$0xff]
        %v652 = vld [vmem:[%s580 + $0x52] sm:$0xff]
        %v653 = vld [vmem:[%s580 + $0x62] sm:$0xff]
        %v654 = vld [vmem:[%s580 + $0x6a] sm:$0xff]
        %v655 = vld [vmem:[%s580 + $0x7a] sm:$0xff]
        %v656 = vld [vmem:[%s580 + $0x82] sm:$0xff]
        %v657 = vld [vmem:[%s580 + $0x92] sm:$0xff]
        %v658 = vld [vmem:[%s580 + $0x9a] sm:$0xff]
        %v659 = vld [vmem:[%s580 + $0xaa] sm:$0xff]
        %v660 = vld [vmem:[%s580 + $0xb2] sm:$0xff]
        %v661 = vld [vmem:[%s580 + $0xc2] sm:$0xff]
        %v662 = vld [vmem:[%s580 + $0xca] sm:$0xff]
        %v663 = vld [vmem:[%s580 + $0xda] sm:$0xff]
        %v664 = vld [vmem:[%s580 + $0xe2] sm:$0xff]
        %v665 = vld [vmem:[%s580 + $0xf2] sm:$0xff]
        %v666 = vld [vmem:[%s580 + $0xfa] sm:$0xff]
        %v667 = vld [vmem:[%s580 + $0x10a] sm:$0xff]
        %v668 = vld [vmem:[%s580 + $0x112] sm:$0xff]
        %v669 = vld [vmem:[%s580 + $0x122] sm:$0xff]
        %v670 = vld [vmem:[%s580 + $0x12a] sm:$0xff]
        %v671 = vld [vmem:[%s580 + $0x13a] sm:$0xff]
        %v672 = vld [vmem:[%s580 + $0x142] sm:$0xff]
        %v673 = vld [vmem:[%s580 + $0x152] sm:$0xff]
        %v674 = vld [vmem:[%s580 + $0x15a] sm:$0xff]
        %v675 = vld [vmem:[%s580 + $0x16a] sm:$0xff]
        %v676 = vld [vmem:[%s580 + $0x172] sm:$0xff]
        %709 = vrot.lane.b32.xlu0 %v419, 16
        %v710 = vpop.permute.xlu0 %709
        %711 = vrot.lane.b32.xlu0 %v420, 16
        %v712 = vpop.permute.xlu0 %711
        %713 = vrot.lane.b32.xlu0 %v421, 16
        %v714 = vpop.permute.xlu0 %713
        %715 = vrot.lane.b32.xlu0 %v422, 16
        %v716 = vpop.permute.xlu0 %715
        %717 = vrot.lane.b32.xlu0 %v423, 16
        %v718 = vpop.permute.xlu0 %717
        %719 = vrot.lane.b32.xlu0 %v424, 16
        %v720 = vpop.permute.xlu0 %719
        %721 = vrot.lane.b32.xlu0 %v425, 16
        %v722 = vpop.permute.xlu0 %721
        %723 = vrot.lane.b32.xlu0 %v426, 16
        %v724 = vpop.permute.xlu0 %723
        %725 = vrot.lane.b32.xlu0 %v427, 16
        %v726 = vpop.permute.xlu0 %725
        %727 = vrot.lane.b32.xlu0 %v428, 16
        %v728 = vpop.permute.xlu0 %727
        %729 = vrot.lane.b32.xlu0 %v429, 16
        %v730 = vpop.permute.xlu0 %729
        %731 = vrot.lane.b32.xlu0 %v430, 16
        %v732 = vpop.permute.xlu0 %731
        %733 = vrot.lane.b32.xlu0 %v431, 16
        %v734 = vpop.permute.xlu0 %733
        %735 = vrot.lane.b32.xlu0 %v432, 16
        %v736 = vpop.permute.xlu0 %735
        %737 = vrot.lane.b32.xlu0 %v433, 16
        %v738 = vpop.permute.xlu0 %737
        %739 = vrot.lane.b32.xlu0 %v434, 16
        %v740 = vpop.permute.xlu0 %739
        %741 = vrot.lane.b32.xlu0 %v435, 16
        %v742 = vpop.permute.xlu0 %741
        %743 = vrot.lane.b32.xlu0 %v436, 16
        %v744 = vpop.permute.xlu0 %743
        %745 = vrot.lane.b32.xlu0 %v437, 16
        %v746 = vpop.permute.xlu0 %745
        %747 = vrot.lane.b32.xlu0 %v438, 16
        %v748 = vpop.permute.xlu0 %747
        %749 = vrot.lane.b32.xlu0 %v439, 16
        %v750 = vpop.permute.xlu0 %749
        %751 = vrot.lane.b32.xlu0 %v440, 16
        %v752 = vpop.permute.xlu0 %751
        %753 = vrot.lane.b32.xlu0 %v441, 16
        %v754 = vpop.permute.xlu0 %753
        %755 = vrot.lane.b32.xlu0 %v442, 16
        %v756 = vpop.permute.xlu0 %755
        %757 = vrot.lane.b32.xlu0 %v443, 16
        %v758 = vpop.permute.xlu0 %757
        %759 = vrot.lane.b32.xlu0 %v444, 16
        %v760 = vpop.permute.xlu0 %759
        %761 = vrot.lane.b32.xlu0 %v445, 16
        %v762 = vpop.permute.xlu0 %761
        %763 = vrot.lane.b32.xlu0 %v446, 16
        %v764 = vpop.permute.xlu0 %763
        %765 = vrot.lane.b32.xlu0 %v447, 16
        %v766 = vpop.permute.xlu0 %765
        %767 = vrot.lane.b32.xlu0 %v448, 16
        %v768 = vpop.permute.xlu0 %767
        %769 = vrot.lane.b32.xlu0 %v449, 16
        %v770 = vpop.permute.xlu0 %769
        %771 = vrot.lane.b32.xlu0 %v450, 16
        %v772 = vpop.permute.xlu0 %771
        %837 = vrot.lane.b32.xlu0 %v451, 32
        %v838 = vpop.permute.xlu0 %837
        %839 = vrot.lane.b32.xlu0 %v452, 32
        %v840 = vpop.permute.xlu0 %839
        %841 = vrot.lane.b32.xlu0 %v453, 32
        %v842 = vpop.permute.xlu0 %841
        %843 = vrot.lane.b32.xlu0 %v454, 32
        %v844 = vpop.permute.xlu0 %843
        %845 = vrot.lane.b32.xlu0 %v455, 32
        %v846 = vpop.permute.xlu0 %845
        %847 = vrot.lane.b32.xlu0 %v456, 32
        %v848 = vpop.permute.xlu0 %847
        %849 = vrot.lane.b32.xlu0 %v457, 32
        %v850 = vpop.permute.xlu0 %849
        %851 = vrot.lane.b32.xlu0 %v458, 32
        %v852 = vpop.permute.xlu0 %851
        %853 = vrot.lane.b32.xlu0 %v459, 32
        %v854 = vpop.permute.xlu0 %853
        %855 = vrot.lane.b32.xlu0 %v460, 32
        %v856 = vpop.permute.xlu0 %855
        %857 = vrot.lane.b32.xlu0 %v461, 32
        %v858 = vpop.permute.xlu0 %857
        %859 = vrot.lane.b32.xlu0 %v462, 32
        %v860 = vpop.permute.xlu0 %859
        %861 = vrot.lane.b32.xlu0 %v463, 32
        %v862 = vpop.permute.xlu0 %861
        %863 = vrot.lane.b32.xlu0 %v464, 32
        %v864 = vpop.permute.xlu0 %863
        %865 = vrot.lane.b32.xlu0 %v465, 32
        %v866 = vpop.permute.xlu0 %865
        %867 = vrot.lane.b32.xlu0 %v466, 32
        %v868 = vpop.permute.xlu0 %867
        %869 = vrot.lane.b32.xlu0 %v467, 32
        %v870 = vpop.permute.xlu0 %869
        %871 = vrot.lane.b32.xlu0 %v468, 32
        %v872 = vpop.permute.xlu0 %871
        %873 = vrot.lane.b32.xlu0 %v469, 32
        %v874 = vpop.permute.xlu0 %873
        %875 = vrot.lane.b32.xlu0 %v470, 32
        %v876 = vpop.permute.xlu0 %875
        %877 = vrot.lane.b32.xlu0 %v471, 32
        %v878 = vpop.permute.xlu0 %877
        %879 = vrot.lane.b32.xlu0 %v472, 32
        %v880 = vpop.permute.xlu0 %879
        %881 = vrot.lane.b32.xlu0 %v473, 32
        %v882 = vpop.permute.xlu0 %881
        %883 = vrot.lane.b32.xlu0 %v474, 32
        %v884 = vpop.permute.xlu0 %883
        %885 = vrot.lane.b32.xlu0 %v475, 32
        %v886 = vpop.permute.xlu0 %885
        %887 = vrot.lane.b32.xlu0 %v476, 32
        %v888 = vpop.permute.xlu0 %887
        %889 = vrot.lane.b32.xlu0 %v477, 32
        %v890 = vpop.permute.xlu0 %889
        %891 = vrot.lane.b32.xlu0 %v478, 32
        %v892 = vpop.permute.xlu0 %891
        %893 = vrot.lane.b32.xlu0 %v479, 32
        %v894 = vpop.permute.xlu0 %893
        %895 = vrot.lane.b32.xlu0 %v480, 32
        %v896 = vpop.permute.xlu0 %895
        %897 = vrot.lane.b32.xlu0 %v481, 32
        %v898 = vpop.permute.xlu0 %897
        %899 = vrot.lane.b32.xlu0 %v482, 32
        %v900 = vpop.permute.xlu0 %899
        %965 = vrot.lane.b32.xlu0 %v484, 48
        %v966 = vpop.permute.xlu0 %965
        %967 = vrot.lane.b32.xlu0 %v485, 48
        %v968 = vpop.permute.xlu0 %967
        %969 = vrot.lane.b32.xlu0 %v486, 48
        %v970 = vpop.permute.xlu0 %969
        %971 = vrot.lane.b32.xlu0 %v487, 48
        %v972 = vpop.permute.xlu0 %971
        %973 = vrot.lane.b32.xlu0 %v488, 48
        %v974 = vpop.permute.xlu0 %973
        %975 = vrot.lane.b32.xlu0 %v489, 48
        %v976 = vpop.permute.xlu0 %975
        %977 = vrot.lane.b32.xlu0 %v490, 48
        %v978 = vpop.permute.xlu0 %977
        %979 = vrot.lane.b32.xlu0 %v491, 48
        %v980 = vpop.permute.xlu0 %979
        %981 = vrot.lane.b32.xlu0 %v492, 48
        %v982 = vpop.permute.xlu0 %981
        %983 = vrot.lane.b32.xlu0 %v493, 48
        %v984 = vpop.permute.xlu0 %983
        %985 = vrot.lane.b32.xlu0 %v494, 48
        %v986 = vpop.permute.xlu0 %985
        %987 = vrot.lane.b32.xlu0 %v495, 48
        %v988 = vpop.permute.xlu0 %987
        %989 = vrot.lane.b32.xlu0 %v496, 48
        %v990 = vpop.permute.xlu0 %989
        %991 = vrot.lane.b32.xlu0 %v497, 48
        %v992 = vpop.permute.xlu0 %991
        %993 = vrot.lane.b32.xlu0 %v498, 48
        %v994 = vpop.permute.xlu0 %993
        %995 = vrot.lane.b32.xlu0 %v499, 48
        %v996 = vpop.permute.xlu0 %995
        %997 = vrot.lane.b32.xlu0 %v500, 48
        %v998 = vpop.permute.xlu0 %997
        %999 = vrot.lane.b32.xlu0 %v501, 48
        %v1000 = vpop.permute.xlu0 %999
        %1001 = vrot.lane.b32.xlu0 %v502, 48
        %v1002 = vpop.permute.xlu0 %1001
        %1003 = vrot.lane.b32.xlu0 %v503, 48
        %v1004 = vpop.permute.xlu0 %1003
        %1005 = vrot.lane.b32.xlu0 %v504, 48
        %v1006 = vpop.permute.xlu0 %1005
        %1007 = vrot.lane.b32.xlu0 %v505, 48
        %v1008 = vpop.permute.xlu0 %1007
        %1009 = vrot.lane.b32.xlu0 %v506, 48
        %v1010 = vpop.permute.xlu0 %1009
        %1011 = vrot.lane.b32.xlu0 %v507, 48
        %v1012 = vpop.permute.xlu0 %1011
        %1013 = vrot.lane.b32.xlu0 %v508, 48
        %v1014 = vpop.permute.xlu0 %1013
        %1015 = vrot.lane.b32.xlu0 %v509, 48
        %v1016 = vpop.permute.xlu0 %1015
        %1017 = vrot.lane.b32.xlu0 %v510, 48
        %v1018 = vpop.permute.xlu0 %1017
        %1019 = vrot.lane.b32.xlu0 %v511, 48
        %v1020 = vpop.permute.xlu0 %1019
        %1021 = vrot.lane.b32.xlu0 %v512, 48
        %v1022 = vpop.permute.xlu0 %1021
        %1023 = vrot.lane.b32.xlu0 %v513, 48
        %v1024 = vpop.permute.xlu0 %1023
        %1025 = vrot.lane.b32.xlu0 %v514, 48
        %v1026 = vpop.permute.xlu0 %1025
        %1027 = vrot.lane.b32.xlu0 %v515, 48
        %v1028 = vpop.permute.xlu0 %1027
        %1093 = vrot.lane.b32.xlu0 %v516, 64
        %v1094 = vpop.permute.xlu0 %1093
        %1095 = vrot.lane.b32.xlu0 %v517, 64
        %v1096 = vpop.permute.xlu0 %1095
        %1097 = vrot.lane.b32.xlu0 %v518, 64
        %v1098 = vpop.permute.xlu0 %1097
        %1099 = vrot.lane.b32.xlu0 %v519, 64
        %v1100 = vpop.permute.xlu0 %1099
        %1101 = vrot.lane.b32.xlu0 %v520, 64
        %v1102 = vpop.permute.xlu0 %1101
        %1103 = vrot.lane.b32.xlu0 %v521, 64
        %v1104 = vpop.permute.xlu0 %1103
        %1105 = vrot.lane.b32.xlu0 %v522, 64
        %v1106 = vpop.permute.xlu0 %1105
        %1107 = vrot.lane.b32.xlu0 %v523, 64
        %v1108 = vpop.permute.xlu0 %1107
        %1109 = vrot.lane.b32.xlu0 %v524, 64
        %v1110 = vpop.permute.xlu0 %1109
        %1111 = vrot.lane.b32.xlu0 %v525, 64
        %v1112 = vpop.permute.xlu0 %1111
        %1113 = vrot.lane.b32.xlu0 %v526, 64
        %v1114 = vpop.permute.xlu0 %1113
        %1115 = vrot.lane.b32.xlu0 %v527, 64
        %v1116 = vpop.permute.xlu0 %1115
        %1117 = vrot.lane.b32.xlu0 %v528, 64
        %v1118 = vpop.permute.xlu0 %1117
        %1119 = vrot.lane.b32.xlu0 %v529, 64
        %v1120 = vpop.permute.xlu0 %1119
        %1121 = vrot.lane.b32.xlu0 %v530, 64
        %v1122 = vpop.permute.xlu0 %1121
        %1123 = vrot.lane.b32.xlu0 %v531, 64
        %v1124 = vpop.permute.xlu0 %1123
        %1125 = vrot.lane.b32.xlu0 %v532, 64
        %v1126 = vpop.permute.xlu0 %1125
        %1127 = vrot.lane.b32.xlu0 %v533, 64
        %v1128 = vpop.permute.xlu0 %1127
        %1129 = vrot.lane.b32.xlu0 %v534, 64
        %v1130 = vpop.permute.xlu0 %1129
        %1131 = vrot.lane.b32.xlu0 %v535, 64
        %v1132 = vpop.permute.xlu0 %1131
        %1133 = vrot.lane.b32.xlu0 %v536, 64
        %v1134 = vpop.permute.xlu0 %1133
        %1135 = vrot.lane.b32.xlu0 %v537, 64
        %v1136 = vpop.permute.xlu0 %1135
        %1137 = vrot.lane.b32.xlu0 %v538, 64
        %v1138 = vpop.permute.xlu0 %1137
        %1139 = vrot.lane.b32.xlu0 %v539, 64
        %v1140 = vpop.permute.xlu0 %1139
        %1141 = vrot.lane.b32.xlu0 %v540, 64
        %v1142 = vpop.permute.xlu0 %1141
        %1143 = vrot.lane.b32.xlu0 %v541, 64
        %v1144 = vpop.permute.xlu0 %1143
        %1145 = vrot.lane.b32.xlu0 %v542, 64
        %v1146 = vpop.permute.xlu0 %1145
        %1147 = vrot.lane.b32.xlu0 %v543, 64
        %v1148 = vpop.permute.xlu0 %1147
        %1149 = vrot.lane.b32.xlu0 %v544, 64
        %v1150 = vpop.permute.xlu0 %1149
        %1151 = vrot.lane.b32.xlu0 %v545, 64
        %v1152 = vpop.permute.xlu0 %1151
        %1153 = vrot.lane.b32.xlu0 %v546, 64
        %v1154 = vpop.permute.xlu0 %1153
        %1155 = vrot.lane.b32.xlu0 %v547, 64
        %v1156 = vpop.permute.xlu0 %1155
        %1221 = vrot.lane.b32.xlu0 %v548, 80
        %v1222 = vpop.permute.xlu0 %1221
        %1223 = vrot.lane.b32.xlu0 %v549, 80
        %v1224 = vpop.permute.xlu0 %1223
        %1225 = vrot.lane.b32.xlu0 %v550, 80
        %v1226 = vpop.permute.xlu0 %1225
        %1227 = vrot.lane.b32.xlu0 %v551, 80
        %v1228 = vpop.permute.xlu0 %1227
        %1229 = vrot.lane.b32.xlu0 %v552, 80
        %v1230 = vpop.permute.xlu0 %1229
        %1231 = vrot.lane.b32.xlu0 %v553, 80
        %v1232 = vpop.permute.xlu0 %1231
        %1233 = vrot.lane.b32.xlu0 %v554, 80
        %v1234 = vpop.permute.xlu0 %1233
        %1235 = vrot.lane.b32.xlu0 %v555, 80
        %v1236 = vpop.permute.xlu0 %1235
        %1237 = vrot.lane.b32.xlu0 %v556, 80
        %v1238 = vpop.permute.xlu0 %1237
        %1239 = vrot.lane.b32.xlu0 %v557, 80
        %v1240 = vpop.permute.xlu0 %1239
        %1241 = vrot.lane.b32.xlu0 %v558, 80
        %v1242 = vpop.permute.xlu0 %1241
        %1243 = vrot.lane.b32.xlu0 %v559, 80
        %v1244 = vpop.permute.xlu0 %1243
        %1245 = vrot.lane.b32.xlu0 %v560, 80
        %v1246 = vpop.permute.xlu0 %1245
        %1247 = vrot.lane.b32.xlu0 %v561, 80
        %v1248 = vpop.permute.xlu0 %1247
        %1249 = vrot.lane.b32.xlu0 %v562, 80
        %v1250 = vpop.permute.xlu0 %1249
        %1251 = vrot.lane.b32.xlu0 %v563, 80
        %v1252 = vpop.permute.xlu0 %1251
        %1253 = vrot.lane.b32.xlu0 %v564, 80
        %v1254 = vpop.permute.xlu0 %1253
        %1255 = vrot.lane.b32.xlu0 %v565, 80
        %v1256 = vpop.permute.xlu0 %1255
        %1257 = vrot.lane.b32.xlu0 %v566, 80
        %v1258 = vpop.permute.xlu0 %1257
        %1259 = vrot.lane.b32.xlu0 %v567, 80
        %v1260 = vpop.permute.xlu0 %1259
        %1261 = vrot.lane.b32.xlu0 %v568, 80
        %v1262 = vpop.permute.xlu0 %1261
        %1263 = vrot.lane.b32.xlu0 %v569, 80
        %v1264 = vpop.permute.xlu0 %1263
        %1265 = vrot.lane.b32.xlu0 %v570, 80
        %v1266 = vpop.permute.xlu0 %1265
        %1267 = vrot.lane.b32.xlu0 %v571, 80
        %v1268 = vpop.permute.xlu0 %1267
        %1269 = vrot.lane.b32.xlu0 %v572, 80
        %v1270 = vpop.permute.xlu0 %1269
        %1271 = vrot.lane.b32.xlu0 %v573, 80
        %v1272 = vpop.permute.xlu0 %1271
        %1273 = vrot.lane.b32.xlu0 %v574, 80
        %v1274 = vpop.permute.xlu0 %1273
        %1275 = vrot.lane.b32.xlu0 %v575, 80
        %v1276 = vpop.permute.xlu0 %1275
        %1277 = vrot.lane.b32.xlu0 %v576, 80
        %v1278 = vpop.permute.xlu0 %1277
        %1279 = vrot.lane.b32.xlu0 %v577, 80
        %v1280 = vpop.permute.xlu0 %1279
        %1281 = vrot.lane.b32.xlu0 %v578, 80
        %v1282 = vpop.permute.xlu0 %1281
        %1283 = vrot.lane.b32.xlu0 %v579, 80
        %v1284 = vpop.permute.xlu0 %1283
        %1349 = vrot.lane.b32.xlu0 %v581, 96
        %v1350 = vpop.permute.xlu0 %1349
        %1351 = vrot.lane.b32.xlu0 %v582, 96
        %v1352 = vpop.permute.xlu0 %1351
        %1353 = vrot.lane.b32.xlu0 %v583, 96
        %v1354 = vpop.permute.xlu0 %1353
        %1355 = vrot.lane.b32.xlu0 %v584, 96
        %v1356 = vpop.permute.xlu0 %1355
        %1357 = vrot.lane.b32.xlu0 %v585, 96
        %v1358 = vpop.permute.xlu0 %1357
        %1359 = vrot.lane.b32.xlu0 %v586, 96
        %v1360 = vpop.permute.xlu0 %1359
        %1361 = vrot.lane.b32.xlu0 %v587, 96
        %v1362 = vpop.permute.xlu0 %1361
        %1363 = vrot.lane.b32.xlu0 %v588, 96
        %v1364 = vpop.permute.xlu0 %1363
        %1365 = vrot.lane.b32.xlu0 %v589, 96
        %v1366 = vpop.permute.xlu0 %1365
        %1367 = vrot.lane.b32.xlu0 %v590, 96
        %v1368 = vpop.permute.xlu0 %1367
        %1369 = vrot.lane.b32.xlu0 %v591, 96
        %v1370 = vpop.permute.xlu0 %1369
        %1371 = vrot.lane.b32.xlu0 %v592, 96
        %v1372 = vpop.permute.xlu0 %1371
        %1373 = vrot.lane.b32.xlu0 %v593, 96
        %v1374 = vpop.permute.xlu0 %1373
        %1375 = vrot.lane.b32.xlu0 %v594, 96
        %v1376 = vpop.permute.xlu0 %1375
        %1377 = vrot.lane.b32.xlu0 %v595, 96
        %v1378 = vpop.permute.xlu0 %1377
        %1379 = vrot.lane.b32.xlu0 %v596, 96
        %v1380 = vpop.permute.xlu0 %1379
        %1381 = vrot.lane.b32.xlu0 %v597, 96
        %v1382 = vpop.permute.xlu0 %1381
        %1383 = vrot.lane.b32.xlu0 %v598, 96
        %v1384 = vpop.permute.xlu0 %1383
        %1385 = vrot.lane.b32.xlu0 %v599, 96
        %v1386 = vpop.permute.xlu0 %1385
        %1387 = vrot.lane.b32.xlu0 %v600, 96
        %v1388 = vpop.permute.xlu0 %1387
        %1389 = vrot.lane.b32.xlu0 %v601, 96
        %v1390 = vpop.permute.xlu0 %1389
        %1391 = vrot.lane.b32.xlu0 %v602, 96
        %v1392 = vpop.permute.xlu0 %1391
        %1393 = vrot.lane.b32.xlu0 %v603, 96
        %v1394 = vpop.permute.xlu0 %1393
        %1395 = vrot.lane.b32.xlu0 %v604, 96
        %v1396 = vpop.permute.xlu0 %1395
        %1397 = vrot.lane.b32.xlu0 %v605, 96
        %v1398 = vpop.permute.xlu0 %1397
        %1399 = vrot.lane.b32.xlu0 %v606, 96
        %v1400 = vpop.permute.xlu0 %1399
        %1401 = vrot.lane.b32.xlu0 %v607, 96
        %v1402 = vpop.permute.xlu0 %1401
        %1403 = vrot.lane.b32.xlu0 %v608, 96
        %v1404 = vpop.permute.xlu0 %1403
        %1405 = vrot.lane.b32.xlu0 %v609, 96
        %v1406 = vpop.permute.xlu0 %1405
        %1407 = vrot.lane.b32.xlu0 %v610, 96
        %v1408 = vpop.permute.xlu0 %1407
        %1409 = vrot.lane.b32.xlu0 %v611, 96
        %v1410 = vpop.permute.xlu0 %1409
        %1411 = vrot.lane.b32.xlu0 %v612, 96
        %v1412 = vpop.permute.xlu0 %1411
        %1477 = vrot.lane.b32.xlu0 %v613, 112
        %v1478 = vpop.permute.xlu0 %1477
        %1479 = vrot.lane.b32.xlu0 %v614, 112
        %v1480 = vpop.permute.xlu0 %1479
        %1481 = vrot.lane.b32.xlu0 %v615, 112
        %v1482 = vpop.permute.xlu0 %1481
        %1483 = vrot.lane.b32.xlu0 %v616, 112
        %v1484 = vpop.permute.xlu0 %1483
        %1485 = vrot.lane.b32.xlu0 %v617, 112
        %v1486 = vpop.permute.xlu0 %1485
        %1487 = vrot.lane.b32.xlu0 %v618, 112
        %v1488 = vpop.permute.xlu0 %1487
        %1489 = vrot.lane.b32.xlu0 %v619, 112
        %v1490 = vpop.permute.xlu0 %1489
        %1491 = vrot.lane.b32.xlu0 %v620, 112
        %v1492 = vpop.permute.xlu0 %1491
        %1493 = vrot.lane.b32.xlu0 %v621, 112
        %v1494 = vpop.permute.xlu0 %1493
        %1495 = vrot.lane.b32.xlu0 %v622, 112
        %v1496 = vpop.permute.xlu0 %1495
        %1497 = vrot.lane.b32.xlu0 %v623, 112
        %v1498 = vpop.permute.xlu0 %1497
        %1499 = vrot.lane.b32.xlu0 %v624, 112
        %v1500 = vpop.permute.xlu0 %1499
        %1501 = vrot.lane.b32.xlu0 %v625, 112
        %v1502 = vpop.permute.xlu0 %1501
        %1503 = vrot.lane.b32.xlu0 %v626, 112
        %v1504 = vpop.permute.xlu0 %1503
        %1505 = vrot.lane.b32.xlu0 %v627, 112
        %v1506 = vpop.permute.xlu0 %1505
        %1507 = vrot.lane.b32.xlu0 %v628, 112
        %v1508 = vpop.permute.xlu0 %1507
        %1509 = vrot.lane.b32.xlu0 %v629, 112
        %v1510 = vpop.permute.xlu0 %1509
        %1511 = vrot.lane.b32.xlu0 %v630, 112
        %v1512 = vpop.permute.xlu0 %1511
        %1513 = vrot.lane.b32.xlu0 %v631, 112
        %v1514 = vpop.permute.xlu0 %1513
        %1515 = vrot.lane.b32.xlu0 %v632, 112
        %v1516 = vpop.permute.xlu0 %1515
        %1517 = vrot.lane.b32.xlu0 %v633, 112
        %v1518 = vpop.permute.xlu0 %1517
        %1519 = vrot.lane.b32.xlu0 %v634, 112
        %v1520 = vpop.permute.xlu0 %1519
        %1521 = vrot.lane.b32.xlu0 %v635, 112
        %v1522 = vpop.permute.xlu0 %1521
        %1523 = vrot.lane.b32.xlu0 %v636, 112
        %v1524 = vpop.permute.xlu0 %1523
        %1525 = vrot.lane.b32.xlu0 %v637, 112
        %v1526 = vpop.permute.xlu0 %1525
        %1527 = vrot.lane.b32.xlu0 %v638, 112
        %v1528 = vpop.permute.xlu0 %1527
        %1529 = vrot.lane.b32.xlu0 %v639, 112
        %v1530 = vpop.permute.xlu0 %1529
        %1531 = vrot.lane.b32.xlu0 %v640, 112
        %v1532 = vpop.permute.xlu0 %1531
        %1533 = vrot.lane.b32.xlu0 %v641, 112
        %v1534 = vpop.permute.xlu0 %1533
        %1535 = vrot.lane.b32.xlu0 %v642, 112
        %v1536 = vpop.permute.xlu0 %1535
        %1537 = vrot.lane.b32.xlu0 %v643, 112
        %v1538 = vpop.permute.xlu0 %1537
        %1539 = vrot.lane.b32.xlu0 %v644, 112
        %v1540 = vpop.permute.xlu0 %1539
        %v1573 = vsel %vm331, %v387, %v710
        %v1574 = vsel %vm331, %v388, %v712
        %v1575 = vsel %vm331, %v389, %v714
        %v1576 = vsel %vm331, %v390, %v716
        %v1577 = vsel %vm331, %v391, %v718
        %v1578 = vsel %vm331, %v392, %v720
        %v1579 = vsel %vm331, %v393, %v722
        %v1580 = vsel %vm331, %v394, %v724
        %v1581 = vsel %vm331, %v395, %v726
        %v1582 = vsel %vm331, %v396, %v728
        %v1583 = vsel %vm331, %v397, %v730
        %v1584 = vsel %vm331, %v398, %v732
        %v1585 = vsel %vm331, %v399, %v734
        %v1586 = vsel %vm331, %v400, %v736
        %v1587 = vsel %vm331, %v401, %v738
        %v1588 = vsel %vm331, %v402, %v740
        %v1589 = vsel %vm331, %v403, %v742
        %v1590 = vsel %vm331, %v404, %v744
        %v1591 = vsel %vm331, %v405, %v746
        %v1592 = vsel %vm331, %v406, %v748
        %v1593 = vsel %vm331, %v407, %v750
        %v1594 = vsel %vm331, %v408, %v752
        %v1595 = vsel %vm331, %v409, %v754
        %v1596 = vsel %vm331, %v410, %v756
        %v1597 = vsel %vm331, %v411, %v758
        %v1598 = vsel %vm331, %v412, %v760
        %v1599 = vsel %vm331, %v413, %v762
        %v1600 = vsel %vm331, %v414, %v764
        %v1601 = vsel %vm331, %v415, %v766
        %v1602 = vsel %vm331, %v416, %v768
        %v1603 = vsel %vm331, %v417, %v770
        %v1604 = vsel %vm331, %v418, %v772
        %vm1605 = vcmask 261120
        %v1606 = vsel %vm1605, %v1573, %v838
        %v1607 = vsel %vm1605, %v1574, %v840
        %v1608 = vsel %vm1605, %v1575, %v842
        %v1609 = vsel %vm1605, %v1576, %v844
        %v1610 = vsel %vm1605, %v1577, %v846
        %v1611 = vsel %vm1605, %v1578, %v848
        %v1612 = vsel %vm1605, %v1579, %v850
        %v1613 = vsel %vm1605, %v1580, %v852
        %v1614 = vsel %vm1605, %v1581, %v854
        %v1615 = vsel %vm1605, %v1582, %v856
        %v1616 = vsel %vm1605, %v1583, %v858
        %v1617 = vsel %vm1605, %v1584, %v860
        %v1618 = vsel %vm1605, %v1585, %v862
        %v1619 = vsel %vm1605, %v1586, %v864
        %v1620 = vsel %vm1605, %v1587, %v866
        %v1621 = vsel %vm1605, %v1588, %v868
        %v1622 = vsel %vm1605, %v1589, %v870
        %v1623 = vsel %vm1605, %v1590, %v872
        %v1624 = vsel %vm1605, %v1591, %v874
        %v1625 = vsel %vm1605, %v1592, %v876
        %v1626 = vsel %vm1605, %v1593, %v878
        %v1627 = vsel %vm1605, %v1594, %v880
        %v1628 = vsel %vm1605, %v1595, %v882
        %v1629 = vsel %vm1605, %v1596, %v884
        %v1630 = vsel %vm1605, %v1597, %v886
        %v1631 = vsel %vm1605, %v1598, %v888
        %v1632 = vsel %vm1605, %v1599, %v890
        %v1633 = vsel %vm1605, %v1600, %v892
        %v1634 = vsel %vm1605, %v1601, %v894
        %v1635 = vsel %vm1605, %v1602, %v896
        %v1636 = vsel %vm1605, %v1603, %v898
        %v1637 = vsel %vm1605, %v1604, %v900
        %vm1638 = vcmask 392192
        %v1639 = vsel %vm1638, %v1606, %v966
        %v1640 = vsel %vm1638, %v1607, %v968
        %v1641 = vsel %vm1638, %v1608, %v970
        %v1642 = vsel %vm1638, %v1609, %v972
        %v1643 = vsel %vm1638, %v1610, %v974
        %v1644 = vsel %vm1638, %v1611, %v976
        %v1645 = vsel %vm1638, %v1612, %v978
        %v1646 = vsel %vm1638, %v1613, %v980
        %v1647 = vsel %vm1638, %v1614, %v982
        %v1648 = vsel %vm1638, %v1615, %v984
        %v1649 = vsel %vm1638, %v1616, %v986
        %v1650 = vsel %vm1638, %v1617, %v988
        %v1651 = vsel %vm1638, %v1618, %v990
        %v1652 = vsel %vm1638, %v1619, %v992
        %v1653 = vsel %vm1638, %v1620, %v994
        %v1654 = vsel %vm1638, %v1621, %v996
        %v1655 = vsel %vm1638, %v1622, %v998
        %v1656 = vsel %vm1638, %v1623, %v1000
        %v1657 = vsel %vm1638, %v1624, %v1002
        %v1658 = vsel %vm1638, %v1625, %v1004
        %v1659 = vsel %vm1638, %v1626, %v1006
        %v1660 = vsel %vm1638, %v1627, %v1008
        %v1661 = vsel %vm1638, %v1628, %v1010
        %v1662 = vsel %vm1638, %v1629, %v1012
        %v1663 = vsel %vm1638, %v1630, %v1014
        %v1664 = vsel %vm1638, %v1631, %v1016
        %v1665 = vsel %vm1638, %v1632, %v1018
        %v1666 = vsel %vm1638, %v1633, %v1020
        %v1667 = vsel %vm1638, %v1634, %v1022
        %v1668 = vsel %vm1638, %v1635, %v1024
        %v1669 = vsel %vm1638, %v1636, %v1026
        %v1670 = vsel %vm1638, %v1637, %v1028
        %vm1671 = vcmask 523264
        %v1672 = vsel %vm1671, %v1639, %v1094
        %v1673 = vsel %vm1671, %v1640, %v1096
        %v1674 = vsel %vm1671, %v1641, %v1098
        %v1675 = vsel %vm1671, %v1642, %v1100
        %v1676 = vsel %vm1671, %v1643, %v1102
        %v1677 = vsel %vm1671, %v1644, %v1104
        %v1678 = vsel %vm1671, %v1645, %v1106
        %v1679 = vsel %vm1671, %v1646, %v1108
        %v1680 = vsel %vm1671, %v1647, %v1110
        %v1681 = vsel %vm1671, %v1648, %v1112
        %v1682 = vsel %vm1671, %v1649, %v1114
        %v1683 = vsel %vm1671, %v1650, %v1116
        %v1684 = vsel %vm1671, %v1651, %v1118
        %v1685 = vsel %vm1671, %v1652, %v1120
        %v1686 = vsel %vm1671, %v1653, %v1122
        %v1687 = vsel %vm1671, %v1654, %v1124
        %v1688 = vsel %vm1671, %v1655, %v1126
        %v1689 = vsel %vm1671, %v1656, %v1128
        %v1690 = vsel %vm1671, %v1657, %v1130
        %v1691 = vsel %vm1671, %v1658, %v1132
        %v1692 = vsel %vm1671, %v1659, %v1134
        %v1693 = vsel %vm1671, %v1660, %v1136
        %v1694 = vsel %vm1671, %v1661, %v1138
        %v1695 = vsel %vm1671, %v1662, %v1140
        %v1696 = vsel %vm1671, %v1663, %v1142
        %v1697 = vsel %vm1671, %v1664, %v1144
        %v1698 = vsel %vm1671, %v1665, %v1146
        %v1699 = vsel %vm1671, %v1666, %v1148
        %v1700 = vsel %vm1671, %v1667, %v1150
        %v1701 = vsel %vm1671, %v1668, %v1152
        %v1702 = vsel %vm1671, %v1669, %v1154
        %v1703 = vsel %vm1671, %v1670, %v1156
        %vm1704 = vcmask 654336
        %v1705 = vsel %vm1704, %v1672, %v1222
        %v1706 = vsel %vm1704, %v1673, %v1224
        %v1707 = vsel %vm1704, %v1674, %v1226
        %v1708 = vsel %vm1704, %v1675, %v1228
        %v1709 = vsel %vm1704, %v1676, %v1230
        %v1710 = vsel %vm1704, %v1677, %v1232
        %v1711 = vsel %vm1704, %v1678, %v1234
        %v1712 = vsel %vm1704, %v1679, %v1236
        %v1713 = vsel %vm1704, %v1680, %v1238
        %v1714 = vsel %vm1704, %v1681, %v1240
        %v1715 = vsel %vm1704, %v1682, %v1242
        %v1716 = vsel %vm1704, %v1683, %v1244
        %v1717 = vsel %vm1704, %v1684, %v1246
        %v1718 = vsel %vm1704, %v1685, %v1248
        %v1719 = vsel %vm1704, %v1686, %v1250
        %v1720 = vsel %vm1704, %v1687, %v1252
        %v1721 = vsel %vm1704, %v1688, %v1254
        %v1722 = vsel %vm1704, %v1689, %v1256
        %v1723 = vsel %vm1704, %v1690, %v1258
        %v1724 = vsel %vm1704, %v1691, %v1260
        %v1725 = vsel %vm1704, %v1692, %v1262
        %v1726 = vsel %vm1704, %v1693, %v1264
        %v1727 = vsel %vm1704, %v1694, %v1266
        %v1728 = vsel %vm1704, %v1695, %v1268
        %v1729 = vsel %vm1704, %v1696, %v1270
        %v1730 = vsel %vm1704, %v1697, %v1272
        %v1731 = vsel %vm1704, %v1698, %v1274
        %v1732 = vsel %vm1704, %v1699, %v1276
        %v1733 = vsel %vm1704, %v1700, %v1278
        %v1734 = vsel %vm1704, %v1701, %v1280
        %v1735 = vsel %vm1704, %v1702, %v1282
        %v1736 = vsel %vm1704, %v1703, %v1284
        %vm1737 = vcmask 785408
        %v1738 = vsel %vm1737, %v1705, %v1350
        %v1739 = vsel %vm1737, %v1706, %v1352
        %v1740 = vsel %vm1737, %v1707, %v1354
        %v1741 = vsel %vm1737, %v1708, %v1356
        %v1742 = vsel %vm1737, %v1709, %v1358
        %v1743 = vsel %vm1737, %v1710, %v1360
        %v1744 = vsel %vm1737, %v1711, %v1362
        %v1745 = vsel %vm1737, %v1712, %v1364
        %v1746 = vsel %vm1737, %v1713, %v1366
        %v1747 = vsel %vm1737, %v1714, %v1368
        %v1748 = vsel %vm1737, %v1715, %v1370
        %v1749 = vsel %vm1737, %v1716, %v1372
        %v1750 = vsel %vm1737, %v1717, %v1374
        %v1751 = vsel %vm1737, %v1718, %v1376
        %v1752 = vsel %vm1737, %v1719, %v1378
        %v1753 = vsel %vm1737, %v1720, %v1380
        %v1754 = vsel %vm1737, %v1721, %v1382
        %v1755 = vsel %vm1737, %v1722, %v1384
        %v1756 = vsel %vm1737, %v1723, %v1386
        %v1757 = vsel %vm1737, %v1724, %v1388
        %v1758 = vsel %vm1737, %v1725, %v1390
        %v1759 = vsel %vm1737, %v1726, %v1392
        %v1760 = vsel %vm1737, %v1727, %v1394
        %v1761 = vsel %vm1737, %v1728, %v1396
        %v1762 = vsel %vm1737, %v1729, %v1398
        %v1763 = vsel %vm1737, %v1730, %v1400
        %v1764 = vsel %vm1737, %v1731, %v1402
        %v1765 = vsel %vm1737, %v1732, %v1404
        %v1766 = vsel %vm1737, %v1733, %v1406
        %v1767 = vsel %vm1737, %v1734, %v1408
        %v1768 = vsel %vm1737, %v1735, %v1410
        %v1769 = vsel %vm1737, %v1736, %v1412
        %vm1770 = vcmask 916480
        %v1771 = vsel %vm1770, %v1738, %v1478
        %v1772 = vsel %vm1770, %v1739, %v1480
        %v1773 = vsel %vm1770, %v1740, %v1482
        %v1774 = vsel %vm1770, %v1741, %v1484
        %v1775 = vsel %vm1770, %v1742, %v1486
        %v1776 = vsel %vm1770, %v1743, %v1488
        %v1777 = vsel %vm1770, %v1744, %v1490
        %v1778 = vsel %vm1770, %v1745, %v1492
        %v1779 = vsel %vm1770, %v1746, %v1494
        %v1780 = vsel %vm1770, %v1747, %v1496
        %v1781 = vsel %vm1770, %v1748, %v1498
        %v1782 = vsel %vm1770, %v1749, %v1500
        %v1783 = vsel %vm1770, %v1750, %v1502
        %v1784 = vsel %vm1770, %v1751, %v1504
        %v1785 = vsel %vm1770, %v1752, %v1506
        %v1786 = vsel %vm1770, %v1753, %v1508
        %v1787 = vsel %vm1770, %v1754, %v1510
        %v1788 = vsel %vm1770, %v1755, %v1512
        %v1789 = vsel %vm1770, %v1756, %v1514
        %v1790 = vsel %vm1770, %v1757, %v1516
        %v1791 = vsel %vm1770, %v1758, %v1518
        %v1792 = vsel %vm1770, %v1759, %v1520
        %v1793 = vsel %vm1770, %v1760, %v1522
        %v1794 = vsel %vm1770, %v1761, %v1524
        %v1795 = vsel %vm1770, %v1762, %v1526
        %v1796 = vsel %vm1770, %v1763, %v1528
        %v1797 = vsel %vm1770, %v1764, %v1530
        %v1798 = vsel %vm1770, %v1765, %v1532
        %v1799 = vsel %vm1770, %v1766, %v1534
        %v1800 = vsel %vm1770, %v1767, %v1536
        %v1801 = vsel %vm1770, %v1768, %v1538
        %v1802 = vsel %vm1770, %v1769, %v1540
        %v1803 = vld [vmem:[%s1] sm:$0xff]
        %v1804 = vld [vmem:[%s1 + $0x8] sm:$0xff]
        %v1805 = vld [vmem:[%s1 + $0x10] sm:$0xff]
        %v1806 = vld [vmem:[%s1 + $0x18] sm:$0xff]
        %v1807 = vld [vmem:[%s1 + $0x20] sm:$0xff]
        %v1808 = vld [vmem:[%s1 + $0x28] sm:$0xff]
        %v1809 = vld [vmem:[%s1 + $0x30] sm:$0xff]
        %v1810 = vld [vmem:[%s1 + $0x38] sm:$0xff]
        %v1811 = vld [vmem:[%s1 + $0x40] sm:$0xff]
        %v1812 = vld [vmem:[%s1 + $0x48] sm:$0xff]
        %v1813 = vld [vmem:[%s1 + $0x50] sm:$0xff]
        %v1814 = vld [vmem:[%s1 + $0x58] sm:$0xff]
        %v1815 = vld [vmem:[%s1 + $0x60] sm:$0xff]
        %v1816 = vld [vmem:[%s1 + $0x68] sm:$0xff]
        %v1817 = vld [vmem:[%s1 + $0x70] sm:$0xff]
        %v1818 = vld [vmem:[%s1 + $0x78] sm:$0xff]
        %v1819 = vld [vmem:[%s1 + $0x80] sm:$0xff]
        %v1820 = vld [vmem:[%s1 + $0x88] sm:$0xff]
        %v1821 = vld [vmem:[%s2] sm:$0x1]
        %v1823 = vlaneseq
        %v1824 = vshrl.u32 %v1823, 7
        %v1825 = vsub.s32 0, %v1824
        %v1826 = vrot.slane %v1821, %v1825
        %v1829 = vsel %vm331, %v645, 0
        %v1832 = vsel %vm331, %v646, 0
        %v1835 = vsel %vm331, %v647, 0
        %v1838 = vsel %vm331, %v648, 0
        %v1841 = vsel %vm331, %v649, 0
        %v1844 = vsel %vm331, %v650, 0
        %v1847 = vsel %vm331, %v651, 0
        %v1850 = vsel %vm331, %v652, 0
        %v1853 = vsel %vm331, %v653, 0
        %v1856 = vsel %vm331, %v654, 0
        %v1859 = vsel %vm331, %v655, 0
        %v1862 = vsel %vm331, %v656, 0
        %v1865 = vsel %vm331, %v657, 0
        %v1868 = vsel %vm331, %v658, 0
        %v1871 = vsel %vm331, %v659, 0
        %v1874 = vsel %vm331, %v660, 0
        %v1877 = vsel %vm331, %v661, 0
        %v1880 = vsel %vm331, %v662, 0
        %v1883 = vsel %vm331, %v663, 0
        %v1886 = vsel %vm331, %v664, 0
        %v1889 = vsel %vm331, %v665, 0
        %v1892 = vsel %vm331, %v666, 0
        %v1895 = vsel %vm331, %v667, 0
        %v1898 = vsel %vm331, %v668, 0
        %v1901 = vsel %vm331, %v669, 0
        %v1904 = vsel %vm331, %v670, 0
        %v1907 = vsel %vm331, %v671, 0
        %v1910 = vsel %vm331, %v672, 0
        %v1913 = vsel %vm331, %v673, 0
        %v1916 = vsel %vm331, %v674, 0
        %v1919 = vsel %vm331, %v675, 0
        %v1922 = vsel %vm331, %v676, 0
        %1924 = vmatprep.subr.mxu0 0.0
        %1925 = vmatpush1.msra.mxu0 %v1803
        %1926 = vmatprep.subr.mxu0 0.0
        %1927 = vmatpush1.msra.mxu0 %v1804
        %1928 = vmatprep.subr.mxu0 0.0
        %1929 = vmatpush1.msra.mxu0 %v1805
        %1930 = vmatprep.subr.mxu0 0.0
        %1931 = vmatpush1.msra.mxu0 %v1806
        %1932 = vmatprep.subr.mxu0 0.0
        %1933 = vmatpush1.msra.mxu0 %v1807
        %1934 = vmatprep.subr.mxu0 0.0
        %1935 = vmatpush1.msra.mxu0 %v1808
        %1936 = vmatprep.subr.mxu0 0.0
        %1937 = vmatpush1.msra.mxu0 %v1809
        %1938 = vmatprep.subr.mxu0 0.0
        %1939 = vmatpush1.msra.mxu0 %v1810
        %1940 = vmatprep.subr.mxu0 0.0
        %1941 = vmatpush1.msra.mxu0 %v1811
        %1942 = vmatprep.subr.mxu0 0.0
        %1943 = vmatpush1.msra.mxu0 %v1812
        %1944 = vmatprep.subr.mxu0 0.0
        %1945 = vmatpush1.msra.mxu0 %v1813
        %1946 = vmatprep.subr.mxu0 0.0
        %1947 = vmatpush1.msra.mxu0 %v1814
        %1948 = vmatprep.subr.mxu0 0.0
        %1949 = vmatpush1.msra.mxu0 %v1815
        %1950 = vmatprep.subr.mxu0 0.0
        %1951 = vmatpush1.msra.mxu0 %v1816
        %1952 = vmatprep.subr.mxu0 0.0
        %1953 = vmatpush1.msra.mxu0 %v1817
        %1954 = vmatprep.subr.mxu0 0.0
        %1955 = vmatpush1.msra.mxu0 %v1818
        %1956 = vmatprep.subr.mxu0 0.0
        %1957 = vmatpush1.msra.mxu0 %v1819
        %1958 = vmatprep.subr.mxu0 0.0
        %1959 = vmatpush1.msra.mxu0 %v1820
        %1960 = vmatprep.subr.mxu0 0.0
        %1961 = vmatpush1.msra.mxu0 0.0
        %1962 = vmatprep.subr.mxu0 0.0
        %1963 = vmatpush1.msra.mxu0 0.0
        %1964 = vmatprep.subr.mxu0 0.0
        %1965 = vmatpush1.msra.mxu0 0.0
        %1966 = vmatprep.subr.mxu0 0.0
        %1967 = vmatpush1.msra.mxu0 0.0
        %1968 = vmatprep.subr.mxu0 0.0
        %1969 = vmatpush1.msra.mxu0 0.0
        %1970 = vmatprep.subr.mxu0 0.0
        %1971 = vmatpush1.msra.mxu0 0.0
        %1972 = vmatprep.subr.mxu0 0.0
        %1973 = vmatpush1.msra.mxu0 0.0
        %1974 = vmatprep.subr.mxu0 0.0
        %1975 = vmatpush1.msra.mxu0 0.0
        %1976 = vmatprep.subr.mxu0 0.0
        %1977 = vmatpush1.msra.mxu0 0.0
        %1978 = vmatprep.subr.mxu0 0.0
        %1979 = vmatpush1.msra.mxu0 0.0
        %1980 = vmatprep.subr.mxu0 0.0
        %1981 = vmatpush1.msra.mxu0 0.0
        %1982 = vmatprep.subr.mxu0 0.0
        %1983 = vmatpush1.msra.mxu0 0.0
        %1984 = vmatprep.subr.mxu0 0.0
        %1985 = vmatpush1.msra.mxu0 0.0
        %1986 = vmatprep.subr.mxu0 0.0
        %1987 = vmatpush1.msra.mxu0 0.0
        %1988 = vmatprep.mubr.f32.mxu0 %v1829
        %1989 = vmatmul.mubr.f32.gmra.mrb[0].mxu0 %v1771
        %v1990 = vpop.f32.mrb[0].mxu0
        %v1991 = vadd.f32 %v1826, %v1990
        %v1992 = vpop.f32.mrb[0].mxu0
        %1993 = vmatprep.mubr.f32.mxu0 %v1832
        %1994 = vmatmul.mubr.f32.gmra.mrb[0].mxu0 %v1772
        %v1995 = vpop.f32.mrb[0].mxu0
        %v1996 = vadd.f32 %v1826, %v1995
        %v1997 = vpop.f32.mrb[0].mxu0
        %1998 = vmatprep.mubr.f32.mxu0 %v1835
        %1999 = vmatmul.mubr.f32.gmra.mrb[0].mxu0 %v1773
        %v2000 = vpop.f32.mrb[0].mxu0
        %v2001 = vadd.f32 %v1826, %v2000
        %v2002 = vpop.f32.mrb[0].mxu0
        %2003 = vmatprep.mubr.f32.mxu0 %v1838
        %2004 = vmatmul.mubr.f32.gmra.mrb[0].mxu0 %v1774
        %v2005 = vpop.f32.mrb[0].mxu0
        %v2006 = vadd.f32 %v1826, %v2005
        %v2007 = vpop.f32.mrb[0].mxu0
        %2008 = vmatprep.mubr.f32.mxu0 %v1841
        %2009 = vmatmul.mubr.f32.gmra.mrb[0].mxu0 %v1775
        %v2010 = vpop.f32.mrb[0].mxu0
        %v2011 = vadd.f32 %v1826, %v2010
        %v2012 = vpop.f32.mrb[0].mxu0
        %2013 = vmatprep.mubr.f32.mxu0 %v1844
        %2014 = vmatmul.mubr.f32.gmra.mrb[0].mxu0 %v1776
        %v2015 = vpop.f32.mrb[0].mxu0
        %v2016 = vadd.f32 %v1826, %v2015
        %v2017 = vpop.f32.mrb[0].mxu0
        %2018 = vmatprep.mubr.f32.mxu0 %v1847
        %2019 = vmatmul.mubr.f32.gmra.mrb[0].mxu0 %v1777
        %v2020 = vpop.f32.mrb[0].mxu0
        %v2021 = vadd.f32 %v1826, %v2020
        %v2022 = vpop.f32.mrb[0].mxu0
        %2023 = vmatprep.mubr.f32.mxu0 %v1850
        %2024 = vmatmul.mubr.f32.gmra.mrb[0].mxu0 %v1778
        %v2025 = vpop.f32.mrb[0].mxu0
        %v2026 = vadd.f32 %v1826, %v2025
        %v2027 = vpop.f32.mrb[0].mxu0
        %2028 = vmatprep.mubr.f32.mxu0 %v1853
        %2029 = vmatmul.mubr.f32.gmra.mrb[0].mxu0 %v1779
        %v2030 = vpop.f32.mrb[0].mxu0
        %v2031 = vadd.f32 %v1826, %v2030
        %v2032 = vpop.f32.mrb[0].mxu0
        %2033 = vmatprep.mubr.f32.mxu0 %v1856
        %2034 = vmatmul.mubr.f32.gmra.mrb[0].mxu0 %v1780
        %v2035 = vpop.f32.mrb[0].mxu0
        %v2036 = vadd.f32 %v1826, %v2035
        %v2037 = vpop.f32.mrb[0].mxu0
        %2038 = vmatprep.mubr.f32.mxu0 %v1859
        %2039 = vmatmul.mubr.f32.gmra.mrb[0].mxu0 %v1781
        %v2040 = vpop.f32.mrb[0].mxu0
        %v2041 = vadd.f32 %v1826, %v2040
        %v2042 = vpop.f32.mrb[0].mxu0
        %2043 = vmatprep.mubr.f32.mxu0 %v1862
        %2044 = vmatmul.mubr.f32.gmra.mrb[0].mxu0 %v1782
        %v2045 = vpop.f32.mrb[0].mxu0
        %v2046 = vadd.f32 %v1826, %v2045
        %v2047 = vpop.f32.mrb[0].mxu0
        %2048 = vmatprep.mubr.f32.mxu0 %v1865
        %2049 = vmatmul.mubr.f32.gmra.mrb[0].mxu0 %v1783
        %v2050 = vpop.f32.mrb[0].mxu0
        %v2051 = vadd.f32 %v1826, %v2050
        %v2052 = vpop.f32.mrb[0].mxu0
        %2053 = vmatprep.mubr.f32.mxu0 %v1868
        %2054 = vmatmul.mubr.f32.gmra.mrb[0].mxu0 %v1784
        %v2055 = vpop.f32.mrb[0].mxu0
        %v2056 = vadd.f32 %v1826, %v2055
        %v2057 = vpop.f32.mrb[0].mxu0
        %2058 = vmatprep.mubr.f32.mxu0 %v1871
        %2059 = vmatmul.mubr.f32.gmra.mrb[0].mxu0 %v1785
        %v2060 = vpop.f32.mrb[0].mxu0
        %v2061 = vadd.f32 %v1826, %v2060
        %v2062 = vpop.f32.mrb[0].mxu0
        %2063 = vmatprep.mubr.f32.mxu0 %v1874
        %2064 = vmatmul.mubr.f32.gmra.mrb[0].mxu0 %v1786
        %v2065 = vpop.f32.mrb[0].mxu0
        %v2066 = vadd.f32 %v1826, %v2065
        %v2067 = vpop.f32.mrb[0].mxu0
        %2068 = vmatprep.mubr.f32.mxu0 %v1877
        %2069 = vmatmul.mubr.f32.gmra.mrb[0].mxu0 %v1787
        %v2070 = vpop.f32.mrb[0].mxu0
        %v2071 = vadd.f32 %v1826, %v2070
        %v2072 = vpop.f32.mrb[0].mxu0
        %2073 = vmatprep.mubr.f32.mxu0 %v1880
        %2074 = vmatmul.mubr.f32.gmra.mrb[0].mxu0 %v1788
        %v2075 = vpop.f32.mrb[0].mxu0
        %v2076 = vadd.f32 %v1826, %v2075
        %v2077 = vpop.f32.mrb[0].mxu0
        %2078 = vmatprep.mubr.f32.mxu0 %v1883
        %2079 = vmatmul.mubr.f32.gmra.mrb[0].mxu0 %v1789
        %v2080 = vpop.f32.mrb[0].mxu0
        %v2081 = vadd.f32 %v1826, %v2080
        %v2082 = vpop.f32.mrb[0].mxu0
        %2083 = vmatprep.mubr.f32.mxu0 %v1886
        %2084 = vmatmul.mubr.f32.gmra.mrb[0].mxu0 %v1790
        %v2085 = vpop.f32.mrb[0].mxu0
        %v2086 = vadd.f32 %v1826, %v2085
        %v2087 = vpop.f32.mrb[0].mxu0
        %2088 = vmatprep.mubr.f32.mxu0 %v1889
        %2089 = vmatmul.mubr.f32.gmra.mrb[0].mxu0 %v1791
        %v2090 = vpop.f32.mrb[0].mxu0
        %v2091 = vadd.f32 %v1826, %v2090
        %v2092 = vpop.f32.mrb[0].mxu0
        %2093 = vmatprep.mubr.f32.mxu0 %v1892
        %2094 = vmatmul.mubr.f32.gmra.mrb[0].mxu0 %v1792
        %v2095 = vpop.f32.mrb[0].mxu0
        %v2096 = vadd.f32 %v1826, %v2095
        %v2097 = vpop.f32.mrb[0].mxu0
        %2098 = vmatprep.mubr.f32.mxu0 %v1895
        %2099 = vmatmul.mubr.f32.gmra.mrb[0].mxu0 %v1793
        %v2100 = vpop.f32.mrb[0].mxu0
        %v2101 = vadd.f32 %v1826, %v2100
        %v2102 = vpop.f32.mrb[0].mxu0
        %2103 = vmatprep.mubr.f32.mxu0 %v1898
        %2104 = vmatmul.mubr.f32.gmra.mrb[0].mxu0 %v1794
        %v2105 = vpop.f32.mrb[0].mxu0
        %v2106 = vadd.f32 %v1826, %v2105
        %v2107 = vpop.f32.mrb[0].mxu0
        %2108 = vmatprep.mubr.f32.mxu0 %v1901
        %2109 = vmatmul.mubr.f32.gmra.mrb[0].mxu0 %v1795
        %v2110 = vpop.f32.mrb[0].mxu0
        %v2111 = vadd.f32 %v1826, %v2110
        %v2112 = vpop.f32.mrb[0].mxu0
        %2113 = vmatprep.mubr.f32.mxu0 %v1904
        %2114 = vmatmul.mubr.f32.gmra.mrb[0].mxu0 %v1796
        %v2115 = vpop.f32.mrb[0].mxu0
        %v2116 = vadd.f32 %v1826, %v2115
        %v2117 = vpop.f32.mrb[0].mxu0
        %2118 = vmatprep.mubr.f32.mxu0 %v1907
        %2119 = vmatmul.mubr.f32.gmra.mrb[0].mxu0 %v1797
        %v2120 = vpop.f32.mrb[0].mxu0
        %v2121 = vadd.f32 %v1826, %v2120
        %v2122 = vpop.f32.mrb[0].mxu0
        %2123 = vmatprep.mubr.f32.mxu0 %v1910
        %2124 = vmatmul.mubr.f32.gmra.mrb[0].mxu0 %v1798
        %v2125 = vpop.f32.mrb[0].mxu0
        %v2126 = vadd.f32 %v1826, %v2125
        %v2127 = vpop.f32.mrb[0].mxu0
        %2128 = vmatprep.mubr.f32.mxu0 %v1913
        %2129 = vmatmul.mubr.f32.gmra.mrb[0].mxu0 %v1799
        %v2130 = vpop.f32.mrb[0].mxu0
        %v2131 = vadd.f32 %v1826, %v2130
        %v2132 = vpop.f32.mrb[0].mxu0
        %2133 = vmatprep.mubr.f32.mxu0 %v1916
        %2134 = vmatmul.mubr.f32.gmra.mrb[0].mxu0 %v1800
        %v2135 = vpop.f32.mrb[0].mxu0
        %v2136 = vadd.f32 %v1826, %v2135
        %v2137 = vpop.f32.mrb[0].mxu0
        %2138 = vmatprep.mubr.f32.mxu0 %v1919
        %2139 = vmatmul.mubr.f32.gmra.mrb[0].mxu0 %v1801
        %v2140 = vpop.f32.mrb[0].mxu0
        %v2141 = vadd.f32 %v1826, %v2140
        %v2142 = vpop.f32.mrb[0].mxu0
        %2143 = vmatprep.mubr.f32.mxu0 %v1922
        %2144 = vmatmul.mubr.f32.gmra.mrb[0].mxu0 %v1802
        %v2145 = vpop.f32.mrb[0].mxu0
        %v2146 = vadd.f32 %v1826, %v2145
        %v2147 = vpop.f32.mrb[0].mxu0
        %2148 = vdwg.mxu0
        %v2149 = vsel %vm331, %v1991, 0.0
        %v2150 = vsel %vm331, %v1996, 0.0
        %v2151 = vadd.f32 %v2149, %v2150
        %v2152 = vsel %vm331, %v2001, 0.0
        %v2153 = vadd.f32 %v2151, %v2152
        %v2154 = vsel %vm331, %v2006, 0.0
        %v2155 = vadd.f32 %v2153, %v2154
        %v2156 = vsel %vm331, %v2011, 0.0
        %v2157 = vadd.f32 %v2155, %v2156
        %v2158 = vsel %vm331, %v2016, 0.0
        %v2159 = vadd.f32 %v2157, %v2158
        %v2160 = vsel %vm331, %v2021, 0.0
        %v2161 = vadd.f32 %v2159, %v2160
        %v2162 = vsel %vm331, %v2026, 0.0
        %v2163 = vadd.f32 %v2161, %v2162
        %v2164 = vsel %vm331, %v2031, 0.0
        %v2165 = vadd.f32 %v2163, %v2164
        %v2166 = vsel %vm331, %v2036, 0.0
        %v2167 = vadd.f32 %v2165, %v2166
        %v2168 = vsel %vm331, %v2041, 0.0
        %v2169 = vadd.f32 %v2167, %v2168
        %v2170 = vsel %vm331, %v2046, 0.0
        %v2171 = vadd.f32 %v2169, %v2170
        %v2172 = vsel %vm331, %v2051, 0.0
        %v2173 = vadd.f32 %v2171, %v2172
        %v2174 = vsel %vm331, %v2056, 0.0
        %v2175 = vadd.f32 %v2173, %v2174
        %v2176 = vsel %vm331, %v2061, 0.0
        %v2177 = vadd.f32 %v2175, %v2176
        %v2178 = vsel %vm331, %v2066, 0.0
        %v2179 = vadd.f32 %v2177, %v2178
        %v2180 = vsel %vm331, %v2071, 0.0
        %v2181 = vadd.f32 %v2179, %v2180
        %v2182 = vsel %vm331, %v2076, 0.0
        %v2183 = vadd.f32 %v2181, %v2182
        %v2184 = vsel %vm331, %v2081, 0.0
        %v2185 = vadd.f32 %v2183, %v2184
        %v2186 = vsel %vm331, %v2086, 0.0
        %v2187 = vadd.f32 %v2185, %v2186
        %v2188 = vsel %vm331, %v2091, 0.0
        %v2189 = vadd.f32 %v2187, %v2188
        %v2190 = vsel %vm331, %v2096, 0.0
        %v2191 = vadd.f32 %v2189, %v2190
        %v2192 = vsel %vm331, %v2101, 0.0
        %v2193 = vadd.f32 %v2191, %v2192
        %v2194 = vsel %vm331, %v2106, 0.0
        %v2195 = vadd.f32 %v2193, %v2194
        %v2196 = vsel %vm331, %v2111, 0.0
        %v2197 = vadd.f32 %v2195, %v2196
        %v2198 = vsel %vm331, %v2116, 0.0
        %v2199 = vadd.f32 %v2197, %v2198
        %v2200 = vsel %vm331, %v2121, 0.0
        %v2201 = vadd.f32 %v2199, %v2200
        %v2202 = vsel %vm331, %v2126, 0.0
        %v2203 = vadd.f32 %v2201, %v2202
        %v2204 = vsel %vm331, %v2131, 0.0
        %v2205 = vadd.f32 %v2203, %v2204
        %v2206 = vsel %vm331, %v2136, 0.0
        %v2207 = vadd.f32 %v2205, %v2206
        %v2208 = vsel %vm331, %v2141, 0.0
        %v2209 = vadd.f32 %v2207, %v2208
        %v2210 = vsel %vm331, %v2146, 0.0
        %v2211 = vadd.f32 %v2209, %v2210
        %v2212 = vrot.slane %v2211, 4
        %v2213 = vadd.f32 %v2211, %v2212
        %v2214 = vrot.slane %v2213, 2
        %v2215 = vadd.f32 %v2213, %v2214
        %v2216 = vrot.slane %v2215, 1
        %v2217 = vadd.f32 %v2215, %v2216
        %v2218 = vmul.f32 %v1991, %v1991
        %v2219 = vmul.f32 %v1996, %v1996
        %v2220 = vmul.f32 %v2001, %v2001
        %v2221 = vmul.f32 %v2006, %v2006
        %v2222 = vmul.f32 %v2011, %v2011
        %v2223 = vmul.f32 %v2016, %v2016
        %v2224 = vmul.f32 %v2021, %v2021
        %v2225 = vmul.f32 %v2026, %v2026
        %v2226 = vmul.f32 %v2031, %v2031
        %v2227 = vmul.f32 %v2036, %v2036
        %v2228 = vmul.f32 %v2041, %v2041
        %v2229 = vmul.f32 %v2046, %v2046
        %v2230 = vmul.f32 %v2051, %v2051
        %v2231 = vmul.f32 %v2056, %v2056
        %v2232 = vmul.f32 %v2061, %v2061
        %v2233 = vmul.f32 %v2066, %v2066
        %v2234 = vmul.f32 %v2071, %v2071
        %v2235 = vmul.f32 %v2076, %v2076
        %v2236 = vmul.f32 %v2081, %v2081
        %v2237 = vmul.f32 %v2086, %v2086
        %v2238 = vmul.f32 %v2091, %v2091
        %v2239 = vmul.f32 %v2096, %v2096
        %v2240 = vmul.f32 %v2101, %v2101
        %v2241 = vmul.f32 %v2106, %v2106
        %v2242 = vmul.f32 %v2111, %v2111
        %v2243 = vmul.f32 %v2116, %v2116
        %v2244 = vmul.f32 %v2121, %v2121
        %v2245 = vmul.f32 %v2126, %v2126
        %v2246 = vmul.f32 %v2131, %v2131
        %v2247 = vmul.f32 %v2136, %v2136
        %v2248 = vmul.f32 %v2141, %v2141
        %v2249 = vmul.f32 %v2146, %v2146
        %v2250 = vsel %vm331, %v2218, 0.0
        %v2251 = vsel %vm331, %v2219, 0.0
        %v2252 = vadd.f32 %v2250, %v2251
        %v2253 = vsel %vm331, %v2220, 0.0
        %v2254 = vadd.f32 %v2252, %v2253
        %v2255 = vsel %vm331, %v2221, 0.0
        %v2256 = vadd.f32 %v2254, %v2255
        %v2257 = vsel %vm331, %v2222, 0.0
        %v2258 = vadd.f32 %v2256, %v2257
        %v2259 = vsel %vm331, %v2223, 0.0
        %v2260 = vadd.f32 %v2258, %v2259
        %v2261 = vsel %vm331, %v2224, 0.0
        %v2262 = vadd.f32 %v2260, %v2261
        %v2263 = vsel %vm331, %v2225, 0.0
        %v2264 = vadd.f32 %v2262, %v2263
        %v2265 = vsel %vm331, %v2226, 0.0
        %v2266 = vadd.f32 %v2264, %v2265
        %v2267 = vsel %vm331, %v2227, 0.0
        %v2268 = vadd.f32 %v2266, %v2267
        %v2269 = vsel %vm331, %v2228, 0.0
        %v2270 = vadd.f32 %v2268, %v2269
        %v2271 = vsel %vm331, %v2229, 0.0
        %v2272 = vadd.f32 %v2270, %v2271
        %v2273 = vsel %vm331, %v2230, 0.0
        %v2274 = vadd.f32 %v2272, %v2273
        %v2275 = vsel %vm331, %v2231, 0.0
        %v2276 = vadd.f32 %v2274, %v2275
        %v2277 = vsel %vm331, %v2232, 0.0
        %v2278 = vadd.f32 %v2276, %v2277
        %v2279 = vsel %vm331, %v2233, 0.0
        %v2280 = vadd.f32 %v2278, %v2279
        %v2281 = vsel %vm331, %v2234, 0.0
        %v2282 = vadd.f32 %v2280, %v2281
        %v2283 = vsel %vm331, %v2235, 0.0
        %v2284 = vadd.f32 %v2282, %v2283
        %v2285 = vsel %vm331, %v2236, 0.0
        %v2286 = vadd.f32 %v2284, %v2285
        %v2287 = vsel %vm331, %v2237, 0.0
        %v2288 = vadd.f32 %v2286, %v2287
        %v2289 = vsel %vm331, %v2238, 0.0
        %v2290 = vadd.f32 %v2288, %v2289
        %v2291 = vsel %vm331, %v2239, 0.0
        %v2292 = vadd.f32 %v2290, %v2291
        %v2293 = vsel %vm331, %v2240, 0.0
        %v2294 = vadd.f32 %v2292, %v2293
        %v2295 = vsel %vm331, %v2241, 0.0
        %v2296 = vadd.f32 %v2294, %v2295
        %v2297 = vsel %vm331, %v2242, 0.0
        %v2298 = vadd.f32 %v2296, %v2297
        %v2299 = vsel %vm331, %v2243, 0.0
        %v2300 = vadd.f32 %v2298, %v2299
        %v2301 = vsel %vm331, %v2244, 0.0
        %v2302 = vadd.f32 %v2300, %v2301
        %v2303 = vsel %vm331, %v2245, 0.0
        %v2304 = vadd.f32 %v2302, %v2303
        %v2305 = vsel %vm331, %v2246, 0.0
        %v2306 = vadd.f32 %v2304, %v2305
        %v2307 = vsel %vm331, %v2247, 0.0
        %v2308 = vadd.f32 %v2306, %v2307
        %v2309 = vsel %vm331, %v2248, 0.0
        %v2310 = vadd.f32 %v2308, %v2309
        %v2311 = vsel %vm331, %v2249, 0.0
        %v2312 = vadd.f32 %v2310, %v2311
        %v2313 = vrot.slane %v2312, 4
        %v2314 = vadd.f32 %v2312, %v2313
        %v2315 = vrot.slane %v2314, 2
        %v2316 = vadd.f32 %v2314, %v2315
        %v2317 = vrot.slane %v2316, 1
        %v2318 = vadd.f32 %v2316, %v2317
        %v2319 = vmul.f32 %v2217, 0.00390625
        %v2320 = vmul.f32 %v2318, 0.00390625
        %v2321 = vmul.f32 %v2319, %v2319
        %v2322 = vsub.f32 %v2320, %v2321
        %v2323 = vmax.f32 %v2322, 0.0
        %v2324 = vadd.f32 %v2323, 1e-05
        %v2325 = vrsqrt.pop %v2324
        %v2326 = vld [vmem:[%s3] sm:$0x1]
        %v2327 = vmul.f32 %v2325, %v2326
        %v2328 = vld [vmem:[%s4] sm:$0x1]
        %v2329 = vmul.f32 %v2319, %v2327
        %v2330 = vsub.f32 %v2328, %v2329
        %v2331 = vlaneseq
        %v2332 = vshrl.u32 %v2331, 7
        %v2333 = vsub.s32 0, %v2332
        %v2334 = vrot.slane %v2327, %v2333
        %v2335 = vmul.f32 %v1991, %v2334
        %v2336 = vmul.f32 %v1996, %v2334
        %v2337 = vmul.f32 %v2001, %v2334
        %v2338 = vmul.f32 %v2006, %v2334
        %v2339 = vmul.f32 %v2011, %v2334
        %v2340 = vmul.f32 %v2016, %v2334
        %v2341 = vmul.f32 %v2021, %v2334
        %v2342 = vmul.f32 %v2026, %v2334
        %v2343 = vmul.f32 %v2031, %v2334
        %v2344 = vmul.f32 %v2036, %v2334
        %v2345 = vmul.f32 %v2041, %v2334
        %v2346 = vmul.f32 %v2046, %v2334
        %v2347 = vmul.f32 %v2051, %v2334
        %v2348 = vmul.f32 %v2056, %v2334
        %v2349 = vmul.f32 %v2061, %v2334
        %v2350 = vmul.f32 %v2066, %v2334
        %v2351 = vmul.f32 %v2071, %v2334
        %v2352 = vmul.f32 %v2076, %v2334
        %v2353 = vmul.f32 %v2081, %v2334
        %v2354 = vmul.f32 %v2086, %v2334
        %v2355 = vmul.f32 %v2091, %v2334
        %v2356 = vmul.f32 %v2096, %v2334
        %v2357 = vmul.f32 %v2101, %v2334
        %v2358 = vmul.f32 %v2106, %v2334
        %v2359 = vmul.f32 %v2111, %v2334
        %v2360 = vmul.f32 %v2116, %v2334
        %v2361 = vmul.f32 %v2121, %v2334
        %v2362 = vmul.f32 %v2126, %v2334
        %v2363 = vmul.f32 %v2131, %v2334
        %v2364 = vmul.f32 %v2136, %v2334
        %v2365 = vmul.f32 %v2141, %v2334
        %v2366 = vmul.f32 %v2146, %v2334
        %v2368 = vlaneseq
        %v2369 = vshrl.u32 %v2368, 7
        %v2370 = vsub.s32 0, %v2369
        %v2371 = vrot.slane %v2330, %v2370
        %v2373 = vadd.f32 %v2335, %v2371
        %v2374 = vadd.f32 %v2336, %v2371
        %v2375 = vadd.f32 %v2337, %v2371
        %v2376 = vadd.f32 %v2338, %v2371
        %v2377 = vadd.f32 %v2339, %v2371
        %v2378 = vadd.f32 %v2340, %v2371
        %v2379 = vadd.f32 %v2341, %v2371
        %v2380 = vadd.f32 %v2342, %v2371
        %v2381 = vadd.f32 %v2343, %v2371
        %v2382 = vadd.f32 %v2344, %v2371
        %v2383 = vadd.f32 %v2345, %v2371
        %v2384 = vadd.f32 %v2346, %v2371
        %v2385 = vadd.f32 %v2347, %v2371
        %v2386 = vadd.f32 %v2348, %v2371
        %v2387 = vadd.f32 %v2349, %v2371
        %v2388 = vadd.f32 %v2350, %v2371
        %v2389 = vadd.f32 %v2351, %v2371
        %v2390 = vadd.f32 %v2352, %v2371
        %v2391 = vadd.f32 %v2353, %v2371
        %v2392 = vadd.f32 %v2354, %v2371
        %v2393 = vadd.f32 %v2355, %v2371
        %v2394 = vadd.f32 %v2356, %v2371
        %v2395 = vadd.f32 %v2357, %v2371
        %v2396 = vadd.f32 %v2358, %v2371
        %v2397 = vadd.f32 %v2359, %v2371
        %v2398 = vadd.f32 %v2360, %v2371
        %v2399 = vadd.f32 %v2361, %v2371
        %v2400 = vadd.f32 %v2362, %v2371
        %v2401 = vadd.f32 %v2363, %v2371
        %v2402 = vadd.f32 %v2364, %v2371
        %v2403 = vadd.f32 %v2365, %v2371
        %v2404 = vadd.f32 %v2366, %v2371
        %v2405 = vmax.f32 %v2373, 0.0
        %v2406 = vmax.f32 %v2374, 0.0
        %v2407 = vmax.f32 %v2375, 0.0
        %v2408 = vmax.f32 %v2376, 0.0
        %v2409 = vmax.f32 %v2377, 0.0
        %v2410 = vmax.f32 %v2378, 0.0
        %v2411 = vmax.f32 %v2379, 0.0
        %v2412 = vmax.f32 %v2380, 0.0
        %v2413 = vmax.f32 %v2381, 0.0
        %v2414 = vmax.f32 %v2382, 0.0
        %v2415 = vmax.f32 %v2383, 0.0
        %v2416 = vmax.f32 %v2384, 0.0
        %v2417 = vmax.f32 %v2385, 0.0
        %v2418 = vmax.f32 %v2386, 0.0
        %v2419 = vmax.f32 %v2387, 0.0
        %v2420 = vmax.f32 %v2388, 0.0
        %v2421 = vmax.f32 %v2389, 0.0
        %v2422 = vmax.f32 %v2390, 0.0
        %v2423 = vmax.f32 %v2391, 0.0
        %v2424 = vmax.f32 %v2392, 0.0
        %v2425 = vmax.f32 %v2393, 0.0
        %v2426 = vmax.f32 %v2394, 0.0
        %v2427 = vmax.f32 %v2395, 0.0
        %v2428 = vmax.f32 %v2396, 0.0
        %v2429 = vmax.f32 %v2397, 0.0
        %v2430 = vmax.f32 %v2398, 0.0
        %v2431 = vmax.f32 %v2399, 0.0
        %v2432 = vmax.f32 %v2400, 0.0
        %v2433 = vmax.f32 %v2401, 0.0
        %v2434 = vmax.f32 %v2402, 0.0
        %v2435 = vmax.f32 %v2403, 0.0
        %v2436 = vmax.f32 %v2404, 0.0
        %2437 = vst.msk [vmem:[%s483 + $0x1] sm:$0xff] %vm331, %v2405
        %2438 = vst.msk [vmem:[%s483 + $0x9] sm:$0xff] %vm331, %v2406
        %2439 = vst.msk [vmem:[%s483 + $0x19] sm:$0xff] %vm331, %v2407
        %2440 = vst.msk [vmem:[%s483 + $0x21] sm:$0xff] %vm331, %v2408
        %2441 = vst.msk [vmem:[%s483 + $0x31] sm:$0xff] %vm331, %v2409
        %2442 = vst.msk [vmem:[%s483 + $0x39] sm:$0xff] %vm331, %v2410
        %2443 = vst.msk [vmem:[%s483 + $0x49] sm:$0xff] %vm331, %v2411
        %2444 = vst.msk [vmem:[%s483 + $0x51] sm:$0xff] %vm331, %v2412
        %2445 = vst.msk [vmem:[%s483 + $0x61] sm:$0xff] %vm331, %v2413
        %2446 = vst.msk [vmem:[%s483 + $0x69] sm:$0xff] %vm331, %v2414
        %2447 = vst.msk [vmem:[%s483 + $0x79] sm:$0xff] %vm331, %v2415
        %2448 = vst.msk [vmem:[%s483 + $0x81] sm:$0xff] %vm331, %v2416
        %2449 = vst.msk [vmem:[%s483 + $0x91] sm:$0xff] %vm331, %v2417
        %2450 = vst.msk [vmem:[%s483 + $0x99] sm:$0xff] %vm331, %v2418
        %2451 = vst.msk [vmem:[%s483 + $0xa9] sm:$0xff] %vm331, %v2419
        %2452 = vst.msk [vmem:[%s483 + $0xb1] sm:$0xff] %vm331, %v2420
        %2453 = vst.msk [vmem:[%s483 + $0xc1] sm:$0xff] %vm331, %v2421
        %2454 = vst.msk [vmem:[%s483 + $0xc9] sm:$0xff] %vm331, %v2422
        %2455 = vst.msk [vmem:[%s483 + $0xd9] sm:$0xff] %vm331, %v2423
        %2456 = vst.msk [vmem:[%s483 + $0xe1] sm:$0xff] %vm331, %v2424
        %2457 = vst.msk [vmem:[%s483 + $0xf1] sm:$0xff] %vm331, %v2425
        %2458 = vst.msk [vmem:[%s483 + $0xf9] sm:$0xff] %vm331, %v2426
        %2459 = vst.msk [vmem:[%s483 + $0x109] sm:$0xff] %vm331, %v2427
        %2460 = vst.msk [vmem:[%s483 + $0x111] sm:$0xff] %vm331, %v2428
        %2461 = vst.msk [vmem:[%s483 + $0x121] sm:$0xff] %vm331, %v2429
        %2462 = vst.msk [vmem:[%s483 + $0x129] sm:$0xff] %vm331, %v2430
        %2463 = vst.msk [vmem:[%s483 + $0x139] sm:$0xff] %vm331, %v2431
        %2464 = vst.msk [vmem:[%s483 + $0x141] sm:$0xff] %vm331, %v2432
        %2465 = vst.msk [vmem:[%s483 + $0x151] sm:$0xff] %vm331, %v2433
        %2466 = vst.msk [vmem:[%s483 + $0x159] sm:$0xff] %vm331, %v2434
        %2467 = vst.msk [vmem:[%s483 + $0x169] sm:$0xff] %vm331, %v2435
        %2468 = vst.msk [vmem:[%s483 + $0x171] sm:$0xff] %vm331, %v2436
        %v2469 = vld [vmem:[#allocation2] sm:$0xff]
        %v2470 = vld [vmem:[#allocation2 + $0x8] sm:$0xff]
        %v2471 = vld [vmem:[#allocation2 + $0x18] sm:$0xff]
        %v2472 = vld [vmem:[#allocation2 + $0x20] sm:$0xff]
        %v2473 = vld [vmem:[#allocation2 + $0x30] sm:$0xff]
        %v2474 = vld [vmem:[#allocation2 + $0x38] sm:$0xff]
        %v2475 = vld [vmem:[#allocation2 + $0x48] sm:$0xff]
        %v2476 = vld [vmem:[#allocation2 + $0x50] sm:$0xff]
        %v2477 = vld [vmem:[#allocation2 + $0x60] sm:$0xff]
        %v2478 = vld [vmem:[#allocation2 + $0x68] sm:$0xff]
        %v2479 = vld [vmem:[#allocation2 + $0x78] sm:$0xff]
        %v2480 = vld [vmem:[#allocation2 + $0x80] sm:$0xff]
        %v2481 = vld [vmem:[#allocation2 + $0x90] sm:$0xff]
        %v2482 = vld [vmem:[#allocation2 + $0x98] sm:$0xff]
        %v2483 = vld [vmem:[#allocation2 + $0xa8] sm:$0xff]
        %v2484 = vld [vmem:[#allocation2 + $0xb0] sm:$0xff]
        %v2485 = vld [vmem:[#allocation2 + $0xc0] sm:$0xff]
        %v2486 = vld [vmem:[#allocation2 + $0xc8] sm:$0xff]
        %v2487 = vld [vmem:[#allocation2 + $0xd8] sm:$0xff]
        %v2488 = vld [vmem:[#allocation2 + $0xe0] sm:$0xff]
        %v2489 = vld [vmem:[#allocation2 + $0xf0] sm:$0xff]
        %v2490 = vld [vmem:[#allocation2 + $0xf8] sm:$0xff]
        %v2491 = vld [vmem:[#allocation2 + $0x108] sm:$0xff]
        %v2492 = vld [vmem:[#allocation2 + $0x110] sm:$0xff]
        %v2493 = vld [vmem:[#allocation2 + $0x120] sm:$0xff]
        %v2494 = vld [vmem:[#allocation2 + $0x128] sm:$0xff]
        %v2495 = vld [vmem:[#allocation2 + $0x138] sm:$0xff]
        %v2496 = vld [vmem:[#allocation2 + $0x140] sm:$0xff]
        %v2497 = vld [vmem:[#allocation2 + $0x150] sm:$0xff]
        %v2498 = vld [vmem:[#allocation2 + $0x158] sm:$0xff]
        %v2499 = vld [vmem:[#allocation2 + $0x168] sm:$0xff]
        %v2500 = vld [vmem:[#allocation2 + $0x170] sm:$0xff]
        %v2501 = vld [vmem:[#allocation2 + $0x1] sm:$0xff]
        %v2502 = vld [vmem:[#allocation2 + $0x9] sm:$0xff]
        %v2503 = vld [vmem:[#allocation2 + $0x19] sm:$0xff]
        %v2504 = vld [vmem:[#allocation2 + $0x21] sm:$0xff]
        %v2505 = vld [vmem:[#allocation2 + $0x31] sm:$0xff]
        %v2506 = vld [vmem:[#allocation2 + $0x39] sm:$0xff]
        %v2507 = vld [vmem:[#allocation2 + $0x49] sm:$0xff]
        %v2508 = vld [vmem:[#allocation2 + $0x51] sm:$0xff]
        %v2509 = vld [vmem:[#allocation2 + $0x61] sm:$0xff]
        %v2510 = vld [vmem:[#allocation2 + $0x69] sm:$0xff]
        %v2511 = vld [vmem:[#allocation2 + $0x79] sm:$0xff]
        %v2512 = vld [vmem:[#allocation2 + $0x81] sm:$0xff]
        %v2513 = vld [vmem:[#allocation2 + $0x91] sm:$0xff]
        %v2514 = vld [vmem:[#allocation2 + $0x99] sm:$0xff]
        %v2515 = vld [vmem:[#allocation2 + $0xa9] sm:$0xff]
        %v2516 = vld [vmem:[#allocation2 + $0xb1] sm:$0xff]
        %v2517 = vld [vmem:[#allocation2 + $0xc1] sm:$0xff]
        %v2518 = vld [vmem:[#allocation2 + $0xc9] sm:$0xff]
        %v2519 = vld [vmem:[#allocation2 + $0xd9] sm:$0xff]
        %v2520 = vld [vmem:[#allocation2 + $0xe1] sm:$0xff]
        %v2521 = vld [vmem:[#allocation2 + $0xf1] sm:$0xff]
        %v2522 = vld [vmem:[#allocation2 + $0xf9] sm:$0xff]
        %v2523 = vld [vmem:[#allocation2 + $0x109] sm:$0xff]
        %v2524 = vld [vmem:[#allocation2 + $0x111] sm:$0xff]
        %v2525 = vld [vmem:[#allocation2 + $0x121] sm:$0xff]
        %v2526 = vld [vmem:[#allocation2 + $0x129] sm:$0xff]
        %v2527 = vld [vmem:[#allocation2 + $0x139] sm:$0xff]
        %v2528 = vld [vmem:[#allocation2 + $0x141] sm:$0xff]
        %v2529 = vld [vmem:[#allocation2 + $0x151] sm:$0xff]
        %v2530 = vld [vmem:[#allocation2 + $0x159] sm:$0xff]
        %v2531 = vld [vmem:[#allocation2 + $0x169] sm:$0xff]
        %v2532 = vld [vmem:[#allocation2 + $0x171] sm:$0xff]
        %v2533 = vld [vmem:[#allocation2 + $0x2] sm:$0xff]
        %v2534 = vld [vmem:[#allocation2 + $0xa] sm:$0xff]
        %v2535 = vld [vmem:[#allocation2 + $0x1a] sm:$0xff]
        %v2536 = vld [vmem:[#allocation2 + $0x22] sm:$0xff]
        %v2537 = vld [vmem:[#allocation2 + $0x32] sm:$0xff]
        %v2538 = vld [vmem:[#allocation2 + $0x3a] sm:$0xff]
        %v2539 = vld [vmem:[#allocation2 + $0x4a] sm:$0xff]
        %v2540 = vld [vmem:[#allocation2 + $0x52] sm:$0xff]
        %v2541 = vld [vmem:[#allocation2 + $0x62] sm:$0xff]
        %v2542 = vld [vmem:[#allocation2 + $0x6a] sm:$0xff]
        %v2543 = vld [vmem:[#allocation2 + $0x7a] sm:$0xff]
        %v2544 = vld [vmem:[#allocation2 + $0x82] sm:$0xff]
        %v2545 = vld [vmem:[#allocation2 + $0x92] sm:$0xff]
        %v2546 = vld [vmem:[#allocation2 + $0x9a] sm:$0xff]
        %v2547 = vld [vmem:[#allocation2 + $0xaa] sm:$0xff]
        %v2548 = vld [vmem:[#allocation2 + $0xb2] sm:$0xff]
        %v2549 = vld [vmem:[#allocation2 + $0xc2] sm:$0xff]
        %v2550 = vld [vmem:[#allocation2 + $0xca] sm:$0xff]
        %v2551 = vld [vmem:[#allocation2 + $0xda] sm:$0xff]
        %v2552 = vld [vmem:[#allocation2 + $0xe2] sm:$0xff]
        %v2553 = vld [vmem:[#allocation2 + $0xf2] sm:$0xff]
        %v2554 = vld [vmem:[#allocation2 + $0xfa] sm:$0xff]
        %v2555 = vld [vmem:[#allocation2 + $0x10a] sm:$0xff]
        %v2556 = vld [vmem:[#allocation2 + $0x112] sm:$0xff]
        %v2557 = vld [vmem:[#allocation2 + $0x122] sm:$0xff]
        %v2558 = vld [vmem:[#allocation2 + $0x12a] sm:$0xff]
        %v2559 = vld [vmem:[#allocation2 + $0x13a] sm:$0xff]
        %v2560 = vld [vmem:[#allocation2 + $0x142] sm:$0xff]
        %v2561 = vld [vmem:[#allocation2 + $0x152] sm:$0xff]
        %v2562 = vld [vmem:[#allocation2 + $0x15a] sm:$0xff]
        %v2563 = vld [vmem:[#allocation2 + $0x16a] sm:$0xff]
        %v2564 = vld [vmem:[#allocation2 + $0x172] sm:$0xff]
        %v2565 = vld [vmem:[%s483] sm:$0xff]
        %v2566 = vld [vmem:[%s483 + $0x8] sm:$0xff]
        %v2567 = vld [vmem:[%s483 + $0x18] sm:$0xff]
        %v2568 = vld [vmem:[%s483 + $0x20] sm:$0xff]
        %v2569 = vld [vmem:[%s483 + $0x30] sm:$0xff]
        %v2570 = vld [vmem:[%s483 + $0x38] sm:$0xff]
        %v2571 = vld [vmem:[%s483 + $0x48] sm:$0xff]
        %v2572 = vld [vmem:[%s483 + $0x50] sm:$0xff]
        %v2573 = vld [vmem:[%s483 + $0x60] sm:$0xff]
        %v2574 = vld [vmem:[%s483 + $0x68] sm:$0xff]
        %v2575 = vld [vmem:[%s483 + $0x78] sm:$0xff]
        %v2576 = vld [vmem:[%s483 + $0x80] sm:$0xff]
        %v2577 = vld [vmem:[%s483 + $0x90] sm:$0xff]
        %v2578 = vld [vmem:[%s483 + $0x98] sm:$0xff]
        %v2579 = vld [vmem:[%s483 + $0xa8] sm:$0xff]
        %v2580 = vld [vmem:[%s483 + $0xb0] sm:$0xff]
        %v2581 = vld [vmem:[%s483 + $0xc0] sm:$0xff]
        %v2582 = vld [vmem:[%s483 + $0xc8] sm:$0xff]
        %v2583 = vld [vmem:[%s483 + $0xd8] sm:$0xff]
        %v2584 = vld [vmem:[%s483 + $0xe0] sm:$0xff]
        %v2585 = vld [vmem:[%s483 + $0xf0] sm:$0xff]
        %v2586 = vld [vmem:[%s483 + $0xf8] sm:$0xff]
        %v2587 = vld [vmem:[%s483 + $0x108] sm:$0xff]
        %v2588 = vld [vmem:[%s483 + $0x110] sm:$0xff]
        %v2589 = vld [vmem:[%s483 + $0x120] sm:$0xff]
        %v2590 = vld [vmem:[%s483 + $0x128] sm:$0xff]
        %v2591 = vld [vmem:[%s483 + $0x138] sm:$0xff]
        %v2592 = vld [vmem:[%s483 + $0x140] sm:$0xff]
        %v2593 = vld [vmem:[%s483 + $0x150] sm:$0xff]
        %v2594 = vld [vmem:[%s483 + $0x158] sm:$0xff]
        %v2595 = vld [vmem:[%s483 + $0x168] sm:$0xff]
        %v2596 = vld [vmem:[%s483 + $0x170] sm:$0xff]
        %v2597 = vld [vmem:[%s483 + $0x1] sm:$0xff]
        %v2598 = vld [vmem:[%s483 + $0x9] sm:$0xff]
        %v2599 = vld [vmem:[%s483 + $0x19] sm:$0xff]
        %v2600 = vld [vmem:[%s483 + $0x21] sm:$0xff]
        %v2601 = vld [vmem:[%s483 + $0x31] sm:$0xff]
        %v2602 = vld [vmem:[%s483 + $0x39] sm:$0xff]
        %v2603 = vld [vmem:[%s483 + $0x49] sm:$0xff]
        %v2604 = vld [vmem:[%s483 + $0x51] sm:$0xff]
        %v2605 = vld [vmem:[%s483 + $0x61] sm:$0xff]
        %v2606 = vld [vmem:[%s483 + $0x69] sm:$0xff]
        %v2607 = vld [vmem:[%s483 + $0x79] sm:$0xff]
        %v2608 = vld [vmem:[%s483 + $0x81] sm:$0xff]
        %v2609 = vld [vmem:[%s483 + $0x91] sm:$0xff]
        %v2610 = vld [vmem:[%s483 + $0x99] sm:$0xff]
        %v2611 = vld [vmem:[%s483 + $0xa9] sm:$0xff]
        %v2612 = vld [vmem:[%s483 + $0xb1] sm:$0xff]
        %v2613 = vld [vmem:[%s483 + $0xc1] sm:$0xff]
        %v2614 = vld [vmem:[%s483 + $0xc9] sm:$0xff]
        %v2615 = vld [vmem:[%s483 + $0xd9] sm:$0xff]
        %v2616 = vld [vmem:[%s483 + $0xe1] sm:$0xff]
        %v2617 = vld [vmem:[%s483 + $0xf1] sm:$0xff]
        %v2618 = vld [vmem:[%s483 + $0xf9] sm:$0xff]
        %v2619 = vld [vmem:[%s483 + $0x109] sm:$0xff]
        %v2620 = vld [vmem:[%s483 + $0x111] sm:$0xff]
        %v2621 = vld [vmem:[%s483 + $0x121] sm:$0xff]
        %v2622 = vld [vmem:[%s483 + $0x129] sm:$0xff]
        %v2623 = vld [vmem:[%s483 + $0x139] sm:$0xff]
        %v2624 = vld [vmem:[%s483 + $0x141] sm:$0xff]
        %v2625 = vld [vmem:[%s483 + $0x151] sm:$0xff]
        %v2626 = vld [vmem:[%s483 + $0x159] sm:$0xff]
        %v2627 = vld [vmem:[%s483 + $0x169] sm:$0xff]
        %v2628 = vld [vmem:[%s483 + $0x171] sm:$0xff]
        %v2629 = vld [vmem:[%s483 + $0x2] sm:$0xff]
        %v2630 = vld [vmem:[%s483 + $0xa] sm:$0xff]
        %v2631 = vld [vmem:[%s483 + $0x1a] sm:$0xff]
        %v2632 = vld [vmem:[%s483 + $0x22] sm:$0xff]
        %v2633 = vld [vmem:[%s483 + $0x32] sm:$0xff]
        %v2634 = vld [vmem:[%s483 + $0x3a] sm:$0xff]
        %v2635 = vld [vmem:[%s483 + $0x4a] sm:$0xff]
        %v2636 = vld [vmem:[%s483 + $0x52] sm:$0xff]
        %v2637 = vld [vmem:[%s483 + $0x62] sm:$0xff]
        %v2638 = vld [vmem:[%s483 + $0x6a] sm:$0xff]
        %v2639 = vld [vmem:[%s483 + $0x7a] sm:$0xff]
        %v2640 = vld [vmem:[%s483 + $0x82] sm:$0xff]
        %v2641 = vld [vmem:[%s483 + $0x92] sm:$0xff]
        %v2642 = vld [vmem:[%s483 + $0x9a] sm:$0xff]
        %v2643 = vld [vmem:[%s483 + $0xaa] sm:$0xff]
        %v2644 = vld [vmem:[%s483 + $0xb2] sm:$0xff]
        %v2645 = vld [vmem:[%s483 + $0xc2] sm:$0xff]
        %v2646 = vld [vmem:[%s483 + $0xca] sm:$0xff]
        %v2647 = vld [vmem:[%s483 + $0xda] sm:$0xff]
        %v2648 = vld [vmem:[%s483 + $0xe2] sm:$0xff]
        %v2649 = vld [vmem:[%s483 + $0xf2] sm:$0xff]
        %v2650 = vld [vmem:[%s483 + $0xfa] sm:$0xff]
        %v2651 = vld [vmem:[%s483 + $0x10a] sm:$0xff]
        %v2652 = vld [vmem:[%s483 + $0x112] sm:$0xff]
        %v2653 = vld [vmem:[%s483 + $0x122] sm:$0xff]
        %v2654 = vld [vmem:[%s483 + $0x12a] sm:$0xff]
        %v2655 = vld [vmem:[%s483 + $0x13a] sm:$0xff]
        %v2656 = vld [vmem:[%s483 + $0x142] sm:$0xff]
        %v2657 = vld [vmem:[%s483 + $0x152] sm:$0xff]
        %v2658 = vld [vmem:[%s483 + $0x15a] sm:$0xff]
        %v2659 = vld [vmem:[%s483 + $0x16a] sm:$0xff]
        %v2660 = vld [vmem:[%s483 + $0x172] sm:$0xff]
        %v2661 = vld [vmem:[%s580] sm:$0xff]
        %v2662 = vld [vmem:[%s580 + $0x8] sm:$0xff]
        %v2663 = vld [vmem:[%s580 + $0x18] sm:$0xff]
        %v2664 = vld [vmem:[%s580 + $0x20] sm:$0xff]
        %v2665 = vld [vmem:[%s580 + $0x30] sm:$0xff]
        %v2666 = vld [vmem:[%s580 + $0x38] sm:$0xff]
        %v2667 = vld [vmem:[%s580 + $0x48] sm:$0xff]
        %v2668 = vld [vmem:[%s580 + $0x50] sm:$0xff]
        %v2669 = vld [vmem:[%s580 + $0x60] sm:$0xff]
        %v2670 = vld [vmem:[%s580 + $0x68] sm:$0xff]
        %v2671 = vld [vmem:[%s580 + $0x78] sm:$0xff]
        %v2672 = vld [vmem:[%s580 + $0x80] sm:$0xff]
        %v2673 = vld [vmem:[%s580 + $0x90] sm:$0xff]
        %v2674 = vld [vmem:[%s580 + $0x98] sm:$0xff]
        %v2675 = vld [vmem:[%s580 + $0xa8] sm:$0xff]
        %v2676 = vld [vmem:[%s580 + $0xb0] sm:$0xff]
        %v2677 = vld [vmem:[%s580 + $0xc0] sm:$0xff]
        %v2678 = vld [vmem:[%s580 + $0xc8] sm:$0xff]
        %v2679 = vld [vmem:[%s580 + $0xd8] sm:$0xff]
        %v2680 = vld [vmem:[%s580 + $0xe0] sm:$0xff]
        %v2681 = vld [vmem:[%s580 + $0xf0] sm:$0xff]
        %v2682 = vld [vmem:[%s580 + $0xf8] sm:$0xff]
        %v2683 = vld [vmem:[%s580 + $0x108] sm:$0xff]
        %v2684 = vld [vmem:[%s580 + $0x110] sm:$0xff]
        %v2685 = vld [vmem:[%s580 + $0x120] sm:$0xff]
        %v2686 = vld [vmem:[%s580 + $0x128] sm:$0xff]
        %v2687 = vld [vmem:[%s580 + $0x138] sm:$0xff]
        %v2688 = vld [vmem:[%s580 + $0x140] sm:$0xff]
        %v2689 = vld [vmem:[%s580 + $0x150] sm:$0xff]
        %v2690 = vld [vmem:[%s580 + $0x158] sm:$0xff]
        %v2691 = vld [vmem:[%s580 + $0x168] sm:$0xff]
        %v2692 = vld [vmem:[%s580 + $0x170] sm:$0xff]
        %v2693 = vld [vmem:[%s580 + $0x1] sm:$0xff]
        %v2694 = vld [vmem:[%s580 + $0x9] sm:$0xff]
        %v2695 = vld [vmem:[%s580 + $0x19] sm:$0xff]
        %v2696 = vld [vmem:[%s580 + $0x21] sm:$0xff]
        %v2697 = vld [vmem:[%s580 + $0x31] sm:$0xff]
        %v2698 = vld [vmem:[%s580 + $0x39] sm:$0xff]
        %v2699 = vld [vmem:[%s580 + $0x49] sm:$0xff]
        %v2700 = vld [vmem:[%s580 + $0x51] sm:$0xff]
        %v2701 = vld [vmem:[%s580 + $0x61] sm:$0xff]
        %v2702 = vld [vmem:[%s580 + $0x69] sm:$0xff]
        %v2703 = vld [vmem:[%s580 + $0x79] sm:$0xff]
        %v2704 = vld [vmem:[%s580 + $0x81] sm:$0xff]
        %v2705 = vld [vmem:[%s580 + $0x91] sm:$0xff]
        %v2706 = vld [vmem:[%s580 + $0x99] sm:$0xff]
        %v2707 = vld [vmem:[%s580 + $0xa9] sm:$0xff]
        %v2708 = vld [vmem:[%s580 + $0xb1] sm:$0xff]
        %v2709 = vld [vmem:[%s580 + $0xc1] sm:$0xff]
        %v2710 = vld [vmem:[%s580 + $0xc9] sm:$0xff]
        %v2711 = vld [vmem:[%s580 + $0xd9] sm:$0xff]
        %v2712 = vld [vmem:[%s580 + $0xe1] sm:$0xff]
        %v2713 = vld [vmem:[%s580 + $0xf1] sm:$0xff]
        %v2714 = vld [vmem:[%s580 + $0xf9] sm:$0xff]
        %v2715 = vld [vmem:[%s580 + $0x109] sm:$0xff]
        %v2716 = vld [vmem:[%s580 + $0x111] sm:$0xff]
        %v2717 = vld [vmem:[%s580 + $0x121] sm:$0xff]
        %v2718 = vld [vmem:[%s580 + $0x129] sm:$0xff]
        %v2719 = vld [vmem:[%s580 + $0x139] sm:$0xff]
        %v2720 = vld [vmem:[%s580 + $0x141] sm:$0xff]
        %v2721 = vld [vmem:[%s580 + $0x151] sm:$0xff]
        %v2722 = vld [vmem:[%s580 + $0x159] sm:$0xff]
        %v2723 = vld [vmem:[%s580 + $0x169] sm:$0xff]
        %v2724 = vld [vmem:[%s580 + $0x171] sm:$0xff]
        %v2725 = vld [vmem:[%s580 + $0x2] sm:$0xff]
        %v2726 = vld [vmem:[%s580 + $0xa] sm:$0xff]
        %v2727 = vld [vmem:[%s580 + $0x1a] sm:$0xff]
        %v2728 = vld [vmem:[%s580 + $0x22] sm:$0xff]
        %v2729 = vld [vmem:[%s580 + $0x32] sm:$0xff]
        %v2730 = vld [vmem:[%s580 + $0x3a] sm:$0xff]
        %v2731 = vld [vmem:[%s580 + $0x4a] sm:$0xff]
        %v2732 = vld [vmem:[%s580 + $0x52] sm:$0xff]
        %v2733 = vld [vmem:[%s580 + $0x62] sm:$0xff]
        %v2734 = vld [vmem:[%s580 + $0x6a] sm:$0xff]
        %v2735 = vld [vmem:[%s580 + $0x7a] sm:$0xff]
        %v2736 = vld [vmem:[%s580 + $0x82] sm:$0xff]
        %v2737 = vld [vmem:[%s580 + $0x92] sm:$0xff]
        %v2738 = vld [vmem:[%s580 + $0x9a] sm:$0xff]
        %v2739 = vld [vmem:[%s580 + $0xaa] sm:$0xff]
        %v2740 = vld [vmem:[%s580 + $0xb2] sm:$0xff]
        %v2741 = vld [vmem:[%s580 + $0xc2] sm:$0xff]
        %v2742 = vld [vmem:[%s580 + $0xca] sm:$0xff]
        %v2743 = vld [vmem:[%s580 + $0xda] sm:$0xff]
        %v2744 = vld [vmem:[%s580 + $0xe2] sm:$0xff]
        %v2745 = vld [vmem:[%s580 + $0xf2] sm:$0xff]
        %v2746 = vld [vmem:[%s580 + $0xfa] sm:$0xff]
        %v2747 = vld [vmem:[%s580 + $0x10a] sm:$0xff]
        %v2748 = vld [vmem:[%s580 + $0x112] sm:$0xff]
        %v2749 = vld [vmem:[%s580 + $0x122] sm:$0xff]
        %v2750 = vld [vmem:[%s580 + $0x12a] sm:$0xff]
        %v2751 = vld [vmem:[%s580 + $0x13a] sm:$0xff]
        %v2752 = vld [vmem:[%s580 + $0x142] sm:$0xff]
        %v2753 = vld [vmem:[%s580 + $0x152] sm:$0xff]
        %v2754 = vld [vmem:[%s580 + $0x15a] sm:$0xff]
        %v2755 = vld [vmem:[%s580 + $0x16a] sm:$0xff]
        %v2756 = vld [vmem:[%s580 + $0x172] sm:$0xff]
        %2789 = vrot.lane.b32.xlu0 %v2501, 16
        %v2790 = vpop.permute.xlu0 %2789
        %2791 = vrot.lane.b32.xlu0 %v2502, 16
        %v2792 = vpop.permute.xlu0 %2791
        %2793 = vrot.lane.b32.xlu0 %v2503, 16
        %v2794 = vpop.permute.xlu0 %2793
        %2795 = vrot.lane.b32.xlu0 %v2504, 16
        %v2796 = vpop.permute.xlu0 %2795
        %2797 = vrot.lane.b32.xlu0 %v2505, 16
        %v2798 = vpop.permute.xlu0 %2797
        %2799 = vrot.lane.b32.xlu0 %v2506, 16
        %v2800 = vpop.permute.xlu0 %2799
        %2801 = vrot.lane.b32.xlu0 %v2507, 16
        %v2802 = vpop.permute.xlu0 %2801
        %2803 = vrot.lane.b32.xlu0 %v2508, 16
        %v2804 = vpop.permute.xlu0 %2803
        %2805 = vrot.lane.b32.xlu0 %v2509, 16
        %v2806 = vpop.permute.xlu0 %2805
        %2807 = vrot.lane.b32.xlu0 %v2510, 16
        %v2808 = vpop.permute.xlu0 %2807
        %2809 = vrot.lane.b32.xlu0 %v2511, 16
        %v2810 = vpop.permute.xlu0 %2809
        %2811 = vrot.lane.b32.xlu0 %v2512, 16
        %v2812 = vpop.permute.xlu0 %2811
        %2813 = vrot.lane.b32.xlu0 %v2513, 16
        %v2814 = vpop.permute.xlu0 %2813
        %2815 = vrot.lane.b32.xlu0 %v2514, 16
        %v2816 = vpop.permute.xlu0 %2815
        %2817 = vrot.lane.b32.xlu0 %v2515, 16
        %v2818 = vpop.permute.xlu0 %2817
        %2819 = vrot.lane.b32.xlu0 %v2516, 16
        %v2820 = vpop.permute.xlu0 %2819
        %2821 = vrot.lane.b32.xlu0 %v2517, 16
        %v2822 = vpop.permute.xlu0 %2821
        %2823 = vrot.lane.b32.xlu0 %v2518, 16
        %v2824 = vpop.permute.xlu0 %2823
        %2825 = vrot.lane.b32.xlu0 %v2519, 16
        %v2826 = vpop.permute.xlu0 %2825
        %2827 = vrot.lane.b32.xlu0 %v2520, 16
        %v2828 = vpop.permute.xlu0 %2827
        %2829 = vrot.lane.b32.xlu0 %v2521, 16
        %v2830 = vpop.permute.xlu0 %2829
        %2831 = vrot.lane.b32.xlu0 %v2522, 16
        %v2832 = vpop.permute.xlu0 %2831
        %2833 = vrot.lane.b32.xlu0 %v2523, 16
        %v2834 = vpop.permute.xlu0 %2833
        %2835 = vrot.lane.b32.xlu0 %v2524, 16
        %v2836 = vpop.permute.xlu0 %2835
        %2837 = vrot.lane.b32.xlu0 %v2525, 16
        %v2838 = vpop.permute.xlu0 %2837
        %2839 = vrot.lane.b32.xlu0 %v2526, 16
        %v2840 = vpop.permute.xlu0 %2839
        %2841 = vrot.lane.b32.xlu0 %v2527, 16
        %v2842 = vpop.permute.xlu0 %2841
        %2843 = vrot.lane.b32.xlu0 %v2528, 16
        %v2844 = vpop.permute.xlu0 %2843
        %2845 = vrot.lane.b32.xlu0 %v2529, 16
        %v2846 = vpop.permute.xlu0 %2845
        %2847 = vrot.lane.b32.xlu0 %v2530, 16
        %v2848 = vpop.permute.xlu0 %2847
        %2849 = vrot.lane.b32.xlu0 %v2531, 16
        %v2850 = vpop.permute.xlu0 %2849
        %2851 = vrot.lane.b32.xlu0 %v2532, 16
        %v2852 = vpop.permute.xlu0 %2851
        %2917 = vrot.lane.b32.xlu0 %v2533, 32
        %v2918 = vpop.permute.xlu0 %2917
        %2919 = vrot.lane.b32.xlu0 %v2534, 32
        %v2920 = vpop.permute.xlu0 %2919
        %2921 = vrot.lane.b32.xlu0 %v2535, 32
        %v2922 = vpop.permute.xlu0 %2921
        %2923 = vrot.lane.b32.xlu0 %v2536, 32
        %v2924 = vpop.permute.xlu0 %2923
        %2925 = vrot.lane.b32.xlu0 %v2537, 32
        %v2926 = vpop.permute.xlu0 %2925
        %2927 = vrot.lane.b32.xlu0 %v2538, 32
        %v2928 = vpop.permute.xlu0 %2927
        %2929 = vrot.lane.b32.xlu0 %v2539, 32
        %v2930 = vpop.permute.xlu0 %2929
        %2931 = vrot.lane.b32.xlu0 %v2540, 32
        %v2932 = vpop.permute.xlu0 %2931
        %2933 = vrot.lane.b32.xlu0 %v2541, 32
        %v2934 = vpop.permute.xlu0 %2933
        %2935 = vrot.lane.b32.xlu0 %v2542, 32
        %v2936 = vpop.permute.xlu0 %2935
        %2937 = vrot.lane.b32.xlu0 %v2543, 32
        %v2938 = vpop.permute.xlu0 %2937
        %2939 = vrot.lane.b32.xlu0 %v2544, 32
        %v2940 = vpop.permute.xlu0 %2939
        %2941 = vrot.lane.b32.xlu0 %v2545, 32
        %v2942 = vpop.permute.xlu0 %2941
        %2943 = vrot.lane.b32.xlu0 %v2546, 32
        %v2944 = vpop.permute.xlu0 %2943
        %2945 = vrot.lane.b32.xlu0 %v2547, 32
        %v2946 = vpop.permute.xlu0 %2945
        %2947 = vrot.lane.b32.xlu0 %v2548, 32
        %v2948 = vpop.permute.xlu0 %2947
        %2949 = vrot.lane.b32.xlu0 %v2549, 32
        %v2950 = vpop.permute.xlu0 %2949
        %2951 = vrot.lane.b32.xlu0 %v2550, 32
        %v2952 = vpop.permute.xlu0 %2951
        %2953 = vrot.lane.b32.xlu0 %v2551, 32
        %v2954 = vpop.permute.xlu0 %2953
        %2955 = vrot.lane.b32.xlu0 %v2552, 32
        %v2956 = vpop.permute.xlu0 %2955
        %2957 = vrot.lane.b32.xlu0 %v2553, 32
        %v2958 = vpop.permute.xlu0 %2957
        %2959 = vrot.lane.b32.xlu0 %v2554, 32
        %v2960 = vpop.permute.xlu0 %2959
        %2961 = vrot.lane.b32.xlu0 %v2555, 32
        %v2962 = vpop.permute.xlu0 %2961
        %2963 = vrot.lane.b32.xlu0 %v2556, 32
        %v2964 = vpop.permute.xlu0 %2963
        %2965 = vrot.lane.b32.xlu0 %v2557, 32
        %v2966 = vpop.permute.xlu0 %2965
        %2967 = vrot.lane.b32.xlu0 %v2558, 32
        %v2968 = vpop.permute.xlu0 %2967
        %2969 = vrot.lane.b32.xlu0 %v2559, 32
        %v2970 = vpop.permute.xlu0 %2969
        %2971 = vrot.lane.b32.xlu0 %v2560, 32
        %v2972 = vpop.permute.xlu0 %2971
        %2973 = vrot.lane.b32.xlu0 %v2561, 32
        %v2974 = vpop.permute.xlu0 %2973
        %2975 = vrot.lane.b32.xlu0 %v2562, 32
        %v2976 = vpop.permute.xlu0 %2975
        %2977 = vrot.lane.b32.xlu0 %v2563, 32
        %v2978 = vpop.permute.xlu0 %2977
        %2979 = vrot.lane.b32.xlu0 %v2564, 32
        %v2980 = vpop.permute.xlu0 %2979
        %3045 = vrot.lane.b32.xlu0 %v2565, 48
        %v3046 = vpop.permute.xlu0 %3045
        %3047 = vrot.lane.b32.xlu0 %v2566, 48
        %v3048 = vpop.permute.xlu0 %3047
        %3049 = vrot.lane.b32.xlu0 %v2567, 48
        %v3050 = vpop.permute.xlu0 %3049
        %3051 = vrot.lane.b32.xlu0 %v2568, 48
        %v3052 = vpop.permute.xlu0 %3051
        %3053 = vrot.lane.b32.xlu0 %v2569, 48
        %v3054 = vpop.permute.xlu0 %3053
        %3055 = vrot.lane.b32.xlu0 %v2570, 48
        %v3056 = vpop.permute.xlu0 %3055
        %3057 = vrot.lane.b32.xlu0 %v2571, 48
        %v3058 = vpop.permute.xlu0 %3057
        %3059 = vrot.lane.b32.xlu0 %v2572, 48
        %v3060 = vpop.permute.xlu0 %3059
        %3061 = vrot.lane.b32.xlu0 %v2573, 48
        %v3062 = vpop.permute.xlu0 %3061
        %3063 = vrot.lane.b32.xlu0 %v2574, 48
        %v3064 = vpop.permute.xlu0 %3063
        %3065 = vrot.lane.b32.xlu0 %v2575, 48
        %v3066 = vpop.permute.xlu0 %3065
        %3067 = vrot.lane.b32.xlu0 %v2576, 48
        %v3068 = vpop.permute.xlu0 %3067
        %3069 = vrot.lane.b32.xlu0 %v2577, 48
        %v3070 = vpop.permute.xlu0 %3069
        %3071 = vrot.lane.b32.xlu0 %v2578, 48
        %v3072 = vpop.permute.xlu0 %3071
        %3073 = vrot.lane.b32.xlu0 %v2579, 48
        %v3074 = vpop.permute.xlu0 %3073
        %3075 = vrot.lane.b32.xlu0 %v2580, 48
        %v3076 = vpop.permute.xlu0 %3075
        %3077 = vrot.lane.b32.xlu0 %v2581, 48
        %v3078 = vpop.permute.xlu0 %3077
        %3079 = vrot.lane.b32.xlu0 %v2582, 48
        %v3080 = vpop.permute.xlu0 %3079
        %3081 = vrot.lane.b32.xlu0 %v2583, 48
        %v3082 = vpop.permute.xlu0 %3081
        %3083 = vrot.lane.b32.xlu0 %v2584, 48
        %v3084 = vpop.permute.xlu0 %3083
        %3085 = vrot.lane.b32.xlu0 %v2585, 48
        %v3086 = vpop.permute.xlu0 %3085
        %3087 = vrot.lane.b32.xlu0 %v2586, 48
        %v3088 = vpop.permute.xlu0 %3087
        %3089 = vrot.lane.b32.xlu0 %v2587, 48
        %v3090 = vpop.permute.xlu0 %3089
        %3091 = vrot.lane.b32.xlu0 %v2588, 48
        %v3092 = vpop.permute.xlu0 %3091
        %3093 = vrot.lane.b32.xlu0 %v2589, 48
        %v3094 = vpop.permute.xlu0 %3093
        %3095 = vrot.lane.b32.xlu0 %v2590, 48
        %v3096 = vpop.permute.xlu0 %3095
        %3097 = vrot.lane.b32.xlu0 %v2591, 48
        %v3098 = vpop.permute.xlu0 %3097
        %3099 = vrot.lane.b32.xlu0 %v2592, 48
        %v3100 = vpop.permute.xlu0 %3099
        %3101 = vrot.lane.b32.xlu0 %v2593, 48
        %v3102 = vpop.permute.xlu0 %3101
        %3103 = vrot.lane.b32.xlu0 %v2594, 48
        %v3104 = vpop.permute.xlu0 %3103
        %3105 = vrot.lane.b32.xlu0 %v2595, 48
        %v3106 = vpop.permute.xlu0 %3105
        %3107 = vrot.lane.b32.xlu0 %v2596, 48
        %v3108 = vpop.permute.xlu0 %3107
        %3173 = vrot.lane.b32.xlu0 %v2597, 64
        %v3174 = vpop.permute.xlu0 %3173
        %3175 = vrot.lane.b32.xlu0 %v2598, 64
        %v3176 = vpop.permute.xlu0 %3175
        %3177 = vrot.lane.b32.xlu0 %v2599, 64
        %v3178 = vpop.permute.xlu0 %3177
        %3179 = vrot.lane.b32.xlu0 %v2600, 64
        %v3180 = vpop.permute.xlu0 %3179
        %3181 = vrot.lane.b32.xlu0 %v2601, 64
        %v3182 = vpop.permute.xlu0 %3181
        %3183 = vrot.lane.b32.xlu0 %v2602, 64
        %v3184 = vpop.permute.xlu0 %3183
        %3185 = vrot.lane.b32.xlu0 %v2603, 64
        %v3186 = vpop.permute.xlu0 %3185
        %3187 = vrot.lane.b32.xlu0 %v2604, 64
        %v3188 = vpop.permute.xlu0 %3187
        %3189 = vrot.lane.b32.xlu0 %v2605, 64
        %v3190 = vpop.permute.xlu0 %3189
        %3191 = vrot.lane.b32.xlu0 %v2606, 64
        %v3192 = vpop.permute.xlu0 %3191
        %3193 = vrot.lane.b32.xlu0 %v2607, 64
        %v3194 = vpop.permute.xlu0 %3193
        %3195 = vrot.lane.b32.xlu0 %v2608, 64
        %v3196 = vpop.permute.xlu0 %3195
        %3197 = vrot.lane.b32.xlu0 %v2609, 64
        %v3198 = vpop.permute.xlu0 %3197
        %3199 = vrot.lane.b32.xlu0 %v2610, 64
        %v3200 = vpop.permute.xlu0 %3199
        %3201 = vrot.lane.b32.xlu0 %v2611, 64
        %v3202 = vpop.permute.xlu0 %3201
        %3203 = vrot.lane.b32.xlu0 %v2612, 64
        %v3204 = vpop.permute.xlu0 %3203
        %3205 = vrot.lane.b32.xlu0 %v2613, 64
        %v3206 = vpop.permute.xlu0 %3205
        %3207 = vrot.lane.b32.xlu0 %v2614, 64
        %v3208 = vpop.permute.xlu0 %3207
        %3209 = vrot.lane.b32.xlu0 %v2615, 64
        %v3210 = vpop.permute.xlu0 %3209
        %3211 = vrot.lane.b32.xlu0 %v2616, 64
        %v3212 = vpop.permute.xlu0 %3211
        %3213 = vrot.lane.b32.xlu0 %v2617, 64
        %v3214 = vpop.permute.xlu0 %3213
        %3215 = vrot.lane.b32.xlu0 %v2618, 64
        %v3216 = vpop.permute.xlu0 %3215
        %3217 = vrot.lane.b32.xlu0 %v2619, 64
        %v3218 = vpop.permute.xlu0 %3217
        %3219 = vrot.lane.b32.xlu0 %v2620, 64
        %v3220 = vpop.permute.xlu0 %3219
        %3221 = vrot.lane.b32.xlu0 %v2621, 64
        %v3222 = vpop.permute.xlu0 %3221
        %3223 = vrot.lane.b32.xlu0 %v2622, 64
        %v3224 = vpop.permute.xlu0 %3223
        %3225 = vrot.lane.b32.xlu0 %v2623, 64
        %v3226 = vpop.permute.xlu0 %3225
        %3227 = vrot.lane.b32.xlu0 %v2624, 64
        %v3228 = vpop.permute.xlu0 %3227
        %3229 = vrot.lane.b32.xlu0 %v2625, 64
        %v3230 = vpop.permute.xlu0 %3229
        %3231 = vrot.lane.b32.xlu0 %v2626, 64
        %v3232 = vpop.permute.xlu0 %3231
        %3233 = vrot.lane.b32.xlu0 %v2627, 64
        %v3234 = vpop.permute.xlu0 %3233
        %3235 = vrot.lane.b32.xlu0 %v2628, 64
        %v3236 = vpop.permute.xlu0 %3235
        %3301 = vrot.lane.b32.xlu0 %v2629, 80
        %v3302 = vpop.permute.xlu0 %3301
        %3303 = vrot.lane.b32.xlu0 %v2630, 80
        %v3304 = vpop.permute.xlu0 %3303
        %3305 = vrot.lane.b32.xlu0 %v2631, 80
        %v3306 = vpop.permute.xlu0 %3305
        %3307 = vrot.lane.b32.xlu0 %v2632, 80
        %v3308 = vpop.permute.xlu0 %3307
        %3309 = vrot.lane.b32.xlu0 %v2633, 80
        %v3310 = vpop.permute.xlu0 %3309
        %3311 = vrot.lane.b32.xlu0 %v2634, 80
        %v3312 = vpop.permute.xlu0 %3311
        %3313 = vrot.lane.b32.xlu0 %v2635, 80
        %v3314 = vpop.permute.xlu0 %3313
        %3315 = vrot.lane.b32.xlu0 %v2636, 80
        %v3316 = vpop.permute.xlu0 %3315
        %3317 = vrot.lane.b32.xlu0 %v2637, 80
        %v3318 = vpop.permute.xlu0 %3317
        %3319 = vrot.lane.b32.xlu0 %v2638, 80
        %v3320 = vpop.permute.xlu0 %3319
        %3321 = vrot.lane.b32.xlu0 %v2639, 80
        %v3322 = vpop.permute.xlu0 %3321
        %3323 = vrot.lane.b32.xlu0 %v2640, 80
        %v3324 = vpop.permute.xlu0 %3323
        %3325 = vrot.lane.b32.xlu0 %v2641, 80
        %v3326 = vpop.permute.xlu0 %3325
        %3327 = vrot.lane.b32.xlu0 %v2642, 80
        %v3328 = vpop.permute.xlu0 %3327
        %3329 = vrot.lane.b32.xlu0 %v2643, 80
        %v3330 = vpop.permute.xlu0 %3329
        %3331 = vrot.lane.b32.xlu0 %v2644, 80
        %v3332 = vpop.permute.xlu0 %3331
        %3333 = vrot.lane.b32.xlu0 %v2645, 80
        %v3334 = vpop.permute.xlu0 %3333
        %3335 = vrot.lane.b32.xlu0 %v2646, 80
        %v3336 = vpop.permute.xlu0 %3335
        %3337 = vrot.lane.b32.xlu0 %v2647, 80
        %v3338 = vpop.permute.xlu0 %3337
        %3339 = vrot.lane.b32.xlu0 %v2648, 80
        %v3340 = vpop.permute.xlu0 %3339
        %3341 = vrot.lane.b32.xlu0 %v2649, 80
        %v3342 = vpop.permute.xlu0 %3341
        %3343 = vrot.lane.b32.xlu0 %v2650, 80
        %v3344 = vpop.permute.xlu0 %3343
        %3345 = vrot.lane.b32.xlu0 %v2651, 80
        %v3346 = vpop.permute.xlu0 %3345
        %3347 = vrot.lane.b32.xlu0 %v2652, 80
        %v3348 = vpop.permute.xlu0 %3347
        %3349 = vrot.lane.b32.xlu0 %v2653, 80
        %v3350 = vpop.permute.xlu0 %3349
        %3351 = vrot.lane.b32.xlu0 %v2654, 80
        %v3352 = vpop.permute.xlu0 %3351
        %3353 = vrot.lane.b32.xlu0 %v2655, 80
        %v3354 = vpop.permute.xlu0 %3353
        %3355 = vrot.lane.b32.xlu0 %v2656, 80
        %v3356 = vpop.permute.xlu0 %3355
        %3357 = vrot.lane.b32.xlu0 %v2657, 80
        %v3358 = vpop.permute.xlu0 %3357
        %3359 = vrot.lane.b32.xlu0 %v2658, 80
        %v3360 = vpop.permute.xlu0 %3359
        %3361 = vrot.lane.b32.xlu0 %v2659, 80
        %v3362 = vpop.permute.xlu0 %3361
        %3363 = vrot.lane.b32.xlu0 %v2660, 80
        %v3364 = vpop.permute.xlu0 %3363
        %3429 = vrot.lane.b32.xlu0 %v2661, 96
        %v3430 = vpop.permute.xlu0 %3429
        %3431 = vrot.lane.b32.xlu0 %v2662, 96
        %v3432 = vpop.permute.xlu0 %3431
        %3433 = vrot.lane.b32.xlu0 %v2663, 96
        %v3434 = vpop.permute.xlu0 %3433
        %3435 = vrot.lane.b32.xlu0 %v2664, 96
        %v3436 = vpop.permute.xlu0 %3435
        %3437 = vrot.lane.b32.xlu0 %v2665, 96
        %v3438 = vpop.permute.xlu0 %3437
        %3439 = vrot.lane.b32.xlu0 %v2666, 96
        %v3440 = vpop.permute.xlu0 %3439
        %3441 = vrot.lane.b32.xlu0 %v2667, 96
        %v3442 = vpop.permute.xlu0 %3441
        %3443 = vrot.lane.b32.xlu0 %v2668, 96
        %v3444 = vpop.permute.xlu0 %3443
        %3445 = vrot.lane.b32.xlu0 %v2669, 96
        %v3446 = vpop.permute.xlu0 %3445
        %3447 = vrot.lane.b32.xlu0 %v2670, 96
        %v3448 = vpop.permute.xlu0 %3447
        %3449 = vrot.lane.b32.xlu0 %v2671, 96
        %v3450 = vpop.permute.xlu0 %3449
        %3451 = vrot.lane.b32.xlu0 %v2672, 96
        %v3452 = vpop.permute.xlu0 %3451
        %3453 = vrot.lane.b32.xlu0 %v2673, 96
        %v3454 = vpop.permute.xlu0 %3453
        %3455 = vrot.lane.b32.xlu0 %v2674, 96
        %v3456 = vpop.permute.xlu0 %3455
        %3457 = vrot.lane.b32.xlu0 %v2675, 96
        %v3458 = vpop.permute.xlu0 %3457
        %3459 = vrot.lane.b32.xlu0 %v2676, 96
        %v3460 = vpop.permute.xlu0 %3459
        %3461 = vrot.lane.b32.xlu0 %v2677, 96
        %v3462 = vpop.permute.xlu0 %3461
        %3463 = vrot.lane.b32.xlu0 %v2678, 96
        %v3464 = vpop.permute.xlu0 %3463
        %3465 = vrot.lane.b32.xlu0 %v2679, 96
        %v3466 = vpop.permute.xlu0 %3465
        %3467 = vrot.lane.b32.xlu0 %v2680, 96
        %v3468 = vpop.permute.xlu0 %3467
        %3469 = vrot.lane.b32.xlu0 %v2681, 96
        %v3470 = vpop.permute.xlu0 %3469
        %3471 = vrot.lane.b32.xlu0 %v2682, 96
        %v3472 = vpop.permute.xlu0 %3471
        %3473 = vrot.lane.b32.xlu0 %v2683, 96
        %v3474 = vpop.permute.xlu0 %3473
        %3475 = vrot.lane.b32.xlu0 %v2684, 96
        %v3476 = vpop.permute.xlu0 %3475
        %3477 = vrot.lane.b32.xlu0 %v2685, 96
        %v3478 = vpop.permute.xlu0 %3477
        %3479 = vrot.lane.b32.xlu0 %v2686, 96
        %v3480 = vpop.permute.xlu0 %3479
        %3481 = vrot.lane.b32.xlu0 %v2687, 96
        %v3482 = vpop.permute.xlu0 %3481
        %3483 = vrot.lane.b32.xlu0 %v2688, 96
        %v3484 = vpop.permute.xlu0 %3483
        %3485 = vrot.lane.b32.xlu0 %v2689, 96
        %v3486 = vpop.permute.xlu0 %3485
        %3487 = vrot.lane.b32.xlu0 %v2690, 96
        %v3488 = vpop.permute.xlu0 %3487
        %3489 = vrot.lane.b32.xlu0 %v2691, 96
        %v3490 = vpop.permute.xlu0 %3489
        %3491 = vrot.lane.b32.xlu0 %v2692, 96
        %v3492 = vpop.permute.xlu0 %3491
        %3557 = vrot.lane.b32.xlu0 %v2693, 112
        %v3558 = vpop.permute.xlu0 %3557
        %3559 = vrot.lane.b32.xlu0 %v2694, 112
        %v3560 = vpop.permute.xlu0 %3559
        %3561 = vrot.lane.b32.xlu0 %v2695, 112
        %v3562 = vpop.permute.xlu0 %3561
        %3563 = vrot.lane.b32.xlu0 %v2696, 112
        %v3564 = vpop.permute.xlu0 %3563
        %3565 = vrot.lane.b32.xlu0 %v2697, 112
        %v3566 = vpop.permute.xlu0 %3565
        %3567 = vrot.lane.b32.xlu0 %v2698, 112
        %v3568 = vpop.permute.xlu0 %3567
        %3569 = vrot.lane.b32.xlu0 %v2699, 112
        %v3570 = vpop.permute.xlu0 %3569
        %3571 = vrot.lane.b32.xlu0 %v2700, 112
        %v3572 = vpop.permute.xlu0 %3571
        %3573 = vrot.lane.b32.xlu0 %v2701, 112
        %v3574 = vpop.permute.xlu0 %3573
        %3575 = vrot.lane.b32.xlu0 %v2702, 112
        %v3576 = vpop.permute.xlu0 %3575
        %3577 = vrot.lane.b32.xlu0 %v2703, 112
        %v3578 = vpop.permute.xlu0 %3577
        %3579 = vrot.lane.b32.xlu0 %v2704, 112
        %v3580 = vpop.permute.xlu0 %3579
        %3581 = vrot.lane.b32.xlu0 %v2705, 112
        %v3582 = vpop.permute.xlu0 %3581
        %3583 = vrot.lane.b32.xlu0 %v2706, 112
        %v3584 = vpop.permute.xlu0 %3583
        %3585 = vrot.lane.b32.xlu0 %v2707, 112
        %v3586 = vpop.permute.xlu0 %3585
        %3587 = vrot.lane.b32.xlu0 %v2708, 112
        %v3588 = vpop.permute.xlu0 %3587
        %3589 = vrot.lane.b32.xlu0 %v2709, 112
        %v3590 = vpop.permute.xlu0 %3589
        %3591 = vrot.lane.b32.xlu0 %v2710, 112
        %v3592 = vpop.permute.xlu0 %3591
        %3593 = vrot.lane.b32.xlu0 %v2711, 112
        %v3594 = vpop.permute.xlu0 %3593
        %3595 = vrot.lane.b32.xlu0 %v2712, 112
        %v3596 = vpop.permute.xlu0 %3595
        %3597 = vrot.lane.b32.xlu0 %v2713, 112
        %v3598 = vpop.permute.xlu0 %3597
        %3599 = vrot.lane.b32.xlu0 %v2714, 112
        %v3600 = vpop.permute.xlu0 %3599
        %3601 = vrot.lane.b32.xlu0 %v2715, 112
        %v3602 = vpop.permute.xlu0 %3601
        %3603 = vrot.lane.b32.xlu0 %v2716, 112
        %v3604 = vpop.permute.xlu0 %3603
        %3605 = vrot.lane.b32.xlu0 %v2717, 112
        %v3606 = vpop.permute.xlu0 %3605
        %3607 = vrot.lane.b32.xlu0 %v2718, 112
        %v3608 = vpop.permute.xlu0 %3607
        %3609 = vrot.lane.b32.xlu0 %v2719, 112
        %v3610 = vpop.permute.xlu0 %3609
        %3611 = vrot.lane.b32.xlu0 %v2720, 112
        %v3612 = vpop.permute.xlu0 %3611
        %3613 = vrot.lane.b32.xlu0 %v2721, 112
        %v3614 = vpop.permute.xlu0 %3613
        %3615 = vrot.lane.b32.xlu0 %v2722, 112
        %v3616 = vpop.permute.xlu0 %3615
        %3617 = vrot.lane.b32.xlu0 %v2723, 112
        %v3618 = vpop.permute.xlu0 %3617
        %3619 = vrot.lane.b32.xlu0 %v2724, 112
        %v3620 = vpop.permute.xlu0 %3619
        %v3653 = vsel %vm331, %v2469, %v2790
        %v3654 = vsel %vm331, %v2470, %v2792
        %v3655 = vsel %vm331, %v2471, %v2794
        %v3656 = vsel %vm331, %v2472, %v2796
        %v3657 = vsel %vm331, %v2473, %v2798
        %v3658 = vsel %vm331, %v2474, %v2800
        %v3659 = vsel %vm331, %v2475, %v2802
        %v3660 = vsel %vm331, %v2476, %v2804
        %v3661 = vsel %vm331, %v2477, %v2806
        %v3662 = vsel %vm331, %v2478, %v2808
        %v3663 = vsel %vm331, %v2479, %v2810
        %v3664 = vsel %vm331, %v2480, %v2812
        %v3665 = vsel %vm331, %v2481, %v2814
        %v3666 = vsel %vm331, %v2482, %v2816
        %v3667 = vsel %vm331, %v2483, %v2818
        %v3668 = vsel %vm331, %v2484, %v2820
        %v3669 = vsel %vm331, %v2485, %v2822
        %v3670 = vsel %vm331, %v2486, %v2824
        %v3671 = vsel %vm331, %v2487, %v2826
        %v3672 = vsel %vm331, %v2488, %v2828
        %v3673 = vsel %vm331, %v2489, %v2830
        %v3674 = vsel %vm331, %v2490, %v2832
        %v3675 = vsel %vm331, %v2491, %v2834
        %v3676 = vsel %vm331, %v2492, %v2836
        %v3677 = vsel %vm331, %v2493, %v2838
        %v3678 = vsel %vm331, %v2494, %v2840
        %v3679 = vsel %vm331, %v2495, %v2842
        %v3680 = vsel %vm331, %v2496, %v2844
        %v3681 = vsel %vm331, %v2497, %v2846
        %v3682 = vsel %vm331, %v2498, %v2848
        %v3683 = vsel %vm331, %v2499, %v2850
        %v3684 = vsel %vm331, %v2500, %v2852
        %v3685 = vsel %vm1605, %v3653, %v2918
        %v3686 = vsel %vm1605, %v3654, %v2920
        %v3687 = vsel %vm1605, %v3655, %v2922
        %v3688 = vsel %vm1605, %v3656, %v2924
        %v3689 = vsel %vm1605, %v3657, %v2926
        %v3690 = vsel %vm1605, %v3658, %v2928
        %v3691 = vsel %vm1605, %v3659, %v2930
        %v3692 = vsel %vm1605, %v3660, %v2932
        %v3693 = vsel %vm1605, %v3661, %v2934
        %v3694 = vsel %vm1605, %v3662, %v2936
        %v3695 = vsel %vm1605, %v3663, %v2938
        %v3696 = vsel %vm1605, %v3664, %v2940
        %v3697 = vsel %vm1605, %v3665, %v2942
        %v3698 = vsel %vm1605, %v3666, %v2944
        %v3699 = vsel %vm1605, %v3667, %v2946
        %v3700 = vsel %vm1605, %v3668, %v2948
        %v3701 = vsel %vm1605, %v3669, %v2950
        %v3702 = vsel %vm1605, %v3670, %v2952
        %v3703 = vsel %vm1605, %v3671, %v2954
        %v3704 = vsel %vm1605, %v3672, %v2956
        %v3705 = vsel %vm1605, %v3673, %v2958
        %v3706 = vsel %vm1605, %v3674, %v2960
        %v3707 = vsel %vm1605, %v3675, %v2962
        %v3708 = vsel %vm1605, %v3676, %v2964
        %v3709 = vsel %vm1605, %v3677, %v2966
        %v3710 = vsel %vm1605, %v3678, %v2968
        %v3711 = vsel %vm1605, %v3679, %v2970
        %v3712 = vsel %vm1605, %v3680, %v2972
        %v3713 = vsel %vm1605, %v3681, %v2974
        %v3714 = vsel %vm1605, %v3682, %v2976
        %v3715 = vsel %vm1605, %v3683, %v2978
        %v3716 = vsel %vm1605, %v3684, %v2980
        %v3717 = vsel %vm1638, %v3685, %v3046
        %v3718 = vsel %vm1638, %v3686, %v3048
        %v3719 = vsel %vm1638, %v3687, %v3050
        %v3720 = vsel %vm1638, %v3688, %v3052
        %v3721 = vsel %vm1638, %v3689, %v3054
        %v3722 = vsel %vm1638, %v3690, %v3056
        %v3723 = vsel %vm1638, %v3691, %v3058
        %v3724 = vsel %vm1638, %v3692, %v3060
        %v3725 = vsel %vm1638, %v3693, %v3062
        %v3726 = vsel %vm1638, %v3694, %v3064
        %v3727 = vsel %vm1638, %v3695, %v3066
        %v3728 = vsel %vm1638, %v3696, %v3068
        %v3729 = vsel %vm1638, %v3697, %v3070
        %v3730 = vsel %vm1638, %v3698, %v3072
        %v3731 = vsel %vm1638, %v3699, %v3074
        %v3732 = vsel %vm1638, %v3700, %v3076
        %v3733 = vsel %vm1638, %v3701, %v3078
        %v3734 = vsel %vm1638, %v3702, %v3080
        %v3735 = vsel %vm1638, %v3703, %v3082
        %v3736 = vsel %vm1638, %v3704, %v3084
        %v3737 = vsel %vm1638, %v3705, %v3086
        %v3738 = vsel %vm1638, %v3706, %v3088
        %v3739 = vsel %vm1638, %v3707, %v3090
        %v3740 = vsel %vm1638, %v3708, %v3092
        %v3741 = vsel %vm1638, %v3709, %v3094
        %v3742 = vsel %vm1638, %v3710, %v3096
        %v3743 = vsel %vm1638, %v3711, %v3098
        %v3744 = vsel %vm1638, %v3712, %v3100
        %v3745 = vsel %vm1638, %v3713, %v3102
        %v3746 = vsel %vm1638, %v3714, %v3104
        %v3747 = vsel %vm1638, %v3715, %v3106
        %v3748 = vsel %vm1638, %v3716, %v3108
        %v3749 = vsel %vm1671, %v3717, %v3174
        %v3750 = vsel %vm1671, %v3718, %v3176
        %v3751 = vsel %vm1671, %v3719, %v3178
        %v3752 = vsel %vm1671, %v3720, %v3180
        %v3753 = vsel %vm1671, %v3721, %v3182
        %v3754 = vsel %vm1671, %v3722, %v3184
        %v3755 = vsel %vm1671, %v3723, %v3186
        %v3756 = vsel %vm1671, %v3724, %v3188
        %v3757 = vsel %vm1671, %v3725, %v3190
        %v3758 = vsel %vm1671, %v3726, %v3192
        %v3759 = vsel %vm1671, %v3727, %v3194
        %v3760 = vsel %vm1671, %v3728, %v3196
        %v3761 = vsel %vm1671, %v3729, %v3198
        %v3762 = vsel %vm1671, %v3730, %v3200
        %v3763 = vsel %vm1671, %v3731, %v3202
        %v3764 = vsel %vm1671, %v3732, %v3204
        %v3765 = vsel %vm1671, %v3733, %v3206
        %v3766 = vsel %vm1671, %v3734, %v3208
        %v3767 = vsel %vm1671, %v3735, %v3210
        %v3768 = vsel %vm1671, %v3736, %v3212
        %v3769 = vsel %vm1671, %v3737, %v3214
        %v3770 = vsel %vm1671, %v3738, %v3216
        %v3771 = vsel %vm1671, %v3739, %v3218
        %v3772 = vsel %vm1671, %v3740, %v3220
        %v3773 = vsel %vm1671, %v3741, %v3222
        %v3774 = vsel %vm1671, %v3742, %v3224
        %v3775 = vsel %vm1671, %v3743, %v3226
        %v3776 = vsel %vm1671, %v3744, %v3228
        %v3777 = vsel %vm1671, %v3745, %v3230
        %v3778 = vsel %vm1671, %v3746, %v3232
        %v3779 = vsel %vm1671, %v3747, %v3234
        %v3780 = vsel %vm1671, %v3748, %v3236
        %v3781 = vsel %vm1704, %v3749, %v3302
        %v3782 = vsel %vm1704, %v3750, %v3304
        %v3783 = vsel %vm1704, %v3751, %v3306
        %v3784 = vsel %vm1704, %v3752, %v3308
        %v3785 = vsel %vm1704, %v3753, %v3310
        %v3786 = vsel %vm1704, %v3754, %v3312
        %v3787 = vsel %vm1704, %v3755, %v3314
        %v3788 = vsel %vm1704, %v3756, %v3316
        %v3789 = vsel %vm1704, %v3757, %v3318
        %v3790 = vsel %vm1704, %v3758, %v3320
        %v3791 = vsel %vm1704, %v3759, %v3322
        %v3792 = vsel %vm1704, %v3760, %v3324
        %v3793 = vsel %vm1704, %v3761, %v3326
        %v3794 = vsel %vm1704, %v3762, %v3328
        %v3795 = vsel %vm1704, %v3763, %v3330
        %v3796 = vsel %vm1704, %v3764, %v3332
        %v3797 = vsel %vm1704, %v3765, %v3334
        %v3798 = vsel %vm1704, %v3766, %v3336
        %v3799 = vsel %vm1704, %v3767, %v3338
        %v3800 = vsel %vm1704, %v3768, %v3340
        %v3801 = vsel %vm1704, %v3769, %v3342
        %v3802 = vsel %vm1704, %v3770, %v3344
        %v3803 = vsel %vm1704, %v3771, %v3346
        %v3804 = vsel %vm1704, %v3772, %v3348
        %v3805 = vsel %vm1704, %v3773, %v3350
        %v3806 = vsel %vm1704, %v3774, %v3352
        %v3807 = vsel %vm1704, %v3775, %v3354
        %v3808 = vsel %vm1704, %v3776, %v3356
        %v3809 = vsel %vm1704, %v3777, %v3358
        %v3810 = vsel %vm1704, %v3778, %v3360
        %v3811 = vsel %vm1704, %v3779, %v3362
        %v3812 = vsel %vm1704, %v3780, %v3364
        %v3813 = vsel %vm1737, %v3781, %v3430
        %v3814 = vsel %vm1737, %v3782, %v3432
        %v3815 = vsel %vm1737, %v3783, %v3434
        %v3816 = vsel %vm1737, %v3784, %v3436
        %v3817 = vsel %vm1737, %v3785, %v3438
        %v3818 = vsel %vm1737, %v3786, %v3440
        %v3819 = vsel %vm1737, %v3787, %v3442
        %v3820 = vsel %vm1737, %v3788, %v3444
        %v3821 = vsel %vm1737, %v3789, %v3446
        %v3822 = vsel %vm1737, %v3790, %v3448
        %v3823 = vsel %vm1737, %v3791, %v3450
        %v3824 = vsel %vm1737, %v3792, %v3452
        %v3825 = vsel %vm1737, %v3793, %v3454
        %v3826 = vsel %vm1737, %v3794, %v3456
        %v3827 = vsel %vm1737, %v3795, %v3458
        %v3828 = vsel %vm1737, %v3796, %v3460
        %v3829 = vsel %vm1737, %v3797, %v3462
        %v3830 = vsel %vm1737, %v3798, %v3464
        %v3831 = vsel %vm1737, %v3799, %v3466
        %v3832 = vsel %vm1737, %v3800, %v3468
        %v3833 = vsel %vm1737, %v3801, %v3470
        %v3834 = vsel %vm1737, %v3802, %v3472
        %v3835 = vsel %vm1737, %v3803, %v3474
        %v3836 = vsel %vm1737, %v3804, %v3476
        %v3837 = vsel %vm1737, %v3805, %v3478
        %v3838 = vsel %vm1737, %v3806, %v3480
        %v3839 = vsel %vm1737, %v3807, %v3482
        %v3840 = vsel %vm1737, %v3808, %v3484
        %v3841 = vsel %vm1737, %v3809, %v3486
        %v3842 = vsel %vm1737, %v3810, %v3488
        %v3843 = vsel %vm1737, %v3811, %v3490
        %v3844 = vsel %vm1737, %v3812, %v3492
        %v3845 = vsel %vm1770, %v3813, %v3558
        %v3846 = vsel %vm1770, %v3814, %v3560
        %v3847 = vsel %vm1770, %v3815, %v3562
        %v3848 = vsel %vm1770, %v3816, %v3564
        %v3849 = vsel %vm1770, %v3817, %v3566
        %v3850 = vsel %vm1770, %v3818, %v3568
        %v3851 = vsel %vm1770, %v3819, %v3570
        %v3852 = vsel %vm1770, %v3820, %v3572
        %v3853 = vsel %vm1770, %v3821, %v3574
        %v3854 = vsel %vm1770, %v3822, %v3576
        %v3855 = vsel %vm1770, %v3823, %v3578
        %v3856 = vsel %vm1770, %v3824, %v3580
        %v3857 = vsel %vm1770, %v3825, %v3582
        %v3858 = vsel %vm1770, %v3826, %v3584
        %v3859 = vsel %vm1770, %v3827, %v3586
        %v3860 = vsel %vm1770, %v3828, %v3588
        %v3861 = vsel %vm1770, %v3829, %v3590
        %v3862 = vsel %vm1770, %v3830, %v3592
        %v3863 = vsel %vm1770, %v3831, %v3594
        %v3864 = vsel %vm1770, %v3832, %v3596
        %v3865 = vsel %vm1770, %v3833, %v3598
        %v3866 = vsel %vm1770, %v3834, %v3600
        %v3867 = vsel %vm1770, %v3835, %v3602
        %v3868 = vsel %vm1770, %v3836, %v3604
        %v3869 = vsel %vm1770, %v3837, %v3606
        %v3870 = vsel %vm1770, %v3838, %v3608
        %v3871 = vsel %vm1770, %v3839, %v3610
        %v3872 = vsel %vm1770, %v3840, %v3612
        %v3873 = vsel %vm1770, %v3841, %v3614
        %v3874 = vsel %vm1770, %v3842, %v3616
        %v3875 = vsel %vm1770, %v3843, %v3618
        %v3876 = vsel %vm1770, %v3844, %v3620
        %s3877 = scalar_lea.vmem %s1, 144
        %v3878 = vld [vmem:[%s3877] sm:$0xff]
        %v3879 = vld [vmem:[%s3877 + $0x8] sm:$0xff]
        %v3880 = vld [vmem:[%s3877 + $0x10] sm:$0xff]
        %v3881 = vld [vmem:[%s3877 + $0x18] sm:$0xff]
        %v3882 = vld [vmem:[%s3877 + $0x20] sm:$0xff]
        %v3883 = vld [vmem:[%s3877 + $0x28] sm:$0xff]
        %v3884 = vld [vmem:[%s3877 + $0x30] sm:$0xff]
        %v3885 = vld [vmem:[%s3877 + $0x38] sm:$0xff]
        %v3886 = vld [vmem:[%s3877 + $0x40] sm:$0xff]
        %v3887 = vld [vmem:[%s3877 + $0x48] sm:$0xff]
        %v3888 = vld [vmem:[%s3877 + $0x50] sm:$0xff]
        %v3889 = vld [vmem:[%s3877 + $0x58] sm:$0xff]
        %v3890 = vld [vmem:[%s3877 + $0x60] sm:$0xff]
        %v3891 = vld [vmem:[%s3877 + $0x68] sm:$0xff]
        %v3892 = vld [vmem:[%s3877 + $0x70] sm:$0xff]
        %v3893 = vld [vmem:[%s3877 + $0x78] sm:$0xff]
        %v3894 = vld [vmem:[%s3877 + $0x80] sm:$0xff]
        %v3895 = vld [vmem:[%s3877 + $0x88] sm:$0xff]
        %s3896 = scalar_lea.vmem %s2, 1
        %v3897 = vld [vmem:[%s3896] sm:$0x1]
        %v3899 = vlaneseq
        %v3900 = vshrl.u32 %v3899, 7
        %v3901 = vsub.s32 0, %v3900
        %v3902 = vrot.slane %v3897, %v3901
        %v3905 = vsel %vm331, %v2725, 0
        %v3908 = vsel %vm331, %v2726, 0
        %v3911 = vsel %vm331, %v2727, 0
        %v3914 = vsel %vm331, %v2728, 0
        %v3917 = vsel %vm331, %v2729, 0
        %v3920 = vsel %vm331, %v2730, 0
        %v3923 = vsel %vm331, %v2731, 0
        %v3926 = vsel %vm331, %v2732, 0
        %v3929 = vsel %vm331, %v2733, 0
        %v3932 = vsel %vm331, %v2734, 0
        %v3935 = vsel %vm331, %v2735, 0
        %v3938 = vsel %vm331, %v2736, 0
        %v3941 = vsel %vm331, %v2737, 0
        %v3944 = vsel %vm331, %v2738, 0
        %v3947 = vsel %vm331, %v2739, 0
        %v3950 = vsel %vm331, %v2740, 0
        %v3953 = vsel %vm331, %v2741, 0
        %v3956 = vsel %vm331, %v2742, 0
        %v3959 = vsel %vm331, %v2743, 0
        %v3962 = vsel %vm331, %v2744, 0
        %v3965 = vsel %vm331, %v2745, 0
        %v3968 = vsel %vm331, %v2746, 0
        %v3971 = vsel %vm331, %v2747, 0
        %v3974 = vsel %vm331, %v2748, 0
        %v3977 = vsel %vm331, %v2749, 0
        %v3980 = vsel %vm331, %v2750, 0
        %v3983 = vsel %vm331, %v2751, 0
        %v3986 = vsel %vm331, %v2752, 0
        %v3989 = vsel %vm331, %v2753, 0
        %v3992 = vsel %vm331, %v2754, 0
        %v3995 = vsel %vm331, %v2755, 0
        %v3998 = vsel %vm331, %v2756, 0
        %4000 = vmatprep.subr.mxu0 0.0
        %4001 = vmatpush1.msra.mxu0 %v3878
        %4002 = vmatprep.subr.mxu0 0.0
        %4003 = vmatpush1.msra.mxu0 %v3879
        %4004 = vmatprep.subr.mxu0 0.0
        %4005 = vmatpush1.msra.mxu0 %v3880
        %4006 = vmatprep.subr.mxu0 0.0
        %4007 = vmatpush1.msra.mxu0 %v3881
        %4008 = vmatprep.subr.mxu0 0.0
        %4009 = vmatpush1.msra.mxu0 %v3882
        %4010 = vmatprep.subr.mxu0 0.0
        %4011 = vmatpush1.msra.mxu0 %v3883
        %4012 = vmatprep.subr.mxu0 0.0
        %4013 = vmatpush1.msra.mxu0 %v3884
        %4014 = vmatprep.subr.mxu0 0.0
        %4015 = vmatpush1.msra.mxu0 %v3885
        %4016 = vmatprep.subr.mxu0 0.0
        %4017 = vmatpush1.msra.mxu0 %v3886
        %4018 = vmatprep.subr.mxu0 0.0
        %4019 = vmatpush1.msra.mxu0 %v3887
        %4020 = vmatprep.subr.mxu0 0.0
        %4021 = vmatpush1.msra.mxu0 %v3888
        %4022 = vmatprep.subr.mxu0 0.0
        %4023 = vmatpush1.msra.mxu0 %v3889
        %4024 = vmatprep.subr.mxu0 0.0
        %4025 = vmatpush1.msra.mxu0 %v3890
        %4026 = vmatprep.subr.mxu0 0.0
        %4027 = vmatpush1.msra.mxu0 %v3891
        %4028 = vmatprep.subr.mxu0 0.0
        %4029 = vmatpush1.msra.mxu0 %v3892
        %4030 = vmatprep.subr.mxu0 0.0
        %4031 = vmatpush1.msra.mxu0 %v3893
        %4032 = vmatprep.subr.mxu0 0.0
        %4033 = vmatpush1.msra.mxu0 %v3894
        %4034 = vmatprep.subr.mxu0 0.0
        %4035 = vmatpush1.msra.mxu0 %v3895
        %4036 = vmatprep.subr.mxu0 0.0
        %4037 = vmatpush1.msra.mxu0 0.0
        %4038 = vmatprep.subr.mxu0 0.0
        %4039 = vmatpush1.msra.mxu0 0.0
        %4040 = vmatprep.subr.mxu0 0.0
        %4041 = vmatpush1.msra.mxu0 0.0
        %4042 = vmatprep.subr.mxu0 0.0
        %4043 = vmatpush1.msra.mxu0 0.0
        %4044 = vmatprep.subr.mxu0 0.0
        %4045 = vmatpush1.msra.mxu0 0.0
        %4046 = vmatprep.subr.mxu0 0.0
        %4047 = vmatpush1.msra.mxu0 0.0
        %4048 = vmatprep.subr.mxu0 0.0
        %4049 = vmatpush1.msra.mxu0 0.0
        %4050 = vmatprep.subr.mxu0 0.0
        %4051 = vmatpush1.msra.mxu0 0.0
        %4052 = vmatprep.subr.mxu0 0.0
        %4053 = vmatpush1.msra.mxu0 0.0
        %4054 = vmatprep.subr.mxu0 0.0
        %4055 = vmatpush1.msra.mxu0 0.0
        %4056 = vmatprep.subr.mxu0 0.0
        %4057 = vmatpush1.msra.mxu0 0.0
        %4058 = vmatprep.subr.mxu0 0.0
        %4059 = vmatpush1.msra.mxu0 0.0
        %4060 = vmatprep.subr.mxu0 0.0
        %4061 = vmatpush1.msra.mxu0 0.0
        %4062 = vmatprep.subr.mxu0 0.0
        %4063 = vmatpush1.msra.mxu0 0.0
        %4064 = vmatprep.mubr.f32.mxu0 %v3905
        %4065 = vmatmul.mubr.f32.gmra.mrb[0].mxu0 %v3845
        %v4066 = vpop.f32.mrb[0].mxu0
        %v4067 = vadd.f32 %v3902, %v4066
        %v4068 = vpop.f32.mrb[0].mxu0
        %4069 = vmatprep.mubr.f32.mxu0 %v3908
        %4070 = vmatmul.mubr.f32.gmra.mrb[0].mxu0 %v3846
        %v4071 = vpop.f32.mrb[0].mxu0
        %v4072 = vadd.f32 %v3902, %v4071
        %v4073 = vpop.f32.mrb[0].mxu0
        %4074 = vmatprep.mubr.f32.mxu0 %v3911
        %4075 = vmatmul.mubr.f32.gmra.mrb[0].mxu0 %v3847
        %v4076 = vpop.f32.mrb[0].mxu0
        %v4077 = vadd.f32 %v3902, %v4076
        %v4078 = vpop.f32.mrb[0].mxu0
        %4079 = vmatprep.mubr.f32.mxu0 %v3914
        %4080 = vmatmul.mubr.f32.gmra.mrb[0].mxu0 %v3848
        %v4081 = vpop.f32.mrb[0].mxu0
        %v4082 = vadd.f32 %v3902, %v4081
        %v4083 = vpop.f32.mrb[0].mxu0
        %4084 = vmatprep.mubr.f32.mxu0 %v3917
        %4085 = vmatmul.mubr.f32.gmra.mrb[0].mxu0 %v3849
        %v4086 = vpop.f32.mrb[0].mxu0
        %v4087 = vadd.f32 %v3902, %v4086
        %v4088 = vpop.f32.mrb[0].mxu0
        %4089 = vmatprep.mubr.f32.mxu0 %v3920
        %4090 = vmatmul.mubr.f32.gmra.mrb[0].mxu0 %v3850
        %v4091 = vpop.f32.mrb[0].mxu0
        %v4092 = vadd.f32 %v3902, %v4091
        %v4093 = vpop.f32.mrb[0].mxu0
        %4094 = vmatprep.mubr.f32.mxu0 %v3923
        %4095 = vmatmul.mubr.f32.gmra.mrb[0].mxu0 %v3851
        %v4096 = vpop.f32.mrb[0].mxu0
        %v4097 = vadd.f32 %v3902, %v4096
        %v4098 = vpop.f32.mrb[0].mxu0
        %4099 = vmatprep.mubr.f32.mxu0 %v3926
        %4100 = vmatmul.mubr.f32.gmra.mrb[0].mxu0 %v3852
        %v4101 = vpop.f32.mrb[0].mxu0
        %v4102 = vadd.f32 %v3902, %v4101
        %v4103 = vpop.f32.mrb[0].mxu0
        %4104 = vmatprep.mubr.f32.mxu0 %v3929
        %4105 = vmatmul.mubr.f32.gmra.mrb[0].mxu0 %v3853
        %v4106 = vpop.f32.mrb[0].mxu0
        %v4107 = vadd.f32 %v3902, %v4106
        %v4108 = vpop.f32.mrb[0].mxu0
        %4109 = vmatprep.mubr.f32.mxu0 %v3932
        %4110 = vmatmul.mubr.f32.gmra.mrb[0].mxu0 %v3854
        %v4111 = vpop.f32.mrb[0].mxu0
        %v4112 = vadd.f32 %v3902, %v4111
        %v4113 = vpop.f32.mrb[0].mxu0
        %4114 = vmatprep.mubr.f32.mxu0 %v3935
        %4115 = vmatmul.mubr.f32.gmra.mrb[0].mxu0 %v3855
        %v4116 = vpop.f32.mrb[0].mxu0
        %v4117 = vadd.f32 %v3902, %v4116
        %v4118 = vpop.f32.mrb[0].mxu0
        %4119 = vmatprep.mubr.f32.mxu0 %v3938
        %4120 = vmatmul.mubr.f32.gmra.mrb[0].mxu0 %v3856
        %v4121 = vpop.f32.mrb[0].mxu0
        %v4122 = vadd.f32 %v3902, %v4121
        %v4123 = vpop.f32.mrb[0].mxu0
        %4124 = vmatprep.mubr.f32.mxu0 %v3941
        %4125 = vmatmul.mubr.f32.gmra.mrb[0].mxu0 %v3857
        %v4126 = vpop.f32.mrb[0].mxu0
        %v4127 = vadd.f32 %v3902, %v4126
        %v4128 = vpop.f32.mrb[0].mxu0
        %4129 = vmatprep.mubr.f32.mxu0 %v3944
        %4130 = vmatmul.mubr.f32.gmra.mrb[0].mxu0 %v3858
        %v4131 = vpop.f32.mrb[0].mxu0
        %v4132 = vadd.f32 %v3902, %v4131
        %v4133 = vpop.f32.mrb[0].mxu0
        %4134 = vmatprep.mubr.f32.mxu0 %v3947
        %4135 = vmatmul.mubr.f32.gmra.mrb[0].mxu0 %v3859
        %v4136 = vpop.f32.mrb[0].mxu0
        %v4137 = vadd.f32 %v3902, %v4136
        %v4138 = vpop.f32.mrb[0].mxu0
        %4139 = vmatprep.mubr.f32.mxu0 %v3950
        %4140 = vmatmul.mubr.f32.gmra.mrb[0].mxu0 %v3860
        %v4141 = vpop.f32.mrb[0].mxu0
        %v4142 = vadd.f32 %v3902, %v4141
        %v4143 = vpop.f32.mrb[0].mxu0
        %4144 = vmatprep.mubr.f32.mxu0 %v3953
        %4145 = vmatmul.mubr.f32.gmra.mrb[0].mxu0 %v3861
        %v4146 = vpop.f32.mrb[0].mxu0
        %v4147 = vadd.f32 %v3902, %v4146
        %v4148 = vpop.f32.mrb[0].mxu0
        %4149 = vmatprep.mubr.f32.mxu0 %v3956
        %4150 = vmatmul.mubr.f32.gmra.mrb[0].mxu0 %v3862
        %v4151 = vpop.f32.mrb[0].mxu0
        %v4152 = vadd.f32 %v3902, %v4151
        %v4153 = vpop.f32.mrb[0].mxu0
        %4154 = vmatprep.mubr.f32.mxu0 %v3959
        %4155 = vmatmul.mubr.f32.gmra.mrb[0].mxu0 %v3863
        %v4156 = vpop.f32.mrb[0].mxu0
        %v4157 = vadd.f32 %v3902, %v4156
        %v4158 = vpop.f32.mrb[0].mxu0
        %4159 = vmatprep.mubr.f32.mxu0 %v3962
        %4160 = vmatmul.mubr.f32.gmra.mrb[0].mxu0 %v3864
        %v4161 = vpop.f32.mrb[0].mxu0
        %v4162 = vadd.f32 %v3902, %v4161
        %v4163 = vpop.f32.mrb[0].mxu0
        %4164 = vmatprep.mubr.f32.mxu0 %v3965
        %4165 = vmatmul.mubr.f32.gmra.mrb[0].mxu0 %v3865
        %v4166 = vpop.f32.mrb[0].mxu0
        %v4167 = vadd.f32 %v3902, %v4166
        %v4168 = vpop.f32.mrb[0].mxu0
        %4169 = vmatprep.mubr.f32.mxu0 %v3968
        %4170 = vmatmul.mubr.f32.gmra.mrb[0].mxu0 %v3866
        %v4171 = vpop.f32.mrb[0].mxu0
        %v4172 = vadd.f32 %v3902, %v4171
        %v4173 = vpop.f32.mrb[0].mxu0
        %4174 = vmatprep.mubr.f32.mxu0 %v3971
        %4175 = vmatmul.mubr.f32.gmra.mrb[0].mxu0 %v3867
        %v4176 = vpop.f32.mrb[0].mxu0
        %v4177 = vadd.f32 %v3902, %v4176
        %v4178 = vpop.f32.mrb[0].mxu0
        %4179 = vmatprep.mubr.f32.mxu0 %v3974
        %4180 = vmatmul.mubr.f32.gmra.mrb[0].mxu0 %v3868
        %v4181 = vpop.f32.mrb[0].mxu0
        %v4182 = vadd.f32 %v3902, %v4181
        %v4183 = vpop.f32.mrb[0].mxu0
        %4184 = vmatprep.mubr.f32.mxu0 %v3977
        %4185 = vmatmul.mubr.f32.gmra.mrb[0].mxu0 %v3869
        %v4186 = vpop.f32.mrb[0].mxu0
        %v4187 = vadd.f32 %v3902, %v4186
        %v4188 = vpop.f32.mrb[0].mxu0
        %4189 = vmatprep.mubr.f32.mxu0 %v3980
        %4190 = vmatmul.mubr.f32.gmra.mrb[0].mxu0 %v3870
        %v4191 = vpop.f32.mrb[0].mxu0
        %v4192 = vadd.f32 %v3902, %v4191
        %v4193 = vpop.f32.mrb[0].mxu0
        %4194 = vmatprep.mubr.f32.mxu0 %v3983
        %4195 = vmatmul.mubr.f32.gmra.mrb[0].mxu0 %v3871
        %v4196 = vpop.f32.mrb[0].mxu0
        %v4197 = vadd.f32 %v3902, %v4196
        %v4198 = vpop.f32.mrb[0].mxu0
        %4199 = vmatprep.mubr.f32.mxu0 %v3986
        %4200 = vmatmul.mubr.f32.gmra.mrb[0].mxu0 %v3872
        %v4201 = vpop.f32.mrb[0].mxu0
        %v4202 = vadd.f32 %v3902, %v4201
        %v4203 = vpop.f32.mrb[0].mxu0
        %4204 = vmatprep.mubr.f32.mxu0 %v3989
        %4205 = vmatmul.mubr.f32.gmra.mrb[0].mxu0 %v3873
        %v4206 = vpop.f32.mrb[0].mxu0
        %v4207 = vadd.f32 %v3902, %v4206
        %v4208 = vpop.f32.mrb[0].mxu0
        %4209 = vmatprep.mubr.f32.mxu0 %v3992
        %4210 = vmatmul.mubr.f32.gmra.mrb[0].mxu0 %v3874
        %v4211 = vpop.f32.mrb[0].mxu0
        %v4212 = vadd.f32 %v3902, %v4211
        %v4213 = vpop.f32.mrb[0].mxu0
        %4214 = vmatprep.mubr.f32.mxu0 %v3995
        %4215 = vmatmul.mubr.f32.gmra.mrb[0].mxu0 %v3875
        %v4216 = vpop.f32.mrb[0].mxu0
        %v4217 = vadd.f32 %v3902, %v4216
        %v4218 = vpop.f32.mrb[0].mxu0
        %4219 = vmatprep.mubr.f32.mxu0 %v3998
        %4220 = vmatmul.mubr.f32.gmra.mrb[0].mxu0 %v3876
        %v4221 = vpop.f32.mrb[0].mxu0
        %v4222 = vadd.f32 %v3902, %v4221
        %v4223 = vpop.f32.mrb[0].mxu0
        %4224 = vdwg.mxu0
        %v4225 = vsel %vm331, %v4067, 0.0
        %v4226 = vsel %vm331, %v4072, 0.0
        %v4227 = vadd.f32 %v4225, %v4226
        %v4228 = vsel %vm331, %v4077, 0.0
        %v4229 = vadd.f32 %v4227, %v4228
        %v4230 = vsel %vm331, %v4082, 0.0
        %v4231 = vadd.f32 %v4229, %v4230
        %v4232 = vsel %vm331, %v4087, 0.0
        %v4233 = vadd.f32 %v4231, %v4232
        %v4234 = vsel %vm331, %v4092, 0.0
        %v4235 = vadd.f32 %v4233, %v4234
        %v4236 = vsel %vm331, %v4097, 0.0
        %v4237 = vadd.f32 %v4235, %v4236
        %v4238 = vsel %vm331, %v4102, 0.0
        %v4239 = vadd.f32 %v4237, %v4238
        %v4240 = vsel %vm331, %v4107, 0.0
        %v4241 = vadd.f32 %v4239, %v4240
        %v4242 = vsel %vm331, %v4112, 0.0
        %v4243 = vadd.f32 %v4241, %v4242
        %v4244 = vsel %vm331, %v4117, 0.0
        %v4245 = vadd.f32 %v4243, %v4244
        %v4246 = vsel %vm331, %v4122, 0.0
        %v4247 = vadd.f32 %v4245, %v4246
        %v4248 = vsel %vm331, %v4127, 0.0
        %v4249 = vadd.f32 %v4247, %v4248
        %v4250 = vsel %vm331, %v4132, 0.0
        %v4251 = vadd.f32 %v4249, %v4250
        %v4252 = vsel %vm331, %v4137, 0.0
        %v4253 = vadd.f32 %v4251, %v4252
        %v4254 = vsel %vm331, %v4142, 0.0
        %v4255 = vadd.f32 %v4253, %v4254
        %v4256 = vsel %vm331, %v4147, 0.0
        %v4257 = vadd.f32 %v4255, %v4256
        %v4258 = vsel %vm331, %v4152, 0.0
        %v4259 = vadd.f32 %v4257, %v4258
        %v4260 = vsel %vm331, %v4157, 0.0
        %v4261 = vadd.f32 %v4259, %v4260
        %v4262 = vsel %vm331, %v4162, 0.0
        %v4263 = vadd.f32 %v4261, %v4262
        %v4264 = vsel %vm331, %v4167, 0.0
        %v4265 = vadd.f32 %v4263, %v4264
        %v4266 = vsel %vm331, %v4172, 0.0
        %v4267 = vadd.f32 %v4265, %v4266
        %v4268 = vsel %vm331, %v4177, 0.0
        %v4269 = vadd.f32 %v4267, %v4268
        %v4270 = vsel %vm331, %v4182, 0.0
        %v4271 = vadd.f32 %v4269, %v4270
        %v4272 = vsel %vm331, %v4187, 0.0
        %v4273 = vadd.f32 %v4271, %v4272
        %v4274 = vsel %vm331, %v4192, 0.0
        %v4275 = vadd.f32 %v4273, %v4274
        %v4276 = vsel %vm331, %v4197, 0.0
        %v4277 = vadd.f32 %v4275, %v4276
        %v4278 = vsel %vm331, %v4202, 0.0
        %v4279 = vadd.f32 %v4277, %v4278
        %v4280 = vsel %vm331, %v4207, 0.0
        %v4281 = vadd.f32 %v4279, %v4280
        %v4282 = vsel %vm331, %v4212, 0.0
        %v4283 = vadd.f32 %v4281, %v4282
        %v4284 = vsel %vm331, %v4217, 0.0
        %v4285 = vadd.f32 %v4283, %v4284
        %v4286 = vsel %vm331, %v4222, 0.0
        %v4287 = vadd.f32 %v4285, %v4286
        %v4288 = vrot.slane %v4287, 4
        %v4289 = vadd.f32 %v4287, %v4288
        %v4290 = vrot.slane %v4289, 2
        %v4291 = vadd.f32 %v4289, %v4290
        %v4292 = vrot.slane %v4291, 1
        %v4293 = vadd.f32 %v4291, %v4292
        %v4294 = vmul.f32 %v4067, %v4067
        %v4295 = vmul.f32 %v4072, %v4072
        %v4296 = vmul.f32 %v4077, %v4077
        %v4297 = vmul.f32 %v4082, %v4082
        %v4298 = vmul.f32 %v4087, %v4087
        %v4299 = vmul.f32 %v4092, %v4092
        %v4300 = vmul.f32 %v4097, %v4097
        %v4301 = vmul.f32 %v4102, %v4102
        %v4302 = vmul.f32 %v4107, %v4107
        %v4303 = vmul.f32 %v4112, %v4112
        %v4304 = vmul.f32 %v4117, %v4117
        %v4305 = vmul.f32 %v4122, %v4122
        %v4306 = vmul.f32 %v4127, %v4127
        %v4307 = vmul.f32 %v4132, %v4132
        %v4308 = vmul.f32 %v4137, %v4137
        %v4309 = vmul.f32 %v4142, %v4142
        %v4310 = vmul.f32 %v4147, %v4147
        %v4311 = vmul.f32 %v4152, %v4152
        %v4312 = vmul.f32 %v4157, %v4157
        %v4313 = vmul.f32 %v4162, %v4162
        %v4314 = vmul.f32 %v4167, %v4167
        %v4315 = vmul.f32 %v4172, %v4172
        %v4316 = vmul.f32 %v4177, %v4177
        %v4317 = vmul.f32 %v4182, %v4182
        %v4318 = vmul.f32 %v4187, %v4187
        %v4319 = vmul.f32 %v4192, %v4192
        %v4320 = vmul.f32 %v4197, %v4197
        %v4321 = vmul.f32 %v4202, %v4202
        %v4322 = vmul.f32 %v4207, %v4207
        %v4323 = vmul.f32 %v4212, %v4212
        %v4324 = vmul.f32 %v4217, %v4217
        %v4325 = vmul.f32 %v4222, %v4222
        %v4326 = vsel %vm331, %v4294, 0.0
        %v4327 = vsel %vm331, %v4295, 0.0
        %v4328 = vadd.f32 %v4326, %v4327
        %v4329 = vsel %vm331, %v4296, 0.0
        %v4330 = vadd.f32 %v4328, %v4329
        %v4331 = vsel %vm331, %v4297, 0.0
        %v4332 = vadd.f32 %v4330, %v4331
        %v4333 = vsel %vm331, %v4298, 0.0
        %v4334 = vadd.f32 %v4332, %v4333
        %v4335 = vsel %vm331, %v4299, 0.0
        %v4336 = vadd.f32 %v4334, %v4335
        %v4337 = vsel %vm331, %v4300, 0.0
        %v4338 = vadd.f32 %v4336, %v4337
        %v4339 = vsel %vm331, %v4301, 0.0
        %v4340 = vadd.f32 %v4338, %v4339
        %v4341 = vsel %vm331, %v4302, 0.0
        %v4342 = vadd.f32 %v4340, %v4341
        %v4343 = vsel %vm331, %v4303, 0.0
        %v4344 = vadd.f32 %v4342, %v4343
        %v4345 = vsel %vm331, %v4304, 0.0
        %v4346 = vadd.f32 %v4344, %v4345
        %v4347 = vsel %vm331, %v4305, 0.0
        %v4348 = vadd.f32 %v4346, %v4347
        %v4349 = vsel %vm331, %v4306, 0.0
        %v4350 = vadd.f32 %v4348, %v4349
        %v4351 = vsel %vm331, %v4307, 0.0
        %v4352 = vadd.f32 %v4350, %v4351
        %v4353 = vsel %vm331, %v4308, 0.0
        %v4354 = vadd.f32 %v4352, %v4353
        %v4355 = vsel %vm331, %v4309, 0.0
        %v4356 = vadd.f32 %v4354, %v4355
        %v4357 = vsel %vm331, %v4310, 0.0
        %v4358 = vadd.f32 %v4356, %v4357
        %v4359 = vsel %vm331, %v4311, 0.0
        %v4360 = vadd.f32 %v4358, %v4359
        %v4361 = vsel %vm331, %v4312, 0.0
        %v4362 = vadd.f32 %v4360, %v4361
        %v4363 = vsel %vm331, %v4313, 0.0
        %v4364 = vadd.f32 %v4362, %v4363
        %v4365 = vsel %vm331, %v4314, 0.0
        %v4366 = vadd.f32 %v4364, %v4365
        %v4367 = vsel %vm331, %v4315, 0.0
        %v4368 = vadd.f32 %v4366, %v4367
        %v4369 = vsel %vm331, %v4316, 0.0
        %v4370 = vadd.f32 %v4368, %v4369
        %v4371 = vsel %vm331, %v4317, 0.0
        %v4372 = vadd.f32 %v4370, %v4371
        %v4373 = vsel %vm331, %v4318, 0.0
        %v4374 = vadd.f32 %v4372, %v4373
        %v4375 = vsel %vm331, %v4319, 0.0
        %v4376 = vadd.f32 %v4374, %v4375
        %v4377 = vsel %vm331, %v4320, 0.0
        %v4378 = vadd.f32 %v4376, %v4377
        %v4379 = vsel %vm331, %v4321, 0.0
        %v4380 = vadd.f32 %v4378, %v4379
        %v4381 = vsel %vm331, %v4322, 0.0
        %v4382 = vadd.f32 %v4380, %v4381
        %v4383 = vsel %vm331, %v4323, 0.0
        %v4384 = vadd.f32 %v4382, %v4383
        %v4385 = vsel %vm331, %v4324, 0.0
        %v4386 = vadd.f32 %v4384, %v4385
        %v4387 = vsel %vm331, %v4325, 0.0
        %v4388 = vadd.f32 %v4386, %v4387
        %v4389 = vrot.slane %v4388, 4
        %v4390 = vadd.f32 %v4388, %v4389
        %v4391 = vrot.slane %v4390, 2
        %v4392 = vadd.f32 %v4390, %v4391
        %v4393 = vrot.slane %v4392, 1
        %v4394 = vadd.f32 %v4392, %v4393
        %v4395 = vmul.f32 %v4293, 0.00390625
        %v4396 = vmul.f32 %v4394, 0.00390625
        %v4397 = vmul.f32 %v4395, %v4395
        %v4398 = vsub.f32 %v4396, %v4397
        %v4399 = vmax.f32 %v4398, 0.0
        %v4400 = vadd.f32 %v4399, 1e-05
        %v4401 = vrsqrt.pop %v4400
        %s4402 = scalar_lea.vmem %s3, 1
        %v4403 = vld [vmem:[%s4402] sm:$0x1]
        %v4404 = vmul.f32 %v4401, %v4403
        %s4405 = scalar_lea.vmem %s4, 1
        %v4406 = vld [vmem:[%s4405] sm:$0x1]
        %v4407 = vmul.f32 %v4395, %v4404
        %v4408 = vsub.f32 %v4406, %v4407
        %v4409 = vlaneseq
        %v4410 = vshrl.u32 %v4409, 7
        %v4411 = vsub.s32 0, %v4410
        %v4412 = vrot.slane %v4404, %v4411
        %v4413 = vmul.f32 %v4067, %v4412
        %v4414 = vmul.f32 %v4072, %v4412
        %v4415 = vmul.f32 %v4077, %v4412
        %v4416 = vmul.f32 %v4082, %v4412
        %v4417 = vmul.f32 %v4087, %v4412
        %v4418 = vmul.f32 %v4092, %v4412
        %v4419 = vmul.f32 %v4097, %v4412
        %v4420 = vmul.f32 %v4102, %v4412
        %v4421 = vmul.f32 %v4107, %v4412
        %v4422 = vmul.f32 %v4112, %v4412
        %v4423 = vmul.f32 %v4117, %v4412
        %v4424 = vmul.f32 %v4122, %v4412
        %v4425 = vmul.f32 %v4127, %v4412
        %v4426 = vmul.f32 %v4132, %v4412
        %v4427 = vmul.f32 %v4137, %v4412
        %v4428 = vmul.f32 %v4142, %v4412
        %v4429 = vmul.f32 %v4147, %v4412
        %v4430 = vmul.f32 %v4152, %v4412
        %v4431 = vmul.f32 %v4157, %v4412
        %v4432 = vmul.f32 %v4162, %v4412
        %v4433 = vmul.f32 %v4167, %v4412
        %v4434 = vmul.f32 %v4172, %v4412
        %v4435 = vmul.f32 %v4177, %v4412
        %v4436 = vmul.f32 %v4182, %v4412
        %v4437 = vmul.f32 %v4187, %v4412
        %v4438 = vmul.f32 %v4192, %v4412
        %v4439 = vmul.f32 %v4197, %v4412
        %v4440 = vmul.f32 %v4202, %v4412
        %v4441 = vmul.f32 %v4207, %v4412
        %v4442 = vmul.f32 %v4212, %v4412
        %v4443 = vmul.f32 %v4217, %v4412
        %v4444 = vmul.f32 %v4222, %v4412
        %v4446 = vlaneseq
        %v4447 = vshrl.u32 %v4446, 7
        %v4448 = vsub.s32 0, %v4447
        %v4449 = vrot.slane %v4408, %v4448
        %v4451 = vadd.f32 %v4413, %v4449
        %v4452 = vadd.f32 %v4414, %v4449
        %v4453 = vadd.f32 %v4415, %v4449
        %v4454 = vadd.f32 %v4416, %v4449
        %v4455 = vadd.f32 %v4417, %v4449
        %v4456 = vadd.f32 %v4418, %v4449
        %v4457 = vadd.f32 %v4419, %v4449
        %v4458 = vadd.f32 %v4420, %v4449
        %v4459 = vadd.f32 %v4421, %v4449
        %v4460 = vadd.f32 %v4422, %v4449
        %v4461 = vadd.f32 %v4423, %v4449
        %v4462 = vadd.f32 %v4424, %v4449
        %v4463 = vadd.f32 %v4425, %v4449
        %v4464 = vadd.f32 %v4426, %v4449
        %v4465 = vadd.f32 %v4427, %v4449
        %v4466 = vadd.f32 %v4428, %v4449
        %v4467 = vadd.f32 %v4429, %v4449
        %v4468 = vadd.f32 %v4430, %v4449
        %v4469 = vadd.f32 %v4431, %v4449
        %v4470 = vadd.f32 %v4432, %v4449
        %v4471 = vadd.f32 %v4433, %v4449
        %v4472 = vadd.f32 %v4434, %v4449
        %v4473 = vadd.f32 %v4435, %v4449
        %v4474 = vadd.f32 %v4436, %v4449
        %v4475 = vadd.f32 %v4437, %v4449
        %v4476 = vadd.f32 %v4438, %v4449
        %v4477 = vadd.f32 %v4439, %v4449
        %v4478 = vadd.f32 %v4440, %v4449
        %v4479 = vadd.f32 %v4441, %v4449
        %v4480 = vadd.f32 %v4442, %v4449
        %v4481 = vadd.f32 %v4443, %v4449
        %v4482 = vadd.f32 %v4444, %v4449
        %v4483 = vmax.f32 %v4451, 0.0
        %v4484 = vmax.f32 %v4452, 0.0
        %v4485 = vmax.f32 %v4453, 0.0
        %v4486 = vmax.f32 %v4454, 0.0
        %v4487 = vmax.f32 %v4455, 0.0
        %v4488 = vmax.f32 %v4456, 0.0
        %v4489 = vmax.f32 %v4457, 0.0
        %v4490 = vmax.f32 %v4458, 0.0
        %v4491 = vmax.f32 %v4459, 0.0
        %v4492 = vmax.f32 %v4460, 0.0
        %v4493 = vmax.f32 %v4461, 0.0
        %v4494 = vmax.f32 %v4462, 0.0
        %v4495 = vmax.f32 %v4463, 0.0
        %v4496 = vmax.f32 %v4464, 0.0
        %v4497 = vmax.f32 %v4465, 0.0
        %v4498 = vmax.f32 %v4466, 0.0
        %v4499 = vmax.f32 %v4467, 0.0
        %v4500 = vmax.f32 %v4468, 0.0
        %v4501 = vmax.f32 %v4469, 0.0
        %v4502 = vmax.f32 %v4470, 0.0
        %v4503 = vmax.f32 %v4471, 0.0
        %v4504 = vmax.f32 %v4472, 0.0
        %v4505 = vmax.f32 %v4473, 0.0
        %v4506 = vmax.f32 %v4474, 0.0
        %v4507 = vmax.f32 %v4475, 0.0
        %v4508 = vmax.f32 %v4476, 0.0
        %v4509 = vmax.f32 %v4477, 0.0
        %v4510 = vmax.f32 %v4478, 0.0
        %v4511 = vmax.f32 %v4479, 0.0
        %v4512 = vmax.f32 %v4480, 0.0
        %v4513 = vmax.f32 %v4481, 0.0
        %v4514 = vmax.f32 %v4482, 0.0
        %4515 = vst.msk [vmem:[%s483 + $0x1] sm:$0xff] %vm331, %v4483
        %4516 = vst.msk [vmem:[%s483 + $0x9] sm:$0xff] %vm331, %v4484
        %4517 = vst.msk [vmem:[%s483 + $0x19] sm:$0xff] %vm331, %v4485
        %4518 = vst.msk [vmem:[%s483 + $0x21] sm:$0xff] %vm331, %v4486
        %4519 = vst.msk [vmem:[%s483 + $0x31] sm:$0xff] %vm331, %v4487
        %4520 = vst.msk [vmem:[%s483 + $0x39] sm:$0xff] %vm331, %v4488
        %4521 = vst.msk [vmem:[%s483 + $0x49] sm:$0xff] %vm331, %v4489
        %4522 = vst.msk [vmem:[%s483 + $0x51] sm:$0xff] %vm331, %v4490
        %4523 = vst.msk [vmem:[%s483 + $0x61] sm:$0xff] %vm331, %v4491
        %4524 = vst.msk [vmem:[%s483 + $0x69] sm:$0xff] %vm331, %v4492
        %4525 = vst.msk [vmem:[%s483 + $0x79] sm:$0xff] %vm331, %v4493
        %4526 = vst.msk [vmem:[%s483 + $0x81] sm:$0xff] %vm331, %v4494
        %4527 = vst.msk [vmem:[%s483 + $0x91] sm:$0xff] %vm331, %v4495
        %4528 = vst.msk [vmem:[%s483 + $0x99] sm:$0xff] %vm331, %v4496
        %4529 = vst.msk [vmem:[%s483 + $0xa9] sm:$0xff] %vm331, %v4497
        %4530 = vst.msk [vmem:[%s483 + $0xb1] sm:$0xff] %vm331, %v4498
        %4531 = vst.msk [vmem:[%s483 + $0xc1] sm:$0xff] %vm331, %v4499
        %4532 = vst.msk [vmem:[%s483 + $0xc9] sm:$0xff] %vm331, %v4500
        %4533 = vst.msk [vmem:[%s483 + $0xd9] sm:$0xff] %vm331, %v4501
        %4534 = vst.msk [vmem:[%s483 + $0xe1] sm:$0xff] %vm331, %v4502
        %4535 = vst.msk [vmem:[%s483 + $0xf1] sm:$0xff] %vm331, %v4503
        %4536 = vst.msk [vmem:[%s483 + $0xf9] sm:$0xff] %vm331, %v4504
        %4537 = vst.msk [vmem:[%s483 + $0x109] sm:$0xff] %vm331, %v4505
        %4538 = vst.msk [vmem:[%s483 + $0x111] sm:$0xff] %vm331, %v4506
        %4539 = vst.msk [vmem:[%s483 + $0x121] sm:$0xff] %vm331, %v4507
        %4540 = vst.msk [vmem:[%s483 + $0x129] sm:$0xff] %vm331, %v4508
        %4541 = vst.msk [vmem:[%s483 + $0x139] sm:$0xff] %vm331, %v4509
        %4542 = vst.msk [vmem:[%s483 + $0x141] sm:$0xff] %vm331, %v4510
        %4543 = vst.msk [vmem:[%s483 + $0x151] sm:$0xff] %vm331, %v4511
        %4544 = vst.msk [vmem:[%s483 + $0x159] sm:$0xff] %vm331, %v4512
        %4545 = vst.msk [vmem:[%s483 + $0x169] sm:$0xff] %vm331, %v4513
        %4546 = vst.msk [vmem:[%s483 + $0x171] sm:$0xff] %vm331, %v4514
        %v4547 = vld [vmem:[#allocation2] sm:$0xff]
        %v4548 = vld [vmem:[#allocation2 + $0x8] sm:$0xff]
        %v4549 = vld [vmem:[#allocation2 + $0x18] sm:$0xff]
        %v4550 = vld [vmem:[#allocation2 + $0x20] sm:$0xff]
        %v4551 = vld [vmem:[#allocation2 + $0x30] sm:$0xff]
        %v4552 = vld [vmem:[#allocation2 + $0x38] sm:$0xff]
        %v4553 = vld [vmem:[#allocation2 + $0x48] sm:$0xff]
        %v4554 = vld [vmem:[#allocation2 + $0x50] sm:$0xff]
        %v4555 = vld [vmem:[#allocation2 + $0x60] sm:$0xff]
        %v4556 = vld [vmem:[#allocation2 + $0x68] sm:$0xff]
        %v4557 = vld [vmem:[#allocation2 + $0x78] sm:$0xff]
        %v4558 = vld [vmem:[#allocation2 + $0x80] sm:$0xff]
        %v4559 = vld [vmem:[#allocation2 + $0x90] sm:$0xff]
        %v4560 = vld [vmem:[#allocation2 + $0x98] sm:$0xff]
        %v4561 = vld [vmem:[#allocation2 + $0xa8] sm:$0xff]
        %v4562 = vld [vmem:[#allocation2 + $0xb0] sm:$0xff]
        %v4563 = vld [vmem:[#allocation2 + $0xc0] sm:$0xff]
        %v4564 = vld [vmem:[#allocation2 + $0xc8] sm:$0xff]
        %v4565 = vld [vmem:[#allocation2 + $0xd8] sm:$0xff]
        %v4566 = vld [vmem:[#allocation2 + $0xe0] sm:$0xff]
        %v4567 = vld [vmem:[#allocation2 + $0xf0] sm:$0xff]
        %v4568 = vld [vmem:[#allocation2 + $0xf8] sm:$0xff]
        %v4569 = vld [vmem:[#allocation2 + $0x108] sm:$0xff]
        %v4570 = vld [vmem:[#allocation2 + $0x110] sm:$0xff]
        %v4571 = vld [vmem:[#allocation2 + $0x120] sm:$0xff]
        %v4572 = vld [vmem:[#allocation2 + $0x128] sm:$0xff]
        %v4573 = vld [vmem:[#allocation2 + $0x138] sm:$0xff]
        %v4574 = vld [vmem:[#allocation2 + $0x140] sm:$0xff]
        %v4575 = vld [vmem:[#allocation2 + $0x150] sm:$0xff]
        %v4576 = vld [vmem:[#allocation2 + $0x158] sm:$0xff]
        %v4577 = vld [vmem:[#allocation2 + $0x168] sm:$0xff]
        %v4578 = vld [vmem:[#allocation2 + $0x170] sm:$0xff]
        %v4579 = vld [vmem:[#allocation2 + $0x1] sm:$0xff]
        %v4580 = vld [vmem:[#allocation2 + $0x9] sm:$0xff]
        %v4581 = vld [vmem:[#allocation2 + $0x19] sm:$0xff]
        %v4582 = vld [vmem:[#allocation2 + $0x21] sm:$0xff]
        %v4583 = vld [vmem:[#allocation2 + $0x31] sm:$0xff]
        %v4584 = vld [vmem:[#allocation2 + $0x39] sm:$0xff]
        %v4585 = vld [vmem:[#allocation2 + $0x49] sm:$0xff]
        %v4586 = vld [vmem:[#allocation2 + $0x51] sm:$0xff]
        %v4587 = vld [vmem:[#allocation2 + $0x61] sm:$0xff]
        %v4588 = vld [vmem:[#allocation2 + $0x69] sm:$0xff]
        %v4589 = vld [vmem:[#allocation2 + $0x79] sm:$0xff]
        %v4590 = vld [vmem:[#allocation2 + $0x81] sm:$0xff]
        %v4591 = vld [vmem:[#allocation2 + $0x91] sm:$0xff]
        %v4592 = vld [vmem:[#allocation2 + $0x99] sm:$0xff]
        %v4593 = vld [vmem:[#allocation2 + $0xa9] sm:$0xff]
        %v4594 = vld [vmem:[#allocation2 + $0xb1] sm:$0xff]
        %v4595 = vld [vmem:[#allocation2 + $0xc1] sm:$0xff]
        %v4596 = vld [vmem:[#allocation2 + $0xc9] sm:$0xff]
        %v4597 = vld [vmem:[#allocation2 + $0xd9] sm:$0xff]
        %v4598 = vld [vmem:[#allocation2 + $0xe1] sm:$0xff]
        %v4599 = vld [vmem:[#allocation2 + $0xf1] sm:$0xff]
        %v4600 = vld [vmem:[#allocation2 + $0xf9] sm:$0xff]
        %v4601 = vld [vmem:[#allocation2 + $0x109] sm:$0xff]
        %v4602 = vld [vmem:[#allocation2 + $0x111] sm:$0xff]
        %v4603 = vld [vmem:[#allocation2 + $0x121] sm:$0xff]
        %v4604 = vld [vmem:[#allocation2 + $0x129] sm:$0xff]
        %v4605 = vld [vmem:[#allocation2 + $0x139] sm:$0xff]
        %v4606 = vld [vmem:[#allocation2 + $0x141] sm:$0xff]
        %v4607 = vld [vmem:[#allocation2 + $0x151] sm:$0xff]
        %v4608 = vld [vmem:[#allocation2 + $0x159] sm:$0xff]
        %v4609 = vld [vmem:[#allocation2 + $0x169] sm:$0xff]
        %v4610 = vld [vmem:[#allocation2 + $0x171] sm:$0xff]
        %v4611 = vld [vmem:[#allocation2 + $0x2] sm:$0xff]
        %v4612 = vld [vmem:[#allocation2 + $0xa] sm:$0xff]
        %v4613 = vld [vmem:[#allocation2 + $0x1a] sm:$0xff]
        %v4614 = vld [vmem:[#allocation2 + $0x22] sm:$0xff]
        %v4615 = vld [vmem:[#allocation2 + $0x32] sm:$0xff]
        %v4616 = vld [vmem:[#allocation2 + $0x3a] sm:$0xff]
        %v4617 = vld [vmem:[#allocation2 + $0x4a] sm:$0xff]
        %v4618 = vld [vmem:[#allocation2 + $0x52] sm:$0xff]
        %v4619 = vld [vmem:[#allocation2 + $0x62] sm:$0xff]
        %v4620 = vld [vmem:[#allocation2 + $0x6a] sm:$0xff]
        %v4621 = vld [vmem:[#allocation2 + $0x7a] sm:$0xff]
        %v4622 = vld [vmem:[#allocation2 + $0x82] sm:$0xff]
        %v4623 = vld [vmem:[#allocation2 + $0x92] sm:$0xff]
        %v4624 = vld [vmem:[#allocation2 + $0x9a] sm:$0xff]
        %v4625 = vld [vmem:[#allocation2 + $0xaa] sm:$0xff]
        %v4626 = vld [vmem:[#allocation2 + $0xb2] sm:$0xff]
        %v4627 = vld [vmem:[#allocation2 + $0xc2] sm:$0xff]
        %v4628 = vld [vmem:[#allocation2 + $0xca] sm:$0xff]
        %v4629 = vld [vmem:[#allocation2 + $0xda] sm:$0xff]
        %v4630 = vld [vmem:[#allocation2 + $0xe2] sm:$0xff]
        %v4631 = vld [vmem:[#allocation2 + $0xf2] sm:$0xff]
        %v4632 = vld [vmem:[#allocation2 + $0xfa] sm:$0xff]
        %v4633 = vld [vmem:[#allocation2 + $0x10a] sm:$0xff]
        %v4634 = vld [vmem:[#allocation2 + $0x112] sm:$0xff]
        %v4635 = vld [vmem:[#allocation2 + $0x122] sm:$0xff]
        %v4636 = vld [vmem:[#allocation2 + $0x12a] sm:$0xff]
        %v4637 = vld [vmem:[#allocation2 + $0x13a] sm:$0xff]
        %v4638 = vld [vmem:[#allocation2 + $0x142] sm:$0xff]
        %v4639 = vld [vmem:[#allocation2 + $0x152] sm:$0xff]
        %v4640 = vld [vmem:[#allocation2 + $0x15a] sm:$0xff]
        %v4641 = vld [vmem:[#allocation2 + $0x16a] sm:$0xff]
        %v4642 = vld [vmem:[#allocation2 + $0x172] sm:$0xff]
        %v4643 = vld [vmem:[%s483] sm:$0xff]
        %v4644 = vld [vmem:[%s483 + $0x8] sm:$0xff]
        %v4645 = vld [vmem:[%s483 + $0x18] sm:$0xff]
        %v4646 = vld [vmem:[%s483 + $0x20] sm:$0xff]
        %v4647 = vld [vmem:[%s483 + $0x30] sm:$0xff]
        %v4648 = vld [vmem:[%s483 + $0x38] sm:$0xff]
        %v4649 = vld [vmem:[%s483 + $0x48] sm:$0xff]
        %v4650 = vld [vmem:[%s483 + $0x50] sm:$0xff]
        %v4651 = vld [vmem:[%s483 + $0x60] sm:$0xff]
        %v4652 = vld [vmem:[%s483 + $0x68] sm:$0xff]
        %v4653 = vld [vmem:[%s483 + $0x78] sm:$0xff]
        %v4654 = vld [vmem:[%s483 + $0x80] sm:$0xff]
        %v4655 = vld [vmem:[%s483 + $0x90] sm:$0xff]
        %v4656 = vld [vmem:[%s483 + $0x98] sm:$0xff]
        %v4657 = vld [vmem:[%s483 + $0xa8] sm:$0xff]
        %v4658 = vld [vmem:[%s483 + $0xb0] sm:$0xff]
        %v4659 = vld [vmem:[%s483 + $0xc0] sm:$0xff]
        %v4660 = vld [vmem:[%s483 + $0xc8] sm:$0xff]
        %v4661 = vld [vmem:[%s483 + $0xd8] sm:$0xff]
        %v4662 = vld [vmem:[%s483 + $0xe0] sm:$0xff]
        %v4663 = vld [vmem:[%s483 + $0xf0] sm:$0xff]
        %v4664 = vld [vmem:[%s483 + $0xf8] sm:$0xff]
        %v4665 = vld [vmem:[%s483 + $0x108] sm:$0xff]
        %v4666 = vld [vmem:[%s483 + $0x110] sm:$0xff]
        %v4667 = vld [vmem:[%s483 + $0x120] sm:$0xff]
        %v4668 = vld [vmem:[%s483 + $0x128] sm:$0xff]
        %v4669 = vld [vmem:[%s483 + $0x138] sm:$0xff]
        %v4670 = vld [vmem:[%s483 + $0x140] sm:$0xff]
        %v4671 = vld [vmem:[%s483 + $0x150] sm:$0xff]
        %v4672 = vld [vmem:[%s483 + $0x158] sm:$0xff]
        %v4673 = vld [vmem:[%s483 + $0x168] sm:$0xff]
        %v4674 = vld [vmem:[%s483 + $0x170] sm:$0xff]
        %v4675 = vld [vmem:[%s483 + $0x1] sm:$0xff]
        %v4676 = vld [vmem:[%s483 + $0x9] sm:$0xff]
        %v4677 = vld [vmem:[%s483 + $0x19] sm:$0xff]
        %v4678 = vld [vmem:[%s483 + $0x21] sm:$0xff]
        %v4679 = vld [vmem:[%s483 + $0x31] sm:$0xff]
        %v4680 = vld [vmem:[%s483 + $0x39] sm:$0xff]
        %v4681 = vld [vmem:[%s483 + $0x49] sm:$0xff]
        %v4682 = vld [vmem:[%s483 + $0x51] sm:$0xff]
        %v4683 = vld [vmem:[%s483 + $0x61] sm:$0xff]
        %v4684 = vld [vmem:[%s483 + $0x69] sm:$0xff]
        %v4685 = vld [vmem:[%s483 + $0x79] sm:$0xff]
        %v4686 = vld [vmem:[%s483 + $0x81] sm:$0xff]
        %v4687 = vld [vmem:[%s483 + $0x91] sm:$0xff]
        %v4688 = vld [vmem:[%s483 + $0x99] sm:$0xff]
        %v4689 = vld [vmem:[%s483 + $0xa9] sm:$0xff]
        %v4690 = vld [vmem:[%s483 + $0xb1] sm:$0xff]
        %v4691 = vld [vmem:[%s483 + $0xc1] sm:$0xff]
        %v4692 = vld [vmem:[%s483 + $0xc9] sm:$0xff]
        %v4693 = vld [vmem:[%s483 + $0xd9] sm:$0xff]
        %v4694 = vld [vmem:[%s483 + $0xe1] sm:$0xff]
        %v4695 = vld [vmem:[%s483 + $0xf1] sm:$0xff]
        %v4696 = vld [vmem:[%s483 + $0xf9] sm:$0xff]
        %v4697 = vld [vmem:[%s483 + $0x109] sm:$0xff]
        %v4698 = vld [vmem:[%s483 + $0x111] sm:$0xff]
        %v4699 = vld [vmem:[%s483 + $0x121] sm:$0xff]
        %v4700 = vld [vmem:[%s483 + $0x129] sm:$0xff]
        %v4701 = vld [vmem:[%s483 + $0x139] sm:$0xff]
        %v4702 = vld [vmem:[%s483 + $0x141] sm:$0xff]
        %v4703 = vld [vmem:[%s483 + $0x151] sm:$0xff]
        %v4704 = vld [vmem:[%s483 + $0x159] sm:$0xff]
        %v4705 = vld [vmem:[%s483 + $0x169] sm:$0xff]
        %v4706 = vld [vmem:[%s483 + $0x171] sm:$0xff]
        %v4707 = vld [vmem:[%s483 + $0x2] sm:$0xff]
        %v4708 = vld [vmem:[%s483 + $0xa] sm:$0xff]
        %v4709 = vld [vmem:[%s483 + $0x1a] sm:$0xff]
        %v4710 = vld [vmem:[%s483 + $0x22] sm:$0xff]
        %v4711 = vld [vmem:[%s483 + $0x32] sm:$0xff]
        %v4712 = vld [vmem:[%s483 + $0x3a] sm:$0xff]
        %v4713 = vld [vmem:[%s483 + $0x4a] sm:$0xff]
        %v4714 = vld [vmem:[%s483 + $0x52] sm:$0xff]
        %v4715 = vld [vmem:[%s483 + $0x62] sm:$0xff]
        %v4716 = vld [vmem:[%s483 + $0x6a] sm:$0xff]
        %v4717 = vld [vmem:[%s483 + $0x7a] sm:$0xff]
        %v4718 = vld [vmem:[%s483 + $0x82] sm:$0xff]
        %v4719 = vld [vmem:[%s483 + $0x92] sm:$0xff]
        %v4720 = vld [vmem:[%s483 + $0x9a] sm:$0xff]
        %v4721 = vld [vmem:[%s483 + $0xaa] sm:$0xff]
        %v4722 = vld [vmem:[%s483 + $0xb2] sm:$0xff]
        %v4723 = vld [vmem:[%s483 + $0xc2] sm:$0xff]
        %v4724 = vld [vmem:[%s483 + $0xca] sm:$0xff]
        %v4725 = vld [vmem:[%s483 + $0xda] sm:$0xff]
        %v4726 = vld [vmem:[%s483 + $0xe2] sm:$0xff]
        %v4727 = vld [vmem:[%s483 + $0xf2] sm:$0xff]
        %v4728 = vld [vmem:[%s483 + $0xfa] sm:$0xff]
        %v4729 = vld [vmem:[%s483 + $0x10a] sm:$0xff]
        %v4730 = vld [vmem:[%s483 + $0x112] sm:$0xff]
        %v4731 = vld [vmem:[%s483 + $0x122] sm:$0xff]
        %v4732 = vld [vmem:[%s483 + $0x12a] sm:$0xff]
        %v4733 = vld [vmem:[%s483 + $0x13a] sm:$0xff]
        %v4734 = vld [vmem:[%s483 + $0x142] sm:$0xff]
        %v4735 = vld [vmem:[%s483 + $0x152] sm:$0xff]
        %v4736 = vld [vmem:[%s483 + $0x15a] sm:$0xff]
        %v4737 = vld [vmem:[%s483 + $0x16a] sm:$0xff]
        %v4738 = vld [vmem:[%s483 + $0x172] sm:$0xff]
        %v4739 = vld [vmem:[%s580] sm:$0xff]
        %v4740 = vld [vmem:[%s580 + $0x8] sm:$0xff]
        %v4741 = vld [vmem:[%s580 + $0x18] sm:$0xff]
        %v4742 = vld [vmem:[%s580 + $0x20] sm:$0xff]
        %v4743 = vld [vmem:[%s580 + $0x30] sm:$0xff]
        %v4744 = vld [vmem:[%s580 + $0x38] sm:$0xff]
        %v4745 = vld [vmem:[%s580 + $0x48] sm:$0xff]
        %v4746 = vld [vmem:[%s580 + $0x50] sm:$0xff]
        %v4747 = vld [vmem:[%s580 + $0x60] sm:$0xff]
        %v4748 = vld [vmem:[%s580 + $0x68] sm:$0xff]
        %v4749 = vld [vmem:[%s580 + $0x78] sm:$0xff]
        %v4750 = vld [vmem:[%s580 + $0x80] sm:$0xff]
        %v4751 = vld [vmem:[%s580 + $0x90] sm:$0xff]
        %v4752 = vld [vmem:[%s580 + $0x98] sm:$0xff]
        %v4753 = vld [vmem:[%s580 + $0xa8] sm:$0xff]
        %v4754 = vld [vmem:[%s580 + $0xb0] sm:$0xff]
        %v4755 = vld [vmem:[%s580 + $0xc0] sm:$0xff]
        %v4756 = vld [vmem:[%s580 + $0xc8] sm:$0xff]
        %v4757 = vld [vmem:[%s580 + $0xd8] sm:$0xff]
        %v4758 = vld [vmem:[%s580 + $0xe0] sm:$0xff]
        %v4759 = vld [vmem:[%s580 + $0xf0] sm:$0xff]
        %v4760 = vld [vmem:[%s580 + $0xf8] sm:$0xff]
        %v4761 = vld [vmem:[%s580 + $0x108] sm:$0xff]
        %v4762 = vld [vmem:[%s580 + $0x110] sm:$0xff]
        %v4763 = vld [vmem:[%s580 + $0x120] sm:$0xff]
        %v4764 = vld [vmem:[%s580 + $0x128] sm:$0xff]
        %v4765 = vld [vmem:[%s580 + $0x138] sm:$0xff]
        %v4766 = vld [vmem:[%s580 + $0x140] sm:$0xff]
        %v4767 = vld [vmem:[%s580 + $0x150] sm:$0xff]
        %v4768 = vld [vmem:[%s580 + $0x158] sm:$0xff]
        %v4769 = vld [vmem:[%s580 + $0x168] sm:$0xff]
        %v4770 = vld [vmem:[%s580 + $0x170] sm:$0xff]
        %v4771 = vld [vmem:[%s580 + $0x1] sm:$0xff]
        %v4772 = vld [vmem:[%s580 + $0x9] sm:$0xff]
        %v4773 = vld [vmem:[%s580 + $0x19] sm:$0xff]
        %v4774 = vld [vmem:[%s580 + $0x21] sm:$0xff]
        %v4775 = vld [vmem:[%s580 + $0x31] sm:$0xff]
        %v4776 = vld [vmem:[%s580 + $0x39] sm:$0xff]
        %v4777 = vld [vmem:[%s580 + $0x49] sm:$0xff]
        %v4778 = vld [vmem:[%s580 + $0x51] sm:$0xff]
        %v4779 = vld [vmem:[%s580 + $0x61] sm:$0xff]
        %v4780 = vld [vmem:[%s580 + $0x69] sm:$0xff]
        %v4781 = vld [vmem:[%s580 + $0x79] sm:$0xff]
        %v4782 = vld [vmem:[%s580 + $0x81] sm:$0xff]
        %v4783 = vld [vmem:[%s580 + $0x91] sm:$0xff]
        %v4784 = vld [vmem:[%s580 + $0x99] sm:$0xff]
        %v4785 = vld [vmem:[%s580 + $0xa9] sm:$0xff]
        %v4786 = vld [vmem:[%s580 + $0xb1] sm:$0xff]
        %v4787 = vld [vmem:[%s580 + $0xc1] sm:$0xff]
        %v4788 = vld [vmem:[%s580 + $0xc9] sm:$0xff]
        %v4789 = vld [vmem:[%s580 + $0xd9] sm:$0xff]
        %v4790 = vld [vmem:[%s580 + $0xe1] sm:$0xff]
        %v4791 = vld [vmem:[%s580 + $0xf1] sm:$0xff]
        %v4792 = vld [vmem:[%s580 + $0xf9] sm:$0xff]
        %v4793 = vld [vmem:[%s580 + $0x109] sm:$0xff]
        %v4794 = vld [vmem:[%s580 + $0x111] sm:$0xff]
        %v4795 = vld [vmem:[%s580 + $0x121] sm:$0xff]
        %v4796 = vld [vmem:[%s580 + $0x129] sm:$0xff]
        %v4797 = vld [vmem:[%s580 + $0x139] sm:$0xff]
        %v4798 = vld [vmem:[%s580 + $0x141] sm:$0xff]
        %v4799 = vld [vmem:[%s580 + $0x151] sm:$0xff]
        %v4800 = vld [vmem:[%s580 + $0x159] sm:$0xff]
        %v4801 = vld [vmem:[%s580 + $0x169] sm:$0xff]
        %v4802 = vld [vmem:[%s580 + $0x171] sm:$0xff]
        %v4803 = vld [vmem:[%s580 + $0x2] sm:$0xff]
        %v4804 = vld [vmem:[%s580 + $0xa] sm:$0xff]
        %v4805 = vld [vmem:[%s580 + $0x1a] sm:$0xff]
        %v4806 = vld [vmem:[%s580 + $0x22] sm:$0xff]
        %v4807 = vld [vmem:[%s580 + $0x32] sm:$0xff]
        %v4808 = vld [vmem:[%s580 + $0x3a] sm:$0xff]
        %v4809 = vld [vmem:[%s580 + $0x4a] sm:$0xff]
        %v4810 = vld [vmem:[%s580 + $0x52] sm:$0xff]
        %v4811 = vld [vmem:[%s580 + $0x62] sm:$0xff]
        %v4812 = vld [vmem:[%s580 + $0x6a] sm:$0xff]
        %v4813 = vld [vmem:[%s580 + $0x7a] sm:$0xff]
        %v4814 = vld [vmem:[%s580 + $0x82] sm:$0xff]
        %v4815 = vld [vmem:[%s580 + $0x92] sm:$0xff]
        %v4816 = vld [vmem:[%s580 + $0x9a] sm:$0xff]
        %v4817 = vld [vmem:[%s580 + $0xaa] sm:$0xff]
        %v4818 = vld [vmem:[%s580 + $0xb2] sm:$0xff]
        %v4819 = vld [vmem:[%s580 + $0xc2] sm:$0xff]
        %v4820 = vld [vmem:[%s580 + $0xca] sm:$0xff]
        %v4821 = vld [vmem:[%s580 + $0xda] sm:$0xff]
        %v4822 = vld [vmem:[%s580 + $0xe2] sm:$0xff]
        %v4823 = vld [vmem:[%s580 + $0xf2] sm:$0xff]
        %v4824 = vld [vmem:[%s580 + $0xfa] sm:$0xff]
        %v4825 = vld [vmem:[%s580 + $0x10a] sm:$0xff]
        %v4826 = vld [vmem:[%s580 + $0x112] sm:$0xff]
        %v4827 = vld [vmem:[%s580 + $0x122] sm:$0xff]
        %v4828 = vld [vmem:[%s580 + $0x12a] sm:$0xff]
        %v4829 = vld [vmem:[%s580 + $0x13a] sm:$0xff]
        %v4830 = vld [vmem:[%s580 + $0x142] sm:$0xff]
        %v4831 = vld [vmem:[%s580 + $0x152] sm:$0xff]
        %v4832 = vld [vmem:[%s580 + $0x15a] sm:$0xff]
        %v4833 = vld [vmem:[%s580 + $0x16a] sm:$0xff]
        %v4834 = vld [vmem:[%s580 + $0x172] sm:$0xff]
        %4867 = vrot.lane.b32.xlu0 %v4579, 16
        %v4868 = vpop.permute.xlu0 %4867
        %4869 = vrot.lane.b32.xlu0 %v4580, 16
        %v4870 = vpop.permute.xlu0 %4869
        %4871 = vrot.lane.b32.xlu0 %v4581, 16
        %v4872 = vpop.permute.xlu0 %4871
        %4873 = vrot.lane.b32.xlu0 %v4582, 16
        %v4874 = vpop.permute.xlu0 %4873
        %4875 = vrot.lane.b32.xlu0 %v4583, 16
        %v4876 = vpop.permute.xlu0 %4875
        %4877 = vrot.lane.b32.xlu0 %v4584, 16
        %v4878 = vpop.permute.xlu0 %4877
        %4879 = vrot.lane.b32.xlu0 %v4585, 16
        %v4880 = vpop.permute.xlu0 %4879
        %4881 = vrot.lane.b32.xlu0 %v4586, 16
        %v4882 = vpop.permute.xlu0 %4881
        %4883 = vrot.lane.b32.xlu0 %v4587, 16
        %v4884 = vpop.permute.xlu0 %4883
        %4885 = vrot.lane.b32.xlu0 %v4588, 16
        %v4886 = vpop.permute.xlu0 %4885
        %4887 = vrot.lane.b32.xlu0 %v4589, 16
        %v4888 = vpop.permute.xlu0 %4887
        %4889 = vrot.lane.b32.xlu0 %v4590, 16
        %v4890 = vpop.permute.xlu0 %4889
        %4891 = vrot.lane.b32.xlu0 %v4591, 16
        %v4892 = vpop.permute.xlu0 %4891
        %4893 = vrot.lane.b32.xlu0 %v4592, 16
        %v4894 = vpop.permute.xlu0 %4893
        %4895 = vrot.lane.b32.xlu0 %v4593, 16
        %v4896 = vpop.permute.xlu0 %4895
        %4897 = vrot.lane.b32.xlu0 %v4594, 16
        %v4898 = vpop.permute.xlu0 %4897
        %4899 = vrot.lane.b32.xlu0 %v4595, 16
        %v4900 = vpop.permute.xlu0 %4899
        %4901 = vrot.lane.b32.xlu0 %v4596, 16
        %v4902 = vpop.permute.xlu0 %4901
        %4903 = vrot.lane.b32.xlu0 %v4597, 16
        %v4904 = vpop.permute.xlu0 %4903
        %4905 = vrot.lane.b32.xlu0 %v4598, 16
        %v4906 = vpop.permute.xlu0 %4905
        %4907 = vrot.lane.b32.xlu0 %v4599, 16
        %v4908 = vpop.permute.xlu0 %4907
        %4909 = vrot.lane.b32.xlu0 %v4600, 16
        %v4910 = vpop.permute.xlu0 %4909
        %4911 = vrot.lane.b32.xlu0 %v4601, 16
        %v4912 = vpop.permute.xlu0 %4911
        %4913 = vrot.lane.b32.xlu0 %v4602, 16
        %v4914 = vpop.permute.xlu0 %4913
        %4915 = vrot.lane.b32.xlu0 %v4603, 16
        %v4916 = vpop.permute.xlu0 %4915
        %4917 = vrot.lane.b32.xlu0 %v4604, 16
        %v4918 = vpop.permute.xlu0 %4917
        %4919 = vrot.lane.b32.xlu0 %v4605, 16
        %v4920 = vpop.permute.xlu0 %4919
        %4921 = vrot.lane.b32.xlu0 %v4606, 16
        %v4922 = vpop.permute.xlu0 %4921
        %4923 = vrot.lane.b32.xlu0 %v4607, 16
        %v4924 = vpop.permute.xlu0 %4923
        %4925 = vrot.lane.b32.xlu0 %v4608, 16
        %v4926 = vpop.permute.xlu0 %4925
        %4927 = vrot.lane.b32.xlu0 %v4609, 16
        %v4928 = vpop.permute.xlu0 %4927
        %4929 = vrot.lane.b32.xlu0 %v4610, 16
        %v4930 = vpop.permute.xlu0 %4929
        %4995 = vrot.lane.b32.xlu0 %v4611, 32
        %v4996 = vpop.permute.xlu0 %4995
        %4997 = vrot.lane.b32.xlu0 %v4612, 32
        %v4998 = vpop.permute.xlu0 %4997
        %4999 = vrot.lane.b32.xlu0 %v4613, 32
        %v5000 = vpop.permute.xlu0 %4999
        %5001 = vrot.lane.b32.xlu0 %v4614, 32
        %v5002 = vpop.permute.xlu0 %5001
        %5003 = vrot.lane.b32.xlu0 %v4615, 32
        %v5004 = vpop.permute.xlu0 %5003
        %5005 = vrot.lane.b32.xlu0 %v4616, 32
        %v5006 = vpop.permute.xlu0 %5005
        %5007 = vrot.lane.b32.xlu0 %v4617, 32
        %v5008 = vpop.permute.xlu0 %5007
        %5009 = vrot.lane.b32.xlu0 %v4618, 32
        %v5010 = vpop.permute.xlu0 %5009
        %5011 = vrot.lane.b32.xlu0 %v4619, 32
        %v5012 = vpop.permute.xlu0 %5011
        %5013 = vrot.lane.b32.xlu0 %v4620, 32
        %v5014 = vpop.permute.xlu0 %5013
        %5015 = vrot.lane.b32.xlu0 %v4621, 32
        %v5016 = vpop.permute.xlu0 %5015
        %5017 = vrot.lane.b32.xlu0 %v4622, 32
        %v5018 = vpop.permute.xlu0 %5017
        %5019 = vrot.lane.b32.xlu0 %v4623, 32
        %v5020 = vpop.permute.xlu0 %5019
        %5021 = vrot.lane.b32.xlu0 %v4624, 32
        %v5022 = vpop.permute.xlu0 %5021
        %5023 = vrot.lane.b32.xlu0 %v4625, 32
        %v5024 = vpop.permute.xlu0 %5023
        %5025 = vrot.lane.b32.xlu0 %v4626, 32
        %v5026 = vpop.permute.xlu0 %5025
        %5027 = vrot.lane.b32.xlu0 %v4627, 32
        %v5028 = vpop.permute.xlu0 %5027
        %5029 = vrot.lane.b32.xlu0 %v4628, 32
        %v5030 = vpop.permute.xlu0 %5029
        %5031 = vrot.lane.b32.xlu0 %v4629, 32
        %v5032 = vpop.permute.xlu0 %5031
        %5033 = vrot.lane.b32.xlu0 %v4630, 32
        %v5034 = vpop.permute.xlu0 %5033
        %5035 = vrot.lane.b32.xlu0 %v4631, 32
        %v5036 = vpop.permute.xlu0 %5035
        %5037 = vrot.lane.b32.xlu0 %v4632, 32
        %v5038 = vpop.permute.xlu0 %5037
        %5039 = vrot.lane.b32.xlu0 %v4633, 32
        %v5040 = vpop.permute.xlu0 %5039
        %5041 = vrot.lane.b32.xlu0 %v4634, 32
        %v5042 = vpop.permute.xlu0 %5041
        %5043 = vrot.lane.b32.xlu0 %v4635, 32
        %v5044 = vpop.permute.xlu0 %5043
        %5045 = vrot.lane.b32.xlu0 %v4636, 32
        %v5046 = vpop.permute.xlu0 %5045
        %5047 = vrot.lane.b32.xlu0 %v4637, 32
        %v5048 = vpop.permute.xlu0 %5047
        %5049 = vrot.lane.b32.xlu0 %v4638, 32
        %v5050 = vpop.permute.xlu0 %5049
        %5051 = vrot.lane.b32.xlu0 %v4639, 32
        %v5052 = vpop.permute.xlu0 %5051
        %5053 = vrot.lane.b32.xlu0 %v4640, 32
        %v5054 = vpop.permute.xlu0 %5053
        %5055 = vrot.lane.b32.xlu0 %v4641, 32
        %v5056 = vpop.permute.xlu0 %5055
        %5057 = vrot.lane.b32.xlu0 %v4642, 32
        %v5058 = vpop.permute.xlu0 %5057
        %5123 = vrot.lane.b32.xlu0 %v4643, 48
        %v5124 = vpop.permute.xlu0 %5123
        %5125 = vrot.lane.b32.xlu0 %v4644, 48
        %v5126 = vpop.permute.xlu0 %5125
        %5127 = vrot.lane.b32.xlu0 %v4645, 48
        %v5128 = vpop.permute.xlu0 %5127
        %5129 = vrot.lane.b32.xlu0 %v4646, 48
        %v5130 = vpop.permute.xlu0 %5129
        %5131 = vrot.lane.b32.xlu0 %v4647, 48
        %v5132 = vpop.permute.xlu0 %5131
        %5133 = vrot.lane.b32.xlu0 %v4648, 48
        %v5134 = vpop.permute.xlu0 %5133
        %5135 = vrot.lane.b32.xlu0 %v4649, 48
        %v5136 = vpop.permute.xlu0 %5135
        %5137 = vrot.lane.b32.xlu0 %v4650, 48
        %v5138 = vpop.permute.xlu0 %5137
        %5139 = vrot.lane.b32.xlu0 %v4651, 48
        %v5140 = vpop.permute.xlu0 %5139
        %5141 = vrot.lane.b32.xlu0 %v4652, 48
        %v5142 = vpop.permute.xlu0 %5141
        %5143 = vrot.lane.b32.xlu0 %v4653, 48
        %v5144 = vpop.permute.xlu0 %5143
        %5145 = vrot.lane.b32.xlu0 %v4654, 48
        %v5146 = vpop.permute.xlu0 %5145
        %5147 = vrot.lane.b32.xlu0 %v4655, 48
        %v5148 = vpop.permute.xlu0 %5147
        %5149 = vrot.lane.b32.xlu0 %v4656, 48
        %v5150 = vpop.permute.xlu0 %5149
        %5151 = vrot.lane.b32.xlu0 %v4657, 48
        %v5152 = vpop.permute.xlu0 %5151
        %5153 = vrot.lane.b32.xlu0 %v4658, 48
        %v5154 = vpop.permute.xlu0 %5153
        %5155 = vrot.lane.b32.xlu0 %v4659, 48
        %v5156 = vpop.permute.xlu0 %5155
        %5157 = vrot.lane.b32.xlu0 %v4660, 48
        %v5158 = vpop.permute.xlu0 %5157
        %5159 = vrot.lane.b32.xlu0 %v4661, 48
        %v5160 = vpop.permute.xlu0 %5159
        %5161 = vrot.lane.b32.xlu0 %v4662, 48
        %v5162 = vpop.permute.xlu0 %5161
        %5163 = vrot.lane.b32.xlu0 %v4663, 48
        %v5164 = vpop.permute.xlu0 %5163
        %5165 = vrot.lane.b32.xlu0 %v4664, 48
        %v5166 = vpop.permute.xlu0 %5165
        %5167 = vrot.lane.b32.xlu0 %v4665, 48
        %v5168 = vpop.permute.xlu0 %5167
        %5169 = vrot.lane.b32.xlu0 %v4666, 48
        %v5170 = vpop.permute.xlu0 %5169
        %5171 = vrot.lane.b32.xlu0 %v4667, 48
        %v5172 = vpop.permute.xlu0 %5171
        %5173 = vrot.lane.b32.xlu0 %v4668, 48
        %v5174 = vpop.permute.xlu0 %5173
        %5175 = vrot.lane.b32.xlu0 %v4669, 48
        %v5176 = vpop.permute.xlu0 %5175
        %5177 = vrot.lane.b32.xlu0 %v4670, 48
        %v5178 = vpop.permute.xlu0 %5177
        %5179 = vrot.lane.b32.xlu0 %v4671, 48
        %v5180 = vpop.permute.xlu0 %5179
        %5181 = vrot.lane.b32.xlu0 %v4672, 48
        %v5182 = vpop.permute.xlu0 %5181
        %5183 = vrot.lane.b32.xlu0 %v4673, 48
        %v5184 = vpop.permute.xlu0 %5183
        %5185 = vrot.lane.b32.xlu0 %v4674, 48
        %v5186 = vpop.permute.xlu0 %5185
        %5251 = vrot.lane.b32.xlu0 %v4675, 64
        %v5252 = vpop.permute.xlu0 %5251
        %5253 = vrot.lane.b32.xlu0 %v4676, 64
        %v5254 = vpop.permute.xlu0 %5253
        %5255 = vrot.lane.b32.xlu0 %v4677, 64
        %v5256 = vpop.permute.xlu0 %5255
        %5257 = vrot.lane.b32.xlu0 %v4678, 64
        %v5258 = vpop.permute.xlu0 %5257
        %5259 = vrot.lane.b32.xlu0 %v4679, 64
        %v5260 = vpop.permute.xlu0 %5259
        %5261 = vrot.lane.b32.xlu0 %v4680, 64
        %v5262 = vpop.permute.xlu0 %5261
        %5263 = vrot.lane.b32.xlu0 %v4681, 64
        %v5264 = vpop.permute.xlu0 %5263
        %5265 = vrot.lane.b32.xlu0 %v4682, 64
        %v5266 = vpop.permute.xlu0 %5265
        %5267 = vrot.lane.b32.xlu0 %v4683, 64
        %v5268 = vpop.permute.xlu0 %5267
        %5269 = vrot.lane.b32.xlu0 %v4684, 64
        %v5270 = vpop.permute.xlu0 %5269
        %5271 = vrot.lane.b32.xlu0 %v4685, 64
        %v5272 = vpop.permute.xlu0 %5271
        %5273 = vrot.lane.b32.xlu0 %v4686, 64
        %v5274 = vpop.permute.xlu0 %5273
        %5275 = vrot.lane.b32.xlu0 %v4687, 64
        %v5276 = vpop.permute.xlu0 %5275
        %5277 = vrot.lane.b32.xlu0 %v4688, 64
        %v5278 = vpop.permute.xlu0 %5277
        %5279 = vrot.lane.b32.xlu0 %v4689, 64
        %v5280 = vpop.permute.xlu0 %5279
        %5281 = vrot.lane.b32.xlu0 %v4690, 64
        %v5282 = vpop.permute.xlu0 %5281
        %5283 = vrot.lane.b32.xlu0 %v4691, 64
        %v5284 = vpop.permute.xlu0 %5283
        %5285 = vrot.lane.b32.xlu0 %v4692, 64
        %v5286 = vpop.permute.xlu0 %5285
        %5287 = vrot.lane.b32.xlu0 %v4693, 64
        %v5288 = vpop.permute.xlu0 %5287
        %5289 = vrot.lane.b32.xlu0 %v4694, 64
        %v5290 = vpop.permute.xlu0 %5289
        %5291 = vrot.lane.b32.xlu0 %v4695, 64
        %v5292 = vpop.permute.xlu0 %5291
        %5293 = vrot.lane.b32.xlu0 %v4696, 64
        %v5294 = vpop.permute.xlu0 %5293
        %5295 = vrot.lane.b32.xlu0 %v4697, 64
        %v5296 = vpop.permute.xlu0 %5295
        %5297 = vrot.lane.b32.xlu0 %v4698, 64
        %v5298 = vpop.permute.xlu0 %5297
        %5299 = vrot.lane.b32.xlu0 %v4699, 64
        %v5300 = vpop.permute.xlu0 %5299
        %5301 = vrot.lane.b32.xlu0 %v4700, 64
        %v5302 = vpop.permute.xlu0 %5301
        %5303 = vrot.lane.b32.xlu0 %v4701, 64
        %v5304 = vpop.permute.xlu0 %5303
        %5305 = vrot.lane.b32.xlu0 %v4702, 64
        %v5306 = vpop.permute.xlu0 %5305
        %5307 = vrot.lane.b32.xlu0 %v4703, 64
        %v5308 = vpop.permute.xlu0 %5307
        %5309 = vrot.lane.b32.xlu0 %v4704, 64
        %v5310 = vpop.permute.xlu0 %5309
        %5311 = vrot.lane.b32.xlu0 %v4705, 64
        %v5312 = vpop.permute.xlu0 %5311
        %5313 = vrot.lane.b32.xlu0 %v4706, 64
        %v5314 = vpop.permute.xlu0 %5313
        %5379 = vrot.lane.b32.xlu0 %v4707, 80
        %v5380 = vpop.permute.xlu0 %5379
        %5381 = vrot.lane.b32.xlu0 %v4708, 80
        %v5382 = vpop.permute.xlu0 %5381
        %5383 = vrot.lane.b32.xlu0 %v4709, 80
        %v5384 = vpop.permute.xlu0 %5383
        %5385 = vrot.lane.b32.xlu0 %v4710, 80
        %v5386 = vpop.permute.xlu0 %5385
        %5387 = vrot.lane.b32.xlu0 %v4711, 80
        %v5388 = vpop.permute.xlu0 %5387
        %5389 = vrot.lane.b32.xlu0 %v4712, 80
        %v5390 = vpop.permute.xlu0 %5389
        %5391 = vrot.lane.b32.xlu0 %v4713, 80
        %v5392 = vpop.permute.xlu0 %5391
        %5393 = vrot.lane.b32.xlu0 %v4714, 80
        %v5394 = vpop.permute.xlu0 %5393
        %5395 = vrot.lane.b32.xlu0 %v4715, 80
        %v5396 = vpop.permute.xlu0 %5395
        %5397 = vrot.lane.b32.xlu0 %v4716, 80
        %v5398 = vpop.permute.xlu0 %5397
        %5399 = vrot.lane.b32.xlu0 %v4717, 80
        %v5400 = vpop.permute.xlu0 %5399
        %5401 = vrot.lane.b32.xlu0 %v4718, 80
        %v5402 = vpop.permute.xlu0 %5401
        %5403 = vrot.lane.b32.xlu0 %v4719, 80
        %v5404 = vpop.permute.xlu0 %5403
        %5405 = vrot.lane.b32.xlu0 %v4720, 80
        %v5406 = vpop.permute.xlu0 %5405
        %5407 = vrot.lane.b32.xlu0 %v4721, 80
        %v5408 = vpop.permute.xlu0 %5407
        %5409 = vrot.lane.b32.xlu0 %v4722, 80
        %v5410 = vpop.permute.xlu0 %5409
        %5411 = vrot.lane.b32.xlu0 %v4723, 80
        %v5412 = vpop.permute.xlu0 %5411
        %5413 = vrot.lane.b32.xlu0 %v4724, 80
        %v5414 = vpop.permute.xlu0 %5413
        %5415 = vrot.lane.b32.xlu0 %v4725, 80
        %v5416 = vpop.permute.xlu0 %5415
        %5417 = vrot.lane.b32.xlu0 %v4726, 80
        %v5418 = vpop.permute.xlu0 %5417
        %5419 = vrot.lane.b32.xlu0 %v4727, 80
        %v5420 = vpop.permute.xlu0 %5419
        %5421 = vrot.lane.b32.xlu0 %v4728, 80
        %v5422 = vpop.permute.xlu0 %5421
        %5423 = vrot.lane.b32.xlu0 %v4729, 80
        %v5424 = vpop.permute.xlu0 %5423
        %5425 = vrot.lane.b32.xlu0 %v4730, 80
        %v5426 = vpop.permute.xlu0 %5425
        %5427 = vrot.lane.b32.xlu0 %v4731, 80
        %v5428 = vpop.permute.xlu0 %5427
        %5429 = vrot.lane.b32.xlu0 %v4732, 80
        %v5430 = vpop.permute.xlu0 %5429
        %5431 = vrot.lane.b32.xlu0 %v4733, 80
        %v5432 = vpop.permute.xlu0 %5431
        %5433 = vrot.lane.b32.xlu0 %v4734, 80
        %v5434 = vpop.permute.xlu0 %5433
        %5435 = vrot.lane.b32.xlu0 %v4735, 80
        %v5436 = vpop.permute.xlu0 %5435
        %5437 = vrot.lane.b32.xlu0 %v4736, 80
        %v5438 = vpop.permute.xlu0 %5437
        %5439 = vrot.lane.b32.xlu0 %v4737, 80
        %v5440 = vpop.permute.xlu0 %5439
        %5441 = vrot.lane.b32.xlu0 %v4738, 80
        %v5442 = vpop.permute.xlu0 %5441
        %5507 = vrot.lane.b32.xlu0 %v4739, 96
        %v5508 = vpop.permute.xlu0 %5507
        %5509 = vrot.lane.b32.xlu0 %v4740, 96
        %v5510 = vpop.permute.xlu0 %5509
        %5511 = vrot.lane.b32.xlu0 %v4741, 96
        %v5512 = vpop.permute.xlu0 %5511
        %5513 = vrot.lane.b32.xlu0 %v4742, 96
        %v5514 = vpop.permute.xlu0 %5513
        %5515 = vrot.lane.b32.xlu0 %v4743, 96
        %v5516 = vpop.permute.xlu0 %5515
        %5517 = vrot.lane.b32.xlu0 %v4744, 96
        %v5518 = vpop.permute.xlu0 %5517
        %5519 = vrot.lane.b32.xlu0 %v4745, 96
        %v5520 = vpop.permute.xlu0 %5519
        %5521 = vrot.lane.b32.xlu0 %v4746, 96
        %v5522 = vpop.permute.xlu0 %5521
        %5523 = vrot.lane.b32.xlu0 %v4747, 96
        %v5524 = vpop.permute.xlu0 %5523
        %5525 = vrot.lane.b32.xlu0 %v4748, 96
        %v5526 = vpop.permute.xlu0 %5525
        %5527 = vrot.lane.b32.xlu0 %v4749, 96
        %v5528 = vpop.permute.xlu0 %5527
        %5529 = vrot.lane.b32.xlu0 %v4750, 96
        %v5530 = vpop.permute.xlu0 %5529
        %5531 = vrot.lane.b32.xlu0 %v4751, 96
        %v5532 = vpop.permute.xlu0 %5531
        %5533 = vrot.lane.b32.xlu0 %v4752, 96
        %v5534 = vpop.permute.xlu0 %5533
        %5535 = vrot.lane.b32.xlu0 %v4753, 96
        %v5536 = vpop.permute.xlu0 %5535
        %5537 = vrot.lane.b32.xlu0 %v4754, 96
        %v5538 = vpop.permute.xlu0 %5537
        %5539 = vrot.lane.b32.xlu0 %v4755, 96
        %v5540 = vpop.permute.xlu0 %5539
        %5541 = vrot.lane.b32.xlu0 %v4756, 96
        %v5542 = vpop.permute.xlu0 %5541
        %5543 = vrot.lane.b32.xlu0 %v4757, 96
        %v5544 = vpop.permute.xlu0 %5543
        %5545 = vrot.lane.b32.xlu0 %v4758, 96
        %v5546 = vpop.permute.xlu0 %5545
        %5547 = vrot.lane.b32.xlu0 %v4759, 96
        %v5548 = vpop.permute.xlu0 %5547
        %5549 = vrot.lane.b32.xlu0 %v4760, 96
        %v5550 = vpop.permute.xlu0 %5549
        %5551 = vrot.lane.b32.xlu0 %v4761, 96
        %v5552 = vpop.permute.xlu0 %5551
        %5553 = vrot.lane.b32.xlu0 %v4762, 96
        %v5554 = vpop.permute.xlu0 %5553
        %5555 = vrot.lane.b32.xlu0 %v4763, 96
        %v5556 = vpop.permute.xlu0 %5555
        %5557 = vrot.lane.b32.xlu0 %v4764, 96
        %v5558 = vpop.permute.xlu0 %5557
        %5559 = vrot.lane.b32.xlu0 %v4765, 96
        %v5560 = vpop.permute.xlu0 %5559
        %5561 = vrot.lane.b32.xlu0 %v4766, 96
        %v5562 = vpop.permute.xlu0 %5561
        %5563 = vrot.lane.b32.xlu0 %v4767, 96
        %v5564 = vpop.permute.xlu0 %5563
        %5565 = vrot.lane.b32.xlu0 %v4768, 96
        %v5566 = vpop.permute.xlu0 %5565
        %5567 = vrot.lane.b32.xlu0 %v4769, 96
        %v5568 = vpop.permute.xlu0 %5567
        %5569 = vrot.lane.b32.xlu0 %v4770, 96
        %v5570 = vpop.permute.xlu0 %5569
        %5635 = vrot.lane.b32.xlu0 %v4771, 112
        %v5636 = vpop.permute.xlu0 %5635
        %5637 = vrot.lane.b32.xlu0 %v4772, 112
        %v5638 = vpop.permute.xlu0 %5637
        %5639 = vrot.lane.b32.xlu0 %v4773, 112
        %v5640 = vpop.permute.xlu0 %5639
        %5641 = vrot.lane.b32.xlu0 %v4774, 112
        %v5642 = vpop.permute.xlu0 %5641
        %5643 = vrot.lane.b32.xlu0 %v4775, 112
        %v5644 = vpop.permute.xlu0 %5643
        %5645 = vrot.lane.b32.xlu0 %v4776, 112
        %v5646 = vpop.permute.xlu0 %5645
        %5647 = vrot.lane.b32.xlu0 %v4777, 112
        %v5648 = vpop.permute.xlu0 %5647
        %5649 = vrot.lane.b32.xlu0 %v4778, 112
        %v5650 = vpop.permute.xlu0 %5649
        %5651 = vrot.lane.b32.xlu0 %v4779, 112
        %v5652 = vpop.permute.xlu0 %5651
        %5653 = vrot.lane.b32.xlu0 %v4780, 112
        %v5654 = vpop.permute.xlu0 %5653
        %5655 = vrot.lane.b32.xlu0 %v4781, 112
        %v5656 = vpop.permute.xlu0 %5655
        %5657 = vrot.lane.b32.xlu0 %v4782, 112
        %v5658 = vpop.permute.xlu0 %5657
        %5659 = vrot.lane.b32.xlu0 %v4783, 112
        %v5660 = vpop.permute.xlu0 %5659
        %5661 = vrot.lane.b32.xlu0 %v4784, 112
        %v5662 = vpop.permute.xlu0 %5661
        %5663 = vrot.lane.b32.xlu0 %v4785, 112
        %v5664 = vpop.permute.xlu0 %5663
        %5665 = vrot.lane.b32.xlu0 %v4786, 112
        %v5666 = vpop.permute.xlu0 %5665
        %5667 = vrot.lane.b32.xlu0 %v4787, 112
        %v5668 = vpop.permute.xlu0 %5667
        %5669 = vrot.lane.b32.xlu0 %v4788, 112
        %v5670 = vpop.permute.xlu0 %5669
        %5671 = vrot.lane.b32.xlu0 %v4789, 112
        %v5672 = vpop.permute.xlu0 %5671
        %5673 = vrot.lane.b32.xlu0 %v4790, 112
        %v5674 = vpop.permute.xlu0 %5673
        %5675 = vrot.lane.b32.xlu0 %v4791, 112
        %v5676 = vpop.permute.xlu0 %5675
        %5677 = vrot.lane.b32.xlu0 %v4792, 112
        %v5678 = vpop.permute.xlu0 %5677
        %5679 = vrot.lane.b32.xlu0 %v4793, 112
        %v5680 = vpop.permute.xlu0 %5679
        %5681 = vrot.lane.b32.xlu0 %v4794, 112
        %v5682 = vpop.permute.xlu0 %5681
        %5683 = vrot.lane.b32.xlu0 %v4795, 112
        %v5684 = vpop.permute.xlu0 %5683
        %5685 = vrot.lane.b32.xlu0 %v4796, 112
        %v5686 = vpop.permute.xlu0 %5685
        %5687 = vrot.lane.b32.xlu0 %v4797, 112
        %v5688 = vpop.permute.xlu0 %5687
        %5689 = vrot.lane.b32.xlu0 %v4798, 112
        %v5690 = vpop.permute.xlu0 %5689
        %5691 = vrot.lane.b32.xlu0 %v4799, 112
        %v5692 = vpop.permute.xlu0 %5691
        %5693 = vrot.lane.b32.xlu0 %v4800, 112
        %v5694 = vpop.permute.xlu0 %5693
        %5695 = vrot.lane.b32.xlu0 %v4801, 112
        %v5696 = vpop.permute.xlu0 %5695
        %5697 = vrot.lane.b32.xlu0 %v4802, 112
        %v5698 = vpop.permute.xlu0 %5697
        %v5731 = vsel %vm331, %v4547, %v4868
        %v5732 = vsel %vm331, %v4548, %v4870
        %v5733 = vsel %vm331, %v4549, %v4872
        %v5734 = vsel %vm331, %v4550, %v4874
        %v5735 = vsel %vm331, %v4551, %v4876
        %v5736 = vsel %vm331, %v4552, %v4878
        %v5737 = vsel %vm331, %v4553, %v4880
        %v5738 = vsel %vm331, %v4554, %v4882
        %v5739 = vsel %vm331, %v4555, %v4884
        %v5740 = vsel %vm331, %v4556, %v4886
        %v5741 = vsel %vm331, %v4557, %v4888
        %v5742 = vsel %vm331, %v4558, %v4890
        %v5743 = vsel %vm331, %v4559, %v4892
        %v5744 = vsel %vm331, %v4560, %v4894
        %v5745 = vsel %vm331, %v4561, %v4896
        %v5746 = vsel %vm331, %v4562, %v4898
        %v5747 = vsel %vm331, %v4563, %v4900
        %v5748 = vsel %vm331, %v4564, %v4902
        %v5749 = vsel %vm331, %v4565, %v4904
        %v5750 = vsel %vm331, %v4566, %v4906
        %v5751 = vsel %vm331, %v4567, %v4908
        %v5752 = vsel %vm331, %v4568, %v4910
        %v5753 = vsel %vm331, %v4569, %v4912
        %v5754 = vsel %vm331, %v4570, %v4914
        %v5755 = vsel %vm331, %v4571, %v4916
        %v5756 = vsel %vm331, %v4572, %v4918
        %v5757 = vsel %vm331, %v4573, %v4920
        %v5758 = vsel %vm331, %v4574, %v4922
        %v5759 = vsel %vm331, %v4575, %v4924
        %v5760 = vsel %vm331, %v4576, %v4926
        %v5761 = vsel %vm331, %v4577, %v4928
        %v5762 = vsel %vm331, %v4578, %v4930
        %v5763 = vsel %vm1605, %v5731, %v4996
        %v5764 = vsel %vm1605, %v5732, %v4998
        %v5765 = vsel %vm1605, %v5733, %v5000
        %v5766 = vsel %vm1605, %v5734, %v5002
        %v5767 = vsel %vm1605, %v5735, %v5004
        %v5768 = vsel %vm1605, %v5736, %v5006
        %v5769 = vsel %vm1605, %v5737, %v5008
        %v5770 = vsel %vm1605, %v5738, %v5010
        %v5771 = vsel %vm1605, %v5739, %v5012
        %v5772 = vsel %vm1605, %v5740, %v5014
        %v5773 = vsel %vm1605, %v5741, %v5016
        %v5774 = vsel %vm1605, %v5742, %v5018
        %v5775 = vsel %vm1605, %v5743, %v5020
        %v5776 = vsel %vm1605, %v5744, %v5022
        %v5777 = vsel %vm1605, %v5745, %v5024
        %v5778 = vsel %vm1605, %v5746, %v5026
        %v5779 = vsel %vm1605, %v5747, %v5028
        %v5780 = vsel %vm1605, %v5748, %v5030
        %v5781 = vsel %vm1605, %v5749, %v5032
        %v5782 = vsel %vm1605, %v5750, %v5034
        %v5783 = vsel %vm1605, %v5751, %v5036
        %v5784 = vsel %vm1605, %v5752, %v5038
        %v5785 = vsel %vm1605, %v5753, %v5040
        %v5786 = vsel %vm1605, %v5754, %v5042
        %v5787 = vsel %vm1605, %v5755, %v5044
        %v5788 = vsel %vm1605, %v5756, %v5046
        %v5789 = vsel %vm1605, %v5757, %v5048
        %v5790 = vsel %vm1605, %v5758, %v5050
        %v5791 = vsel %vm1605, %v5759, %v5052
        %v5792 = vsel %vm1605, %v5760, %v5054
        %v5793 = vsel %vm1605, %v5761, %v5056
        %v5794 = vsel %vm1605, %v5762, %v5058
        %v5795 = vsel %vm1638, %v5763, %v5124
        %v5796 = vsel %vm1638, %v5764, %v5126
        %v5797 = vsel %vm1638, %v5765, %v5128
        %v5798 = vsel %vm1638, %v5766, %v5130
        %v5799 = vsel %vm1638, %v5767, %v5132
        %v5800 = vsel %vm1638, %v5768, %v5134
        %v5801 = vsel %vm1638, %v5769, %v5136
        %v5802 = vsel %vm1638, %v5770, %v5138
        %v5803 = vsel %vm1638, %v5771, %v5140
        %v5804 = vsel %vm1638, %v5772, %v5142
        %v5805 = vsel %vm1638, %v5773, %v5144
        %v5806 = vsel %vm1638, %v5774, %v5146
        %v5807 = vsel %vm1638, %v5775, %v5148
        %v5808 = vsel %vm1638, %v5776, %v5150
        %v5809 = vsel %vm1638, %v5777, %v5152
        %v5810 = vsel %vm1638, %v5778, %v5154
        %v5811 = vsel %vm1638, %v5779, %v5156
        %v5812 = vsel %vm1638, %v5780, %v5158
        %v5813 = vsel %vm1638, %v5781, %v5160
        %v5814 = vsel %vm1638, %v5782, %v5162
        %v5815 = vsel %vm1638, %v5783, %v5164
        %v5816 = vsel %vm1638, %v5784, %v5166
        %v5817 = vsel %vm1638, %v5785, %v5168
        %v5818 = vsel %vm1638, %v5786, %v5170
        %v5819 = vsel %vm1638, %v5787, %v5172
        %v5820 = vsel %vm1638, %v5788, %v5174
        %v5821 = vsel %vm1638, %v5789, %v5176
        %v5822 = vsel %vm1638, %v5790, %v5178
        %v5823 = vsel %vm1638, %v5791, %v5180
        %v5824 = vsel %vm1638, %v5792, %v5182
        %v5825 = vsel %vm1638, %v5793, %v5184
        %v5826 = vsel %vm1638, %v5794, %v5186
        %v5827 = vsel %vm1671, %v5795, %v5252
        %v5828 = vsel %vm1671, %v5796, %v5254
        %v5829 = vsel %vm1671, %v5797, %v5256
        %v5830 = vsel %vm1671, %v5798, %v5258
        %v5831 = vsel %vm1671, %v5799, %v5260
        %v5832 = vsel %vm1671, %v5800, %v5262
        %v5833 = vsel %vm1671, %v5801, %v5264
        %v5834 = vsel %vm1671, %v5802, %v5266
        %v5835 = vsel %vm1671, %v5803, %v5268
        %v5836 = vsel %vm1671, %v5804, %v5270
        %v5837 = vsel %vm1671, %v5805, %v5272
        %v5838 = vsel %vm1671, %v5806, %v5274
        %v5839 = vsel %vm1671, %v5807, %v5276
        %v5840 = vsel %vm1671, %v5808, %v5278
        %v5841 = vsel %vm1671, %v5809, %v5280
        %v5842 = vsel %vm1671, %v5810, %v5282
        %v5843 = vsel %vm1671, %v5811, %v5284
        %v5844 = vsel %vm1671, %v5812, %v5286
        %v5845 = vsel %vm1671, %v5813, %v5288
        %v5846 = vsel %vm1671, %v5814, %v5290
        %v5847 = vsel %vm1671, %v5815, %v5292
        %v5848 = vsel %vm1671, %v5816, %v5294
        %v5849 = vsel %vm1671, %v5817, %v5296
        %v5850 = vsel %vm1671, %v5818, %v5298
        %v5851 = vsel %vm1671, %v5819, %v5300
        %v5852 = vsel %vm1671, %v5820, %v5302
        %v5853 = vsel %vm1671, %v5821, %v5304
        %v5854 = vsel %vm1671, %v5822, %v5306
        %v5855 = vsel %vm1671, %v5823, %v5308
        %v5856 = vsel %vm1671, %v5824, %v5310
        %v5857 = vsel %vm1671, %v5825, %v5312
        %v5858 = vsel %vm1671, %v5826, %v5314
        %v5859 = vsel %vm1704, %v5827, %v5380
        %v5860 = vsel %vm1704, %v5828, %v5382
        %v5861 = vsel %vm1704, %v5829, %v5384
        %v5862 = vsel %vm1704, %v5830, %v5386
        %v5863 = vsel %vm1704, %v5831, %v5388
        %v5864 = vsel %vm1704, %v5832, %v5390
        %v5865 = vsel %vm1704, %v5833, %v5392
        %v5866 = vsel %vm1704, %v5834, %v5394
        %v5867 = vsel %vm1704, %v5835, %v5396
        %v5868 = vsel %vm1704, %v5836, %v5398
        %v5869 = vsel %vm1704, %v5837, %v5400
        %v5870 = vsel %vm1704, %v5838, %v5402
        %v5871 = vsel %vm1704, %v5839, %v5404
        %v5872 = vsel %vm1704, %v5840, %v5406
        %v5873 = vsel %vm1704, %v5841, %v5408
        %v5874 = vsel %vm1704, %v5842, %v5410
        %v5875 = vsel %vm1704, %v5843, %v5412
        %v5876 = vsel %vm1704, %v5844, %v5414
        %v5877 = vsel %vm1704, %v5845, %v5416
        %v5878 = vsel %vm1704, %v5846, %v5418
        %v5879 = vsel %vm1704, %v5847, %v5420
        %v5880 = vsel %vm1704, %v5848, %v5422
        %v5881 = vsel %vm1704, %v5849, %v5424
        %v5882 = vsel %vm1704, %v5850, %v5426
        %v5883 = vsel %vm1704, %v5851, %v5428
        %v5884 = vsel %vm1704, %v5852, %v5430
        %v5885 = vsel %vm1704, %v5853, %v5432
        %v5886 = vsel %vm1704, %v5854, %v5434
        %v5887 = vsel %vm1704, %v5855, %v5436
        %v5888 = vsel %vm1704, %v5856, %v5438
        %v5889 = vsel %vm1704, %v5857, %v5440
        %v5890 = vsel %vm1704, %v5858, %v5442
        %v5891 = vsel %vm1737, %v5859, %v5508
        %v5892 = vsel %vm1737, %v5860, %v5510
        %v5893 = vsel %vm1737, %v5861, %v5512
        %v5894 = vsel %vm1737, %v5862, %v5514
        %v5895 = vsel %vm1737, %v5863, %v5516
        %v5896 = vsel %vm1737, %v5864, %v5518
        %v5897 = vsel %vm1737, %v5865, %v5520
        %v5898 = vsel %vm1737, %v5866, %v5522
        %v5899 = vsel %vm1737, %v5867, %v5524
        %v5900 = vsel %vm1737, %v5868, %v5526
        %v5901 = vsel %vm1737, %v5869, %v5528
        %v5902 = vsel %vm1737, %v5870, %v5530
        %v5903 = vsel %vm1737, %v5871, %v5532
        %v5904 = vsel %vm1737, %v5872, %v5534
        %v5905 = vsel %vm1737, %v5873, %v5536
        %v5906 = vsel %vm1737, %v5874, %v5538
        %v5907 = vsel %vm1737, %v5875, %v5540
        %v5908 = vsel %vm1737, %v5876, %v5542
        %v5909 = vsel %vm1737, %v5877, %v5544
        %v5910 = vsel %vm1737, %v5878, %v5546
        %v5911 = vsel %vm1737, %v5879, %v5548
        %v5912 = vsel %vm1737, %v5880, %v5550
        %v5913 = vsel %vm1737, %v5881, %v5552
        %v5914 = vsel %vm1737, %v5882, %v5554
        %v5915 = vsel %vm1737, %v5883, %v5556
        %v5916 = vsel %vm1737, %v5884, %v5558
        %v5917 = vsel %vm1737, %v5885, %v5560
        %v5918 = vsel %vm1737, %v5886, %v5562
        %v5919 = vsel %vm1737, %v5887, %v5564
        %v5920 = vsel %vm1737, %v5888, %v5566
        %v5921 = vsel %vm1737, %v5889, %v5568
        %v5922 = vsel %vm1737, %v5890, %v5570
        %v5923 = vsel %vm1770, %v5891, %v5636
        %v5924 = vsel %vm1770, %v5892, %v5638
        %v5925 = vsel %vm1770, %v5893, %v5640
        %v5926 = vsel %vm1770, %v5894, %v5642
        %v5927 = vsel %vm1770, %v5895, %v5644
        %v5928 = vsel %vm1770, %v5896, %v5646
        %v5929 = vsel %vm1770, %v5897, %v5648
        %v5930 = vsel %vm1770, %v5898, %v5650
        %v5931 = vsel %vm1770, %v5899, %v5652
        %v5932 = vsel %vm1770, %v5900, %v5654
        %v5933 = vsel %vm1770, %v5901, %v5656
        %v5934 = vsel %vm1770, %v5902, %v5658
        %v5935 = vsel %vm1770, %v5903, %v5660
        %v5936 = vsel %vm1770, %v5904, %v5662
        %v5937 = vsel %vm1770, %v5905, %v5664
        %v5938 = vsel %vm1770, %v5906, %v5666
        %v5939 = vsel %vm1770, %v5907, %v5668
        %v5940 = vsel %vm1770, %v5908, %v5670
        %v5941 = vsel %vm1770, %v5909, %v5672
        %v5942 = vsel %vm1770, %v5910, %v5674
        %v5943 = vsel %vm1770, %v5911, %v5676
        %v5944 = vsel %vm1770, %v5912, %v5678
        %v5945 = vsel %vm1770, %v5913, %v5680
        %v5946 = vsel %vm1770, %v5914, %v5682
        %v5947 = vsel %vm1770, %v5915, %v5684
        %v5948 = vsel %vm1770, %v5916, %v5686
        %v5949 = vsel %vm1770, %v5917, %v5688
        %v5950 = vsel %vm1770, %v5918, %v5690
        %v5951 = vsel %vm1770, %v5919, %v5692
        %v5952 = vsel %vm1770, %v5920, %v5694
        %v5953 = vsel %vm1770, %v5921, %v5696
        %v5954 = vsel %vm1770, %v5922, %v5698
        %s5955 = scalar_lea.vmem %s1, 288
        %v5956 = vld [vmem:[%s5955] sm:$0xff]
        %v5957 = vld [vmem:[%s5955 + $0x8] sm:$0xff]
        %v5958 = vld [vmem:[%s5955 + $0x10] sm:$0xff]
        %v5959 = vld [vmem:[%s5955 + $0x18] sm:$0xff]
        %v5960 = vld [vmem:[%s5955 + $0x20] sm:$0xff]
        %v5961 = vld [vmem:[%s5955 + $0x28] sm:$0xff]
        %v5962 = vld [vmem:[%s5955 + $0x30] sm:$0xff]
        %v5963 = vld [vmem:[%s5955 + $0x38] sm:$0xff]
        %v5964 = vld [vmem:[%s5955 + $0x40] sm:$0xff]
        %v5965 = vld [vmem:[%s5955 + $0x48] sm:$0xff]
        %v5966 = vld [vmem:[%s5955 + $0x50] sm:$0xff]
        %v5967 = vld [vmem:[%s5955 + $0x58] sm:$0xff]
        %v5968 = vld [vmem:[%s5955 + $0x60] sm:$0xff]
        %v5969 = vld [vmem:[%s5955 + $0x68] sm:$0xff]
        %v5970 = vld [vmem:[%s5955 + $0x70] sm:$0xff]
        %v5971 = vld [vmem:[%s5955 + $0x78] sm:$0xff]
        %v5972 = vld [vmem:[%s5955 + $0x80] sm:$0xff]
        %v5973 = vld [vmem:[%s5955 + $0x88] sm:$0xff]
        %s5974 = scalar_lea.vmem %s2, 2
        %v5975 = vld [vmem:[%s5974] sm:$0x1]
        %v5977 = vlaneseq
        %v5978 = vshrl.u32 %v5977, 7
        %v5979 = vsub.s32 0, %v5978
        %v5980 = vrot.slane %v5975, %v5979
        %v5983 = vsel %vm331, %v4803, 0
        %v5986 = vsel %vm331, %v4804, 0
        %v5989 = vsel %vm331, %v4805, 0
        %v5992 = vsel %vm331, %v4806, 0
        %v5995 = vsel %vm331, %v4807, 0
        %v5998 = vsel %vm331, %v4808, 0
        %v6001 = vsel %vm331, %v4809, 0
        %v6004 = vsel %vm331, %v4810, 0
        %v6007 = vsel %vm331, %v4811, 0
        %v6010 = vsel %vm331, %v4812, 0
        %v6013 = vsel %vm331, %v4813, 0
        %v6016 = vsel %vm331, %v4814, 0
        %v6019 = vsel %vm331, %v4815, 0
        %v6022 = vsel %vm331, %v4816, 0
        %v6025 = vsel %vm331, %v4817, 0
        %v6028 = vsel %vm331, %v4818, 0
        %v6031 = vsel %vm331, %v4819, 0
        %v6034 = vsel %vm331, %v4820, 0
        %v6037 = vsel %vm331, %v4821, 0
        %v6040 = vsel %vm331, %v4822, 0
        %v6043 = vsel %vm331, %v4823, 0
        %v6046 = vsel %vm331, %v4824, 0
        %v6049 = vsel %vm331, %v4825, 0
        %v6052 = vsel %vm331, %v4826, 0
        %v6055 = vsel %vm331, %v4827, 0
        %v6058 = vsel %vm331, %v4828, 0
        %v6061 = vsel %vm331, %v4829, 0
        %v6064 = vsel %vm331, %v4830, 0
        %v6067 = vsel %vm331, %v4831, 0
        %v6070 = vsel %vm331, %v4832, 0
        %v6073 = vsel %vm331, %v4833, 0
        %v6076 = vsel %vm331, %v4834, 0
        %6078 = vmatprep.subr.mxu0 0.0
        %6079 = vmatpush1.msra.mxu0 %v5956
        %6080 = vmatprep.subr.mxu0 0.0
        %6081 = vmatpush1.msra.mxu0 %v5957
        %6082 = vmatprep.subr.mxu0 0.0
        %6083 = vmatpush1.msra.mxu0 %v5958
        %6084 = vmatprep.subr.mxu0 0.0
        %6085 = vmatpush1.msra.mxu0 %v5959
        %6086 = vmatprep.subr.mxu0 0.0
        %6087 = vmatpush1.msra.mxu0 %v5960
        %6088 = vmatprep.subr.mxu0 0.0
        %6089 = vmatpush1.msra.mxu0 %v5961
        %6090 = vmatprep.subr.mxu0 0.0
        %6091 = vmatpush1.msra.mxu0 %v5962
        %6092 = vmatprep.subr.mxu0 0.0
        %6093 = vmatpush1.msra.mxu0 %v5963
        %6094 = vmatprep.subr.mxu0 0.0
        %6095 = vmatpush1.msra.mxu0 %v5964
        %6096 = vmatprep.subr.mxu0 0.0
        %6097 = vmatpush1.msra.mxu0 %v5965
        %6098 = vmatprep.subr.mxu0 0.0
        %6099 = vmatpush1.msra.mxu0 %v5966
        %6100 = vmatprep.subr.mxu0 0.0
        %6101 = vmatpush1.msra.mxu0 %v5967
        %6102 = vmatprep.subr.mxu0 0.0
        %6103 = vmatpush1.msra.mxu0 %v5968
        %6104 = vmatprep.subr.mxu0 0.0
        %6105 = vmatpush1.msra.mxu0 %v5969
        %6106 = vmatprep.subr.mxu0 0.0
        %6107 = vmatpush1.msra.mxu0 %v5970
        %6108 = vmatprep.subr.mxu0 0.0
        %6109 = vmatpush1.msra.mxu0 %v5971
        %6110 = vmatprep.subr.mxu0 0.0
        %6111 = vmatpush1.msra.mxu0 %v5972
        %6112 = vmatprep.subr.mxu0 0.0
        %6113 = vmatpush1.msra.mxu0 %v5973
        %6114 = vmatprep.subr.mxu0 0.0
        %6115 = vmatpush1.msra.mxu0 0.0
        %6116 = vmatprep.subr.mxu0 0.0
        %6117 = vmatpush1.msra.mxu0 0.0
        %6118 = vmatprep.subr.mxu0 0.0
        %6119 = vmatpush1.msra.mxu0 0.0
        %6120 = vmatprep.subr.mxu0 0.0
        %6121 = vmatpush1.msra.mxu0 0.0
        %6122 = vmatprep.subr.mxu0 0.0
        %6123 = vmatpush1.msra.mxu0 0.0
        %6124 = vmatprep.subr.mxu0 0.0
        %6125 = vmatpush1.msra.mxu0 0.0
        %6126 = vmatprep.subr.mxu0 0.0
        %6127 = vmatpush1.msra.mxu0 0.0
        %6128 = vmatprep.subr.mxu0 0.0
        %6129 = vmatpush1.msra.mxu0 0.0
        %6130 = vmatprep.subr.mxu0 0.0
        %6131 = vmatpush1.msra.mxu0 0.0
        %6132 = vmatprep.subr.mxu0 0.0
        %6133 = vmatpush1.msra.mxu0 0.0
        %6134 = vmatprep.subr.mxu0 0.0
        %6135 = vmatpush1.msra.mxu0 0.0
        %6136 = vmatprep.subr.mxu0 0.0
        %6137 = vmatpush1.msra.mxu0 0.0
        %6138 = vmatprep.subr.mxu0 0.0
        %6139 = vmatpush1.msra.mxu0 0.0
        %6140 = vmatprep.subr.mxu0 0.0
        %6141 = vmatpush1.msra.mxu0 0.0
        %6142 = vmatprep.mubr.f32.mxu0 %v5983
        %6143 = vmatmul.mubr.f32.gmra.mrb[0].mxu0 %v5923
        %v6144 = vpop.f32.mrb[0].mxu0
        %v6145 = vadd.f32 %v5980, %v6144
        %v6146 = vpop.f32.mrb[0].mxu0
        %6147 = vmatprep.mubr.f32.mxu0 %v5986
        %6148 = vmatmul.mubr.f32.gmra.mrb[0].mxu0 %v5924
        %v6149 = vpop.f32.mrb[0].mxu0
        %v6150 = vadd.f32 %v5980, %v6149
        %v6151 = vpop.f32.mrb[0].mxu0
        %6152 = vmatprep.mubr.f32.mxu0 %v5989
        %6153 = vmatmul.mubr.f32.gmra.mrb[0].mxu0 %v5925
        %v6154 = vpop.f32.mrb[0].mxu0
        %v6155 = vadd.f32 %v5980, %v6154
        %v6156 = vpop.f32.mrb[0].mxu0
        %6157 = vmatprep.mubr.f32.mxu0 %v5992
        %6158 = vmatmul.mubr.f32.gmra.mrb[0].mxu0 %v5926
        %v6159 = vpop.f32.mrb[0].mxu0
        %v6160 = vadd.f32 %v5980, %v6159
        %v6161 = vpop.f32.mrb[0].mxu0
        %6162 = vmatprep.mubr.f32.mxu0 %v5995
        %6163 = vmatmul.mubr.f32.gmra.mrb[0].mxu0 %v5927
        %v6164 = vpop.f32.mrb[0].mxu0
        %v6165 = vadd.f32 %v5980, %v6164
        %v6166 = vpop.f32.mrb[0].mxu0
        %6167 = vmatprep.mubr.f32.mxu0 %v5998
        %6168 = vmatmul.mubr.f32.gmra.mrb[0].mxu0 %v5928
        %v6169 = vpop.f32.mrb[0].mxu0
        %v6170 = vadd.f32 %v5980, %v6169
        %v6171 = vpop.f32.mrb[0].mxu0
        %6172 = vmatprep.mubr.f32.mxu0 %v6001
        %6173 = vmatmul.mubr.f32.gmra.mrb[0].mxu0 %v5929
        %v6174 = vpop.f32.mrb[0].mxu0
        %v6175 = vadd.f32 %v5980, %v6174
        %v6176 = vpop.f32.mrb[0].mxu0
        %6177 = vmatprep.mubr.f32.mxu0 %v6004
        %6178 = vmatmul.mubr.f32.gmra.mrb[0].mxu0 %v5930
        %v6179 = vpop.f32.mrb[0].mxu0
        %v6180 = vadd.f32 %v5980, %v6179
        %v6181 = vpop.f32.mrb[0].mxu0
        %6182 = vmatprep.mubr.f32.mxu0 %v6007
        %6183 = vmatmul.mubr.f32.gmra.mrb[0].mxu0 %v5931
        %v6184 = vpop.f32.mrb[0].mxu0
        %v6185 = vadd.f32 %v5980, %v6184
        %v6186 = vpop.f32.mrb[0].mxu0
        %6187 = vmatprep.mubr.f32.mxu0 %v6010
        %6188 = vmatmul.mubr.f32.gmra.mrb[0].mxu0 %v5932
        %v6189 = vpop.f32.mrb[0].mxu0
        %v6190 = vadd.f32 %v5980, %v6189
        %v6191 = vpop.f32.mrb[0].mxu0
        %6192 = vmatprep.mubr.f32.mxu0 %v6013
        %6193 = vmatmul.mubr.f32.gmra.mrb[0].mxu0 %v5933
        %v6194 = vpop.f32.mrb[0].mxu0
        %v6195 = vadd.f32 %v5980, %v6194
        %v6196 = vpop.f32.mrb[0].mxu0
        %6197 = vmatprep.mubr.f32.mxu0 %v6016
        %6198 = vmatmul.mubr.f32.gmra.mrb[0].mxu0 %v5934
        %v6199 = vpop.f32.mrb[0].mxu0
        %v6200 = vadd.f32 %v5980, %v6199
        %v6201 = vpop.f32.mrb[0].mxu0
        %6202 = vmatprep.mubr.f32.mxu0 %v6019
        %6203 = vmatmul.mubr.f32.gmra.mrb[0].mxu0 %v5935
        %v6204 = vpop.f32.mrb[0].mxu0
        %v6205 = vadd.f32 %v5980, %v6204
        %v6206 = vpop.f32.mrb[0].mxu0
        %6207 = vmatprep.mubr.f32.mxu0 %v6022
        %6208 = vmatmul.mubr.f32.gmra.mrb[0].mxu0 %v5936
        %v6209 = vpop.f32.mrb[0].mxu0
        %v6210 = vadd.f32 %v5980, %v6209
        %v6211 = vpop.f32.mrb[0].mxu0
        %6212 = vmatprep.mubr.f32.mxu0 %v6025
        %6213 = vmatmul.mubr.f32.gmra.mrb[0].mxu0 %v5937
        %v6214 = vpop.f32.mrb[0].mxu0
        %v6215 = vadd.f32 %v5980, %v6214
        %v6216 = vpop.f32.mrb[0].mxu0
        %6217 = vmatprep.mubr.f32.mxu0 %v6028
        %6218 = vmatmul.mubr.f32.gmra.mrb[0].mxu0 %v5938
        %v6219 = vpop.f32.mrb[0].mxu0
        %v6220 = vadd.f32 %v5980, %v6219
        %v6221 = vpop.f32.mrb[0].mxu0
        %6222 = vmatprep.mubr.f32.mxu0 %v6031
        %6223 = vmatmul.mubr.f32.gmra.mrb[0].mxu0 %v5939
        %v6224 = vpop.f32.mrb[0].mxu0
        %v6225 = vadd.f32 %v5980, %v6224
        %v6226 = vpop.f32.mrb[0].mxu0
        %6227 = vmatprep.mubr.f32.mxu0 %v6034
        %6228 = vmatmul.mubr.f32.gmra.mrb[0].mxu0 %v5940
        %v6229 = vpop.f32.mrb[0].mxu0
        %v6230 = vadd.f32 %v5980, %v6229
        %v6231 = vpop.f32.mrb[0].mxu0
        %6232 = vmatprep.mubr.f32.mxu0 %v6037
        %6233 = vmatmul.mubr.f32.gmra.mrb[0].mxu0 %v5941
        %v6234 = vpop.f32.mrb[0].mxu0
        %v6235 = vadd.f32 %v5980, %v6234
        %v6236 = vpop.f32.mrb[0].mxu0
        %6237 = vmatprep.mubr.f32.mxu0 %v6040
        %6238 = vmatmul.mubr.f32.gmra.mrb[0].mxu0 %v5942
        %v6239 = vpop.f32.mrb[0].mxu0
        %v6240 = vadd.f32 %v5980, %v6239
        %v6241 = vpop.f32.mrb[0].mxu0
        %6242 = vmatprep.mubr.f32.mxu0 %v6043
        %6243 = vmatmul.mubr.f32.gmra.mrb[0].mxu0 %v5943
        %v6244 = vpop.f32.mrb[0].mxu0
        %v6245 = vadd.f32 %v5980, %v6244
        %v6246 = vpop.f32.mrb[0].mxu0
        %6247 = vmatprep.mubr.f32.mxu0 %v6046
        %6248 = vmatmul.mubr.f32.gmra.mrb[0].mxu0 %v5944
        %v6249 = vpop.f32.mrb[0].mxu0
        %v6250 = vadd.f32 %v5980, %v6249
        %v6251 = vpop.f32.mrb[0].mxu0
        %6252 = vmatprep.mubr.f32.mxu0 %v6049
        %6253 = vmatmul.mubr.f32.gmra.mrb[0].mxu0 %v5945
        %v6254 = vpop.f32.mrb[0].mxu0
        %v6255 = vadd.f32 %v5980, %v6254
        %v6256 = vpop.f32.mrb[0].mxu0
        %6257 = vmatprep.mubr.f32.mxu0 %v6052
        %6258 = vmatmul.mubr.f32.gmra.mrb[0].mxu0 %v5946
        %v6259 = vpop.f32.mrb[0].mxu0
        %v6260 = vadd.f32 %v5980, %v6259
        %v6261 = vpop.f32.mrb[0].mxu0
        %6262 = vmatprep.mubr.f32.mxu0 %v6055
        %6263 = vmatmul.mubr.f32.gmra.mrb[0].mxu0 %v5947
        %v6264 = vpop.f32.mrb[0].mxu0
        %v6265 = vadd.f32 %v5980, %v6264
        %v6266 = vpop.f32.mrb[0].mxu0
        %6267 = vmatprep.mubr.f32.mxu0 %v6058
        %6268 = vmatmul.mubr.f32.gmra.mrb[0].mxu0 %v5948
        %v6269 = vpop.f32.mrb[0].mxu0
        %v6270 = vadd.f32 %v5980, %v6269
        %v6271 = vpop.f32.mrb[0].mxu0
        %6272 = vmatprep.mubr.f32.mxu0 %v6061
        %6273 = vmatmul.mubr.f32.gmra.mrb[0].mxu0 %v5949
        %v6274 = vpop.f32.mrb[0].mxu0
        %v6275 = vadd.f32 %v5980, %v6274
        %v6276 = vpop.f32.mrb[0].mxu0
        %6277 = vmatprep.mubr.f32.mxu0 %v6064
        %6278 = vmatmul.mubr.f32.gmra.mrb[0].mxu0 %v5950
        %v6279 = vpop.f32.mrb[0].mxu0
        %v6280 = vadd.f32 %v5980, %v6279
        %v6281 = vpop.f32.mrb[0].mxu0
        %6282 = vmatprep.mubr.f32.mxu0 %v6067
        %6283 = vmatmul.mubr.f32.gmra.mrb[0].mxu0 %v5951
        %v6284 = vpop.f32.mrb[0].mxu0
        %v6285 = vadd.f32 %v5980, %v6284
        %v6286 = vpop.f32.mrb[0].mxu0
        %6287 = vmatprep.mubr.f32.mxu0 %v6070
        %6288 = vmatmul.mubr.f32.gmra.mrb[0].mxu0 %v5952
        %v6289 = vpop.f32.mrb[0].mxu0
        %v6290 = vadd.f32 %v5980, %v6289
        %v6291 = vpop.f32.mrb[0].mxu0
        %6292 = vmatprep.mubr.f32.mxu0 %v6073
        %6293 = vmatmul.mubr.f32.gmra.mrb[0].mxu0 %v5953
        %v6294 = vpop.f32.mrb[0].mxu0
        %v6295 = vadd.f32 %v5980, %v6294
        %v6296 = vpop.f32.mrb[0].mxu0
        %6297 = vmatprep.mubr.f32.mxu0 %v6076
        %6298 = vmatmul.mubr.f32.gmra.mrb[0].mxu0 %v5954
        %v6299 = vpop.f32.mrb[0].mxu0
        %v6300 = vadd.f32 %v5980, %v6299
        %v6301 = vpop.f32.mrb[0].mxu0
        %6302 = vdwg.mxu0
        %v6303 = vsel %vm331, %v6145, 0.0
        %v6304 = vsel %vm331, %v6150, 0.0
        %v6305 = vadd.f32 %v6303, %v6304
        %v6306 = vsel %vm331, %v6155, 0.0
        %v6307 = vadd.f32 %v6305, %v6306
        %v6308 = vsel %vm331, %v6160, 0.0
        %v6309 = vadd.f32 %v6307, %v6308
        %v6310 = vsel %vm331, %v6165, 0.0
        %v6311 = vadd.f32 %v6309, %v6310
        %v6312 = vsel %vm331, %v6170, 0.0
        %v6313 = vadd.f32 %v6311, %v6312
        %v6314 = vsel %vm331, %v6175, 0.0
        %v6315 = vadd.f32 %v6313, %v6314
        %v6316 = vsel %vm331, %v6180, 0.0
        %v6317 = vadd.f32 %v6315, %v6316
        %v6318 = vsel %vm331, %v6185, 0.0
        %v6319 = vadd.f32 %v6317, %v6318
        %v6320 = vsel %vm331, %v6190, 0.0
        %v6321 = vadd.f32 %v6319, %v6320
        %v6322 = vsel %vm331, %v6195, 0.0
        %v6323 = vadd.f32 %v6321, %v6322
        %v6324 = vsel %vm331, %v6200, 0.0
        %v6325 = vadd.f32 %v6323, %v6324
        %v6326 = vsel %vm331, %v6205, 0.0
        %v6327 = vadd.f32 %v6325, %v6326
        %v6328 = vsel %vm331, %v6210, 0.0
        %v6329 = vadd.f32 %v6327, %v6328
        %v6330 = vsel %vm331, %v6215, 0.0
        %v6331 = vadd.f32 %v6329, %v6330
        %v6332 = vsel %vm331, %v6220, 0.0
        %v6333 = vadd.f32 %v6331, %v6332
        %v6334 = vsel %vm331, %v6225, 0.0
        %v6335 = vadd.f32 %v6333, %v6334
        %v6336 = vsel %vm331, %v6230, 0.0
        %v6337 = vadd.f32 %v6335, %v6336
        %v6338 = vsel %vm331, %v6235, 0.0
        %v6339 = vadd.f32 %v6337, %v6338
        %v6340 = vsel %vm331, %v6240, 0.0
        %v6341 = vadd.f32 %v6339, %v6340
        %v6342 = vsel %vm331, %v6245, 0.0
        %v6343 = vadd.f32 %v6341, %v6342
        %v6344 = vsel %vm331, %v6250, 0.0
        %v6345 = vadd.f32 %v6343, %v6344
        %v6346 = vsel %vm331, %v6255, 0.0
        %v6347 = vadd.f32 %v6345, %v6346
        %v6348 = vsel %vm331, %v6260, 0.0
        %v6349 = vadd.f32 %v6347, %v6348
        %v6350 = vsel %vm331, %v6265, 0.0
        %v6351 = vadd.f32 %v6349, %v6350
        %v6352 = vsel %vm331, %v6270, 0.0
        %v6353 = vadd.f32 %v6351, %v6352
        %v6354 = vsel %vm331, %v6275, 0.0
        %v6355 = vadd.f32 %v6353, %v6354
        %v6356 = vsel %vm331, %v6280, 0.0
        %v6357 = vadd.f32 %v6355, %v6356
        %v6358 = vsel %vm331, %v6285, 0.0
        %v6359 = vadd.f32 %v6357, %v6358
        %v6360 = vsel %vm331, %v6290, 0.0
        %v6361 = vadd.f32 %v6359, %v6360
        %v6362 = vsel %vm331, %v6295, 0.0
        %v6363 = vadd.f32 %v6361, %v6362
        %v6364 = vsel %vm331, %v6300, 0.0
        %v6365 = vadd.f32 %v6363, %v6364
        %v6366 = vrot.slane %v6365, 4
        %v6367 = vadd.f32 %v6365, %v6366
        %v6368 = vrot.slane %v6367, 2
        %v6369 = vadd.f32 %v6367, %v6368
        %v6370 = vrot.slane %v6369, 1
        %v6371 = vadd.f32 %v6369, %v6370
        %v6372 = vmul.f32 %v6145, %v6145
        %v6373 = vmul.f32 %v6150, %v6150
        %v6374 = vmul.f32 %v6155, %v6155
        %v6375 = vmul.f32 %v6160, %v6160
        %v6376 = vmul.f32 %v6165, %v6165
        %v6377 = vmul.f32 %v6170, %v6170
        %v6378 = vmul.f32 %v6175, %v6175
        %v6379 = vmul.f32 %v6180, %v6180
        %v6380 = vmul.f32 %v6185, %v6185
        %v6381 = vmul.f32 %v6190, %v6190
        %v6382 = vmul.f32 %v6195, %v6195
        %v6383 = vmul.f32 %v6200, %v6200
        %v6384 = vmul.f32 %v6205, %v6205
        %v6385 = vmul.f32 %v6210, %v6210
        %v6386 = vmul.f32 %v6215, %v6215
        %v6387 = vmul.f32 %v6220, %v6220
        %v6388 = vmul.f32 %v6225, %v6225
        %v6389 = vmul.f32 %v6230, %v6230
        %v6390 = vmul.f32 %v6235, %v6235
        %v6391 = vmul.f32 %v6240, %v6240
        %v6392 = vmul.f32 %v6245, %v6245
        %v6393 = vmul.f32 %v6250, %v6250
        %v6394 = vmul.f32 %v6255, %v6255
        %v6395 = vmul.f32 %v6260, %v6260
        %v6396 = vmul.f32 %v6265, %v6265
        %v6397 = vmul.f32 %v6270, %v6270
        %v6398 = vmul.f32 %v6275, %v6275
        %v6399 = vmul.f32 %v6280, %v6280
        %v6400 = vmul.f32 %v6285, %v6285
        %v6401 = vmul.f32 %v6290, %v6290
        %v6402 = vmul.f32 %v6295, %v6295
        %v6403 = vmul.f32 %v6300, %v6300
        %v6404 = vsel %vm331, %v6372, 0.0
        %v6405 = vsel %vm331, %v6373, 0.0
        %v6406 = vadd.f32 %v6404, %v6405
        %v6407 = vsel %vm331, %v6374, 0.0
        %v6408 = vadd.f32 %v6406, %v6407
        %v6409 = vsel %vm331, %v6375, 0.0
        %v6410 = vadd.f32 %v6408, %v6409
        %v6411 = vsel %vm331, %v6376, 0.0
        %v6412 = vadd.f32 %v6410, %v6411
        %v6413 = vsel %vm331, %v6377, 0.0
        %v6414 = vadd.f32 %v6412, %v6413
        %v6415 = vsel %vm331, %v6378, 0.0
        %v6416 = vadd.f32 %v6414, %v6415
        %v6417 = vsel %vm331, %v6379, 0.0
        %v6418 = vadd.f32 %v6416, %v6417
        %v6419 = vsel %vm331, %v6380, 0.0
        %v6420 = vadd.f32 %v6418, %v6419
        %v6421 = vsel %vm331, %v6381, 0.0
        %v6422 = vadd.f32 %v6420, %v6421
        %v6423 = vsel %vm331, %v6382, 0.0
        %v6424 = vadd.f32 %v6422, %v6423
        %v6425 = vsel %vm331, %v6383, 0.0
        %v6426 = vadd.f32 %v6424, %v6425
        %v6427 = vsel %vm331, %v6384, 0.0
        %v6428 = vadd.f32 %v6426, %v6427
        %v6429 = vsel %vm331, %v6385, 0.0
        %v6430 = vadd.f32 %v6428, %v6429
        %v6431 = vsel %vm331, %v6386, 0.0
        %v6432 = vadd.f32 %v6430, %v6431
        %v6433 = vsel %vm331, %v6387, 0.0
        %v6434 = vadd.f32 %v6432, %v6433
        %v6435 = vsel %vm331, %v6388, 0.0
        %v6436 = vadd.f32 %v6434, %v6435
        %v6437 = vsel %vm331, %v6389, 0.0
        %v6438 = vadd.f32 %v6436, %v6437
        %v6439 = vsel %vm331, %v6390, 0.0
        %v6440 = vadd.f32 %v6438, %v6439
        %v6441 = vsel %vm331, %v6391, 0.0
        %v6442 = vadd.f32 %v6440, %v6441
        %v6443 = vsel %vm331, %v6392, 0.0
        %v6444 = vadd.f32 %v6442, %v6443
        %v6445 = vsel %vm331, %v6393, 0.0
        %v6446 = vadd.f32 %v6444, %v6445
        %v6447 = vsel %vm331, %v6394, 0.0
        %v6448 = vadd.f32 %v6446, %v6447
        %v6449 = vsel %vm331, %v6395, 0.0
        %v6450 = vadd.f32 %v6448, %v6449
        %v6451 = vsel %vm331, %v6396, 0.0
        %v6452 = vadd.f32 %v6450, %v6451
        %v6453 = vsel %vm331, %v6397, 0.0
        %v6454 = vadd.f32 %v6452, %v6453
        %v6455 = vsel %vm331, %v6398, 0.0
        %v6456 = vadd.f32 %v6454, %v6455
        %v6457 = vsel %vm331, %v6399, 0.0
        %v6458 = vadd.f32 %v6456, %v6457
        %v6459 = vsel %vm331, %v6400, 0.0
        %v6460 = vadd.f32 %v6458, %v6459
        %v6461 = vsel %vm331, %v6401, 0.0
        %v6462 = vadd.f32 %v6460, %v6461
        %v6463 = vsel %vm331, %v6402, 0.0
        %v6464 = vadd.f32 %v6462, %v6463
        %v6465 = vsel %vm331, %v6403, 0.0
        %v6466 = vadd.f32 %v6464, %v6465
        %v6467 = vrot.slane %v6466, 4
        %v6468 = vadd.f32 %v6466, %v6467
        %v6469 = vrot.slane %v6468, 2
        %v6470 = vadd.f32 %v6468, %v6469
        %v6471 = vrot.slane %v6470, 1
        %v6472 = vadd.f32 %v6470, %v6471
        %v6473 = vmul.f32 %v6371, 0.00390625
        %v6474 = vmul.f32 %v6472, 0.00390625
        %v6475 = vmul.f32 %v6473, %v6473
        %v6476 = vsub.f32 %v6474, %v6475
        %v6477 = vmax.f32 %v6476, 0.0
        %v6478 = vadd.f32 %v6477, 1e-05
        %v6479 = vrsqrt.pop %v6478
        %s6480 = scalar_lea.vmem %s3, 2
        %v6481 = vld [vmem:[%s6480] sm:$0x1]
        %v6482 = vmul.f32 %v6479, %v6481
        %s6483 = scalar_lea.vmem %s4, 2
        %v6484 = vld [vmem:[%s6483] sm:$0x1]
        %v6485 = vmul.f32 %v6473, %v6482
        %v6486 = vsub.f32 %v6484, %v6485
        %v6487 = vlaneseq
        %v6488 = vshrl.u32 %v6487, 7
        %v6489 = vsub.s32 0, %v6488
        %v6490 = vrot.slane %v6482, %v6489
        %v6491 = vmul.f32 %v6145, %v6490
        %v6492 = vmul.f32 %v6150, %v6490
        %v6493 = vmul.f32 %v6155, %v6490
        %v6494 = vmul.f32 %v6160, %v6490
        %v6495 = vmul.f32 %v6165, %v6490
        %v6496 = vmul.f32 %v6170, %v6490
        %v6497 = vmul.f32 %v6175, %v6490
        %v6498 = vmul.f32 %v6180, %v6490
        %v6499 = vmul.f32 %v6185, %v6490
        %v6500 = vmul.f32 %v6190, %v6490
        %v6501 = vmul.f32 %v6195, %v6490
        %v6502 = vmul.f32 %v6200, %v6490
        %v6503 = vmul.f32 %v6205, %v6490
        %v6504 = vmul.f32 %v6210, %v6490
        %v6505 = vmul.f32 %v6215, %v6490
        %v6506 = vmul.f32 %v6220, %v6490
        %v6507 = vmul.f32 %v6225, %v6490
        %v6508 = vmul.f32 %v6230, %v6490
        %v6509 = vmul.f32 %v6235, %v6490
        %v6510 = vmul.f32 %v6240, %v6490
        %v6511 = vmul.f32 %v6245, %v6490
        %v6512 = vmul.f32 %v6250, %v6490
        %v6513 = vmul.f32 %v6255, %v6490
        %v6514 = vmul.f32 %v6260, %v6490
        %v6515 = vmul.f32 %v6265, %v6490
        %v6516 = vmul.f32 %v6270, %v6490
        %v6517 = vmul.f32 %v6275, %v6490
        %v6518 = vmul.f32 %v6280, %v6490
        %v6519 = vmul.f32 %v6285, %v6490
        %v6520 = vmul.f32 %v6290, %v6490
        %v6521 = vmul.f32 %v6295, %v6490
        %v6522 = vmul.f32 %v6300, %v6490
        %v6524 = vlaneseq
        %v6525 = vshrl.u32 %v6524, 7
        %v6526 = vsub.s32 0, %v6525
        %v6527 = vrot.slane %v6486, %v6526
        %v6529 = vadd.f32 %v6491, %v6527
        %v6530 = vadd.f32 %v6492, %v6527
        %v6531 = vadd.f32 %v6493, %v6527
        %v6532 = vadd.f32 %v6494, %v6527
        %v6533 = vadd.f32 %v6495, %v6527
        %v6534 = vadd.f32 %v6496, %v6527
        %v6535 = vadd.f32 %v6497, %v6527
        %v6536 = vadd.f32 %v6498, %v6527
        %v6537 = vadd.f32 %v6499, %v6527
        %v6538 = vadd.f32 %v6500, %v6527
        %v6539 = vadd.f32 %v6501, %v6527
        %v6540 = vadd.f32 %v6502, %v6527
        %v6541 = vadd.f32 %v6503, %v6527
        %v6542 = vadd.f32 %v6504, %v6527
        %v6543 = vadd.f32 %v6505, %v6527
        %v6544 = vadd.f32 %v6506, %v6527
        %v6545 = vadd.f32 %v6507, %v6527
        %v6546 = vadd.f32 %v6508, %v6527
        %v6547 = vadd.f32 %v6509, %v6527
        %v6548 = vadd.f32 %v6510, %v6527
        %v6549 = vadd.f32 %v6511, %v6527
        %v6550 = vadd.f32 %v6512, %v6527
        %v6551 = vadd.f32 %v6513, %v6527
        %v6552 = vadd.f32 %v6514, %v6527
        %v6553 = vadd.f32 %v6515, %v6527
        %v6554 = vadd.f32 %v6516, %v6527
        %v6555 = vadd.f32 %v6517, %v6527
        %v6556 = vadd.f32 %v6518, %v6527
        %v6557 = vadd.f32 %v6519, %v6527
        %v6558 = vadd.f32 %v6520, %v6527
        %v6559 = vadd.f32 %v6521, %v6527
        %v6560 = vadd.f32 %v6522, %v6527
        %v6561 = vmax.f32 %v6529, 0.0
        %v6562 = vmax.f32 %v6530, 0.0
        %v6563 = vmax.f32 %v6531, 0.0
        %v6564 = vmax.f32 %v6532, 0.0
        %v6565 = vmax.f32 %v6533, 0.0
        %v6566 = vmax.f32 %v6534, 0.0
        %v6567 = vmax.f32 %v6535, 0.0
        %v6568 = vmax.f32 %v6536, 0.0
        %v6569 = vmax.f32 %v6537, 0.0
        %v6570 = vmax.f32 %v6538, 0.0
        %v6571 = vmax.f32 %v6539, 0.0
        %v6572 = vmax.f32 %v6540, 0.0
        %v6573 = vmax.f32 %v6541, 0.0
        %v6574 = vmax.f32 %v6542, 0.0
        %v6575 = vmax.f32 %v6543, 0.0
        %v6576 = vmax.f32 %v6544, 0.0
        %v6577 = vmax.f32 %v6545, 0.0
        %v6578 = vmax.f32 %v6546, 0.0
        %v6579 = vmax.f32 %v6547, 0.0
        %v6580 = vmax.f32 %v6548, 0.0
        %v6581 = vmax.f32 %v6549, 0.0
        %v6582 = vmax.f32 %v6550, 0.0
        %v6583 = vmax.f32 %v6551, 0.0
        %v6584 = vmax.f32 %v6552, 0.0
        %v6585 = vmax.f32 %v6553, 0.0
        %v6586 = vmax.f32 %v6554, 0.0
        %v6587 = vmax.f32 %v6555, 0.0
        %v6588 = vmax.f32 %v6556, 0.0
        %v6589 = vmax.f32 %v6557, 0.0
        %v6590 = vmax.f32 %v6558, 0.0
        %v6591 = vmax.f32 %v6559, 0.0
        %v6592 = vmax.f32 %v6560, 0.0
        %6593 = vst.msk [vmem:[%s483 + $0x1] sm:$0xff] %vm331, %v6561
        %6594 = vst.msk [vmem:[%s483 + $0x9] sm:$0xff] %vm331, %v6562
        %6595 = vst.msk [vmem:[%s483 + $0x19] sm:$0xff] %vm331, %v6563
        %6596 = vst.msk [vmem:[%s483 + $0x21] sm:$0xff] %vm331, %v6564
        %6597 = vst.msk [vmem:[%s483 + $0x31] sm:$0xff] %vm331, %v6565
        %6598 = vst.msk [vmem:[%s483 + $0x39] sm:$0xff] %vm331, %v6566
        %6599 = vst.msk [vmem:[%s483 + $0x49] sm:$0xff] %vm331, %v6567
        %6600 = vst.msk [vmem:[%s483 + $0x51] sm:$0xff] %vm331, %v6568
        %6601 = vst.msk [vmem:[%s483 + $0x61] sm:$0xff] %vm331, %v6569
        %6602 = vst.msk [vmem:[%s483 + $0x69] sm:$0xff] %vm331, %v6570
        %6603 = vst.msk [vmem:[%s483 + $0x79] sm:$0xff] %vm331, %v6571
        %6604 = vst.msk [vmem:[%s483 + $0x81] sm:$0xff] %vm331, %v6572
        %6605 = vst.msk [vmem:[%s483 + $0x91] sm:$0xff] %vm331, %v6573
        %6606 = vst.msk [vmem:[%s483 + $0x99] sm:$0xff] %vm331, %v6574
        %6607 = vst.msk [vmem:[%s483 + $0xa9] sm:$0xff] %vm331, %v6575
        %6608 = vst.msk [vmem:[%s483 + $0xb1] sm:$0xff] %vm331, %v6576
        %6609 = vst.msk [vmem:[%s483 + $0xc1] sm:$0xff] %vm331, %v6577
        %6610 = vst.msk [vmem:[%s483 + $0xc9] sm:$0xff] %vm331, %v6578
        %6611 = vst.msk [vmem:[%s483 + $0xd9] sm:$0xff] %vm331, %v6579
        %6612 = vst.msk [vmem:[%s483 + $0xe1] sm:$0xff] %vm331, %v6580
        %6613 = vst.msk [vmem:[%s483 + $0xf1] sm:$0xff] %vm331, %v6581
        %6614 = vst.msk [vmem:[%s483 + $0xf9] sm:$0xff] %vm331, %v6582
        %6615 = vst.msk [vmem:[%s483 + $0x109] sm:$0xff] %vm331, %v6583
        %6616 = vst.msk [vmem:[%s483 + $0x111] sm:$0xff] %vm331, %v6584
        %6617 = vst.msk [vmem:[%s483 + $0x121] sm:$0xff] %vm331, %v6585
        %6618 = vst.msk [vmem:[%s483 + $0x129] sm:$0xff] %vm331, %v6586
        %6619 = vst.msk [vmem:[%s483 + $0x139] sm:$0xff] %vm331, %v6587
        %6620 = vst.msk [vmem:[%s483 + $0x141] sm:$0xff] %vm331, %v6588
        %6621 = vst.msk [vmem:[%s483 + $0x151] sm:$0xff] %vm331, %v6589
        %6622 = vst.msk [vmem:[%s483 + $0x159] sm:$0xff] %vm331, %v6590
        %6623 = vst.msk [vmem:[%s483 + $0x169] sm:$0xff] %vm331, %v6591
        %6624 = vst.msk [vmem:[%s483 + $0x171] sm:$0xff] %vm331, %v6592
        %v6625 = vld [vmem:[#allocation2] sm:$0xff]
        %v6626 = vld [vmem:[#allocation2 + $0x8] sm:$0xff]
        %v6627 = vld [vmem:[#allocation2 + $0x18] sm:$0xff]
        %v6628 = vld [vmem:[#allocation2 + $0x20] sm:$0xff]
        %v6629 = vld [vmem:[#allocation2 + $0x30] sm:$0xff]
        %v6630 = vld [vmem:[#allocation2 + $0x38] sm:$0xff]
        %v6631 = vld [vmem:[#allocation2 + $0x48] sm:$0xff]
        %v6632 = vld [vmem:[#allocation2 + $0x50] sm:$0xff]
        %v6633 = vld [vmem:[#allocation2 + $0x60] sm:$0xff]
        %v6634 = vld [vmem:[#allocation2 + $0x68] sm:$0xff]
        %v6635 = vld [vmem:[#allocation2 + $0x78] sm:$0xff]
        %v6636 = vld [vmem:[#allocation2 + $0x80] sm:$0xff]
        %v6637 = vld [vmem:[#allocation2 + $0x90] sm:$0xff]
        %v6638 = vld [vmem:[#allocation2 + $0x98] sm:$0xff]
        %v6639 = vld [vmem:[#allocation2 + $0xa8] sm:$0xff]
        %v6640 = vld [vmem:[#allocation2 + $0xb0] sm:$0xff]
        %v6641 = vld [vmem:[#allocation2 + $0xc0] sm:$0xff]
        %v6642 = vld [vmem:[#allocation2 + $0xc8] sm:$0xff]
        %v6643 = vld [vmem:[#allocation2 + $0xd8] sm:$0xff]
        %v6644 = vld [vmem:[#allocation2 + $0xe0] sm:$0xff]
        %v6645 = vld [vmem:[#allocation2 + $0xf0] sm:$0xff]
        %v6646 = vld [vmem:[#allocation2 + $0xf8] sm:$0xff]
        %v6647 = vld [vmem:[#allocation2 + $0x108] sm:$0xff]
        %v6648 = vld [vmem:[#allocation2 + $0x110] sm:$0xff]
        %v6649 = vld [vmem:[#allocation2 + $0x120] sm:$0xff]
        %v6650 = vld [vmem:[#allocation2 + $0x128] sm:$0xff]
        %v6651 = vld [vmem:[#allocation2 + $0x138] sm:$0xff]
        %v6652 = vld [vmem:[#allocation2 + $0x140] sm:$0xff]
        %v6653 = vld [vmem:[#allocation2 + $0x150] sm:$0xff]
        %v6654 = vld [vmem:[#allocation2 + $0x158] sm:$0xff]
        %v6655 = vld [vmem:[#allocation2 + $0x168] sm:$0xff]
        %v6656 = vld [vmem:[#allocation2 + $0x170] sm:$0xff]
        %v6657 = vld [vmem:[#allocation2 + $0x1] sm:$0xff]
        %v6658 = vld [vmem:[#allocation2 + $0x9] sm:$0xff]
        %v6659 = vld [vmem:[#allocation2 + $0x19] sm:$0xff]
        %v6660 = vld [vmem:[#allocation2 + $0x21] sm:$0xff]
        %v6661 = vld [vmem:[#allocation2 + $0x31] sm:$0xff]
        %v6662 = vld [vmem:[#allocation2 + $0x39] sm:$0xff]
        %v6663 = vld [vmem:[#allocation2 + $0x49] sm:$0xff]
        %v6664 = vld [vmem:[#allocation2 + $0x51] sm:$0xff]
        %v6665 = vld [vmem:[#allocation2 + $0x61] sm:$0xff]
        %v6666 = vld [vmem:[#allocation2 + $0x69] sm:$0xff]
        %v6667 = vld [vmem:[#allocation2 + $0x79] sm:$0xff]
        %v6668 = vld [vmem:[#allocation2 + $0x81] sm:$0xff]
        %v6669 = vld [vmem:[#allocation2 + $0x91] sm:$0xff]
        %v6670 = vld [vmem:[#allocation2 + $0x99] sm:$0xff]
        %v6671 = vld [vmem:[#allocation2 + $0xa9] sm:$0xff]
        %v6672 = vld [vmem:[#allocation2 + $0xb1] sm:$0xff]
        %v6673 = vld [vmem:[#allocation2 + $0xc1] sm:$0xff]
        %v6674 = vld [vmem:[#allocation2 + $0xc9] sm:$0xff]
        %v6675 = vld [vmem:[#allocation2 + $0xd9] sm:$0xff]
        %v6676 = vld [vmem:[#allocation2 + $0xe1] sm:$0xff]
        %v6677 = vld [vmem:[#allocation2 + $0xf1] sm:$0xff]
        %v6678 = vld [vmem:[#allocation2 + $0xf9] sm:$0xff]
        %v6679 = vld [vmem:[#allocation2 + $0x109] sm:$0xff]
        %v6680 = vld [vmem:[#allocation2 + $0x111] sm:$0xff]
        %v6681 = vld [vmem:[#allocation2 + $0x121] sm:$0xff]
        %v6682 = vld [vmem:[#allocation2 + $0x129] sm:$0xff]
        %v6683 = vld [vmem:[#allocation2 + $0x139] sm:$0xff]
        %v6684 = vld [vmem:[#allocation2 + $0x141] sm:$0xff]
        %v6685 = vld [vmem:[#allocation2 + $0x151] sm:$0xff]
        %v6686 = vld [vmem:[#allocation2 + $0x159] sm:$0xff]
        %v6687 = vld [vmem:[#allocation2 + $0x169] sm:$0xff]
        %v6688 = vld [vmem:[#allocation2 + $0x171] sm:$0xff]
        %v6689 = vld [vmem:[#allocation2 + $0x2] sm:$0xff]
        %v6690 = vld [vmem:[#allocation2 + $0xa] sm:$0xff]
        %v6691 = vld [vmem:[#allocation2 + $0x1a] sm:$0xff]
        %v6692 = vld [vmem:[#allocation2 + $0x22] sm:$0xff]
        %v6693 = vld [vmem:[#allocation2 + $0x32] sm:$0xff]
        %v6694 = vld [vmem:[#allocation2 + $0x3a] sm:$0xff]
        %v6695 = vld [vmem:[#allocation2 + $0x4a] sm:$0xff]
        %v6696 = vld [vmem:[#allocation2 + $0x52] sm:$0xff]
        %v6697 = vld [vmem:[#allocation2 + $0x62] sm:$0xff]
        %v6698 = vld [vmem:[#allocation2 + $0x6a] sm:$0xff]
        %v6699 = vld [vmem:[#allocation2 + $0x7a] sm:$0xff]
        %v6700 = vld [vmem:[#allocation2 + $0x82] sm:$0xff]
        %v6701 = vld [vmem:[#allocation2 + $0x92] sm:$0xff]
        %v6702 = vld [vmem:[#allocation2 + $0x9a] sm:$0xff]
        %v6703 = vld [vmem:[#allocation2 + $0xaa] sm:$0xff]
        %v6704 = vld [vmem:[#allocation2 + $0xb2] sm:$0xff]
        %v6705 = vld [vmem:[#allocation2 + $0xc2] sm:$0xff]
        %v6706 = vld [vmem:[#allocation2 + $0xca] sm:$0xff]
        %v6707 = vld [vmem:[#allocation2 + $0xda] sm:$0xff]
        %v6708 = vld [vmem:[#allocation2 + $0xe2] sm:$0xff]
        %v6709 = vld [vmem:[#allocation2 + $0xf2] sm:$0xff]
        %v6710 = vld [vmem:[#allocation2 + $0xfa] sm:$0xff]
        %v6711 = vld [vmem:[#allocation2 + $0x10a] sm:$0xff]
        %v6712 = vld [vmem:[#allocation2 + $0x112] sm:$0xff]
        %v6713 = vld [vmem:[#allocation2 + $0x122] sm:$0xff]
        %v6714 = vld [vmem:[#allocation2 + $0x12a] sm:$0xff]
        %v6715 = vld [vmem:[#allocation2 + $0x13a] sm:$0xff]
        %v6716 = vld [vmem:[#allocation2 + $0x142] sm:$0xff]
        %v6717 = vld [vmem:[#allocation2 + $0x152] sm:$0xff]
        %v6718 = vld [vmem:[#allocation2 + $0x15a] sm:$0xff]
        %v6719 = vld [vmem:[#allocation2 + $0x16a] sm:$0xff]
        %v6720 = vld [vmem:[#allocation2 + $0x172] sm:$0xff]
        %v6721 = vld [vmem:[%s483] sm:$0xff]
        %v6722 = vld [vmem:[%s483 + $0x8] sm:$0xff]
        %v6723 = vld [vmem:[%s483 + $0x18] sm:$0xff]
        %v6724 = vld [vmem:[%s483 + $0x20] sm:$0xff]
        %v6725 = vld [vmem:[%s483 + $0x30] sm:$0xff]
        %v6726 = vld [vmem:[%s483 + $0x38] sm:$0xff]
        %v6727 = vld [vmem:[%s483 + $0x48] sm:$0xff]
        %v6728 = vld [vmem:[%s483 + $0x50] sm:$0xff]
        %v6729 = vld [vmem:[%s483 + $0x60] sm:$0xff]
        %v6730 = vld [vmem:[%s483 + $0x68] sm:$0xff]
        %v6731 = vld [vmem:[%s483 + $0x78] sm:$0xff]
        %v6732 = vld [vmem:[%s483 + $0x80] sm:$0xff]
        %v6733 = vld [vmem:[%s483 + $0x90] sm:$0xff]
        %v6734 = vld [vmem:[%s483 + $0x98] sm:$0xff]
        %v6735 = vld [vmem:[%s483 + $0xa8] sm:$0xff]
        %v6736 = vld [vmem:[%s483 + $0xb0] sm:$0xff]
        %v6737 = vld [vmem:[%s483 + $0xc0] sm:$0xff]
        %v6738 = vld [vmem:[%s483 + $0xc8] sm:$0xff]
        %v6739 = vld [vmem:[%s483 + $0xd8] sm:$0xff]
        %v6740 = vld [vmem:[%s483 + $0xe0] sm:$0xff]
        %v6741 = vld [vmem:[%s483 + $0xf0] sm:$0xff]
        %v6742 = vld [vmem:[%s483 + $0xf8] sm:$0xff]
        %v6743 = vld [vmem:[%s483 + $0x108] sm:$0xff]
        %v6744 = vld [vmem:[%s483 + $0x110] sm:$0xff]
        %v6745 = vld [vmem:[%s483 + $0x120] sm:$0xff]
        %v6746 = vld [vmem:[%s483 + $0x128] sm:$0xff]
        %v6747 = vld [vmem:[%s483 + $0x138] sm:$0xff]
        %v6748 = vld [vmem:[%s483 + $0x140] sm:$0xff]
        %v6749 = vld [vmem:[%s483 + $0x150] sm:$0xff]
        %v6750 = vld [vmem:[%s483 + $0x158] sm:$0xff]
        %v6751 = vld [vmem:[%s483 + $0x168] sm:$0xff]
        %v6752 = vld [vmem:[%s483 + $0x170] sm:$0xff]
        %v6753 = vld [vmem:[%s483 + $0x1] sm:$0xff]
        %v6754 = vld [vmem:[%s483 + $0x9] sm:$0xff]
        %v6755 = vld [vmem:[%s483 + $0x19] sm:$0xff]
        %v6756 = vld [vmem:[%s483 + $0x21] sm:$0xff]
        %v6757 = vld [vmem:[%s483 + $0x31] sm:$0xff]
        %v6758 = vld [vmem:[%s483 + $0x39] sm:$0xff]
        %v6759 = vld [vmem:[%s483 + $0x49] sm:$0xff]
        %v6760 = vld [vmem:[%s483 + $0x51] sm:$0xff]
        %v6761 = vld [vmem:[%s483 + $0x61] sm:$0xff]
        %v6762 = vld [vmem:[%s483 + $0x69] sm:$0xff]
        %v6763 = vld [vmem:[%s483 + $0x79] sm:$0xff]
        %v6764 = vld [vmem:[%s483 + $0x81] sm:$0xff]
        %v6765 = vld [vmem:[%s483 + $0x91] sm:$0xff]
        %v6766 = vld [vmem:[%s483 + $0x99] sm:$0xff]
        %v6767 = vld [vmem:[%s483 + $0xa9] sm:$0xff]
        %v6768 = vld [vmem:[%s483 + $0xb1] sm:$0xff]
        %v6769 = vld [vmem:[%s483 + $0xc1] sm:$0xff]
        %v6770 = vld [vmem:[%s483 + $0xc9] sm:$0xff]
        %v6771 = vld [vmem:[%s483 + $0xd9] sm:$0xff]
        %v6772 = vld [vmem:[%s483 + $0xe1] sm:$0xff]
        %v6773 = vld [vmem:[%s483 + $0xf1] sm:$0xff]
        %v6774 = vld [vmem:[%s483 + $0xf9] sm:$0xff]
        %v6775 = vld [vmem:[%s483 + $0x109] sm:$0xff]
        %v6776 = vld [vmem:[%s483 + $0x111] sm:$0xff]
        %v6777 = vld [vmem:[%s483 + $0x121] sm:$0xff]
        %v6778 = vld [vmem:[%s483 + $0x129] sm:$0xff]
        %v6779 = vld [vmem:[%s483 + $0x139] sm:$0xff]
        %v6780 = vld [vmem:[%s483 + $0x141] sm:$0xff]
        %v6781 = vld [vmem:[%s483 + $0x151] sm:$0xff]
        %v6782 = vld [vmem:[%s483 + $0x159] sm:$0xff]
        %v6783 = vld [vmem:[%s483 + $0x169] sm:$0xff]
        %v6784 = vld [vmem:[%s483 + $0x171] sm:$0xff]
        %v6785 = vld [vmem:[%s483 + $0x2] sm:$0xff]
        %v6786 = vld [vmem:[%s483 + $0xa] sm:$0xff]
        %v6787 = vld [vmem:[%s483 + $0x1a] sm:$0xff]
        %v6788 = vld [vmem:[%s483 + $0x22] sm:$0xff]
        %v6789 = vld [vmem:[%s483 + $0x32] sm:$0xff]
        %v6790 = vld [vmem:[%s483 + $0x3a] sm:$0xff]
        %v6791 = vld [vmem:[%s483 + $0x4a] sm:$0xff]
        %v6792 = vld [vmem:[%s483 + $0x52] sm:$0xff]
        %v6793 = vld [vmem:[%s483 + $0x62] sm:$0xff]
        %v6794 = vld [vmem:[%s483 + $0x6a] sm:$0xff]
        %v6795 = vld [vmem:[%s483 + $0x7a] sm:$0xff]
        %v6796 = vld [vmem:[%s483 + $0x82] sm:$0xff]
        %v6797 = vld [vmem:[%s483 + $0x92] sm:$0xff]
        %v6798 = vld [vmem:[%s483 + $0x9a] sm:$0xff]
        %v6799 = vld [vmem:[%s483 + $0xaa] sm:$0xff]
        %v6800 = vld [vmem:[%s483 + $0xb2] sm:$0xff]
        %v6801 = vld [vmem:[%s483 + $0xc2] sm:$0xff]
        %v6802 = vld [vmem:[%s483 + $0xca] sm:$0xff]
        %v6803 = vld [vmem:[%s483 + $0xda] sm:$0xff]
        %v6804 = vld [vmem:[%s483 + $0xe2] sm:$0xff]
        %v6805 = vld [vmem:[%s483 + $0xf2] sm:$0xff]
        %v6806 = vld [vmem:[%s483 + $0xfa] sm:$0xff]
        %v6807 = vld [vmem:[%s483 + $0x10a] sm:$0xff]
        %v6808 = vld [vmem:[%s483 + $0x112] sm:$0xff]
        %v6809 = vld [vmem:[%s483 + $0x122] sm:$0xff]
        %v6810 = vld [vmem:[%s483 + $0x12a] sm:$0xff]
        %v6811 = vld [vmem:[%s483 + $0x13a] sm:$0xff]
        %v6812 = vld [vmem:[%s483 + $0x142] sm:$0xff]
        %v6813 = vld [vmem:[%s483 + $0x152] sm:$0xff]
        %v6814 = vld [vmem:[%s483 + $0x15a] sm:$0xff]
        %v6815 = vld [vmem:[%s483 + $0x16a] sm:$0xff]
        %v6816 = vld [vmem:[%s483 + $0x172] sm:$0xff]
        %v6817 = vld [vmem:[%s580] sm:$0xff]
        %v6818 = vld [vmem:[%s580 + $0x8] sm:$0xff]
        %v6819 = vld [vmem:[%s580 + $0x18] sm:$0xff]
        %v6820 = vld [vmem:[%s580 + $0x20] sm:$0xff]
        %v6821 = vld [vmem:[%s580 + $0x30] sm:$0xff]
        %v6822 = vld [vmem:[%s580 + $0x38] sm:$0xff]
        %v6823 = vld [vmem:[%s580 + $0x48] sm:$0xff]
        %v6824 = vld [vmem:[%s580 + $0x50] sm:$0xff]
        %v6825 = vld [vmem:[%s580 + $0x60] sm:$0xff]
        %v6826 = vld [vmem:[%s580 + $0x68] sm:$0xff]
        %v6827 = vld [vmem:[%s580 + $0x78] sm:$0xff]
        %v6828 = vld [vmem:[%s580 + $0x80] sm:$0xff]
        %v6829 = vld [vmem:[%s580 + $0x90] sm:$0xff]
        %v6830 = vld [vmem:[%s580 + $0x98] sm:$0xff]
        %v6831 = vld [vmem:[%s580 + $0xa8] sm:$0xff]
        %v6832 = vld [vmem:[%s580 + $0xb0] sm:$0xff]
        %v6833 = vld [vmem:[%s580 + $0xc0] sm:$0xff]
        %v6834 = vld [vmem:[%s580 + $0xc8] sm:$0xff]
        %v6835 = vld [vmem:[%s580 + $0xd8] sm:$0xff]
        %v6836 = vld [vmem:[%s580 + $0xe0] sm:$0xff]
        %v6837 = vld [vmem:[%s580 + $0xf0] sm:$0xff]
        %v6838 = vld [vmem:[%s580 + $0xf8] sm:$0xff]
        %v6839 = vld [vmem:[%s580 + $0x108] sm:$0xff]
        %v6840 = vld [vmem:[%s580 + $0x110] sm:$0xff]
        %v6841 = vld [vmem:[%s580 + $0x120] sm:$0xff]
        %v6842 = vld [vmem:[%s580 + $0x128] sm:$0xff]
        %v6843 = vld [vmem:[%s580 + $0x138] sm:$0xff]
        %v6844 = vld [vmem:[%s580 + $0x140] sm:$0xff]
        %v6845 = vld [vmem:[%s580 + $0x150] sm:$0xff]
        %v6846 = vld [vmem:[%s580 + $0x158] sm:$0xff]
        %v6847 = vld [vmem:[%s580 + $0x168] sm:$0xff]
        %v6848 = vld [vmem:[%s580 + $0x170] sm:$0xff]
        %v6849 = vld [vmem:[%s580 + $0x1] sm:$0xff]
        %v6850 = vld [vmem:[%s580 + $0x9] sm:$0xff]
        %v6851 = vld [vmem:[%s580 + $0x19] sm:$0xff]
        %v6852 = vld [vmem:[%s580 + $0x21] sm:$0xff]
        %v6853 = vld [vmem:[%s580 + $0x31] sm:$0xff]
        %v6854 = vld [vmem:[%s580 + $0x39] sm:$0xff]
        %v6855 = vld [vmem:[%s580 + $0x49] sm:$0xff]
        %v6856 = vld [vmem:[%s580 + $0x51] sm:$0xff]
        %v6857 = vld [vmem:[%s580 + $0x61] sm:$0xff]
        %v6858 = vld [vmem:[%s580 + $0x69] sm:$0xff]
        %v6859 = vld [vmem:[%s580 + $0x79] sm:$0xff]
        %v6860 = vld [vmem:[%s580 + $0x81] sm:$0xff]
        %v6861 = vld [vmem:[%s580 + $0x91] sm:$0xff]
        %v6862 = vld [vmem:[%s580 + $0x99] sm:$0xff]
        %v6863 = vld [vmem:[%s580 + $0xa9] sm:$0xff]
        %v6864 = vld [vmem:[%s580 + $0xb1] sm:$0xff]
        %v6865 = vld [vmem:[%s580 + $0xc1] sm:$0xff]
        %v6866 = vld [vmem:[%s580 + $0xc9] sm:$0xff]
        %v6867 = vld [vmem:[%s580 + $0xd9] sm:$0xff]
        %v6868 = vld [vmem:[%s580 + $0xe1] sm:$0xff]
        %v6869 = vld [vmem:[%s580 + $0xf1] sm:$0xff]
        %v6870 = vld [vmem:[%s580 + $0xf9] sm:$0xff]
        %v6871 = vld [vmem:[%s580 + $0x109] sm:$0xff]
        %v6872 = vld [vmem:[%s580 + $0x111] sm:$0xff]
        %v6873 = vld [vmem:[%s580 + $0x121] sm:$0xff]
        %v6874 = vld [vmem:[%s580 + $0x129] sm:$0xff]
        %v6875 = vld [vmem:[%s580 + $0x139] sm:$0xff]
        %v6876 = vld [vmem:[%s580 + $0x141] sm:$0xff]
        %v6877 = vld [vmem:[%s580 + $0x151] sm:$0xff]
        %v6878 = vld [vmem:[%s580 + $0x159] sm:$0xff]
        %v6879 = vld [vmem:[%s580 + $0x169] sm:$0xff]
        %v6880 = vld [vmem:[%s580 + $0x171] sm:$0xff]
        %v6881 = vld [vmem:[%s580 + $0x2] sm:$0xff]
        %v6882 = vld [vmem:[%s580 + $0xa] sm:$0xff]
        %v6883 = vld [vmem:[%s580 + $0x1a] sm:$0xff]
        %v6884 = vld [vmem:[%s580 + $0x22] sm:$0xff]
        %v6885 = vld [vmem:[%s580 + $0x32] sm:$0xff]
        %v6886 = vld [vmem:[%s580 + $0x3a] sm:$0xff]
        %v6887 = vld [vmem:[%s580 + $0x4a] sm:$0xff]
        %v6888 = vld [vmem:[%s580 + $0x52] sm:$0xff]
        %v6889 = vld [vmem:[%s580 + $0x62] sm:$0xff]
        %v6890 = vld [vmem:[%s580 + $0x6a] sm:$0xff]
        %v6891 = vld [vmem:[%s580 + $0x7a] sm:$0xff]
        %v6892 = vld [vmem:[%s580 + $0x82] sm:$0xff]
        %v6893 = vld [vmem:[%s580 + $0x92] sm:$0xff]
        %v6894 = vld [vmem:[%s580 + $0x9a] sm:$0xff]
        %v6895 = vld [vmem:[%s580 + $0xaa] sm:$0xff]
        %v6896 = vld [vmem:[%s580 + $0xb2] sm:$0xff]
        %v6897 = vld [vmem:[%s580 + $0xc2] sm:$0xff]
        %v6898 = vld [vmem:[%s580 + $0xca] sm:$0xff]
        %v6899 = vld [vmem:[%s580 + $0xda] sm:$0xff]
        %v6900 = vld [vmem:[%s580 + $0xe2] sm:$0xff]
        %v6901 = vld [vmem:[%s580 + $0xf2] sm:$0xff]
        %v6902 = vld [vmem:[%s580 + $0xfa] sm:$0xff]
        %v6903 = vld [vmem:[%s580 + $0x10a] sm:$0xff]
        %v6904 = vld [vmem:[%s580 + $0x112] sm:$0xff]
        %v6905 = vld [vmem:[%s580 + $0x122] sm:$0xff]
        %v6906 = vld [vmem:[%s580 + $0x12a] sm:$0xff]
        %v6907 = vld [vmem:[%s580 + $0x13a] sm:$0xff]
        %v6908 = vld [vmem:[%s580 + $0x142] sm:$0xff]
        %v6909 = vld [vmem:[%s580 + $0x152] sm:$0xff]
        %v6910 = vld [vmem:[%s580 + $0x15a] sm:$0xff]
        %v6911 = vld [vmem:[%s580 + $0x16a] sm:$0xff]
        %v6912 = vld [vmem:[%s580 + $0x172] sm:$0xff]
        %6945 = vrot.lane.b32.xlu0 %v6657, 16
        %v6946 = vpop.permute.xlu0 %6945
        %6947 = vrot.lane.b32.xlu0 %v6658, 16
        %v6948 = vpop.permute.xlu0 %6947
        %6949 = vrot.lane.b32.xlu0 %v6659, 16
        %v6950 = vpop.permute.xlu0 %6949
        %6951 = vrot.lane.b32.xlu0 %v6660, 16
        %v6952 = vpop.permute.xlu0 %6951
        %6953 = vrot.lane.b32.xlu0 %v6661, 16
        %v6954 = vpop.permute.xlu0 %6953
        %6955 = vrot.lane.b32.xlu0 %v6662, 16
        %v6956 = vpop.permute.xlu0 %6955
        %6957 = vrot.lane.b32.xlu0 %v6663, 16
        %v6958 = vpop.permute.xlu0 %6957
        %6959 = vrot.lane.b32.xlu0 %v6664, 16
        %v6960 = vpop.permute.xlu0 %6959
        %6961 = vrot.lane.b32.xlu0 %v6665, 16
        %v6962 = vpop.permute.xlu0 %6961
        %6963 = vrot.lane.b32.xlu0 %v6666, 16
        %v6964 = vpop.permute.xlu0 %6963
        %6965 = vrot.lane.b32.xlu0 %v6667, 16
        %v6966 = vpop.permute.xlu0 %6965
        %6967 = vrot.lane.b32.xlu0 %v6668, 16
        %v6968 = vpop.permute.xlu0 %6967
        %6969 = vrot.lane.b32.xlu0 %v6669, 16
        %v6970 = vpop.permute.xlu0 %6969
        %6971 = vrot.lane.b32.xlu0 %v6670, 16
        %v6972 = vpop.permute.xlu0 %6971
        %6973 = vrot.lane.b32.xlu0 %v6671, 16
        %v6974 = vpop.permute.xlu0 %6973
        %6975 = vrot.lane.b32.xlu0 %v6672, 16
        %v6976 = vpop.permute.xlu0 %6975
        %6977 = vrot.lane.b32.xlu0 %v6673, 16
        %v6978 = vpop.permute.xlu0 %6977
        %6979 = vrot.lane.b32.xlu0 %v6674, 16
        %v6980 = vpop.permute.xlu0 %6979
        %6981 = vrot.lane.b32.xlu0 %v6675, 16
        %v6982 = vpop.permute.xlu0 %6981
        %6983 = vrot.lane.b32.xlu0 %v6676, 16
        %v6984 = vpop.permute.xlu0 %6983
        %6985 = vrot.lane.b32.xlu0 %v6677, 16
        %v6986 = vpop.permute.xlu0 %6985
        %6987 = vrot.lane.b32.xlu0 %v6678, 16
        %v6988 = vpop.permute.xlu0 %6987
        %6989 = vrot.lane.b32.xlu0 %v6679, 16
        %v6990 = vpop.permute.xlu0 %6989
        %6991 = vrot.lane.b32.xlu0 %v6680, 16
        %v6992 = vpop.permute.xlu0 %6991
        %6993 = vrot.lane.b32.xlu0 %v6681, 16
        %v6994 = vpop.permute.xlu0 %6993
        %6995 = vrot.lane.b32.xlu0 %v6682, 16
        %v6996 = vpop.permute.xlu0 %6995
        %6997 = vrot.lane.b32.xlu0 %v6683, 16
        %v6998 = vpop.permute.xlu0 %6997
        %6999 = vrot.lane.b32.xlu0 %v6684, 16
        %v7000 = vpop.permute.xlu0 %6999
        %7001 = vrot.lane.b32.xlu0 %v6685, 16
        %v7002 = vpop.permute.xlu0 %7001
        %7003 = vrot.lane.b32.xlu0 %v6686, 16
        %v7004 = vpop.permute.xlu0 %7003
        %7005 = vrot.lane.b32.xlu0 %v6687, 16
        %v7006 = vpop.permute.xlu0 %7005
        %7007 = vrot.lane.b32.xlu0 %v6688, 16
        %v7008 = vpop.permute.xlu0 %7007
        %7073 = vrot.lane.b32.xlu0 %v6689, 32
        %v7074 = vpop.permute.xlu0 %7073
        %7075 = vrot.lane.b32.xlu0 %v6690, 32
        %v7076 = vpop.permute.xlu0 %7075
        %7077 = vrot.lane.b32.xlu0 %v6691, 32
        %v7078 = vpop.permute.xlu0 %7077
        %7079 = vrot.lane.b32.xlu0 %v6692, 32
        %v7080 = vpop.permute.xlu0 %7079
        %7081 = vrot.lane.b32.xlu0 %v6693, 32
        %v7082 = vpop.permute.xlu0 %7081
        %7083 = vrot.lane.b32.xlu0 %v6694, 32
        %v7084 = vpop.permute.xlu0 %7083
        %7085 = vrot.lane.b32.xlu0 %v6695, 32
        %v7086 = vpop.permute.xlu0 %7085
        %7087 = vrot.lane.b32.xlu0 %v6696, 32
        %v7088 = vpop.permute.xlu0 %7087
        %7089 = vrot.lane.b32.xlu0 %v6697, 32
        %v7090 = vpop.permute.xlu0 %7089
        %7091 = vrot.lane.b32.xlu0 %v6698, 32
        %v7092 = vpop.permute.xlu0 %7091
        %7093 = vrot.lane.b32.xlu0 %v6699, 32
        %v7094 = vpop.permute.xlu0 %7093
        %7095 = vrot.lane.b32.xlu0 %v6700, 32
        %v7096 = vpop.permute.xlu0 %7095
        %7097 = vrot.lane.b32.xlu0 %v6701, 32
        %v7098 = vpop.permute.xlu0 %7097
        %7099 = vrot.lane.b32.xlu0 %v6702, 32
        %v7100 = vpop.permute.xlu0 %7099
        %7101 = vrot.lane.b32.xlu0 %v6703, 32
        %v7102 = vpop.permute.xlu0 %7101
        %7103 = vrot.lane.b32.xlu0 %v6704, 32
        %v7104 = vpop.permute.xlu0 %7103
        %7105 = vrot.lane.b32.xlu0 %v6705, 32
        %v7106 = vpop.permute.xlu0 %7105
        %7107 = vrot.lane.b32.xlu0 %v6706, 32
        %v7108 = vpop.permute.xlu0 %7107
        %7109 = vrot.lane.b32.xlu0 %v6707, 32
        %v7110 = vpop.permute.xlu0 %7109
        %7111 = vrot.lane.b32.xlu0 %v6708, 32
        %v7112 = vpop.permute.xlu0 %7111
        %7113 = vrot.lane.b32.xlu0 %v6709, 32
        %v7114 = vpop.permute.xlu0 %7113
        %7115 = vrot.lane.b32.xlu0 %v6710, 32
        %v7116 = vpop.permute.xlu0 %7115
        %7117 = vrot.lane.b32.xlu0 %v6711, 32
        %v7118 = vpop.permute.xlu0 %7117
        %7119 = vrot.lane.b32.xlu0 %v6712, 32
        %v7120 = vpop.permute.xlu0 %7119
        %7121 = vrot.lane.b32.xlu0 %v6713, 32
        %v7122 = vpop.permute.xlu0 %7121
        %7123 = vrot.lane.b32.xlu0 %v6714, 32
        %v7124 = vpop.permute.xlu0 %7123
        %7125 = vrot.lane.b32.xlu0 %v6715, 32
        %v7126 = vpop.permute.xlu0 %7125
        %7127 = vrot.lane.b32.xlu0 %v6716, 32
        %v7128 = vpop.permute.xlu0 %7127
        %7129 = vrot.lane.b32.xlu0 %v6717, 32
        %v7130 = vpop.permute.xlu0 %7129
        %7131 = vrot.lane.b32.xlu0 %v6718, 32
        %v7132 = vpop.permute.xlu0 %7131
        %7133 = vrot.lane.b32.xlu0 %v6719, 32
        %v7134 = vpop.permute.xlu0 %7133
        %7135 = vrot.lane.b32.xlu0 %v6720, 32
        %v7136 = vpop.permute.xlu0 %7135
        %7201 = vrot.lane.b32.xlu0 %v6721, 48
        %v7202 = vpop.permute.xlu0 %7201
        %7203 = vrot.lane.b32.xlu0 %v6722, 48
        %v7204 = vpop.permute.xlu0 %7203
        %7205 = vrot.lane.b32.xlu0 %v6723, 48
        %v7206 = vpop.permute.xlu0 %7205
        %7207 = vrot.lane.b32.xlu0 %v6724, 48
        %v7208 = vpop.permute.xlu0 %7207
        %7209 = vrot.lane.b32.xlu0 %v6725, 48
        %v7210 = vpop.permute.xlu0 %7209
        %7211 = vrot.lane.b32.xlu0 %v6726, 48
        %v7212 = vpop.permute.xlu0 %7211
        %7213 = vrot.lane.b32.xlu0 %v6727, 48
        %v7214 = vpop.permute.xlu0 %7213
        %7215 = vrot.lane.b32.xlu0 %v6728, 48
        %v7216 = vpop.permute.xlu0 %7215
        %7217 = vrot.lane.b32.xlu0 %v6729, 48
        %v7218 = vpop.permute.xlu0 %7217
        %7219 = vrot.lane.b32.xlu0 %v6730, 48
        %v7220 = vpop.permute.xlu0 %7219
        %7221 = vrot.lane.b32.xlu0 %v6731, 48
        %v7222 = vpop.permute.xlu0 %7221
        %7223 = vrot.lane.b32.xlu0 %v6732, 48
        %v7224 = vpop.permute.xlu0 %7223
        %7225 = vrot.lane.b32.xlu0 %v6733, 48
        %v7226 = vpop.permute.xlu0 %7225
        %7227 = vrot.lane.b32.xlu0 %v6734, 48
        %v7228 = vpop.permute.xlu0 %7227
        %7229 = vrot.lane.b32.xlu0 %v6735, 48
        %v7230 = vpop.permute.xlu0 %7229
        %7231 = vrot.lane.b32.xlu0 %v6736, 48
        %v7232 = vpop.permute.xlu0 %7231
        %7233 = vrot.lane.b32.xlu0 %v6737, 48
        %v7234 = vpop.permute.xlu0 %7233
        %7235 = vrot.lane.b32.xlu0 %v6738, 48
        %v7236 = vpop.permute.xlu0 %7235
        %7237 = vrot.lane.b32.xlu0 %v6739, 48
        %v7238 = vpop.permute.xlu0 %7237
        %7239 = vrot.lane.b32.xlu0 %v6740, 48
        %v7240 = vpop.permute.xlu0 %7239
        %7241 = vrot.lane.b32.xlu0 %v6741, 48
        %v7242 = vpop.permute.xlu0 %7241
        %7243 = vrot.lane.b32.xlu0 %v6742, 48
        %v7244 = vpop.permute.xlu0 %7243
        %7245 = vrot.lane.b32.xlu0 %v6743, 48
        %v7246 = vpop.permute.xlu0 %7245
        %7247 = vrot.lane.b32.xlu0 %v6744, 48
        %v7248 = vpop.permute.xlu0 %7247
        %7249 = vrot.lane.b32.xlu0 %v6745, 48
        %v7250 = vpop.permute.xlu0 %7249
        %7251 = vrot.lane.b32.xlu0 %v6746, 48
        %v7252 = vpop.permute.xlu0 %7251
        %7253 = vrot.lane.b32.xlu0 %v6747, 48
        %v7254 = vpop.permute.xlu0 %7253
        %7255 = vrot.lane.b32.xlu0 %v6748, 48
        %v7256 = vpop.permute.xlu0 %7255
        %7257 = vrot.lane.b32.xlu0 %v6749, 48
        %v7258 = vpop.permute.xlu0 %7257
        %7259 = vrot.lane.b32.xlu0 %v6750, 48
        %v7260 = vpop.permute.xlu0 %7259
        %7261 = vrot.lane.b32.xlu0 %v6751, 48
        %v7262 = vpop.permute.xlu0 %7261
        %7263 = vrot.lane.b32.xlu0 %v6752, 48
        %v7264 = vpop.permute.xlu0 %7263
        %7329 = vrot.lane.b32.xlu0 %v6753, 64
        %v7330 = vpop.permute.xlu0 %7329
        %7331 = vrot.lane.b32.xlu0 %v6754, 64
        %v7332 = vpop.permute.xlu0 %7331
        %7333 = vrot.lane.b32.xlu0 %v6755, 64
        %v7334 = vpop.permute.xlu0 %7333
        %7335 = vrot.lane.b32.xlu0 %v6756, 64
        %v7336 = vpop.permute.xlu0 %7335
        %7337 = vrot.lane.b32.xlu0 %v6757, 64
        %v7338 = vpop.permute.xlu0 %7337
        %7339 = vrot.lane.b32.xlu0 %v6758, 64
        %v7340 = vpop.permute.xlu0 %7339
        %7341 = vrot.lane.b32.xlu0 %v6759, 64
        %v7342 = vpop.permute.xlu0 %7341
        %7343 = vrot.lane.b32.xlu0 %v6760, 64
        %v7344 = vpop.permute.xlu0 %7343
        %7345 = vrot.lane.b32.xlu0 %v6761, 64
        %v7346 = vpop.permute.xlu0 %7345
        %7347 = vrot.lane.b32.xlu0 %v6762, 64
        %v7348 = vpop.permute.xlu0 %7347
        %7349 = vrot.lane.b32.xlu0 %v6763, 64
        %v7350 = vpop.permute.xlu0 %7349
        %7351 = vrot.lane.b32.xlu0 %v6764, 64
        %v7352 = vpop.permute.xlu0 %7351
        %7353 = vrot.lane.b32.xlu0 %v6765, 64
        %v7354 = vpop.permute.xlu0 %7353
        %7355 = vrot.lane.b32.xlu0 %v6766, 64
        %v7356 = vpop.permute.xlu0 %7355
        %7357 = vrot.lane.b32.xlu0 %v6767, 64
        %v7358 = vpop.permute.xlu0 %7357
        %7359 = vrot.lane.b32.xlu0 %v6768, 64
        %v7360 = vpop.permute.xlu0 %7359
        %7361 = vrot.lane.b32.xlu0 %v6769, 64
        %v7362 = vpop.permute.xlu0 %7361
        %7363 = vrot.lane.b32.xlu0 %v6770, 64
        %v7364 = vpop.permute.xlu0 %7363
        %7365 = vrot.lane.b32.xlu0 %v6771, 64
        %v7366 = vpop.permute.xlu0 %7365
        %7367 = vrot.lane.b32.xlu0 %v6772, 64
        %v7368 = vpop.permute.xlu0 %7367
        %7369 = vrot.lane.b32.xlu0 %v6773, 64
        %v7370 = vpop.permute.xlu0 %7369
        %7371 = vrot.lane.b32.xlu0 %v6774, 64
        %v7372 = vpop.permute.xlu0 %7371
        %7373 = vrot.lane.b32.xlu0 %v6775, 64
        %v7374 = vpop.permute.xlu0 %7373
        %7375 = vrot.lane.b32.xlu0 %v6776, 64
        %v7376 = vpop.permute.xlu0 %7375
        %7377 = vrot.lane.b32.xlu0 %v6777, 64
        %v7378 = vpop.permute.xlu0 %7377
        %7379 = vrot.lane.b32.xlu0 %v6778, 64
        %v7380 = vpop.permute.xlu0 %7379
        %7381 = vrot.lane.b32.xlu0 %v6779, 64
        %v7382 = vpop.permute.xlu0 %7381
        %7383 = vrot.lane.b32.xlu0 %v6780, 64
        %v7384 = vpop.permute.xlu0 %7383
        %7385 = vrot.lane.b32.xlu0 %v6781, 64
        %v7386 = vpop.permute.xlu0 %7385
        %7387 = vrot.lane.b32.xlu0 %v6782, 64
        %v7388 = vpop.permute.xlu0 %7387
        %7389 = vrot.lane.b32.xlu0 %v6783, 64
        %v7390 = vpop.permute.xlu0 %7389
        %7391 = vrot.lane.b32.xlu0 %v6784, 64
        %v7392 = vpop.permute.xlu0 %7391
        %7457 = vrot.lane.b32.xlu0 %v6785, 80
        %v7458 = vpop.permute.xlu0 %7457
        %7459 = vrot.lane.b32.xlu0 %v6786, 80
        %v7460 = vpop.permute.xlu0 %7459
        %7461 = vrot.lane.b32.xlu0 %v6787, 80
        %v7462 = vpop.permute.xlu0 %7461
        %7463 = vrot.lane.b32.xlu0 %v6788, 80
        %v7464 = vpop.permute.xlu0 %7463
        %7465 = vrot.lane.b32.xlu0 %v6789, 80
        %v7466 = vpop.permute.xlu0 %7465
        %7467 = vrot.lane.b32.xlu0 %v6790, 80
        %v7468 = vpop.permute.xlu0 %7467
        %7469 = vrot.lane.b32.xlu0 %v6791, 80
        %v7470 = vpop.permute.xlu0 %7469
        %7471 = vrot.lane.b32.xlu0 %v6792, 80
        %v7472 = vpop.permute.xlu0 %7471
        %7473 = vrot.lane.b32.xlu0 %v6793, 80
        %v7474 = vpop.permute.xlu0 %7473
        %7475 = vrot.lane.b32.xlu0 %v6794, 80
        %v7476 = vpop.permute.xlu0 %7475
        %7477 = vrot.lane.b32.xlu0 %v6795, 80
        %v7478 = vpop.permute.xlu0 %7477
        %7479 = vrot.lane.b32.xlu0 %v6796, 80
        %v7480 = vpop.permute.xlu0 %7479
        %7481 = vrot.lane.b32.xlu0 %v6797, 80
        %v7482 = vpop.permute.xlu0 %7481
        %7483 = vrot.lane.b32.xlu0 %v6798, 80
        %v7484 = vpop.permute.xlu0 %7483
        %7485 = vrot.lane.b32.xlu0 %v6799, 80
        %v7486 = vpop.permute.xlu0 %7485
        %7487 = vrot.lane.b32.xlu0 %v6800, 80
        %v7488 = vpop.permute.xlu0 %7487
        %7489 = vrot.lane.b32.xlu0 %v6801, 80
        %v7490 = vpop.permute.xlu0 %7489
        %7491 = vrot.lane.b32.xlu0 %v6802, 80
        %v7492 = vpop.permute.xlu0 %7491
        %7493 = vrot.lane.b32.xlu0 %v6803, 80
        %v7494 = vpop.permute.xlu0 %7493
        %7495 = vrot.lane.b32.xlu0 %v6804, 80
        %v7496 = vpop.permute.xlu0 %7495
        %7497 = vrot.lane.b32.xlu0 %v6805, 80
        %v7498 = vpop.permute.xlu0 %7497
        %7499 = vrot.lane.b32.xlu0 %v6806, 80
        %v7500 = vpop.permute.xlu0 %7499
        %7501 = vrot.lane.b32.xlu0 %v6807, 80
        %v7502 = vpop.permute.xlu0 %7501
        %7503 = vrot.lane.b32.xlu0 %v6808, 80
        %v7504 = vpop.permute.xlu0 %7503
        %7505 = vrot.lane.b32.xlu0 %v6809, 80
        %v7506 = vpop.permute.xlu0 %7505
        %7507 = vrot.lane.b32.xlu0 %v6810, 80
        %v7508 = vpop.permute.xlu0 %7507
        %7509 = vrot.lane.b32.xlu0 %v6811, 80
        %v7510 = vpop.permute.xlu0 %7509
        %7511 = vrot.lane.b32.xlu0 %v6812, 80
        %v7512 = vpop.permute.xlu0 %7511
        %7513 = vrot.lane.b32.xlu0 %v6813, 80
        %v7514 = vpop.permute.xlu0 %7513
        %7515 = vrot.lane.b32.xlu0 %v6814, 80
        %v7516 = vpop.permute.xlu0 %7515
        %7517 = vrot.lane.b32.xlu0 %v6815, 80
        %v7518 = vpop.permute.xlu0 %7517
        %7519 = vrot.lane.b32.xlu0 %v6816, 80
        %v7520 = vpop.permute.xlu0 %7519
        %7585 = vrot.lane.b32.xlu0 %v6817, 96
        %v7586 = vpop.permute.xlu0 %7585
        %7587 = vrot.lane.b32.xlu0 %v6818, 96
        %v7588 = vpop.permute.xlu0 %7587
        %7589 = vrot.lane.b32.xlu0 %v6819, 96
        %v7590 = vpop.permute.xlu0 %7589
        %7591 = vrot.lane.b32.xlu0 %v6820, 96
        %v7592 = vpop.permute.xlu0 %7591
        %7593 = vrot.lane.b32.xlu0 %v6821, 96
        %v7594 = vpop.permute.xlu0 %7593
        %7595 = vrot.lane.b32.xlu0 %v6822, 96
        %v7596 = vpop.permute.xlu0 %7595
        %7597 = vrot.lane.b32.xlu0 %v6823, 96
        %v7598 = vpop.permute.xlu0 %7597
        %7599 = vrot.lane.b32.xlu0 %v6824, 96
        %v7600 = vpop.permute.xlu0 %7599
        %7601 = vrot.lane.b32.xlu0 %v6825, 96
        %v7602 = vpop.permute.xlu0 %7601
        %7603 = vrot.lane.b32.xlu0 %v6826, 96
        %v7604 = vpop.permute.xlu0 %7603
        %7605 = vrot.lane.b32.xlu0 %v6827, 96
        %v7606 = vpop.permute.xlu0 %7605
        %7607 = vrot.lane.b32.xlu0 %v6828, 96
        %v7608 = vpop.permute.xlu0 %7607
        %7609 = vrot.lane.b32.xlu0 %v6829, 96
        %v7610 = vpop.permute.xlu0 %7609
        %7611 = vrot.lane.b32.xlu0 %v6830, 96
        %v7612 = vpop.permute.xlu0 %7611
        %7613 = vrot.lane.b32.xlu0 %v6831, 96
        %v7614 = vpop.permute.xlu0 %7613
        %7615 = vrot.lane.b32.xlu0 %v6832, 96
        %v7616 = vpop.permute.xlu0 %7615
        %7617 = vrot.lane.b32.xlu0 %v6833, 96
        %v7618 = vpop.permute.xlu0 %7617
        %7619 = vrot.lane.b32.xlu0 %v6834, 96
        %v7620 = vpop.permute.xlu0 %7619
        %7621 = vrot.lane.b32.xlu0 %v6835, 96
        %v7622 = vpop.permute.xlu0 %7621
        %7623 = vrot.lane.b32.xlu0 %v6836, 96
        %v7624 = vpop.permute.xlu0 %7623
        %7625 = vrot.lane.b32.xlu0 %v6837, 96
        %v7626 = vpop.permute.xlu0 %7625
        %7627 = vrot.lane.b32.xlu0 %v6838, 96
        %v7628 = vpop.permute.xlu0 %7627
        %7629 = vrot.lane.b32.xlu0 %v6839, 96
        %v7630 = vpop.permute.xlu0 %7629
        %7631 = vrot.lane.b32.xlu0 %v6840, 96
        %v7632 = vpop.permute.xlu0 %7631
        %7633 = vrot.lane.b32.xlu0 %v6841, 96
        %v7634 = vpop.permute.xlu0 %7633
        %7635 = vrot.lane.b32.xlu0 %v6842, 96
        %v7636 = vpop.permute.xlu0 %7635
        %7637 = vrot.lane.b32.xlu0 %v6843, 96
        %v7638 = vpop.permute.xlu0 %7637
        %7639 = vrot.lane.b32.xlu0 %v6844, 96
        %v7640 = vpop.permute.xlu0 %7639
        %7641 = vrot.lane.b32.xlu0 %v6845, 96
        %v7642 = vpop.permute.xlu0 %7641
        %7643 = vrot.lane.b32.xlu0 %v6846, 96
        %v7644 = vpop.permute.xlu0 %7643
        %7645 = vrot.lane.b32.xlu0 %v6847, 96
        %v7646 = vpop.permute.xlu0 %7645
        %7647 = vrot.lane.b32.xlu0 %v6848, 96
        %v7648 = vpop.permute.xlu0 %7647
        %7713 = vrot.lane.b32.xlu0 %v6849, 112
        %v7714 = vpop.permute.xlu0 %7713
        %7715 = vrot.lane.b32.xlu0 %v6850, 112
        %v7716 = vpop.permute.xlu0 %7715
        %7717 = vrot.lane.b32.xlu0 %v6851, 112
        %v7718 = vpop.permute.xlu0 %7717
        %7719 = vrot.lane.b32.xlu0 %v6852, 112
        %v7720 = vpop.permute.xlu0 %7719
        %7721 = vrot.lane.b32.xlu0 %v6853, 112
        %v7722 = vpop.permute.xlu0 %7721
        %7723 = vrot.lane.b32.xlu0 %v6854, 112
        %v7724 = vpop.permute.xlu0 %7723
        %7725 = vrot.lane.b32.xlu0 %v6855, 112
        %v7726 = vpop.permute.xlu0 %7725
        %7727 = vrot.lane.b32.xlu0 %v6856, 112
        %v7728 = vpop.permute.xlu0 %7727
        %7729 = vrot.lane.b32.xlu0 %v6857, 112
        %v7730 = vpop.permute.xlu0 %7729
        %7731 = vrot.lane.b32.xlu0 %v6858, 112
        %v7732 = vpop.permute.xlu0 %7731
        %7733 = vrot.lane.b32.xlu0 %v6859, 112
        %v7734 = vpop.permute.xlu0 %7733
        %7735 = vrot.lane.b32.xlu0 %v6860, 112
        %v7736 = vpop.permute.xlu0 %7735
        %7737 = vrot.lane.b32.xlu0 %v6861, 112
        %v7738 = vpop.permute.xlu0 %7737
        %7739 = vrot.lane.b32.xlu0 %v6862, 112
        %v7740 = vpop.permute.xlu0 %7739
        %7741 = vrot.lane.b32.xlu0 %v6863, 112
        %v7742 = vpop.permute.xlu0 %7741
        %7743 = vrot.lane.b32.xlu0 %v6864, 112
        %v7744 = vpop.permute.xlu0 %7743
        %7745 = vrot.lane.b32.xlu0 %v6865, 112
        %v7746 = vpop.permute.xlu0 %7745
        %7747 = vrot.lane.b32.xlu0 %v6866, 112
        %v7748 = vpop.permute.xlu0 %7747
        %7749 = vrot.lane.b32.xlu0 %v6867, 112
        %v7750 = vpop.permute.xlu0 %7749
        %7751 = vrot.lane.b32.xlu0 %v6868, 112
        %v7752 = vpop.permute.xlu0 %7751
        %7753 = vrot.lane.b32.xlu0 %v6869, 112
        %v7754 = vpop.permute.xlu0 %7753
        %7755 = vrot.lane.b32.xlu0 %v6870, 112
        %v7756 = vpop.permute.xlu0 %7755
        %7757 = vrot.lane.b32.xlu0 %v6871, 112
        %v7758 = vpop.permute.xlu0 %7757
        %7759 = vrot.lane.b32.xlu0 %v6872, 112
        %v7760 = vpop.permute.xlu0 %7759
        %7761 = vrot.lane.b32.xlu0 %v6873, 112
        %v7762 = vpop.permute.xlu0 %7761
        %7763 = vrot.lane.b32.xlu0 %v6874, 112
        %v7764 = vpop.permute.xlu0 %7763
        %7765 = vrot.lane.b32.xlu0 %v6875, 112
        %v7766 = vpop.permute.xlu0 %7765
        %7767 = vrot.lane.b32.xlu0 %v6876, 112
        %v7768 = vpop.permute.xlu0 %7767
        %7769 = vrot.lane.b32.xlu0 %v6877, 112
        %v7770 = vpop.permute.xlu0 %7769
        %7771 = vrot.lane.b32.xlu0 %v6878, 112
        %v7772 = vpop.permute.xlu0 %7771
        %7773 = vrot.lane.b32.xlu0 %v6879, 112
        %v7774 = vpop.permute.xlu0 %7773
        %7775 = vrot.lane.b32.xlu0 %v6880, 112
        %v7776 = vpop.permute.xlu0 %7775
        %v7809 = vsel %vm331, %v6625, %v6946
        %v7810 = vsel %vm331, %v6626, %v6948
        %v7811 = vsel %vm331, %v6627, %v6950
        %v7812 = vsel %vm331, %v6628, %v6952
        %v7813 = vsel %vm331, %v6629, %v6954
        %v7814 = vsel %vm331, %v6630, %v6956
        %v7815 = vsel %vm331, %v6631, %v6958
        %v7816 = vsel %vm331, %v6632, %v6960
        %v7817 = vsel %vm331, %v6633, %v6962
        %v7818 = vsel %vm331, %v6634, %v6964
        %v7819 = vsel %vm331, %v6635, %v6966
        %v7820 = vsel %vm331, %v6636, %v6968
        %v7821 = vsel %vm331, %v6637, %v6970
        %v7822 = vsel %vm331, %v6638, %v6972
        %v7823 = vsel %vm331, %v6639, %v6974
        %v7824 = vsel %vm331, %v6640, %v6976
        %v7825 = vsel %vm331, %v6641, %v6978
        %v7826 = vsel %vm331, %v6642, %v6980
        %v7827 = vsel %vm331, %v6643, %v6982
        %v7828 = vsel %vm331, %v6644, %v6984
        %v7829 = vsel %vm331, %v6645, %v6986
        %v7830 = vsel %vm331, %v6646, %v6988
        %v7831 = vsel %vm331, %v6647, %v6990
        %v7832 = vsel %vm331, %v6648, %v6992
        %v7833 = vsel %vm331, %v6649, %v6994
        %v7834 = vsel %vm331, %v6650, %v6996
        %v7835 = vsel %vm331, %v6651, %v6998
        %v7836 = vsel %vm331, %v6652, %v7000
        %v7837 = vsel %vm331, %v6653, %v7002
        %v7838 = vsel %vm331, %v6654, %v7004
        %v7839 = vsel %vm331, %v6655, %v7006
        %v7840 = vsel %vm331, %v6656, %v7008
        %v7841 = vsel %vm1605, %v7809, %v7074
        %v7842 = vsel %vm1605, %v7810, %v7076
        %v7843 = vsel %vm1605, %v7811, %v7078
        %v7844 = vsel %vm1605, %v7812, %v7080
        %v7845 = vsel %vm1605, %v7813, %v7082
        %v7846 = vsel %vm1605, %v7814, %v7084
        %v7847 = vsel %vm1605, %v7815, %v7086
        %v7848 = vsel %vm1605, %v7816, %v7088
        %v7849 = vsel %vm1605, %v7817, %v7090
        %v7850 = vsel %vm1605, %v7818, %v7092
        %v7851 = vsel %vm1605, %v7819, %v7094
        %v7852 = vsel %vm1605, %v7820, %v7096
        %v7853 = vsel %vm1605, %v7821, %v7098
        %v7854 = vsel %vm1605, %v7822, %v7100
        %v7855 = vsel %vm1605, %v7823, %v7102
        %v7856 = vsel %vm1605, %v7824, %v7104
        %v7857 = vsel %vm1605, %v7825, %v7106
        %v7858 = vsel %vm1605, %v7826, %v7108
        %v7859 = vsel %vm1605, %v7827, %v7110
        %v7860 = vsel %vm1605, %v7828, %v7112
        %v7861 = vsel %vm1605, %v7829, %v7114
        %v7862 = vsel %vm1605, %v7830, %v7116
        %v7863 = vsel %vm1605, %v7831, %v7118
        %v7864 = vsel %vm1605, %v7832, %v7120
        %v7865 = vsel %vm1605, %v7833, %v7122
        %v7866 = vsel %vm1605, %v7834, %v7124
        %v7867 = vsel %vm1605, %v7835, %v7126
        %v7868 = vsel %vm1605, %v7836, %v7128
        %v7869 = vsel %vm1605, %v7837, %v7130
        %v7870 = vsel %vm1605, %v7838, %v7132
        %v7871 = vsel %vm1605, %v7839, %v7134
        %v7872 = vsel %vm1605, %v7840, %v7136
        %v7873 = vsel %vm1638, %v7841, %v7202
        %v7874 = vsel %vm1638, %v7842, %v7204
        %v7875 = vsel %vm1638, %v7843, %v7206
        %v7876 = vsel %vm1638, %v7844, %v7208
        %v7877 = vsel %vm1638, %v7845, %v7210
        %v7878 = vsel %vm1638, %v7846, %v7212
        %v7879 = vsel %vm1638, %v7847, %v7214
        %v7880 = vsel %vm1638, %v7848, %v7216
        %v7881 = vsel %vm1638, %v7849, %v7218
        %v7882 = vsel %vm1638, %v7850, %v7220
        %v7883 = vsel %vm1638, %v7851, %v7222
        %v7884 = vsel %vm1638, %v7852, %v7224
        %v7885 = vsel %vm1638, %v7853, %v7226
        %v7886 = vsel %vm1638, %v7854, %v7228
        %v7887 = vsel %vm1638, %v7855, %v7230
        %v7888 = vsel %vm1638, %v7856, %v7232
        %v7889 = vsel %vm1638, %v7857, %v7234
        %v7890 = vsel %vm1638, %v7858, %v7236
        %v7891 = vsel %vm1638, %v7859, %v7238
        %v7892 = vsel %vm1638, %v7860, %v7240
        %v7893 = vsel %vm1638, %v7861, %v7242
        %v7894 = vsel %vm1638, %v7862, %v7244
        %v7895 = vsel %vm1638, %v7863, %v7246
        %v7896 = vsel %vm1638, %v7864, %v7248
        %v7897 = vsel %vm1638, %v7865, %v7250
        %v7898 = vsel %vm1638, %v7866, %v7252
        %v7899 = vsel %vm1638, %v7867, %v7254
        %v7900 = vsel %vm1638, %v7868, %v7256
        %v7901 = vsel %vm1638, %v7869, %v7258
        %v7902 = vsel %vm1638, %v7870, %v7260
        %v7903 = vsel %vm1638, %v7871, %v7262
        %v7904 = vsel %vm1638, %v7872, %v7264
        %v7905 = vsel %vm1671, %v7873, %v7330
        %v7906 = vsel %vm1671, %v7874, %v7332
        %v7907 = vsel %vm1671, %v7875, %v7334
        %v7908 = vsel %vm1671, %v7876, %v7336
        %v7909 = vsel %vm1671, %v7877, %v7338
        %v7910 = vsel %vm1671, %v7878, %v7340
        %v7911 = vsel %vm1671, %v7879, %v7342
        %v7912 = vsel %vm1671, %v7880, %v7344
        %v7913 = vsel %vm1671, %v7881, %v7346
        %v7914 = vsel %vm1671, %v7882, %v7348
        %v7915 = vsel %vm1671, %v7883, %v7350
        %v7916 = vsel %vm1671, %v7884, %v7352
        %v7917 = vsel %vm1671, %v7885, %v7354
        %v7918 = vsel %vm1671, %v7886, %v7356
        %v7919 = vsel %vm1671, %v7887, %v7358
        %v7920 = vsel %vm1671, %v7888, %v7360
        %v7921 = vsel %vm1671, %v7889, %v7362
        %v7922 = vsel %vm1671, %v7890, %v7364
        %v7923 = vsel %vm1671, %v7891, %v7366
        %v7924 = vsel %vm1671, %v7892, %v7368
        %v7925 = vsel %vm1671, %v7893, %v7370
        %v7926 = vsel %vm1671, %v7894, %v7372
        %v7927 = vsel %vm1671, %v7895, %v7374
        %v7928 = vsel %vm1671, %v7896, %v7376
        %v7929 = vsel %vm1671, %v7897, %v7378
        %v7930 = vsel %vm1671, %v7898, %v7380
        %v7931 = vsel %vm1671, %v7899, %v7382
        %v7932 = vsel %vm1671, %v7900, %v7384
        %v7933 = vsel %vm1671, %v7901, %v7386
        %v7934 = vsel %vm1671, %v7902, %v7388
        %v7935 = vsel %vm1671, %v7903, %v7390
        %v7936 = vsel %vm1671, %v7904, %v7392
        %v7937 = vsel %vm1704, %v7905, %v7458
        %v7938 = vsel %vm1704, %v7906, %v7460
        %v7939 = vsel %vm1704, %v7907, %v7462
        %v7940 = vsel %vm1704, %v7908, %v7464
        %v7941 = vsel %vm1704, %v7909, %v7466
        %v7942 = vsel %vm1704, %v7910, %v7468
        %v7943 = vsel %vm1704, %v7911, %v7470
        %v7944 = vsel %vm1704, %v7912, %v7472
        %v7945 = vsel %vm1704, %v7913, %v7474
        %v7946 = vsel %vm1704, %v7914, %v7476
        %v7947 = vsel %vm1704, %v7915, %v7478
        %v7948 = vsel %vm1704, %v7916, %v7480
        %v7949 = vsel %vm1704, %v7917, %v7482
        %v7950 = vsel %vm1704, %v7918, %v7484
        %v7951 = vsel %vm1704, %v7919, %v7486
        %v7952 = vsel %vm1704, %v7920, %v7488
        %v7953 = vsel %vm1704, %v7921, %v7490
        %v7954 = vsel %vm1704, %v7922, %v7492
        %v7955 = vsel %vm1704, %v7923, %v7494
        %v7956 = vsel %vm1704, %v7924, %v7496
        %v7957 = vsel %vm1704, %v7925, %v7498
        %v7958 = vsel %vm1704, %v7926, %v7500
        %v7959 = vsel %vm1704, %v7927, %v7502
        %v7960 = vsel %vm1704, %v7928, %v7504
        %v7961 = vsel %vm1704, %v7929, %v7506
        %v7962 = vsel %vm1704, %v7930, %v7508
        %v7963 = vsel %vm1704, %v7931, %v7510
        %v7964 = vsel %vm1704, %v7932, %v7512
        %v7965 = vsel %vm1704, %v7933, %v7514
        %v7966 = vsel %vm1704, %v7934, %v7516
        %v7967 = vsel %vm1704, %v7935, %v7518
        %v7968 = vsel %vm1704, %v7936, %v7520
        %v7969 = vsel %vm1737, %v7937, %v7586
        %v7970 = vsel %vm1737, %v7938, %v7588
        %v7971 = vsel %vm1737, %v7939, %v7590
        %v7972 = vsel %vm1737, %v7940, %v7592
        %v7973 = vsel %vm1737, %v7941, %v7594
        %v7974 = vsel %vm1737, %v7942, %v7596
        %v7975 = vsel %vm1737, %v7943, %v7598
        %v7976 = vsel %vm1737, %v7944, %v7600
        %v7977 = vsel %vm1737, %v7945, %v7602
        %v7978 = vsel %vm1737, %v7946, %v7604
        %v7979 = vsel %vm1737, %v7947, %v7606
        %v7980 = vsel %vm1737, %v7948, %v7608
        %v7981 = vsel %vm1737, %v7949, %v7610
        %v7982 = vsel %vm1737, %v7950, %v7612
        %v7983 = vsel %vm1737, %v7951, %v7614
        %v7984 = vsel %vm1737, %v7952, %v7616
        %v7985 = vsel %vm1737, %v7953, %v7618
        %v7986 = vsel %vm1737, %v7954, %v7620
        %v7987 = vsel %vm1737, %v7955, %v7622
        %v7988 = vsel %vm1737, %v7956, %v7624
        %v7989 = vsel %vm1737, %v7957, %v7626
        %v7990 = vsel %vm1737, %v7958, %v7628
        %v7991 = vsel %vm1737, %v7959, %v7630
        %v7992 = vsel %vm1737, %v7960, %v7632
        %v7993 = vsel %vm1737, %v7961, %v7634
        %v7994 = vsel %vm1737, %v7962, %v7636
        %v7995 = vsel %vm1737, %v7963, %v7638
        %v7996 = vsel %vm1737, %v7964, %v7640
        %v7997 = vsel %vm1737, %v7965, %v7642
        %v7998 = vsel %vm1737, %v7966, %v7644
        %v7999 = vsel %vm1737, %v7967, %v7646
        %v8000 = vsel %vm1737, %v7968, %v7648
        %v8001 = vsel %vm1770, %v7969, %v7714
        %v8002 = vsel %vm1770, %v7970, %v7716
        %v8003 = vsel %vm1770, %v7971, %v7718
        %v8004 = vsel %vm1770, %v7972, %v7720
        %v8005 = vsel %vm1770, %v7973, %v7722
        %v8006 = vsel %vm1770, %v7974, %v7724
        %v8007 = vsel %vm1770, %v7975, %v7726
        %v8008 = vsel %vm1770, %v7976, %v7728
        %v8009 = vsel %vm1770, %v7977, %v7730
        %v8010 = vsel %vm1770, %v7978, %v7732
        %v8011 = vsel %vm1770, %v7979, %v7734
        %v8012 = vsel %vm1770, %v7980, %v7736
        %v8013 = vsel %vm1770, %v7981, %v7738
        %v8014 = vsel %vm1770, %v7982, %v7740
        %v8015 = vsel %vm1770, %v7983, %v7742
        %v8016 = vsel %vm1770, %v7984, %v7744
        %v8017 = vsel %vm1770, %v7985, %v7746
        %v8018 = vsel %vm1770, %v7986, %v7748
        %v8019 = vsel %vm1770, %v7987, %v7750
        %v8020 = vsel %vm1770, %v7988, %v7752
        %v8021 = vsel %vm1770, %v7989, %v7754
        %v8022 = vsel %vm1770, %v7990, %v7756
        %v8023 = vsel %vm1770, %v7991, %v7758
        %v8024 = vsel %vm1770, %v7992, %v7760
        %v8025 = vsel %vm1770, %v7993, %v7762
        %v8026 = vsel %vm1770, %v7994, %v7764
        %v8027 = vsel %vm1770, %v7995, %v7766
        %v8028 = vsel %vm1770, %v7996, %v7768
        %v8029 = vsel %vm1770, %v7997, %v7770
        %v8030 = vsel %vm1770, %v7998, %v7772
        %v8031 = vsel %vm1770, %v7999, %v7774
        %v8032 = vsel %vm1770, %v8000, %v7776
        %v8033 = vld [vmem:[%s5] sm:$0xff]
        %v8034 = vld [vmem:[%s5 + $0x8] sm:$0xff]
        %v8035 = vld [vmem:[%s5 + $0x10] sm:$0xff]
        %v8036 = vld [vmem:[%s5 + $0x18] sm:$0xff]
        %v8037 = vld [vmem:[%s5 + $0x20] sm:$0xff]
        %v8038 = vld [vmem:[%s5 + $0x28] sm:$0xff]
        %v8039 = vld [vmem:[%s5 + $0x30] sm:$0xff]
        %v8040 = vld [vmem:[%s5 + $0x38] sm:$0xff]
        %v8041 = vld [vmem:[%s5 + $0x40] sm:$0xff]
        %v8042 = vld [vmem:[%s5 + $0x48] sm:$0xff]
        %v8043 = vld [vmem:[%s5 + $0x50] sm:$0xff]
        %v8044 = vld [vmem:[%s5 + $0x58] sm:$0xff]
        %v8045 = vld [vmem:[%s5 + $0x60] sm:$0xff]
        %v8046 = vld [vmem:[%s5 + $0x68] sm:$0xff]
        %v8047 = vld [vmem:[%s5 + $0x70] sm:$0xff]
        %v8048 = vld [vmem:[%s5 + $0x78] sm:$0xff]
        %v8049 = vld [vmem:[%s5 + $0x80] sm:$0xff]
        %v8050 = vld [vmem:[%s5 + $0x88] sm:$0xff]
        %v8051 = vld [vmem:[%s6] sm:$0x1]
        %v8053 = vlaneseq
        %v8054 = vshrl.u32 %v8053, 7
        %v8055 = vsub.s32 0, %v8054
        %v8056 = vrot.slane %v8051, %v8055
        %v8059 = vsel %vm331, %v6881, 0
        %v8062 = vsel %vm331, %v6882, 0
        %v8065 = vsel %vm331, %v6883, 0
        %v8068 = vsel %vm331, %v6884, 0
        %v8071 = vsel %vm331, %v6885, 0
        %v8074 = vsel %vm331, %v6886, 0
        %v8077 = vsel %vm331, %v6887, 0
        %v8080 = vsel %vm331, %v6888, 0
        %v8083 = vsel %vm331, %v6889, 0
        %v8086 = vsel %vm331, %v6890, 0
        %v8089 = vsel %vm331, %v6891, 0
        %v8092 = vsel %vm331, %v6892, 0
        %v8095 = vsel %vm331, %v6893, 0
        %v8098 = vsel %vm331, %v6894, 0
        %v8101 = vsel %vm331, %v6895, 0
        %v8104 = vsel %vm331, %v6896, 0
        %v8107 = vsel %vm331, %v6897, 0
        %v8110 = vsel %vm331, %v6898, 0
        %v8113 = vsel %vm331, %v6899, 0
        %v8116 = vsel %vm331, %v6900, 0
        %v8119 = vsel %vm331, %v6901, 0
        %v8122 = vsel %vm331, %v6902, 0
        %v8125 = vsel %vm331, %v6903, 0
        %v8128 = vsel %vm331, %v6904, 0
        %v8131 = vsel %vm331, %v6905, 0
        %v8134 = vsel %vm331, %v6906, 0
        %v8137 = vsel %vm331, %v6907, 0
        %v8140 = vsel %vm331, %v6908, 0
        %v8143 = vsel %vm331, %v6909, 0
        %v8146 = vsel %vm331, %v6910, 0
        %v8149 = vsel %vm331, %v6911, 0
        %v8152 = vsel %vm331, %v6912, 0
        %8154 = vmatprep.subr.mxu0 0.0
        %8155 = vmatpush1.msra.mxu0 %v8033
        %8156 = vmatprep.subr.mxu0 0.0
        %8157 = vmatpush1.msra.mxu0 %v8034
        %8158 = vmatprep.subr.mxu0 0.0
        %8159 = vmatpush1.msra.mxu0 %v8035
        %8160 = vmatprep.subr.mxu0 0.0
        %8161 = vmatpush1.msra.mxu0 %v8036
        %8162 = vmatprep.subr.mxu0 0.0
        %8163 = vmatpush1.msra.mxu0 %v8037
        %8164 = vmatprep.subr.mxu0 0.0
        %8165 = vmatpush1.msra.mxu0 %v8038
        %8166 = vmatprep.subr.mxu0 0.0
        %8167 = vmatpush1.msra.mxu0 %v8039
        %8168 = vmatprep.subr.mxu0 0.0
        %8169 = vmatpush1.msra.mxu0 %v8040
        %8170 = vmatprep.subr.mxu0 0.0
        %8171 = vmatpush1.msra.mxu0 %v8041
        %8172 = vmatprep.subr.mxu0 0.0
        %8173 = vmatpush1.msra.mxu0 %v8042
        %8174 = vmatprep.subr.mxu0 0.0
        %8175 = vmatpush1.msra.mxu0 %v8043
        %8176 = vmatprep.subr.mxu0 0.0
        %8177 = vmatpush1.msra.mxu0 %v8044
        %8178 = vmatprep.subr.mxu0 0.0
        %8179 = vmatpush1.msra.mxu0 %v8045
        %8180 = vmatprep.subr.mxu0 0.0
        %8181 = vmatpush1.msra.mxu0 %v8046
        %8182 = vmatprep.subr.mxu0 0.0
        %8183 = vmatpush1.msra.mxu0 %v8047
        %8184 = vmatprep.subr.mxu0 0.0
        %8185 = vmatpush1.msra.mxu0 %v8048
        %8186 = vmatprep.subr.mxu0 0.0
        %8187 = vmatpush1.msra.mxu0 %v8049
        %8188 = vmatprep.subr.mxu0 0.0
        %8189 = vmatpush1.msra.mxu0 %v8050
        %8190 = vmatprep.subr.mxu0 0.0
        %8191 = vmatpush1.msra.mxu0 0.0
        %8192 = vmatprep.subr.mxu0 0.0
        %8193 = vmatpush1.msra.mxu0 0.0
        %8194 = vmatprep.subr.mxu0 0.0
        %8195 = vmatpush1.msra.mxu0 0.0
        %8196 = vmatprep.subr.mxu0 0.0
        %8197 = vmatpush1.msra.mxu0 0.0
        %8198 = vmatprep.subr.mxu0 0.0
        %8199 = vmatpush1.msra.mxu0 0.0
        %8200 = vmatprep.subr.mxu0 0.0
        %8201 = vmatpush1.msra.mxu0 0.0
        %8202 = vmatprep.subr.mxu0 0.0
        %8203 = vmatpush1.msra.mxu0 0.0
        %8204 = vmatprep.subr.mxu0 0.0
        %8205 = vmatpush1.msra.mxu0 0.0
        %8206 = vmatprep.subr.mxu0 0.0
        %8207 = vmatpush1.msra.mxu0 0.0
        %8208 = vmatprep.subr.mxu0 0.0
        %8209 = vmatpush1.msra.mxu0 0.0
        %8210 = vmatprep.subr.mxu0 0.0
        %8211 = vmatpush1.msra.mxu0 0.0
        %8212 = vmatprep.subr.mxu0 0.0
        %8213 = vmatpush1.msra.mxu0 0.0
        %8214 = vmatprep.subr.mxu0 0.0
        %8215 = vmatpush1.msra.mxu0 0.0
        %8216 = vmatprep.subr.mxu0 0.0
        %8217 = vmatpush1.msra.mxu0 0.0
        %8218 = vmatprep.mubr.f32.mxu0 %v8059
        %8219 = vmatmul.mubr.f32.gmra.mrb[0].mxu0 %v8001
        %v8220 = vpop.f32.mrb[0].mxu0
        %v8221 = vadd.f32 %v8056, %v8220
        %v8222 = vpop.f32.mrb[0].mxu0
        %8223 = vmatprep.mubr.f32.mxu0 %v8062
        %8224 = vmatmul.mubr.f32.gmra.mrb[0].mxu0 %v8002
        %v8225 = vpop.f32.mrb[0].mxu0
        %v8226 = vadd.f32 %v8056, %v8225
        %v8227 = vpop.f32.mrb[0].mxu0
        %8228 = vmatprep.mubr.f32.mxu0 %v8065
        %8229 = vmatmul.mubr.f32.gmra.mrb[0].mxu0 %v8003
        %v8230 = vpop.f32.mrb[0].mxu0
        %v8231 = vadd.f32 %v8056, %v8230
        %v8232 = vpop.f32.mrb[0].mxu0
        %8233 = vmatprep.mubr.f32.mxu0 %v8068
        %8234 = vmatmul.mubr.f32.gmra.mrb[0].mxu0 %v8004
        %v8235 = vpop.f32.mrb[0].mxu0
        %v8236 = vadd.f32 %v8056, %v8235
        %v8237 = vpop.f32.mrb[0].mxu0
        %8238 = vmatprep.mubr.f32.mxu0 %v8071
        %8239 = vmatmul.mubr.f32.gmra.mrb[0].mxu0 %v8005
        %v8240 = vpop.f32.mrb[0].mxu0
        %v8241 = vadd.f32 %v8056, %v8240
        %v8242 = vpop.f32.mrb[0].mxu0
        %8243 = vmatprep.mubr.f32.mxu0 %v8074
        %8244 = vmatmul.mubr.f32.gmra.mrb[0].mxu0 %v8006
        %v8245 = vpop.f32.mrb[0].mxu0
        %v8246 = vadd.f32 %v8056, %v8245
        %v8247 = vpop.f32.mrb[0].mxu0
        %8248 = vmatprep.mubr.f32.mxu0 %v8077
        %8249 = vmatmul.mubr.f32.gmra.mrb[0].mxu0 %v8007
        %v8250 = vpop.f32.mrb[0].mxu0
        %v8251 = vadd.f32 %v8056, %v8250
        %v8252 = vpop.f32.mrb[0].mxu0
        %8253 = vmatprep.mubr.f32.mxu0 %v8080
        %8254 = vmatmul.mubr.f32.gmra.mrb[0].mxu0 %v8008
        %v8255 = vpop.f32.mrb[0].mxu0
        %v8256 = vadd.f32 %v8056, %v8255
        %v8257 = vpop.f32.mrb[0].mxu0
        %8258 = vmatprep.mubr.f32.mxu0 %v8083
        %8259 = vmatmul.mubr.f32.gmra.mrb[0].mxu0 %v8009
        %v8260 = vpop.f32.mrb[0].mxu0
        %v8261 = vadd.f32 %v8056, %v8260
        %v8262 = vpop.f32.mrb[0].mxu0
        %8263 = vmatprep.mubr.f32.mxu0 %v8086
        %8264 = vmatmul.mubr.f32.gmra.mrb[0].mxu0 %v8010
        %v8265 = vpop.f32.mrb[0].mxu0
        %v8266 = vadd.f32 %v8056, %v8265
        %v8267 = vpop.f32.mrb[0].mxu0
        %8268 = vmatprep.mubr.f32.mxu0 %v8089
        %8269 = vmatmul.mubr.f32.gmra.mrb[0].mxu0 %v8011
        %v8270 = vpop.f32.mrb[0].mxu0
        %v8271 = vadd.f32 %v8056, %v8270
        %v8272 = vpop.f32.mrb[0].mxu0
        %8273 = vmatprep.mubr.f32.mxu0 %v8092
        %8274 = vmatmul.mubr.f32.gmra.mrb[0].mxu0 %v8012
        %v8275 = vpop.f32.mrb[0].mxu0
        %v8276 = vadd.f32 %v8056, %v8275
        %v8277 = vpop.f32.mrb[0].mxu0
        %8278 = vmatprep.mubr.f32.mxu0 %v8095
        %8279 = vmatmul.mubr.f32.gmra.mrb[0].mxu0 %v8013
        %v8280 = vpop.f32.mrb[0].mxu0
        %v8281 = vadd.f32 %v8056, %v8280
        %v8282 = vpop.f32.mrb[0].mxu0
        %8283 = vmatprep.mubr.f32.mxu0 %v8098
        %8284 = vmatmul.mubr.f32.gmra.mrb[0].mxu0 %v8014
        %v8285 = vpop.f32.mrb[0].mxu0
        %v8286 = vadd.f32 %v8056, %v8285
        %v8287 = vpop.f32.mrb[0].mxu0
        %8288 = vmatprep.mubr.f32.mxu0 %v8101
        %8289 = vmatmul.mubr.f32.gmra.mrb[0].mxu0 %v8015
        %v8290 = vpop.f32.mrb[0].mxu0
        %v8291 = vadd.f32 %v8056, %v8290
        %v8292 = vpop.f32.mrb[0].mxu0
        %8293 = vmatprep.mubr.f32.mxu0 %v8104
        %8294 = vmatmul.mubr.f32.gmra.mrb[0].mxu0 %v8016
        %v8295 = vpop.f32.mrb[0].mxu0
        %v8296 = vadd.f32 %v8056, %v8295
        %v8297 = vpop.f32.mrb[0].mxu0
        %8298 = vmatprep.mubr.f32.mxu0 %v8107
        %8299 = vmatmul.mubr.f32.gmra.mrb[0].mxu0 %v8017
        %v8300 = vpop.f32.mrb[0].mxu0
        %v8301 = vadd.f32 %v8056, %v8300
        %v8302 = vpop.f32.mrb[0].mxu0
        %8303 = vmatprep.mubr.f32.mxu0 %v8110
        %8304 = vmatmul.mubr.f32.gmra.mrb[0].mxu0 %v8018
        %v8305 = vpop.f32.mrb[0].mxu0
        %v8306 = vadd.f32 %v8056, %v8305
        %v8307 = vpop.f32.mrb[0].mxu0
        %8308 = vmatprep.mubr.f32.mxu0 %v8113
        %8309 = vmatmul.mubr.f32.gmra.mrb[0].mxu0 %v8019
        %v8310 = vpop.f32.mrb[0].mxu0
        %v8311 = vadd.f32 %v8056, %v8310
        %v8312 = vpop.f32.mrb[0].mxu0
        %8313 = vmatprep.mubr.f32.mxu0 %v8116
        %8314 = vmatmul.mubr.f32.gmra.mrb[0].mxu0 %v8020
        %v8315 = vpop.f32.mrb[0].mxu0
        %v8316 = vadd.f32 %v8056, %v8315
        %v8317 = vpop.f32.mrb[0].mxu0
        %8318 = vmatprep.mubr.f32.mxu0 %v8119
        %8319 = vmatmul.mubr.f32.gmra.mrb[0].mxu0 %v8021
        %v8320 = vpop.f32.mrb[0].mxu0
        %v8321 = vadd.f32 %v8056, %v8320
        %v8322 = vpop.f32.mrb[0].mxu0
        %8323 = vmatprep.mubr.f32.mxu0 %v8122
        %8324 = vmatmul.mubr.f32.gmra.mrb[0].mxu0 %v8022
        %v8325 = vpop.f32.mrb[0].mxu0
        %v8326 = vadd.f32 %v8056, %v8325
        %v8327 = vpop.f32.mrb[0].mxu0
        %8328 = vmatprep.mubr.f32.mxu0 %v8125
        %8329 = vmatmul.mubr.f32.gmra.mrb[0].mxu0 %v8023
        %v8330 = vpop.f32.mrb[0].mxu0
        %v8331 = vadd.f32 %v8056, %v8330
        %v8332 = vpop.f32.mrb[0].mxu0
        %8333 = vmatprep.mubr.f32.mxu0 %v8128
        %8334 = vmatmul.mubr.f32.gmra.mrb[0].mxu0 %v8024
        %v8335 = vpop.f32.mrb[0].mxu0
        %v8336 = vadd.f32 %v8056, %v8335
        %v8337 = vpop.f32.mrb[0].mxu0
        %8338 = vmatprep.mubr.f32.mxu0 %v8131
        %8339 = vmatmul.mubr.f32.gmra.mrb[0].mxu0 %v8025
        %v8340 = vpop.f32.mrb[0].mxu0
        %v8341 = vadd.f32 %v8056, %v8340
        %v8342 = vpop.f32.mrb[0].mxu0
        %8343 = vmatprep.mubr.f32.mxu0 %v8134
        %8344 = vmatmul.mubr.f32.gmra.mrb[0].mxu0 %v8026
        %v8345 = vpop.f32.mrb[0].mxu0
        %v8346 = vadd.f32 %v8056, %v8345
        %v8347 = vpop.f32.mrb[0].mxu0
        %8348 = vmatprep.mubr.f32.mxu0 %v8137
        %8349 = vmatmul.mubr.f32.gmra.mrb[0].mxu0 %v8027
        %v8350 = vpop.f32.mrb[0].mxu0
        %v8351 = vadd.f32 %v8056, %v8350
        %v8352 = vpop.f32.mrb[0].mxu0
        %8353 = vmatprep.mubr.f32.mxu0 %v8140
        %8354 = vmatmul.mubr.f32.gmra.mrb[0].mxu0 %v8028
        %v8355 = vpop.f32.mrb[0].mxu0
        %v8356 = vadd.f32 %v8056, %v8355
        %v8357 = vpop.f32.mrb[0].mxu0
        %8358 = vmatprep.mubr.f32.mxu0 %v8143
        %8359 = vmatmul.mubr.f32.gmra.mrb[0].mxu0 %v8029
        %v8360 = vpop.f32.mrb[0].mxu0
        %v8361 = vadd.f32 %v8056, %v8360
        %v8362 = vpop.f32.mrb[0].mxu0
        %8363 = vmatprep.mubr.f32.mxu0 %v8146
        %8364 = vmatmul.mubr.f32.gmra.mrb[0].mxu0 %v8030
        %v8365 = vpop.f32.mrb[0].mxu0
        %v8366 = vadd.f32 %v8056, %v8365
        %v8367 = vpop.f32.mrb[0].mxu0
        %8368 = vmatprep.mubr.f32.mxu0 %v8149
        %8369 = vmatmul.mubr.f32.gmra.mrb[0].mxu0 %v8031
        %v8370 = vpop.f32.mrb[0].mxu0
        %v8371 = vadd.f32 %v8056, %v8370
        %v8372 = vpop.f32.mrb[0].mxu0
        %8373 = vmatprep.mubr.f32.mxu0 %v8152
        %8374 = vmatmul.mubr.f32.gmra.mrb[0].mxu0 %v8032
        %v8375 = vpop.f32.mrb[0].mxu0
        %v8376 = vadd.f32 %v8056, %v8375
        %v8377 = vpop.f32.mrb[0].mxu0
        %8378 = vdwg.mxu0
        %v8379 = vlaneseq
        %v8380 = vand.u32 %v8379, 127
        %vm8381 = vcmp.lt.s32.totalorder %v8380, 4
        %v8382 = vmax.f32 %v8221, 0.0
        %v8383 = vmax.f32 %v8226, 0.0
        %v8384 = vmax.f32 %v8231, 0.0
        %v8385 = vmax.f32 %v8236, 0.0
        %v8386 = vmax.f32 %v8241, 0.0
        %v8387 = vmax.f32 %v8246, 0.0
        %v8388 = vmax.f32 %v8251, 0.0
        %v8389 = vmax.f32 %v8256, 0.0
        %v8390 = vmax.f32 %v8261, 0.0
        %v8391 = vmax.f32 %v8266, 0.0
        %v8392 = vmax.f32 %v8271, 0.0
        %v8393 = vmax.f32 %v8276, 0.0
        %v8394 = vmax.f32 %v8281, 0.0
        %v8395 = vmax.f32 %v8286, 0.0
        %v8396 = vmax.f32 %v8291, 0.0
        %v8397 = vmax.f32 %v8296, 0.0
        %v8398 = vmax.f32 %v8301, 0.0
        %v8399 = vmax.f32 %v8306, 0.0
        %v8400 = vmax.f32 %v8311, 0.0
        %v8401 = vmax.f32 %v8316, 0.0
        %v8402 = vmax.f32 %v8321, 0.0
        %v8403 = vmax.f32 %v8326, 0.0
        %v8404 = vmax.f32 %v8331, 0.0
        %v8405 = vmax.f32 %v8336, 0.0
        %v8406 = vmax.f32 %v8341, 0.0
        %v8407 = vmax.f32 %v8346, 0.0
        %v8408 = vmax.f32 %v8351, 0.0
        %v8409 = vmax.f32 %v8356, 0.0
        %v8410 = vmax.f32 %v8361, 0.0
        %v8411 = vmax.f32 %v8366, 0.0
        %v8412 = vmax.f32 %v8371, 0.0
        %v8413 = vmax.f32 %v8376, 0.0
        %v8414 = vsel %vm8381, %v8382, %v8221
        %v8415 = vsel %vm8381, %v8383, %v8226
        %v8416 = vsel %vm8381, %v8384, %v8231
        %v8417 = vsel %vm8381, %v8385, %v8236
        %v8418 = vsel %vm8381, %v8386, %v8241
        %v8419 = vsel %vm8381, %v8387, %v8246
        %v8420 = vsel %vm8381, %v8388, %v8251
        %v8421 = vsel %vm8381, %v8389, %v8256
        %v8422 = vsel %vm8381, %v8390, %v8261
        %v8423 = vsel %vm8381, %v8391, %v8266
        %v8424 = vsel %vm8381, %v8392, %v8271
        %v8425 = vsel %vm8381, %v8393, %v8276
        %v8426 = vsel %vm8381, %v8394, %v8281
        %v8427 = vsel %vm8381, %v8395, %v8286
        %v8428 = vsel %vm8381, %v8396, %v8291
        %v8429 = vsel %vm8381, %v8397, %v8296
        %v8430 = vsel %vm8381, %v8398, %v8301
        %v8431 = vsel %vm8381, %v8399, %v8306
        %v8432 = vsel %vm8381, %v8400, %v8311
        %v8433 = vsel %vm8381, %v8401, %v8316
        %v8434 = vsel %vm8381, %v8402, %v8321
        %v8435 = vsel %vm8381, %v8403, %v8326
        %v8436 = vsel %vm8381, %v8404, %v8331
        %v8437 = vsel %vm8381, %v8405, %v8336
        %v8438 = vsel %vm8381, %v8406, %v8341
        %v8439 = vsel %vm8381, %v8407, %v8346
        %v8440 = vsel %vm8381, %v8408, %v8351
        %v8441 = vsel %vm8381, %v8409, %v8356
        %v8442 = vsel %vm8381, %v8410, %v8361
        %v8443 = vsel %vm8381, %v8411, %v8366
        %v8444 = vsel %vm8381, %v8412, %v8371
        %v8445 = vsel %vm8381, %v8413, %v8376
        %8446 = vxpose.xlu0.b32.start [1/16] %v8414, 128
        %8447 = vxpose.xlu0.b32.cont [2/16] %v8415, 128
        %8448 = vxpose.xlu0.b32.cont [3/16] %v8416, 128
        %8449 = vxpose.xlu0.b32.cont [4/16] %v8417, 128
        %8450 = vxpose.xlu0.b32.cont [5/16] %v8418, 128
        %8451 = vxpose.xlu0.b32.cont [6/16] %v8419, 128
        %8452 = vxpose.xlu0.b32.cont [7/16] %v8420, 128
        %8453 = vxpose.xlu0.b32.cont [8/16] %v8421, 128
        %8454 = vxpose.xlu0.b32.cont [9/16] %v8422, 128
        %8455 = vxpose.xlu0.b32.cont [10/16] %v8423, 128
        %8456 = vxpose.xlu0.b32.cont [11/16] %v8424, 128
        %8457 = vxpose.xlu0.b32.cont [12/16] %v8425, 128
        %8458 = vxpose.xlu0.b32.cont [13/16] %v8426, 128
        %8459 = vxpose.xlu0.b32.cont [14/16] %v8427, 128
        %8460 = vxpose.xlu0.b32.cont [15/16] %v8428, 128
        %8461 = vxpose.xlu0.b32.end [16/16] %v8429, 128
        %v8462 = vpop.trf.xlu0
        %v8463 = vpop.trf.xlu0
        %v8464 = vpop.trf.xlu0
        %v8465 = vpop.trf.xlu0
        %v8466 = vpop.trf.xlu0
        %v8467 = vpop.trf.xlu0
        %v8468 = vpop.trf.xlu0
        %v8469 = vpop.trf.xlu0
        %v8470 = vpop.trf.xlu0
        %v8471 = vpop.trf.xlu0
        %v8472 = vpop.trf.xlu0
        %v8473 = vpop.trf.xlu0
        %v8474 = vpop.trf.xlu0
        %v8475 = vpop.trf.xlu0
        %v8476 = vpop.trf.xlu0
        %v8477 = vpop.trf.xlu0
        %8478 = vxpose.xlu0.b32.start [1/16] %v8430, 128
        %8479 = vxpose.xlu0.b32.cont [2/16] %v8431, 128
        %8480 = vxpose.xlu0.b32.cont [3/16] %v8432, 128
        %8481 = vxpose.xlu0.b32.cont [4/16] %v8433, 128
        %8482 = vxpose.xlu0.b32.cont [5/16] %v8434, 128
        %8483 = vxpose.xlu0.b32.cont [6/16] %v8435, 128
        %8484 = vxpose.xlu0.b32.cont [7/16] %v8436, 128
        %8485 = vxpose.xlu0.b32.cont [8/16] %v8437, 128
        %8486 = vxpose.xlu0.b32.cont [9/16] %v8438, 128
        %8487 = vxpose.xlu0.b32.cont [10/16] %v8439, 128
        %8488 = vxpose.xlu0.b32.cont [11/16] %v8440, 128
        %8489 = vxpose.xlu0.b32.cont [12/16] %v8441, 128
        %8490 = vxpose.xlu0.b32.cont [13/16] %v8442, 128
        %8491 = vxpose.xlu0.b32.cont [14/16] %v8443, 128
        %8492 = vxpose.xlu0.b32.cont [15/16] %v8444, 128
        %8493 = vxpose.xlu0.b32.end [16/16] %v8445, 128
        %v8494 = vpop.trf.xlu0
        %v8495 = vpop.trf.xlu0
        %v8496 = vpop.trf.xlu0
        %v8497 = vpop.trf.xlu0
        %v8498 = vpop.trf.xlu0
        %v8499 = vpop.trf.xlu0
        %v8500 = vpop.trf.xlu0
        %v8501 = vpop.trf.xlu0
        %v8502 = vpop.trf.xlu0
        %v8503 = vpop.trf.xlu0
        %v8504 = vpop.trf.xlu0
        %v8505 = vpop.trf.xlu0
        %v8506 = vpop.trf.xlu0
        %v8507 = vpop.trf.xlu0
        %v8508 = vpop.trf.xlu0
        %v8509 = vpop.trf.xlu0
        %8510 = vst [vmem:[%s271] sm:$0xff] %v8462
        %8511 = vst [vmem:[%s271 + $0x8] sm:$0xff] %v8494
        %s8512 = sand.u32 %s181, 1
        %s8513 = scalar_lea.sflag [#allocation4], %s8512
        %s8514 = sand.u32 %s181, 1
        %s8515 = smul.addr %s8514, 16
        %s8516 = scalar_lea.vmem [#allocation3], %s8515
        // Predicated region
        $region49: #{tpu_custom_call.1} parent=47 // pred_check
          %p8517 = pneg %p191
        $region50: #{tpu_custom_call.1} parent=47 // pred_check_branch
          %8519 = sbr.rel (%p8517) target = $region52
        $region51: #{tpu_custom_call.1} parent=47 // pred_region
          %s8521 = ssub.s32 256, 256
          %8522 = vsyncadd %s8513, %s8521
          %s8523 = smul.addr %s21, 2
          %s8524 = smul.addr %s8523, 128
          %s8525 = scalar_lea.hbm %s7, %s8524
          %s8527 = sshll.u32 %s8516, 4
          %s8528 = int_to_ptr.vmem [resolvable:$true] %s8527
          %8530 = dma.vmem_to_hbm [thread:$0]  %s8528, 256, %s8525, %s8513
        $region52: #{tpu_custom_call.1} parent=47 // pred_fallthru
          _
      $region48: #{tpu_custom_call.1} parent=5 // pred_fallthru
        _
      %p8531 = scmp.le.s32.totalorder 2, %s16
      // Predicated region
      $region53: #{tpu_custom_call.1} parent=5 // pred_check
        %p8532 = pneg %p8531
      $region54: #{tpu_custom_call.1} parent=5 // pred_check_branch
        %8534 = sbr.rel (%p8532) target = $region56
      $region55: #{tpu_custom_call.1} parent=5 // pred_region
        %s8535 = ssub.s32 %s16, 2
        // Predicated region
        $region57: #{tpu_custom_call.1} parent=55 // pred_check
          %p8536 = pneg %p197
        $region58: #{tpu_custom_call.1} parent=55 // pred_check_branch
          %8538 = sbr.rel (%p8536) target = $region60
        $region59: #{tpu_custom_call.1} parent=55 // pred_region
          %s8539 = sand.u32 %s182, 1
          %s8540 = scalar_lea.sflag [#allocation4], %s8539
          %s8541 = sand.u32 %s182, 1
          %s8542 = smul.addr %s8541, 16
          %s8543 = scalar_lea.vmem [#allocation3], %s8542
          %8544 = dma.done %s8540, 256
        $region60: #{tpu_custom_call.1} parent=55 // pred_fallthru
          _
      $region56: #{tpu_custom_call.1} parent=5 // pred_fallthru
        _
    $region6: #{tpu_custom_call.1} parent=1 // loop_footer
      %s20 = sadd.s32 1, %s16
    $region7: #{tpu_custom_call.1} parent=1 // loop_footer_branch
      %15 = sbr.rel target = $region3
    $region8: #{tpu_custom_call.1} parent=1 // loop_exit
      _
    %8545 = vsyncpa [#allocation4], 1
    %s8546 = scalar_lea.sflag [#allocation4], 1
    %8547 = vsyncpa %s8546, 1

</llo_original>
